<compile_context>
chip_gen: v7x
topology: tpu7x:2x2x1
jax: 0.10.0
libtpu: 0.0.40
codegen_flags: <defaults>
</compile_context>

<pallas_src>
import functools

import numpy as np
import jax
import jax.numpy as jnp
from jax import lax
from jax.experimental import pallas as pl
from jax.experimental.pallas import tpu as pltpu


# Fixed geometry implied by fc1 = Linear(20*8*7, 256): input is (N, 1, 80, 15).
_H, _W = 80, 15              # input patch (mel bands x frames)
_H1, _W1, _C1 = 78, 9, 10    # conv1 output (pre-pool)
_HP1 = 26                    # after MaxPool2d((3, 1))
_H2, _W2, _C2 = 24, 7, 20    # conv2 output (pre-pool)
_HP2 = 8                     # after MaxPool2d((3, 1))
_K1 = 128                    # conv1 GEMM K  (3*15 = 45 real rows, zero-padded)
_N1 = 128                    # conv1 GEMM N  (9*10 = 90 real cols, zero-padded)
_K2 = 3 * _N1                # conv2 GEMM K  (3 row-shifted 128-wide chunks)
_N2 = 256                    # conv2 GEMM N  (7*20 = 140 real cols, zero-padded)
_NFC = 256                   # fc1 width
_NOUT = 128                  # fc2 output padded to one full lane group


# ----------------------------------------------------------------------------
# The fused Pallas kernel (one batch block per grid step)
# ----------------------------------------------------------------------------
def _onset_fused_kernel(x_ref, w1_ref, b1_ref, w2_ref, b2_ref,
                        wf1_ref, bf1_ref, wf2_ref, bf2_ref, o_ref):
    nb = x_ref.shape[0]
    x = x_ref[...]                                                  # (nb, 80, 15)

    # ---- conv1 (1->10, 3x7) as ONE Toeplitz GEMM over the whole batch block.
    # K packs (kernel_row, input_col) = 3*15 = 45 features, zero-padded to 128;
    # the width-direction convolution lives in w1's Toeplitz structure.  Output
    # lanes encode (out_col, out_chan) = 9*10 = 90, zero-padded to 128.
    p1 = jnp.concatenate(
        [x[:, 0:_H1, :], x[:, 1:_H1 + 1, :], x[:, 2:_H1 + 2, :],
         jnp.zeros((nb, _H1, _K1 - 3 * _W), jnp.float32)], axis=-1)  # (nb,78,128)
    z1 = jnp.dot(p1.reshape(nb * _H1, _K1), w1_ref[...],
                 preferred_element_type=jnp.float32) + b1_ref[...]   # (nb*78,128)
    # MaxPool2d((3,1)) BEFORE tanh (monotonic => exact), then a single tanh.
    y1 = jnp.tanh(jnp.max(z1.reshape(nb, _HP1, 3, _N1), axis=2))     # (nb,26,128)

    # ---- conv2 (10->20, 3x3) as ONE Toeplitz GEMM.  K packs
    # (kernel_row, in_col*10 + in_chan) as three lane-aligned 128-wide chunks.
    p2 = jnp.concatenate(
        [y1[:, 0:_H2, :], y1[:, 1:_H2 + 1, :], y1[:, 2:_H2 + 2, :]],
        axis=-1)                                                     # (nb,24,384)
    z2 = jnp.dot(p2.reshape(nb * _H2, _K2), w2_ref[...],
                 preferred_element_type=jnp.float32) + b2_ref[...]   # (nb*24,256)
    y2 = jnp.tanh(jnp.max(z2.reshape(nb, _HP2, 3, _N2), axis=2))     # (nb,8,256)

    # ---- fc1 + sigmoid.  The PyTorch (C,H,W) flatten permutation and y2's
    # lane padding are folded into wf1's row layout host-side, so the flatten
    # is just "accumulate one (256,256) weight slab per pooled row".
    h = bf1_ref[...]                                                 # (1, 256)
    for hh in range(_HP2):
        h = h + jnp.dot(y2[:, hh, :], wf1_ref[hh],
                        preferred_element_type=jnp.float32)          # (nb, 256)
    h = jax.nn.sigmoid(h)

    # ---- fc2 + sigmoid; output padded to 128 lanes (column 0 is the logit)
    # so the only HBM store of this kernel is lane-dense.
    o = jax.nn.sigmoid(jnp.dot(h, wf2_ref[...],
                               preferred_element_type=jnp.float32) + bf2_ref[...])
    o_ref[...] = o.reshape(nb, 1, _NOUT)


# ----------------------------------------------------------------------------
# Wrapper: pad batch to a block multiple, launch one fused kernel
# ----------------------------------------------------------------------------
def onset_cnn_forward(x, params, *, batch_block=8):
    """x: (N, 1, 80, 15) NCHW float -> (N, 1) sigmoid outputs."""
    n = x.shape[0]
    assert x.shape[1:] == (1, _H, _W), x.shape
    xs = x.reshape(n, _H, _W).astype(jnp.float32)

    nb = max(1, min(batch_block, n))
    n_pad = int(pl.cdiv(n, nb)) * nb
    if n_pad != n:
        xs = jnp.concatenate(
            [xs, jnp.zeros((n_pad - n, _H, _W), jnp.float32)], axis=0)

    out = pl.pallas_call(
        _onset_fused_kernel,
        grid=(n_pad // nb,),
        in_specs=[
            pl.BlockSpec((nb, _H, _W), lambda i: (i, 0, 0)),       # x block
            pl.BlockSpec((_K1, _N1), lambda i: (0, 0)),            # conv1 Toeplitz
            pl.BlockSpec((1, _N1), lambda i: (0, 0)),              # conv1 bias row
            pl.BlockSpec((_K2, _N2), lambda i: (0, 0)),            # conv2 Toeplitz
            pl.BlockSpec((1, _N2), lambda i: (0, 0)),              # conv2 bias row
            pl.BlockSpec((_HP2, _N2, _NFC), lambda i: (0, 0, 0)),  # fc1 slabs
            pl.BlockSpec((1, _NFC), lambda i: (0, 0)),             # fc1 bias
            pl.BlockSpec((_NFC, _NOUT), lambda i: (0, 0)),         # fc2 (padded)
            pl.BlockSpec((1, _NOUT), lambda i: (0, 0)),            # fc2 bias
        ],
        out_specs=pl.BlockSpec((nb, 1, _NOUT), lambda i: (i, 0, 0)),
        out_shape=jax.ShapeDtypeStruct((n_pad, 1, _NOUT), jnp.float32),
        compiler_params=pltpu.CompilerParams(
            dimension_semantics=("parallel",)),
    )(xs, params["t1"], params["b1row"], params["t2"], params["b2row"],
      params["wf1"], params["bf1"], params["wf2"], params["bf2"])

    return out[:n, 0, 0:1]


# ----------------------------------------------------------------------------
# Host-side, one-time weight re-layout (numpy; not part of the kernel timing)
# ----------------------------------------------------------------------------
def pack_params(raw):
    """PyTorch-format weights -> fused-kernel GEMM matrices.

    Toeplitz-embeds the width-direction convolutions, zero-pads K / output
    lanes to 128-multiples, tiles biases to the (out_col, out_chan) lane
    layout, and folds the (C,H,W) flatten permutation + padding into fc1.
    """
    w1, b1, w2, b2, fc1_w, fc1_b, fc2_w, fc2_b = [
        np.asarray(a, np.float32) for a in raw]

    # conv1: rows = (kernel_row, input_col), cols = (out_col, out_chan).
    t1 = np.zeros((_K1, _N1), np.float32)
    for i in range(3):                       # kernel row
        for q in range(_W1):                 # output column
            for j in range(7):               # kernel column
                t1[i * _W + q + j, q * _C1:(q + 1) * _C1] = w1[:, 0, i, j]
    b1row = np.zeros((1, _N1), np.float32)
    b1row[0, :_W1 * _C1] = np.tile(b1, _W1)

    # conv2: rows = (kernel_row, in_col*10 + in_chan) in 3 chunks of 128,
    #        cols = (out_col, out_chan) padded to 256.
    t2 = np.zeros((_K2, _N2), np.float32)
    for i in range(3):
        for qo in range(_W2):
            for j in range(3):
                qi = qo + j
                for ci in range(_C1):
                    t2[i * _N1 + qi * _C1 + ci,
                       qo * _C2:(qo + 1) * _C2] = w2[:, ci, i, j]
    b2row = np.zeros((1, _N2), np.float32)
    b2row[0, :_W2 * _C2] = np.tile(b2, _W2)

    # fc1: one (256, 256) slab per pooled row h; row index inside a slab is
    # the kernel's lane layout (w*20 + c, padded to 256); values come from
    # PyTorch's flatten order c*56 + h*7 + w.
    wf1 = np.zeros((_HP2, _N2, _NFC), np.float32)
    fc1_wt = fc1_w.T                          # (1120, 256)
    for c in range(_C2):
        for h in range(_HP2):
            for w in range(_W2):
                wf1[h, w * _C2 + c, :] = fc1_wt[c * (_HP2 * _W2) + h * _W2 + w, :]
    bf1 = fc1_b.reshape(1, _NFC)

    # fc2: pad the single output column to 128 lanes.
    wf2 = np.zeros((_NFC, _NOUT), np.float32)
    wf2[:, 0] = fc2_w[0, :]
    bf2 = np.zeros((1, _NOUT), np.float32)
    bf2[0, 0] = fc2_b[0]

    return {k: jnp.asarray(v) for k, v in dict(
        t1=t1, b1row=b1row, t2=t2, b2row=b2row,
        wf1=wf1, bf1=bf1, wf2=wf2, bf2=bf2).items()}


# ----------------------------------------------------------------------------
# Deterministic parameter init (PyTorch-default-style uniform bounds)
# ----------------------------------------------------------------------------
def init_raw_params(key):
    ks = jax.random.split(key, 8)

    def u(k, shape, fan_in):
        bound = 1.0 / float(np.sqrt(fan_in))
        return jax.random.uniform(k, shape, jnp.float32, -bound, bound)

    w1 = u(ks[0], (10, 1, 3, 7), 1 * 3 * 7)
    b1 = u(ks[1], (10,), 1 * 3 * 7)
    w2 = u(ks[2], (20, 10, 3, 3), 10 * 3 * 3)
    b2 = u(ks[3], (20,), 10 * 3 * 3)
    fc1_w = u(ks[4], (256, 1120), 1120)
    fc1_b = u(ks[5], (256,), 1120)
    fc2_w = u(ks[6], (1, 256), 256)
    fc2_b = u(ks[7], (1,), 256)
    return (w1, b1, w2, b2, fc1_w, fc1_b, fc2_w, fc2_b)


# ----------------------------------------------------------------------------
# Pure-JAX reference of the PyTorch forward (eval mode)
# ----------------------------------------------------------------------------
def reference_forward(x, raw):
    w1, b1, w2, b2, fc1_w, fc1_b, fc2_w, fc2_b = raw
    dn = ("NCHW", "OIHW", "NCHW")
    y = jnp.tanh(lax.conv_general_dilated(x, w1, (1, 1), "VALID",
                                          dimension_numbers=dn)
                 + b1[None, :, None, None])
    y = lax.reduce_window(y, -jnp.inf, lax.max,
                          (1, 1, 3, 1), (1, 1, 3, 1), "VALID")
    y = jnp.tanh(lax.conv_general_dilated(y, w2, (1, 1), "VALID",
                                          dimension_numbers=dn)
                 + b2[None, :, None, None])
    y = lax.reduce_window(y, -jnp.inf, lax.max,
                          (1, 1, 3, 1), (1, 1, 3, 1), "VALID")
    y = y.reshape(y.shape[0], -1)                         # (N, 20*8*7)
    y = jax.nn.sigmoid(y @ fc1_w.T + fc1_b)
    y = jax.nn.sigmoid(y @ fc2_w.T + fc2_b)
    return y


if __name__ == "__main__":
    key = jax.random.PRNGKey(0)
    k_x, k_p = jax.random.split(key)

    # (N, C, H, W) = (8, 1, 80, 15): the spatial size implied by fc1 = 20*8*7.
    x = jax.random.normal(k_x, (8, 1, 80, 15), jnp.float32)
    raw = init_raw_params(k_p)
    params = pack_params(raw)

    fwd = jax.jit(functools.partial(onset_cnn_forward, batch_block=4))
    out = jax.block_until_ready(fwd(x, params))

    assert out.shape == (8, 1), out.shape
    ref = reference_forward(x, raw)
    np.testing.assert_allclose(np.asarray(out), np.asarray(ref),
                               atol=1e-3, rtol=1e-3)

    print("KERNEL_OK")
</pallas_src>

<mosaic_0001>
module attributes {stable_mosaic.version = 11 : i64} {
  func.func @_onset_fused_kernel(%arg0: i32, %arg1: memref<4x80x15xf32, #tpu.memory_space<vmem>>, %arg2: memref<128x128xf32, #tpu.memory_space<vmem>>, %arg3: memref<1x128xf32, #tpu.memory_space<vmem>>, %arg4: memref<384x256xf32, #tpu.memory_space<vmem>>, %arg5: memref<1x256xf32, #tpu.memory_space<vmem>>, %arg6: memref<8x256x256xf32, #tpu.memory_space<vmem>>, %arg7: memref<1x256xf32, #tpu.memory_space<vmem>>, %arg8: memref<256x128xf32, #tpu.memory_space<vmem>>, %arg9: memref<1x128xf32, #tpu.memory_space<vmem>>, %arg10: memref<4x1x128xf32, #tpu.memory_space<vmem>>) attributes {dimension_semantics = [#tpu.dimension_semantics<parallel>], iteration_bounds = array<i64: 2>, scalar_prefetch = 0 : i64, scratch_operands = 0 : i64, tpu.core_type = #tpu.core_type<tc>, window_params = [{transform_indices = @transform_0, window_bounds = array<i64: 4, 80, 15>}, {pipeline_mode = #tpu.pipeline_mode<synchronous>, transform_indices = @transform_1, window_bounds = array<i64: 128, 128>}, {pipeline_mode = #tpu.pipeline_mode<synchronous>, transform_indices = @transform_2, window_bounds = array<i64: 1, 128>}, {pipeline_mode = #tpu.pipeline_mode<synchronous>, transform_indices = @transform_3, window_bounds = array<i64: 384, 256>}, {pipeline_mode = #tpu.pipeline_mode<synchronous>, transform_indices = @transform_4, window_bounds = array<i64: 1, 256>}, {pipeline_mode = #tpu.pipeline_mode<synchronous>, transform_indices = @transform_5, window_bounds = array<i64: 8, 256, 256>}, {pipeline_mode = #tpu.pipeline_mode<synchronous>, transform_indices = @transform_6, window_bounds = array<i64: 1, 256>}, {pipeline_mode = #tpu.pipeline_mode<synchronous>, transform_indices = @transform_7, window_bounds = array<i64: 256, 128>}, {pipeline_mode = #tpu.pipeline_mode<synchronous>, transform_indices = @transform_8, window_bounds = array<i64: 1, 128>}, {transform_indices = @transform_9, window_bounds = array<i64: 4, 1, 128>}]} {
    %c0 = arith.constant 0 : index
    %c0_0 = arith.constant 0 : index
    %c0_1 = arith.constant 0 : index
    %0 = vector.load %arg1[%c0, %c0_0, %c0_1] : memref<4x80x15xf32, #tpu.memory_space<vmem>>, vector<4x80x15xf32>
    %1 = vector.extract_strided_slice %0 {offsets = [0, 0, 0], sizes = [4, 78, 15], strides = [1, 1, 1]} : vector<4x80x15xf32> to vector<4x78x15xf32>
    %2 = vector.extract_strided_slice %0 {offsets = [0, 1, 0], sizes = [4, 78, 15], strides = [1, 1, 1]} : vector<4x80x15xf32> to vector<4x78x15xf32>
    %3 = vector.extract_strided_slice %0 {offsets = [0, 2, 0], sizes = [4, 78, 15], strides = [1, 1, 1]} : vector<4x80x15xf32> to vector<4x78x15xf32>
    %cst = arith.constant 0.000000e+00 : f32
    %4 = vector.broadcast %cst : f32 to vector<4x78x83xf32>
    %5 = tpu.concatenate %1, %2, %3, %4 in 2 : vector<4x78x15xf32>, vector<4x78x15xf32>, vector<4x78x15xf32>, vector<4x78x83xf32> -> vector<4x78x128xf32>
    %6 = vector.shape_cast %5 : vector<4x78x128xf32> to vector<312x128xf32>
    %c0_2 = arith.constant 0 : index
    %c0_3 = arith.constant 0 : index
    %7 = vector.load %arg2[%c0_2, %c0_3] : memref<128x128xf32, #tpu.memory_space<vmem>>, vector<128x128xf32>
    %cst_4 = arith.constant dense<0.000000e+00> : vector<312x128xf32>
    %8 = tpu.matmul %6, %7, %cst_4 {dimension_numbers = #tpu.dot_dimension_numbers<[1], [0], [0], [1], [0, 0, 1, 1], [], []>} : vector<312x128xf32>, vector<128x128xf32>, vector<312x128xf32> -> vector<312x128xf32>
    %c0_5 = arith.constant 0 : index
    %c0_6 = arith.constant 0 : index
    %9 = vector.load %arg3[%c0_5, %c0_6] : memref<1x128xf32, #tpu.memory_space<vmem>>, vector<1x128xf32>
    %10 = vector.broadcast %9 : vector<1x128xf32> to vector<312x128xf32>
    %11 = arith.addf %8, %10 : vector<312x128xf32>
    %12 = vector.shape_cast %11 : vector<312x128xf32> to vector<4x26x3x128xf32>
    %cst_7 = arith.constant dense<0xFF800000> : vector<4x26x128xf32>
    %13 = vector.multi_reduction <maximumf>, %12, %cst_7 [2] : vector<4x26x3x128xf32> to vector<4x26x128xf32>
    %14 = math.tanh %13 : vector<4x26x128xf32>
    %15 = vector.extract_strided_slice %14 {offsets = [0, 0, 0], sizes = [4, 24, 128], strides = [1, 1, 1]} : vector<4x26x128xf32> to vector<4x24x128xf32>
    %16 = vector.extract_strided_slice %14 {offsets = [0, 1, 0], sizes = [4, 24, 128], strides = [1, 1, 1]} : vector<4x26x128xf32> to vector<4x24x128xf32>
    %17 = vector.extract_strided_slice %14 {offsets = [0, 2, 0], sizes = [4, 24, 128], strides = [1, 1, 1]} : vector<4x26x128xf32> to vector<4x24x128xf32>
    %18 = tpu.concatenate %15, %16, %17 in 2 : vector<4x24x128xf32>, vector<4x24x128xf32>, vector<4x24x128xf32> -> vector<4x24x384xf32>
    %19 = vector.shape_cast %18 : vector<4x24x384xf32> to vector<96x384xf32>
    %c0_8 = arith.constant 0 : index
    %c0_9 = arith.constant 0 : index
    %20 = vector.load %arg4[%c0_8, %c0_9] : memref<384x256xf32, #tpu.memory_space<vmem>>, vector<384x256xf32>
    %cst_10 = arith.constant dense<0.000000e+00> : vector<96x256xf32>
    %21 = tpu.matmul %19, %20, %cst_10 {dimension_numbers = #tpu.dot_dimension_numbers<[1], [0], [0], [1], [0, 0, 1, 1], [], []>} : vector<96x384xf32>, vector<384x256xf32>, vector<96x256xf32> -> vector<96x256xf32>
    %c0_11 = arith.constant 0 : index
    %c0_12 = arith.constant 0 : index
    %22 = vector.load %arg5[%c0_11, %c0_12] : memref<1x256xf32, #tpu.memory_space<vmem>>, vector<1x256xf32>
    %23 = vector.broadcast %22 : vector<1x256xf32> to vector<96x256xf32>
    %24 = arith.addf %21, %23 : vector<96x256xf32>
    %25 = vector.shape_cast %24 : vector<96x256xf32> to vector<4x8x3x256xf32>
    %cst_13 = arith.constant dense<0xFF800000> : vector<4x8x256xf32>
    %26 = vector.multi_reduction <maximumf>, %25, %cst_13 [2] : vector<4x8x3x256xf32> to vector<4x8x256xf32>
    %27 = math.tanh %26 : vector<4x8x256xf32>
    %c0_14 = arith.constant 0 : index
    %c0_15 = arith.constant 0 : index
    %28 = vector.load %arg7[%c0_14, %c0_15] : memref<1x256xf32, #tpu.memory_space<vmem>>, vector<1x256xf32>
    %29 = vector.extract_strided_slice %27 {offsets = [0, 0, 0], sizes = [4, 1, 256], strides = [1, 1, 1]} : vector<4x8x256xf32> to vector<4x1x256xf32>
    %30 = vector.shape_cast %29 : vector<4x1x256xf32> to vector<4x256xf32>
    %c0_16 = arith.constant 0 : index
    %c0_17 = arith.constant 0 : index
    %c0_18 = arith.constant 0 : index
    %31 = vector.load %arg6[%c0_16, %c0_17, %c0_18] : memref<8x256x256xf32, #tpu.memory_space<vmem>>, vector<1x256x256xf32>
    %32 = vector.shape_cast %31 : vector<1x256x256xf32> to vector<256x256xf32>
    %cst_19 = arith.constant dense<0.000000e+00> : vector<4x256xf32>
    %33 = tpu.matmul %30, %32, %cst_19 {dimension_numbers = #tpu.dot_dimension_numbers<[1], [0], [0], [1], [0, 0, 1, 1], [], []>} : vector<4x256xf32>, vector<256x256xf32>, vector<4x256xf32> -> vector<4x256xf32>
    %34 = vector.broadcast %28 : vector<1x256xf32> to vector<4x256xf32>
    %35 = arith.addf %34, %33 : vector<4x256xf32>
    %36 = vector.extract_strided_slice %27 {offsets = [0, 1, 0], sizes = [4, 1, 256], strides = [1, 1, 1]} : vector<4x8x256xf32> to vector<4x1x256xf32>
    %37 = vector.shape_cast %36 : vector<4x1x256xf32> to vector<4x256xf32>
    %c1 = arith.constant 1 : index
    %c0_20 = arith.constant 0 : index
    %c0_21 = arith.constant 0 : index
    %38 = vector.load %arg6[%c1, %c0_20, %c0_21] : memref<8x256x256xf32, #tpu.memory_space<vmem>>, vector<1x256x256xf32>
    %39 = vector.shape_cast %38 : vector<1x256x256xf32> to vector<256x256xf32>
    %cst_22 = arith.constant dense<0.000000e+00> : vector<4x256xf32>
    %40 = tpu.matmul %37, %39, %cst_22 {dimension_numbers = #tpu.dot_dimension_numbers<[1], [0], [0], [1], [0, 0, 1, 1], [], []>} : vector<4x256xf32>, vector<256x256xf32>, vector<4x256xf32> -> vector<4x256xf32>
    %41 = arith.addf %35, %40 : vector<4x256xf32>
    %42 = vector.extract_strided_slice %27 {offsets = [0, 2, 0], sizes = [4, 1, 256], strides = [1, 1, 1]} : vector<4x8x256xf32> to vector<4x1x256xf32>
    %43 = vector.shape_cast %42 : vector<4x1x256xf32> to vector<4x256xf32>
    %c2 = arith.constant 2 : index
    %c0_23 = arith.constant 0 : index
    %c0_24 = arith.constant 0 : index
    %44 = vector.load %arg6[%c2, %c0_23, %c0_24] : memref<8x256x256xf32, #tpu.memory_space<vmem>>, vector<1x256x256xf32>
    %45 = vector.shape_cast %44 : vector<1x256x256xf32> to vector<256x256xf32>
    %cst_25 = arith.constant dense<0.000000e+00> : vector<4x256xf32>
    %46 = tpu.matmul %43, %45, %cst_25 {dimension_numbers = #tpu.dot_dimension_numbers<[1], [0], [0], [1], [0, 0, 1, 1], [], []>} : vector<4x256xf32>, vector<256x256xf32>, vector<4x256xf32> -> vector<4x256xf32>
    %47 = arith.addf %41, %46 : vector<4x256xf32>
    %48 = vector.extract_strided_slice %27 {offsets = [0, 3, 0], sizes = [4, 1, 256], strides = [1, 1, 1]} : vector<4x8x256xf32> to vector<4x1x256xf32>
    %49 = vector.shape_cast %48 : vector<4x1x256xf32> to vector<4x256xf32>
    %c3 = arith.constant 3 : index
    %c0_26 = arith.constant 0 : index
    %c0_27 = arith.constant 0 : index
    %50 = vector.load %arg6[%c3, %c0_26, %c0_27] : memref<8x256x256xf32, #tpu.memory_space<vmem>>, vector<1x256x256xf32>
    %51 = vector.shape_cast %50 : vector<1x256x256xf32> to vector<256x256xf32>
    %cst_28 = arith.constant dense<0.000000e+00> : vector<4x256xf32>
    %52 = tpu.matmul %49, %51, %cst_28 {dimension_numbers = #tpu.dot_dimension_numbers<[1], [0], [0], [1], [0, 0, 1, 1], [], []>} : vector<4x256xf32>, vector<256x256xf32>, vector<4x256xf32> -> vector<4x256xf32>
    %53 = arith.addf %47, %52 : vector<4x256xf32>
    %54 = vector.extract_strided_slice %27 {offsets = [0, 4, 0], sizes = [4, 1, 256], strides = [1, 1, 1]} : vector<4x8x256xf32> to vector<4x1x256xf32>
    %55 = vector.shape_cast %54 : vector<4x1x256xf32> to vector<4x256xf32>
    %c4 = arith.constant 4 : index
    %c0_29 = arith.constant 0 : index
    %c0_30 = arith.constant 0 : index
    %56 = vector.load %arg6[%c4, %c0_29, %c0_30] : memref<8x256x256xf32, #tpu.memory_space<vmem>>, vector<1x256x256xf32>
    %57 = vector.shape_cast %56 : vector<1x256x256xf32> to vector<256x256xf32>
    %cst_31 = arith.constant dense<0.000000e+00> : vector<4x256xf32>
    %58 = tpu.matmul %55, %57, %cst_31 {dimension_numbers = #tpu.dot_dimension_numbers<[1], [0], [0], [1], [0, 0, 1, 1], [], []>} : vector<4x256xf32>, vector<256x256xf32>, vector<4x256xf32> -> vector<4x256xf32>
    %59 = arith.addf %53, %58 : vector<4x256xf32>
    %60 = vector.extract_strided_slice %27 {offsets = [0, 5, 0], sizes = [4, 1, 256], strides = [1, 1, 1]} : vector<4x8x256xf32> to vector<4x1x256xf32>
    %61 = vector.shape_cast %60 : vector<4x1x256xf32> to vector<4x256xf32>
    %c5 = arith.constant 5 : index
    %c0_32 = arith.constant 0 : index
    %c0_33 = arith.constant 0 : index
    %62 = vector.load %arg6[%c5, %c0_32, %c0_33] : memref<8x256x256xf32, #tpu.memory_space<vmem>>, vector<1x256x256xf32>
    %63 = vector.shape_cast %62 : vector<1x256x256xf32> to vector<256x256xf32>
    %cst_34 = arith.constant dense<0.000000e+00> : vector<4x256xf32>
    %64 = tpu.matmul %61, %63, %cst_34 {dimension_numbers = #tpu.dot_dimension_numbers<[1], [0], [0], [1], [0, 0, 1, 1], [], []>} : vector<4x256xf32>, vector<256x256xf32>, vector<4x256xf32> -> vector<4x256xf32>
    %65 = arith.addf %59, %64 : vector<4x256xf32>
    %66 = vector.extract_strided_slice %27 {offsets = [0, 6, 0], sizes = [4, 1, 256], strides = [1, 1, 1]} : vector<4x8x256xf32> to vector<4x1x256xf32>
    %67 = vector.shape_cast %66 : vector<4x1x256xf32> to vector<4x256xf32>
    %c6 = arith.constant 6 : index
    %c0_35 = arith.constant 0 : index
    %c0_36 = arith.constant 0 : index
    %68 = vector.load %arg6[%c6, %c0_35, %c0_36] : memref<8x256x256xf32, #tpu.memory_space<vmem>>, vector<1x256x256xf32>
    %69 = vector.shape_cast %68 : vector<1x256x256xf32> to vector<256x256xf32>
    %cst_37 = arith.constant dense<0.000000e+00> : vector<4x256xf32>
    %70 = tpu.matmul %67, %69, %cst_37 {dimension_numbers = #tpu.dot_dimension_numbers<[1], [0], [0], [1], [0, 0, 1, 1], [], []>} : vector<4x256xf32>, vector<256x256xf32>, vector<4x256xf32> -> vector<4x256xf32>
    %71 = arith.addf %65, %70 : vector<4x256xf32>
    %72 = vector.extract_strided_slice %27 {offsets = [0, 7, 0], sizes = [4, 1, 256], strides = [1, 1, 1]} : vector<4x8x256xf32> to vector<4x1x256xf32>
    %73 = vector.shape_cast %72 : vector<4x1x256xf32> to vector<4x256xf32>
    %c7 = arith.constant 7 : index
    %c0_38 = arith.constant 0 : index
    %c0_39 = arith.constant 0 : index
    %74 = vector.load %arg6[%c7, %c0_38, %c0_39] : memref<8x256x256xf32, #tpu.memory_space<vmem>>, vector<1x256x256xf32>
    %75 = vector.shape_cast %74 : vector<1x256x256xf32> to vector<256x256xf32>
    %cst_40 = arith.constant dense<0.000000e+00> : vector<4x256xf32>
    %76 = tpu.matmul %73, %75, %cst_40 {dimension_numbers = #tpu.dot_dimension_numbers<[1], [0], [0], [1], [0, 0, 1, 1], [], []>} : vector<4x256xf32>, vector<256x256xf32>, vector<4x256xf32> -> vector<4x256xf32>
    %77 = arith.addf %71, %76 : vector<4x256xf32>
    %78 = arith.negf %77 : vector<4x256xf32>
    %79 = math.exp %78 : vector<4x256xf32>
    %cst_41 = arith.constant 1.000000e+00 : f32
    %80 = vector.broadcast %cst_41 : f32 to vector<4x256xf32>
    %81 = arith.addf %80, %79 : vector<4x256xf32>
    %82 = arith.divf %80, %81 : vector<4x256xf32>
    %c0_42 = arith.constant 0 : index
    %c0_43 = arith.constant 0 : index
    %83 = vector.load %arg8[%c0_42, %c0_43] : memref<256x128xf32, #tpu.memory_space<vmem>>, vector<256x128xf32>
    %cst_44 = arith.constant dense<0.000000e+00> : vector<4x128xf32>
    %84 = tpu.matmul %82, %83, %cst_44 {dimension_numbers = #tpu.dot_dimension_numbers<[1], [0], [0], [1], [0, 0, 1, 1], [], []>} : vector<4x256xf32>, vector<256x128xf32>, vector<4x128xf32> -> vector<4x128xf32>
    %c0_45 = arith.constant 0 : index
    %c0_46 = arith.constant 0 : index
    %85 = vector.load %arg9[%c0_45, %c0_46] : memref<1x128xf32, #tpu.memory_space<vmem>>, vector<1x128xf32>
    %86 = vector.broadcast %85 : vector<1x128xf32> to vector<4x128xf32>
    %87 = arith.addf %84, %86 : vector<4x128xf32>
    %88 = arith.negf %87 : vector<4x128xf32>
    %89 = math.exp %88 : vector<4x128xf32>
    %cst_47 = arith.constant 1.000000e+00 : f32
    %90 = vector.broadcast %cst_47 : f32 to vector<4x128xf32>
    %91 = arith.addf %90, %89 : vector<4x128xf32>
    %92 = arith.divf %90, %91 : vector<4x128xf32>
    %93 = vector.shape_cast %92 : vector<4x128xf32> to vector<4x1x128xf32>
    %c0_48 = arith.constant 0 : index
    %c0_49 = arith.constant 0 : index
    %c0_50 = arith.constant 0 : index
    %94 = vector.load %arg10[%c0_48, %c0_49, %c0_50] : memref<4x1x128xf32, #tpu.memory_space<vmem>>, vector<4x1x128xf32>
    tpu.vector_store %arg10[%c0_48, %c0_49, %c0_50], %93 {strides = array<i32>} : memref<4x1x128xf32, #tpu.memory_space<vmem>>, vector<4x1x128xf32>,
    return
  }
  func.func @transform_0(%arg0: i32) -> (i32, i32, i32) {
    %c0_i32 = arith.constant 0 : i32
    %c0_i32_0 = arith.constant 0 : i32
    %c0_i32_1 = arith.constant 0 : i32
    return %arg0, %c0_i32, %c0_i32_0 : i32, i32, i32
  }
  func.func @transform_1(%arg0: i32) -> (i32, i32) {
    %c0_i32 = arith.constant 0 : i32
    %c0_i32_0 = arith.constant 0 : i32
    %c0_i32_1 = arith.constant 0 : i32
    return %c0_i32, %c0_i32_0 : i32, i32
  }
  func.func @transform_2(%arg0: i32) -> (i32, i32) {
    %c0_i32 = arith.constant 0 : i32
    %c0_i32_0 = arith.constant 0 : i32
    %c0_i32_1 = arith.constant 0 : i32
    return %c0_i32, %c0_i32_0 : i32, i32
  }
  func.func @transform_3(%arg0: i32) -> (i32, i32) {
    %c0_i32 = arith.constant 0 : i32
    %c0_i32_0 = arith.constant 0 : i32
    %c0_i32_1 = arith.constant 0 : i32
    return %c0_i32, %c0_i32_0 : i32, i32
  }
  func.func @transform_4(%arg0: i32) -> (i32, i32) {
    %c0_i32 = arith.constant 0 : i32
    %c0_i32_0 = arith.constant 0 : i32
    %c0_i32_1 = arith.constant 0 : i32
    return %c0_i32, %c0_i32_0 : i32, i32
  }
  func.func @transform_5(%arg0: i32) -> (i32, i32, i32) {
    %c0_i32 = arith.constant 0 : i32
    %c0_i32_0 = arith.constant 0 : i32
    %c0_i32_1 = arith.constant 0 : i32
    %c0_i32_2 = arith.constant 0 : i32
    return %c0_i32, %c0_i32_0, %c0_i32_1 : i32, i32, i32
  }
  func.func @transform_6(%arg0: i32) -> (i32, i32) {
    %c0_i32 = arith.constant 0 : i32
    %c0_i32_0 = arith.constant 0 : i32
    %c0_i32_1 = arith.constant 0 : i32
    return %c0_i32, %c0_i32_0 : i32, i32
  }
  func.func @transform_7(%arg0: i32) -> (i32, i32) {
    %c0_i32 = arith.constant 0 : i32
    %c0_i32_0 = arith.constant 0 : i32
    %c0_i32_1 = arith.constant 0 : i32
    return %c0_i32, %c0_i32_0 : i32, i32
  }
  func.func @transform_8(%arg0: i32) -> (i32, i32) {
    %c0_i32 = arith.constant 0 : i32
    %c0_i32_0 = arith.constant 0 : i32
    %c0_i32_1 = arith.constant 0 : i32
    return %c0_i32, %c0_i32_0 : i32, i32
  }
  func.func @transform_9(%arg0: i32) -> (i32, i32, i32) {
    %c0_i32 = arith.constant 0 : i32
    %c0_i32_0 = arith.constant 0 : i32
    %c0_i32_1 = arith.constant 0 : i32
    return %arg0, %c0_i32, %c0_i32_0 : i32, i32, i32
  }
}

</mosaic_0001>

<llo_original>
// kernel: onset_cnn_forward.1
$region0: #{onset_cnn_forward.1}
  #allocation0 [shape = 'u32[]', space=smem, size = 0x4, offset = 0x4, fixed_abs, tag = 'smem constant byte address 0x4 - core index']
  #allocation1 [shape = 'u32[144,128]{1,0:T(1,128)}', space=vmem, size = 0x12000, scoped, tag = 'internal scratch']
  %s0 = inlined_call_operand.vmem [shape: f32[8,80,15], index: 0, kind: input, shape index: {}]
  %s1 = inlined_call_operand.hbm [shape: f32[128,128], index: 1, kind: input, shape index: {}]
  %s2 = inlined_call_operand.hbm [shape: f32[1,128], index: 2, kind: input, shape index: {}]
  %s3 = inlined_call_operand.hbm [shape: f32[384,256], index: 3, kind: input, shape index: {}]
  %s4 = inlined_call_operand.hbm [shape: f32[1,256], index: 4, kind: input, shape index: {}]
  %s5 = inlined_call_operand.hbm [shape: f32[8,256,256], index: 5, kind: input, shape index: {}]
  %s6 = inlined_call_operand.hbm [shape: f32[1,256], index: 6, kind: input, shape index: {}]
  %s7 = inlined_call_operand.hbm [shape: f32[256,128], index: 7, kind: input, shape index: {}]
  %s8 = inlined_call_operand.hbm [shape: f32[1,128], index: 8, kind: input, shape index: {}]
  %s9 = inlined_call_operand.vmem [shape: f32[8,1,128], index: 9, kind: output, shape index: {}]
  %s10 = sld [smem:[#allocation0]]
  $region101: #{onset_cnn_forward.1} parent=0
    _
  %s12 = ssub.s32 1, %s10
  %s13 = scalar_select 0, %s12, %s10
  $region1: #{onset_cnn_forward.1} parent=0
    #allocation2 [shape = 'u8[65536]{0}', space=vmem, size = 0x10000, scoped, tag = 'input window, operand 1, single buffered']
    #allocation3 [shape = 's32[2]{0}', space=sflag, size = 0x8, scoped, tag = 'scoped memory for onset_cnn_forward.1']
    #allocation4 [shape = 'u8[512]{0}', space=vmem, size = 0x400, scoped, tag = 'input window, operand 2, single buffered']
    #allocation5 [shape = 's32[1]{0}', space=sflag, size = 0x4, scoped, tag = 'scoped memory for onset_cnn_forward.1']
    #allocation6 [shape = 'u8[393216]{0}', space=vmem, size = 0x60000, scoped, tag = 'input window, operand 3, single buffered']
    #allocation7 [shape = 'u8[1024]{0}', space=vmem, size = 0x400, scoped, tag = 'input window, operand 4, single buffered']
    #allocation8 [shape = 's32[1]{0}', space=sflag, size = 0x4, scoped, tag = 'scoped memory for onset_cnn_forward.1']
    #allocation9 [shape = 'u8[2097152]{0}', space=vmem, size = 0x200000, scoped, tag = 'input window, operand 5, single buffered']
    #allocation10 [shape = 'u8[1024]{0}', space=vmem, size = 0x400, scoped, tag = 'input window, operand 6, single buffered']
    #allocation11 [shape = 's32[1]{0}', space=sflag, size = 0x4, scoped, tag = 'scoped memory for onset_cnn_forward.1']
    #allocation12 [shape = 'u8[131072]{0}', space=vmem, size = 0x20000, scoped, tag = 'input window, operand 7, single buffered']
    #allocation13 [shape = 'u8[512]{0}', space=vmem, size = 0x400, scoped, tag = 'input window, operand 8, single buffered']
    #allocation14 [shape = 's32[1]{0}', space=sflag, size = 0x4, scoped, tag = 'scoped memory for onset_cnn_forward.1']
    %14 = vsyncpa [#allocation3], 0
    %15 = vsyncpa [#allocation5], 0
    %16 = vsyncpa [#allocation8], 0
    %17 = vsyncpa [#allocation11], 0
    %18 = vsyncpa [#allocation14], 0
    loop: start=0, step=1, limit=4
    $region2: #{onset_cnn_forward.1} parent=1 // loop_pre_header
      _
    $region3: #{onset_cnn_forward.1} parent=1 // loop_header
      %s20 = sphi 0, %s24
      %p21 = scmp.ge.s32.totalorder %s20, 4
      %s30 = sphi 0, %s32
      %s33 = sphi 0, %s30
      %s34 = sphi 0, %s33
      %s50 = sphi 0, %s34
      %s54 = sphi 0, %s54
      %s56 = sphi 0, %s54
      %s57 = sphi 0, %s56
      %s71 = sphi 0, %s57
      %s75 = sphi 0, %s75
      %s77 = sphi 0, %s75
      %s78 = sphi 0, %s77
      %s92 = sphi 0, %s78
      %s96 = sphi 0, %s96
      %s98 = sphi 0, %s96
      %s99 = sphi 0, %s98
      %s113 = sphi 0, %s99
      %s117 = sphi 0, %s117
      %s119 = sphi 0, %s117
      %s120 = sphi 0, %s119
      %s134 = sphi 0, %s120
      %s138 = sphi 0, %s138
      %s140 = sphi 0, %s138
      %s141 = sphi 0, %s140
      %s155 = sphi 0, %s141
      %s159 = sphi 0, %s159
      %s161 = sphi 0, %s159
      %s162 = sphi 0, %s161
      %s176 = sphi 0, %s162
      %s180 = sphi 0, %s180
      %s182 = sphi 0, %s180
      %s183 = sphi 0, %s182
      %s197 = sphi 0, %s183
      %s201 = sphi 0, %s201
      %s203 = sphi 0, %s201
      %s204 = sphi 0, %s203
      %s218 = sphi 0, %s204
      %s224 = sphi 0, %s226
      %s227 = sphi 0, %s224
      %s228 = sphi 0, %s227
      %s244 = sphi 0, %s228
    $region4: #{onset_cnn_forward.1} parent=1 // loop_header_branch
      %23 = sbr.rel (%p21) target = $region8
    $region5: #{onset_cnn_forward.1} parent=1 // loop_body
      %s25 = ssub.s32 %s20, 1
      %s26 = ssub.s32 %s20, 2
      %s27 = sadd.s32 %s20, 1
      %s28 = ssub.s32 %s20, %s27
      %p29 = scmp.eq.s32.totalorder %s28, 0
      %s31 = sadd.s32 %s30, 1
      %s32 = scalar_select %p29, %s30, %s31
      %p35 = pneg %p29
      %p36 = scmp.eq.s32.totalorder %s20, 1
      %p37 = por %p35, %p36
      %p38 = scmp.ne.s32.totalorder %s30, %s33
      %p39 = scmp.eq.s32.totalorder %s20, 0
      %p40 = por %p38, %p39
      %p41 = scmp.ne.s32.totalorder %s30, %s33
      %p42 = scmp.eq.s32.totalorder %s25, 1
      %p43 = por %p41, %p42
      %p44 = scmp.ne.s32.totalorder %s33, %s34
      %p45 = scmp.eq.s32.totalorder %s25, 0
      %p46 = por %p44, %p45
      %p47 = scmp.ne.s32.totalorder %s33, %s34
      %p48 = scmp.eq.s32.totalorder %s26, 1
      %p49 = por %p47, %p48
      %p51 = scmp.ne.s32.totalorder %s34, %s50
      %p52 = scmp.eq.s32.totalorder %s26, 0
      %p53 = por %p51, %p52
      %s55 = sadd.s32 %s54, 1
      %p58 = scmp.eq.s32.totalorder %s20, 1
      %p59 = scmp.ne.s32.totalorder %s54, %s56
      %p60 = scmp.eq.s32.totalorder %s20, 0
      %p61 = por %p59, %p60
      %p62 = scmp.ne.s32.totalorder %s54, %s56
      %p63 = scmp.eq.s32.totalorder %s25, 1
      %p64 = por %p62, %p63
      %p65 = scmp.ne.s32.totalorder %s56, %s57
      %p66 = scmp.eq.s32.totalorder %s25, 0
      %p67 = por %p65, %p66
      %p68 = scmp.ne.s32.totalorder %s56, %s57
      %p69 = scmp.eq.s32.totalorder %s26, 1
      %p70 = por %p68, %p69
      %p72 = scmp.ne.s32.totalorder %s57, %s71
      %p73 = scmp.eq.s32.totalorder %s26, 0
      %p74 = por %p72, %p73
      %s76 = sadd.s32 %s75, 1
      %p79 = scmp.eq.s32.totalorder %s20, 1
      %p80 = scmp.ne.s32.totalorder %s75, %s77
      %p81 = scmp.eq.s32.totalorder %s20, 0
      %p82 = por %p80, %p81
      %p83 = scmp.ne.s32.totalorder %s75, %s77
      %p84 = scmp.eq.s32.totalorder %s25, 1
      %p85 = por %p83, %p84
      %p86 = scmp.ne.s32.totalorder %s77, %s78
      %p87 = scmp.eq.s32.totalorder %s25, 0
      %p88 = por %p86, %p87
      %p89 = scmp.ne.s32.totalorder %s77, %s78
      %p90 = scmp.eq.s32.totalorder %s26, 1
      %p91 = por %p89, %p90
      %p93 = scmp.ne.s32.totalorder %s78, %s92
      %p94 = scmp.eq.s32.totalorder %s26, 0
      %p95 = por %p93, %p94
      %s97 = sadd.s32 %s96, 1
      %p100 = scmp.eq.s32.totalorder %s20, 1
      %p101 = scmp.ne.s32.totalorder %s96, %s98
      %p102 = scmp.eq.s32.totalorder %s20, 0
      %p103 = por %p101, %p102
      %p104 = scmp.ne.s32.totalorder %s96, %s98
      %p105 = scmp.eq.s32.totalorder %s25, 1
      %p106 = por %p104, %p105
      %p107 = scmp.ne.s32.totalorder %s98, %s99
      %p108 = scmp.eq.s32.totalorder %s25, 0
      %p109 = por %p107, %p108
      %p110 = scmp.ne.s32.totalorder %s98, %s99
      %p111 = scmp.eq.s32.totalorder %s26, 1
      %p112 = por %p110, %p111
      %p114 = scmp.ne.s32.totalorder %s99, %s113
      %p115 = scmp.eq.s32.totalorder %s26, 0
      %p116 = por %p114, %p115
      %s118 = sadd.s32 %s117, 1
      %p121 = scmp.eq.s32.totalorder %s20, 1
      %p122 = scmp.ne.s32.totalorder %s117, %s119
      %p123 = scmp.eq.s32.totalorder %s20, 0
      %p124 = por %p122, %p123
      %p125 = scmp.ne.s32.totalorder %s117, %s119
      %p126 = scmp.eq.s32.totalorder %s25, 1
      %p127 = por %p125, %p126
      %p128 = scmp.ne.s32.totalorder %s119, %s120
      %p129 = scmp.eq.s32.totalorder %s25, 0
      %p130 = por %p128, %p129
      %p131 = scmp.ne.s32.totalorder %s119, %s120
      %p132 = scmp.eq.s32.totalorder %s26, 1
      %p133 = por %p131, %p132
      %p135 = scmp.ne.s32.totalorder %s120, %s134
      %p136 = scmp.eq.s32.totalorder %s26, 0
      %p137 = por %p135, %p136
      %s139 = sadd.s32 %s138, 1
      %p142 = scmp.eq.s32.totalorder %s20, 1
      %p143 = scmp.ne.s32.totalorder %s138, %s140
      %p144 = scmp.eq.s32.totalorder %s20, 0
      %p145 = por %p143, %p144
      %p146 = scmp.ne.s32.totalorder %s138, %s140
      %p147 = scmp.eq.s32.totalorder %s25, 1
      %p148 = por %p146, %p147
      %p149 = scmp.ne.s32.totalorder %s140, %s141
      %p150 = scmp.eq.s32.totalorder %s25, 0
      %p151 = por %p149, %p150
      %p152 = scmp.ne.s32.totalorder %s140, %s141
      %p153 = scmp.eq.s32.totalorder %s26, 1
      %p154 = por %p152, %p153
      %p156 = scmp.ne.s32.totalorder %s141, %s155
      %p157 = scmp.eq.s32.totalorder %s26, 0
      %p158 = por %p156, %p157
      %s160 = sadd.s32 %s159, 1
      %p163 = scmp.eq.s32.totalorder %s20, 1
      %p164 = scmp.ne.s32.totalorder %s159, %s161
      %p165 = scmp.eq.s32.totalorder %s20, 0
      %p166 = por %p164, %p165
      %p167 = scmp.ne.s32.totalorder %s159, %s161
      %p168 = scmp.eq.s32.totalorder %s25, 1
      %p169 = por %p167, %p168
      %p170 = scmp.ne.s32.totalorder %s161, %s162
      %p171 = scmp.eq.s32.totalorder %s25, 0
      %p172 = por %p170, %p171
      %p173 = scmp.ne.s32.totalorder %s161, %s162
      %p174 = scmp.eq.s32.totalorder %s26, 1
      %p175 = por %p173, %p174
      %p177 = scmp.ne.s32.totalorder %s162, %s176
      %p178 = scmp.eq.s32.totalorder %s26, 0
      %p179 = por %p177, %p178
      %s181 = sadd.s32 %s180, 1
      %p184 = scmp.eq.s32.totalorder %s20, 1
      %p185 = scmp.ne.s32.totalorder %s180, %s182
      %p186 = scmp.eq.s32.totalorder %s20, 0
      %p187 = por %p185, %p186
      %p188 = scmp.ne.s32.totalorder %s180, %s182
      %p189 = scmp.eq.s32.totalorder %s25, 1
      %p190 = por %p188, %p189
      %p191 = scmp.ne.s32.totalorder %s182, %s183
      %p192 = scmp.eq.s32.totalorder %s25, 0
      %p193 = por %p191, %p192
      %p194 = scmp.ne.s32.totalorder %s182, %s183
      %p195 = scmp.eq.s32.totalorder %s26, 1
      %p196 = por %p194, %p195
      %p198 = scmp.ne.s32.totalorder %s183, %s197
      %p199 = scmp.eq.s32.totalorder %s26, 0
      %p200 = por %p198, %p199
      %s202 = sadd.s32 %s201, 1
      %p205 = scmp.eq.s32.totalorder %s20, 1
      %p206 = scmp.ne.s32.totalorder %s201, %s203
      %p207 = scmp.eq.s32.totalorder %s20, 0
      %p208 = por %p206, %p207
      %p209 = scmp.ne.s32.totalorder %s201, %s203
      %p210 = scmp.eq.s32.totalorder %s25, 1
      %p211 = por %p209, %p210
      %p212 = scmp.ne.s32.totalorder %s203, %s204
      %p213 = scmp.eq.s32.totalorder %s25, 0
      %p214 = por %p212, %p213
      %p215 = scmp.ne.s32.totalorder %s203, %s204
      %p216 = scmp.eq.s32.totalorder %s26, 1
      %p217 = por %p215, %p216
      %p219 = scmp.ne.s32.totalorder %s204, %s218
      %p220 = scmp.eq.s32.totalorder %s26, 0
      %p221 = por %p219, %p220
      %s222 = ssub.s32 %s20, %s27
      %p223 = scmp.eq.s32.totalorder %s222, 0
      %s225 = sadd.s32 %s224, 1
      %s226 = scalar_select %p223, %s224, %s225
      %p229 = pneg %p223
      %p230 = scmp.eq.s32.totalorder %s20, 1
      %p231 = por %p229, %p230
      %p232 = scmp.ne.s32.totalorder %s224, %s227
      %p233 = scmp.eq.s32.totalorder %s20, 0
      %p234 = por %p232, %p233
      %p235 = scmp.ne.s32.totalorder %s224, %s227
      %p236 = scmp.eq.s32.totalorder %s25, 1
      %p237 = por %p235, %p236
      %p238 = scmp.ne.s32.totalorder %s227, %s228
      %p239 = scmp.eq.s32.totalorder %s25, 0
      %p240 = por %p238, %p239
      %p241 = scmp.ne.s32.totalorder %s227, %s228
      %p242 = scmp.eq.s32.totalorder %s26, 1
      %p243 = por %p241, %p242
      %p245 = scmp.ne.s32.totalorder %s228, %s244
      %p246 = scmp.eq.s32.totalorder %s26, 0
      %p247 = por %p245, %p246
      %p248 = scmp.le.s32.totalorder 1, %s20
      %p249 = scmp.lt.s32.totalorder %s20, 3
      %p250 = pnand %p248, %p249
      %p251 = pneg %p250
      // Predicated region
      $region9: #{onset_cnn_forward.1} parent=5 // pred_check
        _
      $region10: #{onset_cnn_forward.1} parent=5 // pred_check_branch
        %253 = sbr.rel (%p250) target = $region12
      $region11: #{onset_cnn_forward.1} parent=5 // pred_region
        %s254 = ssub.s32 %s20, 1
        // Predicated region
        $region13: #{onset_cnn_forward.1} parent=11 // pred_check
          %p255 = pneg %p67
        $region14: #{onset_cnn_forward.1} parent=11 // pred_check_branch
          %257 = sbr.rel (%p255) target = $region16
        $region15: #{onset_cnn_forward.1} parent=11 // pred_region
          %s259 = ssub.s32 2048, 2048
          %260 = vsyncadd [#allocation3], %s259
          %s261 = sshll.u32 [#allocation2], 4
          %s262 = int_to_ptr.vmem [resolvable:$true] %s261
          %267 = dma.hbm_to_vmem [thread:$0]  %s1, 2048, %s262, [#allocation3], 128, 128, 8
        $region16: #{onset_cnn_forward.1} parent=11 // pred_fallthru
          _
        // Predicated region
        $region17: #{onset_cnn_forward.1} parent=11 // pred_check
          %p268 = pneg %p88
        $region18: #{onset_cnn_forward.1} parent=11 // pred_check_branch
          %270 = sbr.rel (%p268) target = $region20
        $region19: #{onset_cnn_forward.1} parent=11 // pred_region
          %s272 = ssub.s32 16, 16
          %273 = vsyncadd [#allocation5], %s272
          %s275 = sshll.u32 [#allocation4], 4
          %s276 = int_to_ptr.vmem [resolvable:$true] %s275
          %278 = dma.hbm_to_vmem [thread:$0]  %s2, 16, %s276, [#allocation5]
        $region20: #{onset_cnn_forward.1} parent=11 // pred_fallthru
          _
        // Predicated region
        $region21: #{onset_cnn_forward.1} parent=11 // pred_check
          %p279 = pneg %p109
        $region22: #{onset_cnn_forward.1} parent=11 // pred_check_branch
          %281 = sbr.rel (%p279) target = $region24
        $region23: #{onset_cnn_forward.1} parent=11 // pred_region
          %s283 = ssub.s32 12288, 12288
          %284 = vsyncadd [#allocation5], %s283
          %s285 = sshll.u32 [#allocation6], 4
          %s286 = int_to_ptr.vmem [resolvable:$true] %s285
          %291 = dma.hbm_to_vmem [thread:$0]  %s3, 12288, %s286, [#allocation5], 256, 256, 16
        $region24: #{onset_cnn_forward.1} parent=11 // pred_fallthru
          _
        // Predicated region
        $region25: #{onset_cnn_forward.1} parent=11 // pred_check
          %p292 = pneg %p130
        $region26: #{onset_cnn_forward.1} parent=11 // pred_check_branch
          %294 = sbr.rel (%p292) target = $region28
        $region27: #{onset_cnn_forward.1} parent=11 // pred_region
          %s296 = ssub.s32 32, 32
          %297 = vsyncadd [#allocation8], %s296
          %s299 = sshll.u32 [#allocation7], 4
          %s300 = int_to_ptr.vmem [resolvable:$true] %s299
          %302 = dma.hbm_to_vmem [thread:$0]  %s4, 32, %s300, [#allocation8]
        $region28: #{onset_cnn_forward.1} parent=11 // pred_fallthru
          _
        // Predicated region
        $region29: #{onset_cnn_forward.1} parent=11 // pred_check
          %p303 = pneg %p151
        $region30: #{onset_cnn_forward.1} parent=11 // pred_check_branch
          %305 = sbr.rel (%p303) target = $region32
        $region31: #{onset_cnn_forward.1} parent=11 // pred_region
          %s307 = ssub.s32 65536, 65536
          %308 = vsyncadd [#allocation8], %s307
          %s309 = sshll.u32 [#allocation9], 4
          %s310 = int_to_ptr.vmem [resolvable:$true] %s309
          %315 = dma.hbm_to_vmem [thread:$0]  %s5, 65536, %s310, [#allocation8], 256, 256, 16
        $region32: #{onset_cnn_forward.1} parent=11 // pred_fallthru
          _
        // Predicated region
        $region33: #{onset_cnn_forward.1} parent=11 // pred_check
          %p316 = pneg %p172
        $region34: #{onset_cnn_forward.1} parent=11 // pred_check_branch
          %318 = sbr.rel (%p316) target = $region36
        $region35: #{onset_cnn_forward.1} parent=11 // pred_region
          %s320 = ssub.s32 32, 32
          %321 = vsyncadd [#allocation11], %s320
          %s323 = sshll.u32 [#allocation10], 4
          %s324 = int_to_ptr.vmem [resolvable:$true] %s323
          %326 = dma.hbm_to_vmem [thread:$0]  %s6, 32, %s324, [#allocation11]
        $region36: #{onset_cnn_forward.1} parent=11 // pred_fallthru
          _
        // Predicated region
        $region37: #{onset_cnn_forward.1} parent=11 // pred_check
          %p327 = pneg %p193
        $region38: #{onset_cnn_forward.1} parent=11 // pred_check_branch
          %329 = sbr.rel (%p327) target = $region40
        $region39: #{onset_cnn_forward.1} parent=11 // pred_region
          %s331 = ssub.s32 4096, 4096
          %332 = vsyncadd [#allocation11], %s331
          %s333 = sshll.u32 [#allocation12], 4
          %s334 = int_to_ptr.vmem [resolvable:$true] %s333
          %339 = dma.hbm_to_vmem [thread:$0]  %s7, 4096, %s334, [#allocation11], 128, 128, 8
        $region40: #{onset_cnn_forward.1} parent=11 // pred_fallthru
          _
        // Predicated region
        $region41: #{onset_cnn_forward.1} parent=11 // pred_check
          %p340 = pneg %p214
        $region42: #{onset_cnn_forward.1} parent=11 // pred_check_branch
          %342 = sbr.rel (%p340) target = $region44
        $region43: #{onset_cnn_forward.1} parent=11 // pred_region
          %s344 = ssub.s32 16, 16
          %345 = vsyncadd [#allocation14], %s344
          %s347 = sshll.u32 [#allocation13], 4
          %s348 = int_to_ptr.vmem [resolvable:$true] %s347
          %350 = dma.hbm_to_vmem [thread:$0]  %s8, 16, %s348, [#allocation14]
        $region44: #{onset_cnn_forward.1} parent=11 // pred_fallthru
          _
      $region12: #{onset_cnn_forward.1} parent=5 // pred_fallthru
        _
      %p351 = scmp.lt.s32.totalorder %s20, 2
      // Predicated region
      $region45: #{onset_cnn_forward.1} parent=5 // pred_check
        %p352 = pneg %p351
      $region46: #{onset_cnn_forward.1} parent=5 // pred_check_branch
        %354 = sbr.rel (%p352) target = $region48
      $region47: #{onset_cnn_forward.1} parent=5 // pred_region
        // Predicated region
        $region49: #{onset_cnn_forward.1} parent=47 // pred_check
          %p355 = pneg %p40
        $region50: #{onset_cnn_forward.1} parent=47 // pred_check_branch
          %357 = sbr.rel (%p355) target = $region52
        $region51: #{onset_cnn_forward.1} parent=47 // pred_region
          %s358 = smul.u32 4, %s20
          %p359 = scmp.lt.s32.totalorder %s358, 7
          %s360 = scalar_select %p359, %s358, 7
          %s361 = smul.addr %s360, 10
          %s362 = smul.addr %s361, 8
          %s363 = scalar_lea.vmem %s0, %s362
          %s364 = smul.u32 4, %s20
        $region52: #{onset_cnn_forward.1} parent=47 // pred_fallthru
          _
      $region48: #{onset_cnn_forward.1} parent=5 // pred_fallthru
        _
      %p365 = scmp.le.s32.totalorder 1, %s20
      %p366 = scmp.lt.s32.totalorder %s20, 3
      %p367 = pnand %p365, %p366
      %p368 = pneg %p367
      // Predicated region
      $region53: #{onset_cnn_forward.1} parent=5 // pred_check
        _
      $region54: #{onset_cnn_forward.1} parent=5 // pred_check_branch
        %370 = sbr.rel (%p367) target = $region56
      $region55: #{onset_cnn_forward.1} parent=5 // pred_region
        %s371 = ssub.s32 %s20, 1
        // Predicated region
        $region57: #{onset_cnn_forward.1} parent=55 // pred_check
          %p372 = pneg %p67
        $region58: #{onset_cnn_forward.1} parent=55 // pred_check_branch
          %374 = sbr.rel (%p372) target = $region60
        $region59: #{onset_cnn_forward.1} parent=55 // pred_region
          %375 = dma.done [#allocation3], 2048
        $region60: #{onset_cnn_forward.1} parent=55 // pred_fallthru
          _
        // Predicated region
        $region61: #{onset_cnn_forward.1} parent=55 // pred_check
          %p376 = pneg %p88
        $region62: #{onset_cnn_forward.1} parent=55 // pred_check_branch
          %378 = sbr.rel (%p376) target = $region64
        $region63: #{onset_cnn_forward.1} parent=55 // pred_region
          %379 = dma.done [#allocation5], 16
        $region64: #{onset_cnn_forward.1} parent=55 // pred_fallthru
          _
        // Predicated region
        $region65: #{onset_cnn_forward.1} parent=55 // pred_check
          %p380 = pneg %p109
        $region66: #{onset_cnn_forward.1} parent=55 // pred_check_branch
          %382 = sbr.rel (%p380) target = $region68
        $region67: #{onset_cnn_forward.1} parent=55 // pred_region
          %383 = dma.done [#allocation5], 12288
        $region68: #{onset_cnn_forward.1} parent=55 // pred_fallthru
          _
        // Predicated region
        $region69: #{onset_cnn_forward.1} parent=55 // pred_check
          %p384 = pneg %p130
        $region70: #{onset_cnn_forward.1} parent=55 // pred_check_branch
          %386 = sbr.rel (%p384) target = $region72
        $region71: #{onset_cnn_forward.1} parent=55 // pred_region
          %387 = dma.done [#allocation8], 32
        $region72: #{onset_cnn_forward.1} parent=55 // pred_fallthru
          _
        // Predicated region
        $region73: #{onset_cnn_forward.1} parent=55 // pred_check
          %p388 = pneg %p151
        $region74: #{onset_cnn_forward.1} parent=55 // pred_check_branch
          %390 = sbr.rel (%p388) target = $region76
        $region75: #{onset_cnn_forward.1} parent=55 // pred_region
          %391 = dma.done [#allocation8], 65536
        $region76: #{onset_cnn_forward.1} parent=55 // pred_fallthru
          _
        // Predicated region
        $region77: #{onset_cnn_forward.1} parent=55 // pred_check
          %p392 = pneg %p172
        $region78: #{onset_cnn_forward.1} parent=55 // pred_check_branch
          %394 = sbr.rel (%p392) target = $region80
        $region79: #{onset_cnn_forward.1} parent=55 // pred_region
          %395 = dma.done [#allocation11], 32
        $region80: #{onset_cnn_forward.1} parent=55 // pred_fallthru
          _
        // Predicated region
        $region81: #{onset_cnn_forward.1} parent=55 // pred_check
          %p396 = pneg %p193
        $region82: #{onset_cnn_forward.1} parent=55 // pred_check_branch
          %398 = sbr.rel (%p396) target = $region84
        $region83: #{onset_cnn_forward.1} parent=55 // pred_region
          %399 = dma.done [#allocation11], 4096
        $region84: #{onset_cnn_forward.1} parent=55 // pred_fallthru
          _
        // Predicated region
        $region85: #{onset_cnn_forward.1} parent=55 // pred_check
          %p400 = pneg %p214
        $region86: #{onset_cnn_forward.1} parent=55 // pred_check_branch
          %402 = sbr.rel (%p400) target = $region88
        $region87: #{onset_cnn_forward.1} parent=55 // pred_region
          %403 = dma.done [#allocation14], 16
        $region88: #{onset_cnn_forward.1} parent=55 // pred_fallthru
          _
        %s404 = smul.u32 4, %s25
        %p405 = scmp.lt.s32.totalorder %s404, 7
        %s406 = scalar_select %p405, %s404, 7
        %s407 = smul.addr %s406, 10
        %s408 = smul.addr %s407, 8
        %s409 = scalar_lea.vmem %s0, %s408
        %p410 = pneg %p46
        %p411 = pneg %p43
        %p412 = pneg %p67
        %p413 = pneg %p64
        %p414 = pneg %p88
        %p415 = pneg %p85
        %p416 = pneg %p109
        %p417 = pneg %p106
        %p418 = pneg %p130
        %p419 = pneg %p127
        %p420 = pneg %p151
        %p421 = pneg %p148
        %p422 = pneg %p172
        %p423 = pneg %p169
        %p424 = pneg %p193
        %p425 = pneg %p190
        %p426 = pneg %p214
        %p427 = pneg %p211
        %p428 = pneg %p240
        %p429 = pneg %p237
        %s430 = smul.u32 4, %s25
        %p431 = scmp.lt.s32.totalorder %s430, 7
        %s432 = scalar_select %p431, %s430, 7
        %s433 = scalar_lea.vmem %s9, %s432
        %s434 = smul.u32 4, %s25
        %p435 = scmp.lt.s32.totalorder %s434, 7
        %s436 = scalar_select %p435, %s434, 7
        %s437 = smul.addr %s436, 10
        %s438 = smul.addr %s437, 8
        %s439 = scalar_lea.vmem %s0, %s438
        %s440 = smul.u32 4, %s25
        %s441 = smul.u32 4, %s25
        %p442 = scmp.lt.s32.totalorder %s441, 7
        %s443 = scalar_select %p442, %s441, 7
        %s444 = scalar_lea.vmem %s9, %s443
        %s445 = smul.u32 4, %s25
        %v446 = vld [vmem:[%s439] sm:$0xff]
        %v447 = vld [vmem:[%s439 + $0x8] sm:$0xff]
        %v448 = vld [vmem:[%s439 + $0x10] sm:$0xff]
        %v449 = vld [vmem:[%s439 + $0x18] sm:$0xff]
        %v450 = vld [vmem:[%s439 + $0x20] sm:$0xff]
        %v451 = vld [vmem:[%s439 + $0x28] sm:$0xff]
        %v452 = vld [vmem:[%s439 + $0x30] sm:$0xff]
        %v453 = vld [vmem:[%s439 + $0x38] sm:$0xff]
        %v454 = vld [vmem:[%s439 + $0x40] sm:$0xff]
        %v455 = vld [vmem:[%s439 + $0x48] sm:$0xff]
        %v456 = vld [vmem:[%s439 + $0x50] sm:$0xff]
        %v457 = vld [vmem:[%s439 + $0x58] sm:$0xff]
        %v458 = vld [vmem:[%s439 + $0x60] sm:$0xff]
        %v459 = vld [vmem:[%s439 + $0x68] sm:$0xff]
        %v460 = vld [vmem:[%s439 + $0x70] sm:$0xff]
        %v461 = vld [vmem:[%s439 + $0x78] sm:$0xff]
        %v462 = vld [vmem:[%s439 + $0x80] sm:$0xff]
        %v463 = vld [vmem:[%s439 + $0x88] sm:$0xff]
        %v464 = vld [vmem:[%s439 + $0x90] sm:$0xff]
        %v465 = vld [vmem:[%s439 + $0x98] sm:$0xff]
        %v466 = vld [vmem:[%s439 + $0xa0] sm:$0xff]
        %v467 = vld [vmem:[%s439 + $0xa8] sm:$0xff]
        %v468 = vld [vmem:[%s439 + $0xb0] sm:$0xff]
        %v469 = vld [vmem:[%s439 + $0xb8] sm:$0xff]
        %v470 = vld [vmem:[%s439 + $0xc0] sm:$0xff]
        %v471 = vld [vmem:[%s439 + $0xc8] sm:$0xff]
        %v472 = vld [vmem:[%s439 + $0xd0] sm:$0xff]
        %v473 = vld [vmem:[%s439 + $0xd8] sm:$0xff]
        %v474 = vld [vmem:[%s439 + $0xe0] sm:$0xff]
        %v475 = vld [vmem:[%s439 + $0xe8] sm:$0xff]
        %v476 = vld [vmem:[%s439 + $0xf0] sm:$0xff]
        %v477 = vld [vmem:[%s439 + $0xf8] sm:$0xff]
        %v478 = vld [vmem:[%s439 + $0x100] sm:$0xff]
        %v479 = vld [vmem:[%s439 + $0x108] sm:$0xff]
        %v480 = vld [vmem:[%s439 + $0x110] sm:$0xff]
        %v481 = vld [vmem:[%s439 + $0x118] sm:$0xff]
        %v482 = vld [vmem:[%s439 + $0x120] sm:$0xff]
        %v483 = vld [vmem:[%s439 + $0x128] sm:$0xff]
        %v484 = vld [vmem:[%s439 + $0x130] sm:$0xff]
        %v485 = vld [vmem:[%s439 + $0x138] sm:$0xff]
        %vm526 = vcmask 1046528
        %v527 = vrot.slane %v446, 1
        %v528 = vrot.slane %v447, 1
        %v529 = vsel %vm526, %v527, %v528
        %v530 = vrot.slane %v448, 1
        %v531 = vsel %vm526, %v528, %v530
        %v532 = vrot.slane %v449, 1
        %v533 = vsel %vm526, %v530, %v532
        %v534 = vrot.slane %v450, 1
        %v535 = vsel %vm526, %v532, %v534
        %v536 = vrot.slane %v451, 1
        %v537 = vsel %vm526, %v534, %v536
        %v538 = vrot.slane %v452, 1
        %v539 = vsel %vm526, %v536, %v538
        %v540 = vrot.slane %v453, 1
        %v541 = vsel %vm526, %v538, %v540
        %v542 = vrot.slane %v454, 1
        %v543 = vsel %vm526, %v540, %v542
        %v544 = vrot.slane %v455, 1
        %v545 = vsel %vm526, %v542, %v544
        %v546 = vrot.slane %v456, 1
        %v547 = vrot.slane %v457, 1
        %v548 = vsel %vm526, %v546, %v547
        %v549 = vrot.slane %v458, 1
        %v550 = vsel %vm526, %v547, %v549
        %v551 = vrot.slane %v459, 1
        %v552 = vsel %vm526, %v549, %v551
        %v553 = vrot.slane %v460, 1
        %v554 = vsel %vm526, %v551, %v553
        %v555 = vrot.slane %v461, 1
        %v556 = vsel %vm526, %v553, %v555
        %v557 = vrot.slane %v462, 1
        %v558 = vsel %vm526, %v555, %v557
        %v559 = vrot.slane %v463, 1
        %v560 = vsel %vm526, %v557, %v559
        %v561 = vrot.slane %v464, 1
        %v562 = vsel %vm526, %v559, %v561
        %v563 = vrot.slane %v465, 1
        %v564 = vsel %vm526, %v561, %v563
        %v565 = vrot.slane %v466, 1
        %v566 = vrot.slane %v467, 1
        %v567 = vsel %vm526, %v565, %v566
        %v568 = vrot.slane %v468, 1
        %v569 = vsel %vm526, %v566, %v568
        %v570 = vrot.slane %v469, 1
        %v571 = vsel %vm526, %v568, %v570
        %v572 = vrot.slane %v470, 1
        %v573 = vsel %vm526, %v570, %v572
        %v574 = vrot.slane %v471, 1
        %v575 = vsel %vm526, %v572, %v574
        %v576 = vrot.slane %v472, 1
        %v577 = vsel %vm526, %v574, %v576
        %v578 = vrot.slane %v473, 1
        %v579 = vsel %vm526, %v576, %v578
        %v580 = vrot.slane %v474, 1
        %v581 = vsel %vm526, %v578, %v580
        %v582 = vrot.slane %v475, 1
        %v583 = vsel %vm526, %v580, %v582
        %v584 = vrot.slane %v476, 1
        %v585 = vrot.slane %v477, 1
        %v586 = vsel %vm526, %v584, %v585
        %v587 = vrot.slane %v478, 1
        %v588 = vsel %vm526, %v585, %v587
        %v589 = vrot.slane %v479, 1
        %v590 = vsel %vm526, %v587, %v589
        %v591 = vrot.slane %v480, 1
        %v592 = vsel %vm526, %v589, %v591
        %v593 = vrot.slane %v481, 1
        %v594 = vsel %vm526, %v591, %v593
        %v595 = vrot.slane %v482, 1
        %v596 = vsel %vm526, %v593, %v595
        %v597 = vrot.slane %v483, 1
        %v598 = vsel %vm526, %v595, %v597
        %v599 = vrot.slane %v484, 1
        %v600 = vsel %vm526, %v597, %v599
        %v601 = vrot.slane %v485, 1
        %v602 = vsel %vm526, %v599, %v601
        %603 = vrot.lane.b32.xlu0 %v529, 15
        %v604 = vpop.permute.xlu0 %603
        %605 = vrot.lane.b32.xlu0 %v531, 15
        %v606 = vpop.permute.xlu0 %605
        %607 = vrot.lane.b32.xlu0 %v533, 15
        %v608 = vpop.permute.xlu0 %607
        %609 = vrot.lane.b32.xlu0 %v535, 15
        %v610 = vpop.permute.xlu0 %609
        %611 = vrot.lane.b32.xlu0 %v537, 15
        %v612 = vpop.permute.xlu0 %611
        %613 = vrot.lane.b32.xlu0 %v539, 15
        %v614 = vpop.permute.xlu0 %613
        %615 = vrot.lane.b32.xlu0 %v541, 15
        %v616 = vpop.permute.xlu0 %615
        %617 = vrot.lane.b32.xlu0 %v543, 15
        %v618 = vpop.permute.xlu0 %617
        %619 = vrot.lane.b32.xlu0 %v545, 15
        %v620 = vpop.permute.xlu0 %619
        %621 = vrot.lane.b32.xlu0 %v544, 15
        %v622 = vpop.permute.xlu0 %621
        %623 = vrot.lane.b32.xlu0 %v548, 15
        %v624 = vpop.permute.xlu0 %623
        %625 = vrot.lane.b32.xlu0 %v550, 15
        %v626 = vpop.permute.xlu0 %625
        %627 = vrot.lane.b32.xlu0 %v552, 15
        %v628 = vpop.permute.xlu0 %627
        %629 = vrot.lane.b32.xlu0 %v554, 15
        %v630 = vpop.permute.xlu0 %629
        %631 = vrot.lane.b32.xlu0 %v556, 15
        %v632 = vpop.permute.xlu0 %631
        %633 = vrot.lane.b32.xlu0 %v558, 15
        %v634 = vpop.permute.xlu0 %633
        %635 = vrot.lane.b32.xlu0 %v560, 15
        %v636 = vpop.permute.xlu0 %635
        %637 = vrot.lane.b32.xlu0 %v562, 15
        %v638 = vpop.permute.xlu0 %637
        %639 = vrot.lane.b32.xlu0 %v564, 15
        %v640 = vpop.permute.xlu0 %639
        %641 = vrot.lane.b32.xlu0 %v563, 15
        %v642 = vpop.permute.xlu0 %641
        %643 = vrot.lane.b32.xlu0 %v567, 15
        %v644 = vpop.permute.xlu0 %643
        %645 = vrot.lane.b32.xlu0 %v569, 15
        %v646 = vpop.permute.xlu0 %645
        %647 = vrot.lane.b32.xlu0 %v571, 15
        %v648 = vpop.permute.xlu0 %647
        %649 = vrot.lane.b32.xlu0 %v573, 15
        %v650 = vpop.permute.xlu0 %649
        %651 = vrot.lane.b32.xlu0 %v575, 15
        %v652 = vpop.permute.xlu0 %651
        %653 = vrot.lane.b32.xlu0 %v577, 15
        %v654 = vpop.permute.xlu0 %653
        %655 = vrot.lane.b32.xlu0 %v579, 15
        %v656 = vpop.permute.xlu0 %655
        %657 = vrot.lane.b32.xlu0 %v581, 15
        %v658 = vpop.permute.xlu0 %657
        %659 = vrot.lane.b32.xlu0 %v583, 15
        %v660 = vpop.permute.xlu0 %659
        %661 = vrot.lane.b32.xlu0 %v582, 15
        %v662 = vpop.permute.xlu0 %661
        %663 = vrot.lane.b32.xlu0 %v586, 15
        %v664 = vpop.permute.xlu0 %663
        %665 = vrot.lane.b32.xlu0 %v588, 15
        %v666 = vpop.permute.xlu0 %665
        %667 = vrot.lane.b32.xlu0 %v590, 15
        %v668 = vpop.permute.xlu0 %667
        %669 = vrot.lane.b32.xlu0 %v592, 15
        %v670 = vpop.permute.xlu0 %669
        %671 = vrot.lane.b32.xlu0 %v594, 15
        %v672 = vpop.permute.xlu0 %671
        %673 = vrot.lane.b32.xlu0 %v596, 15
        %v674 = vpop.permute.xlu0 %673
        %675 = vrot.lane.b32.xlu0 %v598, 15
        %v676 = vpop.permute.xlu0 %675
        %677 = vrot.lane.b32.xlu0 %v600, 15
        %v678 = vpop.permute.xlu0 %677
        %679 = vrot.lane.b32.xlu0 %v602, 15
        %v680 = vpop.permute.xlu0 %679
        %681 = vrot.lane.b32.xlu0 %v601, 15
        %v682 = vpop.permute.xlu0 %681
        %vm723 = vcmask 1045504
        %v724 = vrot.slane %v446, 2
        %v725 = vrot.slane %v447, 2
        %v726 = vsel %vm723, %v724, %v725
        %v727 = vrot.slane %v448, 2
        %v728 = vsel %vm723, %v725, %v727
        %v729 = vrot.slane %v449, 2
        %v730 = vsel %vm723, %v727, %v729
        %v731 = vrot.slane %v450, 2
        %v732 = vsel %vm723, %v729, %v731
        %v733 = vrot.slane %v451, 2
        %v734 = vsel %vm723, %v731, %v733
        %v735 = vrot.slane %v452, 2
        %v736 = vsel %vm723, %v733, %v735
        %v737 = vrot.slane %v453, 2
        %v738 = vsel %vm723, %v735, %v737
        %v739 = vrot.slane %v454, 2
        %v740 = vsel %vm723, %v737, %v739
        %v741 = vrot.slane %v455, 2
        %v742 = vsel %vm723, %v739, %v741
        %v743 = vrot.slane %v456, 2
        %v744 = vrot.slane %v457, 2
        %v745 = vsel %vm723, %v743, %v744
        %v746 = vrot.slane %v458, 2
        %v747 = vsel %vm723, %v744, %v746
        %v748 = vrot.slane %v459, 2
        %v749 = vsel %vm723, %v746, %v748
        %v750 = vrot.slane %v460, 2
        %v751 = vsel %vm723, %v748, %v750
        %v752 = vrot.slane %v461, 2
        %v753 = vsel %vm723, %v750, %v752
        %v754 = vrot.slane %v462, 2
        %v755 = vsel %vm723, %v752, %v754
        %v756 = vrot.slane %v463, 2
        %v757 = vsel %vm723, %v754, %v756
        %v758 = vrot.slane %v464, 2
        %v759 = vsel %vm723, %v756, %v758
        %v760 = vrot.slane %v465, 2
        %v761 = vsel %vm723, %v758, %v760
        %v762 = vrot.slane %v466, 2
        %v763 = vrot.slane %v467, 2
        %v764 = vsel %vm723, %v762, %v763
        %v765 = vrot.slane %v468, 2
        %v766 = vsel %vm723, %v763, %v765
        %v767 = vrot.slane %v469, 2
        %v768 = vsel %vm723, %v765, %v767
        %v769 = vrot.slane %v470, 2
        %v770 = vsel %vm723, %v767, %v769
        %v771 = vrot.slane %v471, 2
        %v772 = vsel %vm723, %v769, %v771
        %v773 = vrot.slane %v472, 2
        %v774 = vsel %vm723, %v771, %v773
        %v775 = vrot.slane %v473, 2
        %v776 = vsel %vm723, %v773, %v775
        %v777 = vrot.slane %v474, 2
        %v778 = vsel %vm723, %v775, %v777
        %v779 = vrot.slane %v475, 2
        %v780 = vsel %vm723, %v777, %v779
        %v781 = vrot.slane %v476, 2
        %v782 = vrot.slane %v477, 2
        %v783 = vsel %vm723, %v781, %v782
        %v784 = vrot.slane %v478, 2
        %v785 = vsel %vm723, %v782, %v784
        %v786 = vrot.slane %v479, 2
        %v787 = vsel %vm723, %v784, %v786
        %v788 = vrot.slane %v480, 2
        %v789 = vsel %vm723, %v786, %v788
        %v790 = vrot.slane %v481, 2
        %v791 = vsel %vm723, %v788, %v790
        %v792 = vrot.slane %v482, 2
        %v793 = vsel %vm723, %v790, %v792
        %v794 = vrot.slane %v483, 2
        %v795 = vsel %vm723, %v792, %v794
        %v796 = vrot.slane %v484, 2
        %v797 = vsel %vm723, %v794, %v796
        %v798 = vrot.slane %v485, 2
        %v799 = vsel %vm723, %v796, %v798
        %800 = vrot.lane.b32.xlu0 %v726, 30
        %v801 = vpop.permute.xlu0 %800
        %802 = vrot.lane.b32.xlu0 %v728, 30
        %v803 = vpop.permute.xlu0 %802
        %804 = vrot.lane.b32.xlu0 %v730, 30
        %v805 = vpop.permute.xlu0 %804
        %806 = vrot.lane.b32.xlu0 %v732, 30
        %v807 = vpop.permute.xlu0 %806
        %808 = vrot.lane.b32.xlu0 %v734, 30
        %v809 = vpop.permute.xlu0 %808
        %810 = vrot.lane.b32.xlu0 %v736, 30
        %v811 = vpop.permute.xlu0 %810
        %812 = vrot.lane.b32.xlu0 %v738, 30
        %v813 = vpop.permute.xlu0 %812
        %814 = vrot.lane.b32.xlu0 %v740, 30
        %v815 = vpop.permute.xlu0 %814
        %816 = vrot.lane.b32.xlu0 %v742, 30
        %v817 = vpop.permute.xlu0 %816
        %818 = vrot.lane.b32.xlu0 %v741, 30
        %v819 = vpop.permute.xlu0 %818
        %820 = vrot.lane.b32.xlu0 %v745, 30
        %v821 = vpop.permute.xlu0 %820
        %822 = vrot.lane.b32.xlu0 %v747, 30
        %v823 = vpop.permute.xlu0 %822
        %824 = vrot.lane.b32.xlu0 %v749, 30
        %v825 = vpop.permute.xlu0 %824
        %826 = vrot.lane.b32.xlu0 %v751, 30
        %v827 = vpop.permute.xlu0 %826
        %828 = vrot.lane.b32.xlu0 %v753, 30
        %v829 = vpop.permute.xlu0 %828
        %830 = vrot.lane.b32.xlu0 %v755, 30
        %v831 = vpop.permute.xlu0 %830
        %832 = vrot.lane.b32.xlu0 %v757, 30
        %v833 = vpop.permute.xlu0 %832
        %834 = vrot.lane.b32.xlu0 %v759, 30
        %v835 = vpop.permute.xlu0 %834
        %836 = vrot.lane.b32.xlu0 %v761, 30
        %v837 = vpop.permute.xlu0 %836
        %838 = vrot.lane.b32.xlu0 %v760, 30
        %v839 = vpop.permute.xlu0 %838
        %840 = vrot.lane.b32.xlu0 %v764, 30
        %v841 = vpop.permute.xlu0 %840
        %842 = vrot.lane.b32.xlu0 %v766, 30
        %v843 = vpop.permute.xlu0 %842
        %844 = vrot.lane.b32.xlu0 %v768, 30
        %v845 = vpop.permute.xlu0 %844
        %846 = vrot.lane.b32.xlu0 %v770, 30
        %v847 = vpop.permute.xlu0 %846
        %848 = vrot.lane.b32.xlu0 %v772, 30
        %v849 = vpop.permute.xlu0 %848
        %850 = vrot.lane.b32.xlu0 %v774, 30
        %v851 = vpop.permute.xlu0 %850
        %852 = vrot.lane.b32.xlu0 %v776, 30
        %v853 = vpop.permute.xlu0 %852
        %854 = vrot.lane.b32.xlu0 %v778, 30
        %v855 = vpop.permute.xlu0 %854
        %856 = vrot.lane.b32.xlu0 %v780, 30
        %v857 = vpop.permute.xlu0 %856
        %858 = vrot.lane.b32.xlu0 %v779, 30
        %v859 = vpop.permute.xlu0 %858
        %860 = vrot.lane.b32.xlu0 %v783, 30
        %v861 = vpop.permute.xlu0 %860
        %862 = vrot.lane.b32.xlu0 %v785, 30
        %v863 = vpop.permute.xlu0 %862
        %864 = vrot.lane.b32.xlu0 %v787, 30
        %v865 = vpop.permute.xlu0 %864
        %866 = vrot.lane.b32.xlu0 %v789, 30
        %v867 = vpop.permute.xlu0 %866
        %868 = vrot.lane.b32.xlu0 %v791, 30
        %v869 = vpop.permute.xlu0 %868
        %870 = vrot.lane.b32.xlu0 %v793, 30
        %v871 = vpop.permute.xlu0 %870
        %872 = vrot.lane.b32.xlu0 %v795, 30
        %v873 = vpop.permute.xlu0 %872
        %874 = vrot.lane.b32.xlu0 %v797, 30
        %v875 = vpop.permute.xlu0 %874
        %876 = vrot.lane.b32.xlu0 %v799, 30
        %v877 = vpop.permute.xlu0 %876
        %878 = vrot.lane.b32.xlu0 %v798, 30
        %v879 = vpop.permute.xlu0 %878
        %vm920 = vcmask 121856
        %v921 = vsel %vm920, %v446, %v604
        %v922 = vsel %vm920, %v447, %v606
        %v923 = vsel %vm920, %v448, %v608
        %v924 = vsel %vm920, %v449, %v610
        %v925 = vsel %vm920, %v450, %v612
        %v926 = vsel %vm920, %v451, %v614
        %v927 = vsel %vm920, %v452, %v616
        %v928 = vsel %vm920, %v453, %v618
        %v929 = vsel %vm920, %v454, %v620
        %v930 = vsel %vm920, %v455, %v622
        %v931 = vsel %vm920, %v456, %v624
        %v932 = vsel %vm920, %v457, %v626
        %v933 = vsel %vm920, %v458, %v628
        %v934 = vsel %vm920, %v459, %v630
        %v935 = vsel %vm920, %v460, %v632
        %v936 = vsel %vm920, %v461, %v634
        %v937 = vsel %vm920, %v462, %v636
        %v938 = vsel %vm920, %v463, %v638
        %v939 = vsel %vm920, %v464, %v640
        %v940 = vsel %vm920, %v465, %v642
        %v941 = vsel %vm920, %v466, %v644
        %v942 = vsel %vm920, %v467, %v646
        %v943 = vsel %vm920, %v468, %v648
        %v944 = vsel %vm920, %v469, %v650
        %v945 = vsel %vm920, %v470, %v652
        %v946 = vsel %vm920, %v471, %v654
        %v947 = vsel %vm920, %v472, %v656
        %v948 = vsel %vm920, %v473, %v658
        %v949 = vsel %vm920, %v474, %v660
        %v950 = vsel %vm920, %v475, %v662
        %v951 = vsel %vm920, %v476, %v664
        %v952 = vsel %vm920, %v477, %v666
        %v953 = vsel %vm920, %v478, %v668
        %v954 = vsel %vm920, %v479, %v670
        %v955 = vsel %vm920, %v480, %v672
        %v956 = vsel %vm920, %v481, %v674
        %v957 = vsel %vm920, %v482, %v676
        %v958 = vsel %vm920, %v483, %v678
        %v959 = vsel %vm920, %v484, %v680
        %v960 = vsel %vm920, %v485, %v682
        %vm961 = vcmask 244736
        %v962 = vsel %vm961, %v921, %v801
        %v963 = vsel %vm961, %v922, %v803
        %v964 = vsel %vm961, %v923, %v805
        %v965 = vsel %vm961, %v924, %v807
        %v966 = vsel %vm961, %v925, %v809
        %v967 = vsel %vm961, %v926, %v811
        %v968 = vsel %vm961, %v927, %v813
        %v969 = vsel %vm961, %v928, %v815
        %v970 = vsel %vm961, %v929, %v817
        %v971 = vsel %vm961, %v930, %v819
        %v972 = vsel %vm961, %v931, %v821
        %v973 = vsel %vm961, %v932, %v823
        %v974 = vsel %vm961, %v933, %v825
        %v975 = vsel %vm961, %v934, %v827
        %v976 = vsel %vm961, %v935, %v829
        %v977 = vsel %vm961, %v936, %v831
        %v978 = vsel %vm961, %v937, %v833
        %v979 = vsel %vm961, %v938, %v835
        %v980 = vsel %vm961, %v939, %v837
        %v981 = vsel %vm961, %v940, %v839
        %v982 = vsel %vm961, %v941, %v841
        %v983 = vsel %vm961, %v942, %v843
        %v984 = vsel %vm961, %v943, %v845
        %v985 = vsel %vm961, %v944, %v847
        %v986 = vsel %vm961, %v945, %v849
        %v987 = vsel %vm961, %v946, %v851
        %v988 = vsel %vm961, %v947, %v853
        %v989 = vsel %vm961, %v948, %v855
        %v990 = vsel %vm961, %v949, %v857
        %v991 = vsel %vm961, %v950, %v859
        %v992 = vsel %vm961, %v951, %v861
        %v993 = vsel %vm961, %v952, %v863
        %v994 = vsel %vm961, %v953, %v865
        %v995 = vsel %vm961, %v954, %v867
        %v996 = vsel %vm961, %v955, %v869
        %v997 = vsel %vm961, %v956, %v871
        %v998 = vsel %vm961, %v957, %v873
        %v999 = vsel %vm961, %v958, %v875
        %v1000 = vsel %vm961, %v959, %v877
        %v1001 = vsel %vm961, %v960, %v879
        %vm1002 = vcmask 367616
        %v1003 = vsel %vm1002, %v962, 0.0
        %v1004 = vsel %vm1002, %v963, 0.0
        %v1005 = vsel %vm1002, %v964, 0.0
        %v1006 = vsel %vm1002, %v965, 0.0
        %v1007 = vsel %vm1002, %v966, 0.0
        %v1008 = vsel %vm1002, %v967, 0.0
        %v1009 = vsel %vm1002, %v968, 0.0
        %v1010 = vsel %vm1002, %v969, 0.0
        %v1011 = vsel %vm1002, %v970, 0.0
        %v1012 = vsel %vm1002, %v971, 0.0
        %v1013 = vsel %vm1002, %v972, 0.0
        %v1014 = vsel %vm1002, %v973, 0.0
        %v1015 = vsel %vm1002, %v974, 0.0
        %v1016 = vsel %vm1002, %v975, 0.0
        %v1017 = vsel %vm1002, %v976, 0.0
        %v1018 = vsel %vm1002, %v977, 0.0
        %v1019 = vsel %vm1002, %v978, 0.0
        %v1020 = vsel %vm1002, %v979, 0.0
        %v1021 = vsel %vm1002, %v980, 0.0
        %v1022 = vsel %vm1002, %v981, 0.0
        %v1023 = vsel %vm1002, %v982, 0.0
        %v1024 = vsel %vm1002, %v983, 0.0
        %v1025 = vsel %vm1002, %v984, 0.0
        %v1026 = vsel %vm1002, %v985, 0.0
        %v1027 = vsel %vm1002, %v986, 0.0
        %v1028 = vsel %vm1002, %v987, 0.0
        %v1029 = vsel %vm1002, %v988, 0.0
        %v1030 = vsel %vm1002, %v989, 0.0
        %v1031 = vsel %vm1002, %v990, 0.0
        %v1032 = vsel %vm1002, %v991, 0.0
        %v1033 = vsel %vm1002, %v992, 0.0
        %v1034 = vsel %vm1002, %v993, 0.0
        %v1035 = vsel %vm1002, %v994, 0.0
        %v1036 = vsel %vm1002, %v995, 0.0
        %v1037 = vsel %vm1002, %v996, 0.0
        %v1038 = vsel %vm1002, %v997, 0.0
        %v1039 = vsel %vm1002, %v998, 0.0
        %v1040 = vsel %vm1002, %v999, 0.0
        %v1041 = vsel %vm1002, %v1000, 0.0
        %v1042 = vsel %vm1002, %v1001, 0.0
        %v1083 = vcombine.high %v1003, %v1003
        %v1085 = vunpack.c.l.s4 1983009808
        %v1086 = vunpack.c.0.s8 %v1085
        %v1087 = vlaneseq
        %v1088 = vshrl.u32 %v1087, 7
        %v1089 = vsub.s32 %v1086, %v1088
        %v1090 = vrot.slane %v1003, %v1089
        %v1092 = vunpack.c.l.s4 1983009808
        %v1093 = vunpack.c.0.s8 %v1092
        %v1094 = vlaneseq
        %v1095 = vshrl.u32 %v1094, 7
        %v1096 = vsub.s32 %v1093, %v1095
        %v1097 = vrot.slane %v1083, %v1096
        %v1098 = vcombine.high %v1090, %v1090
        %v1099 = vcombine.high %v1097, %v1097
        %v1100 = vcombine.high %v1004, %v1004
        %v1102 = vunpack.c.l.s4 1983009808
        %v1103 = vunpack.c.0.s8 %v1102
        %v1104 = vlaneseq
        %v1105 = vshrl.u32 %v1104, 7
        %v1106 = vsub.s32 %v1103, %v1105
        %v1107 = vrot.slane %v1004, %v1106
        %v1109 = vunpack.c.l.s4 1983009808
        %v1110 = vunpack.c.0.s8 %v1109
        %v1111 = vlaneseq
        %v1112 = vshrl.u32 %v1111, 7
        %v1113 = vsub.s32 %v1110, %v1112
        %v1114 = vrot.slane %v1100, %v1113
        %v1115 = vcombine.high %v1107, %v1107
        %v1116 = vcombine.high %v1114, %v1114
        %v1117 = vcombine.high %v1005, %v1005
        %v1119 = vunpack.c.l.s4 1983009808
        %v1120 = vunpack.c.0.s8 %v1119
        %v1121 = vlaneseq
        %v1122 = vshrl.u32 %v1121, 7
        %v1123 = vsub.s32 %v1120, %v1122
        %v1124 = vrot.slane %v1005, %v1123
        %v1126 = vunpack.c.l.s4 1983009808
        %v1127 = vunpack.c.0.s8 %v1126
        %v1128 = vlaneseq
        %v1129 = vshrl.u32 %v1128, 7
        %v1130 = vsub.s32 %v1127, %v1129
        %v1131 = vrot.slane %v1117, %v1130
        %v1132 = vcombine.high %v1124, %v1124
        %v1133 = vcombine.high %v1131, %v1131
        %v1134 = vcombine.high %v1006, %v1006
        %v1136 = vunpack.c.l.s4 1983009808
        %v1137 = vunpack.c.0.s8 %v1136
        %v1138 = vlaneseq
        %v1139 = vshrl.u32 %v1138, 7
        %v1140 = vsub.s32 %v1137, %v1139
        %v1141 = vrot.slane %v1006, %v1140
        %v1143 = vunpack.c.l.s4 1983009808
        %v1144 = vunpack.c.0.s8 %v1143
        %v1145 = vlaneseq
        %v1146 = vshrl.u32 %v1145, 7
        %v1147 = vsub.s32 %v1144, %v1146
        %v1148 = vrot.slane %v1134, %v1147
        %v1149 = vcombine.high %v1141, %v1141
        %v1150 = vcombine.high %v1148, %v1148
        %v1151 = vcombine.high %v1007, %v1007
        %v1153 = vunpack.c.l.s4 1983009808
        %v1154 = vunpack.c.0.s8 %v1153
        %v1155 = vlaneseq
        %v1156 = vshrl.u32 %v1155, 7
        %v1157 = vsub.s32 %v1154, %v1156
        %v1158 = vrot.slane %v1007, %v1157
        %v1160 = vunpack.c.l.s4 1983009808
        %v1161 = vunpack.c.0.s8 %v1160
        %v1162 = vlaneseq
        %v1163 = vshrl.u32 %v1162, 7
        %v1164 = vsub.s32 %v1161, %v1163
        %v1165 = vrot.slane %v1151, %v1164
        %v1166 = vcombine.high %v1158, %v1158
        %v1167 = vcombine.high %v1165, %v1165
        %v1168 = vcombine.high %v1008, %v1008
        %v1170 = vunpack.c.l.s4 1983009808
        %v1171 = vunpack.c.0.s8 %v1170
        %v1172 = vlaneseq
        %v1173 = vshrl.u32 %v1172, 7
        %v1174 = vsub.s32 %v1171, %v1173
        %v1175 = vrot.slane %v1008, %v1174
        %v1177 = vunpack.c.l.s4 1983009808
        %v1178 = vunpack.c.0.s8 %v1177
        %v1179 = vlaneseq
        %v1180 = vshrl.u32 %v1179, 7
        %v1181 = vsub.s32 %v1178, %v1180
        %v1182 = vrot.slane %v1168, %v1181
        %v1183 = vcombine.high %v1175, %v1175
        %v1184 = vcombine.high %v1182, %v1182
        %v1185 = vcombine.high %v1009, %v1009
        %v1187 = vunpack.c.l.s4 1983009808
        %v1188 = vunpack.c.0.s8 %v1187
        %v1189 = vlaneseq
        %v1190 = vshrl.u32 %v1189, 7
        %v1191 = vsub.s32 %v1188, %v1190
        %v1192 = vrot.slane %v1009, %v1191
        %v1194 = vunpack.c.l.s4 1983009808
        %v1195 = vunpack.c.0.s8 %v1194
        %v1196 = vlaneseq
        %v1197 = vshrl.u32 %v1196, 7
        %v1198 = vsub.s32 %v1195, %v1197
        %v1199 = vrot.slane %v1185, %v1198
        %v1200 = vcombine.high %v1192, %v1192
        %v1201 = vcombine.high %v1199, %v1199
        %v1202 = vcombine.high %v1010, %v1010
        %v1204 = vunpack.c.l.s4 1983009808
        %v1205 = vunpack.c.0.s8 %v1204
        %v1206 = vlaneseq
        %v1207 = vshrl.u32 %v1206, 7
        %v1208 = vsub.s32 %v1205, %v1207
        %v1209 = vrot.slane %v1010, %v1208
        %v1211 = vunpack.c.l.s4 1983009808
        %v1212 = vunpack.c.0.s8 %v1211
        %v1213 = vlaneseq
        %v1214 = vshrl.u32 %v1213, 7
        %v1215 = vsub.s32 %v1212, %v1214
        %v1216 = vrot.slane %v1202, %v1215
        %v1217 = vcombine.high %v1209, %v1209
        %v1218 = vcombine.high %v1216, %v1216
        %v1219 = vcombine.high %v1011, %v1011
        %v1221 = vunpack.c.l.s4 1983009808
        %v1222 = vunpack.c.0.s8 %v1221
        %v1223 = vlaneseq
        %v1224 = vshrl.u32 %v1223, 7
        %v1225 = vsub.s32 %v1222, %v1224
        %v1226 = vrot.slane %v1011, %v1225
        %v1228 = vunpack.c.l.s4 1983009808
        %v1229 = vunpack.c.0.s8 %v1228
        %v1230 = vlaneseq
        %v1231 = vshrl.u32 %v1230, 7
        %v1232 = vsub.s32 %v1229, %v1231
        %v1233 = vrot.slane %v1219, %v1232
        %v1234 = vcombine.high %v1226, %v1226
        %v1235 = vcombine.high %v1233, %v1233
        %v1236 = vcombine.high %v1012, %v1012
        %v1238 = vunpack.c.l.s4 1983009808
        %v1239 = vunpack.c.0.s8 %v1238
        %v1240 = vlaneseq
        %v1241 = vshrl.u32 %v1240, 7
        %v1242 = vsub.s32 %v1239, %v1241
        %v1243 = vrot.slane %v1012, %v1242
        %v1245 = vunpack.c.l.s4 1983009808
        %v1246 = vunpack.c.0.s8 %v1245
        %v1247 = vlaneseq
        %v1248 = vshrl.u32 %v1247, 7
        %v1249 = vsub.s32 %v1246, %v1248
        %v1250 = vrot.slane %v1236, %v1249
        %v1251 = vcombine.high %v1243, %v1243
        %v1252 = vcombine.high %v1013, %v1013
        %v1254 = vunpack.c.l.s4 1983009808
        %v1255 = vunpack.c.0.s8 %v1254
        %v1256 = vlaneseq
        %v1257 = vshrl.u32 %v1256, 7
        %v1258 = vsub.s32 %v1255, %v1257
        %v1259 = vrot.slane %v1013, %v1258
        %v1261 = vunpack.c.l.s4 1983009808
        %v1262 = vunpack.c.0.s8 %v1261
        %v1263 = vlaneseq
        %v1264 = vshrl.u32 %v1263, 7
        %v1265 = vsub.s32 %v1262, %v1264
        %v1266 = vrot.slane %v1252, %v1265
        %v1267 = vcombine.high %v1259, %v1259
        %v1268 = vcombine.high %v1266, %v1266
        %v1269 = vcombine.high %v1014, %v1014
        %v1271 = vunpack.c.l.s4 1983009808
        %v1272 = vunpack.c.0.s8 %v1271
        %v1273 = vlaneseq
        %v1274 = vshrl.u32 %v1273, 7
        %v1275 = vsub.s32 %v1272, %v1274
        %v1276 = vrot.slane %v1014, %v1275
        %v1278 = vunpack.c.l.s4 1983009808
        %v1279 = vunpack.c.0.s8 %v1278
        %v1280 = vlaneseq
        %v1281 = vshrl.u32 %v1280, 7
        %v1282 = vsub.s32 %v1279, %v1281
        %v1283 = vrot.slane %v1269, %v1282
        %v1284 = vcombine.high %v1276, %v1276
        %v1285 = vcombine.high %v1283, %v1283
        %v1286 = vcombine.high %v1015, %v1015
        %v1288 = vunpack.c.l.s4 1983009808
        %v1289 = vunpack.c.0.s8 %v1288
        %v1290 = vlaneseq
        %v1291 = vshrl.u32 %v1290, 7
        %v1292 = vsub.s32 %v1289, %v1291
        %v1293 = vrot.slane %v1015, %v1292
        %v1295 = vunpack.c.l.s4 1983009808
        %v1296 = vunpack.c.0.s8 %v1295
        %v1297 = vlaneseq
        %v1298 = vshrl.u32 %v1297, 7
        %v1299 = vsub.s32 %v1296, %v1298
        %v1300 = vrot.slane %v1286, %v1299
        %v1301 = vcombine.high %v1293, %v1293
        %v1302 = vcombine.high %v1300, %v1300
        %v1303 = vcombine.high %v1016, %v1016
        %v1305 = vunpack.c.l.s4 1983009808
        %v1306 = vunpack.c.0.s8 %v1305
        %v1307 = vlaneseq
        %v1308 = vshrl.u32 %v1307, 7
        %v1309 = vsub.s32 %v1306, %v1308
        %v1310 = vrot.slane %v1016, %v1309
        %v1312 = vunpack.c.l.s4 1983009808
        %v1313 = vunpack.c.0.s8 %v1312
        %v1314 = vlaneseq
        %v1315 = vshrl.u32 %v1314, 7
        %v1316 = vsub.s32 %v1313, %v1315
        %v1317 = vrot.slane %v1303, %v1316
        %v1318 = vcombine.high %v1310, %v1310
        %v1319 = vcombine.high %v1317, %v1317
        %v1320 = vcombine.high %v1017, %v1017
        %v1322 = vunpack.c.l.s4 1983009808
        %v1323 = vunpack.c.0.s8 %v1322
        %v1324 = vlaneseq
        %v1325 = vshrl.u32 %v1324, 7
        %v1326 = vsub.s32 %v1323, %v1325
        %v1327 = vrot.slane %v1017, %v1326
        %v1329 = vunpack.c.l.s4 1983009808
        %v1330 = vunpack.c.0.s8 %v1329
        %v1331 = vlaneseq
        %v1332 = vshrl.u32 %v1331, 7
        %v1333 = vsub.s32 %v1330, %v1332
        %v1334 = vrot.slane %v1320, %v1333
        %v1335 = vcombine.high %v1327, %v1327
        %v1336 = vcombine.high %v1334, %v1334
        %v1337 = vcombine.high %v1018, %v1018
        %v1339 = vunpack.c.l.s4 1983009808
        %v1340 = vunpack.c.0.s8 %v1339
        %v1341 = vlaneseq
        %v1342 = vshrl.u32 %v1341, 7
        %v1343 = vsub.s32 %v1340, %v1342
        %v1344 = vrot.slane %v1018, %v1343
        %v1346 = vunpack.c.l.s4 1983009808
        %v1347 = vunpack.c.0.s8 %v1346
        %v1348 = vlaneseq
        %v1349 = vshrl.u32 %v1348, 7
        %v1350 = vsub.s32 %v1347, %v1349
        %v1351 = vrot.slane %v1337, %v1350
        %v1352 = vcombine.high %v1344, %v1344
        %v1353 = vcombine.high %v1351, %v1351
        %v1354 = vcombine.high %v1019, %v1019
        %v1356 = vunpack.c.l.s4 1983009808
        %v1357 = vunpack.c.0.s8 %v1356
        %v1358 = vlaneseq
        %v1359 = vshrl.u32 %v1358, 7
        %v1360 = vsub.s32 %v1357, %v1359
        %v1361 = vrot.slane %v1019, %v1360
        %v1363 = vunpack.c.l.s4 1983009808
        %v1364 = vunpack.c.0.s8 %v1363
        %v1365 = vlaneseq
        %v1366 = vshrl.u32 %v1365, 7
        %v1367 = vsub.s32 %v1364, %v1366
        %v1368 = vrot.slane %v1354, %v1367
        %v1369 = vcombine.high %v1361, %v1361
        %v1370 = vcombine.high %v1368, %v1368
        %v1371 = vcombine.high %v1020, %v1020
        %v1373 = vunpack.c.l.s4 1983009808
        %v1374 = vunpack.c.0.s8 %v1373
        %v1375 = vlaneseq
        %v1376 = vshrl.u32 %v1375, 7
        %v1377 = vsub.s32 %v1374, %v1376
        %v1378 = vrot.slane %v1020, %v1377
        %v1380 = vunpack.c.l.s4 1983009808
        %v1381 = vunpack.c.0.s8 %v1380
        %v1382 = vlaneseq
        %v1383 = vshrl.u32 %v1382, 7
        %v1384 = vsub.s32 %v1381, %v1383
        %v1385 = vrot.slane %v1371, %v1384
        %v1386 = vcombine.high %v1378, %v1378
        %v1387 = vcombine.high %v1385, %v1385
        %v1388 = vcombine.high %v1021, %v1021
        %v1390 = vunpack.c.l.s4 1983009808
        %v1391 = vunpack.c.0.s8 %v1390
        %v1392 = vlaneseq
        %v1393 = vshrl.u32 %v1392, 7
        %v1394 = vsub.s32 %v1391, %v1393
        %v1395 = vrot.slane %v1021, %v1394
        %v1397 = vunpack.c.l.s4 1983009808
        %v1398 = vunpack.c.0.s8 %v1397
        %v1399 = vlaneseq
        %v1400 = vshrl.u32 %v1399, 7
        %v1401 = vsub.s32 %v1398, %v1400
        %v1402 = vrot.slane %v1388, %v1401
        %v1403 = vcombine.high %v1395, %v1395
        %v1404 = vcombine.high %v1402, %v1402
        %v1405 = vcombine.high %v1022, %v1022
        %v1407 = vunpack.c.l.s4 1983009808
        %v1408 = vunpack.c.0.s8 %v1407
        %v1409 = vlaneseq
        %v1410 = vshrl.u32 %v1409, 7
        %v1411 = vsub.s32 %v1408, %v1410
        %v1412 = vrot.slane %v1022, %v1411
        %v1414 = vunpack.c.l.s4 1983009808
        %v1415 = vunpack.c.0.s8 %v1414
        %v1416 = vlaneseq
        %v1417 = vshrl.u32 %v1416, 7
        %v1418 = vsub.s32 %v1415, %v1417
        %v1419 = vrot.slane %v1405, %v1418
        %v1420 = vcombine.high %v1412, %v1412
        %v1421 = vcombine.high %v1023, %v1023
        %v1423 = vunpack.c.l.s4 1983009808
        %v1424 = vunpack.c.0.s8 %v1423
        %v1425 = vlaneseq
        %v1426 = vshrl.u32 %v1425, 7
        %v1427 = vsub.s32 %v1424, %v1426
        %v1428 = vrot.slane %v1023, %v1427
        %v1430 = vunpack.c.l.s4 1983009808
        %v1431 = vunpack.c.0.s8 %v1430
        %v1432 = vlaneseq
        %v1433 = vshrl.u32 %v1432, 7
        %v1434 = vsub.s32 %v1431, %v1433
        %v1435 = vrot.slane %v1421, %v1434
        %v1436 = vcombine.high %v1428, %v1428
        %v1437 = vcombine.high %v1435, %v1435
        %v1438 = vcombine.high %v1024, %v1024
        %v1440 = vunpack.c.l.s4 1983009808
        %v1441 = vunpack.c.0.s8 %v1440
        %v1442 = vlaneseq
        %v1443 = vshrl.u32 %v1442, 7
        %v1444 = vsub.s32 %v1441, %v1443
        %v1445 = vrot.slane %v1024, %v1444
        %v1447 = vunpack.c.l.s4 1983009808
        %v1448 = vunpack.c.0.s8 %v1447
        %v1449 = vlaneseq
        %v1450 = vshrl.u32 %v1449, 7
        %v1451 = vsub.s32 %v1448, %v1450
        %v1452 = vrot.slane %v1438, %v1451
        %v1453 = vcombine.high %v1445, %v1445
        %v1454 = vcombine.high %v1452, %v1452
        %v1455 = vcombine.high %v1025, %v1025
        %v1457 = vunpack.c.l.s4 1983009808
        %v1458 = vunpack.c.0.s8 %v1457
        %v1459 = vlaneseq
        %v1460 = vshrl.u32 %v1459, 7
        %v1461 = vsub.s32 %v1458, %v1460
        %v1462 = vrot.slane %v1025, %v1461
        %v1464 = vunpack.c.l.s4 1983009808
        %v1465 = vunpack.c.0.s8 %v1464
        %v1466 = vlaneseq
        %v1467 = vshrl.u32 %v1466, 7
        %v1468 = vsub.s32 %v1465, %v1467
        %v1469 = vrot.slane %v1455, %v1468
        %v1470 = vcombine.high %v1462, %v1462
        %v1471 = vcombine.high %v1469, %v1469
        %v1472 = vcombine.high %v1026, %v1026
        %v1474 = vunpack.c.l.s4 1983009808
        %v1475 = vunpack.c.0.s8 %v1474
        %v1476 = vlaneseq
        %v1477 = vshrl.u32 %v1476, 7
        %v1478 = vsub.s32 %v1475, %v1477
        %v1479 = vrot.slane %v1026, %v1478
        %v1481 = vunpack.c.l.s4 1983009808
        %v1482 = vunpack.c.0.s8 %v1481
        %v1483 = vlaneseq
        %v1484 = vshrl.u32 %v1483, 7
        %v1485 = vsub.s32 %v1482, %v1484
        %v1486 = vrot.slane %v1472, %v1485
        %v1487 = vcombine.high %v1479, %v1479
        %v1488 = vcombine.high %v1486, %v1486
        %v1489 = vcombine.high %v1027, %v1027
        %v1491 = vunpack.c.l.s4 1983009808
        %v1492 = vunpack.c.0.s8 %v1491
        %v1493 = vlaneseq
        %v1494 = vshrl.u32 %v1493, 7
        %v1495 = vsub.s32 %v1492, %v1494
        %v1496 = vrot.slane %v1027, %v1495
        %v1498 = vunpack.c.l.s4 1983009808
        %v1499 = vunpack.c.0.s8 %v1498
        %v1500 = vlaneseq
        %v1501 = vshrl.u32 %v1500, 7
        %v1502 = vsub.s32 %v1499, %v1501
        %v1503 = vrot.slane %v1489, %v1502
        %v1504 = vcombine.high %v1496, %v1496
        %v1505 = vcombine.high %v1503, %v1503
        %v1506 = vcombine.high %v1028, %v1028
        %v1508 = vunpack.c.l.s4 1983009808
        %v1509 = vunpack.c.0.s8 %v1508
        %v1510 = vlaneseq
        %v1511 = vshrl.u32 %v1510, 7
        %v1512 = vsub.s32 %v1509, %v1511
        %v1513 = vrot.slane %v1028, %v1512
        %v1515 = vunpack.c.l.s4 1983009808
        %v1516 = vunpack.c.0.s8 %v1515
        %v1517 = vlaneseq
        %v1518 = vshrl.u32 %v1517, 7
        %v1519 = vsub.s32 %v1516, %v1518
        %v1520 = vrot.slane %v1506, %v1519
        %v1521 = vcombine.high %v1513, %v1513
        %v1522 = vcombine.high %v1520, %v1520
        %v1523 = vcombine.high %v1029, %v1029
        %v1525 = vunpack.c.l.s4 1983009808
        %v1526 = vunpack.c.0.s8 %v1525
        %v1527 = vlaneseq
        %v1528 = vshrl.u32 %v1527, 7
        %v1529 = vsub.s32 %v1526, %v1528
        %v1530 = vrot.slane %v1029, %v1529
        %v1532 = vunpack.c.l.s4 1983009808
        %v1533 = vunpack.c.0.s8 %v1532
        %v1534 = vlaneseq
        %v1535 = vshrl.u32 %v1534, 7
        %v1536 = vsub.s32 %v1533, %v1535
        %v1537 = vrot.slane %v1523, %v1536
        %v1538 = vcombine.high %v1530, %v1530
        %v1539 = vcombine.high %v1537, %v1537
        %v1540 = vcombine.high %v1030, %v1030
        %v1542 = vunpack.c.l.s4 1983009808
        %v1543 = vunpack.c.0.s8 %v1542
        %v1544 = vlaneseq
        %v1545 = vshrl.u32 %v1544, 7
        %v1546 = vsub.s32 %v1543, %v1545
        %v1547 = vrot.slane %v1030, %v1546
        %v1549 = vunpack.c.l.s4 1983009808
        %v1550 = vunpack.c.0.s8 %v1549
        %v1551 = vlaneseq
        %v1552 = vshrl.u32 %v1551, 7
        %v1553 = vsub.s32 %v1550, %v1552
        %v1554 = vrot.slane %v1540, %v1553
        %v1555 = vcombine.high %v1547, %v1547
        %v1556 = vcombine.high %v1554, %v1554
        %v1557 = vcombine.high %v1031, %v1031
        %v1559 = vunpack.c.l.s4 1983009808
        %v1560 = vunpack.c.0.s8 %v1559
        %v1561 = vlaneseq
        %v1562 = vshrl.u32 %v1561, 7
        %v1563 = vsub.s32 %v1560, %v1562
        %v1564 = vrot.slane %v1031, %v1563
        %v1566 = vunpack.c.l.s4 1983009808
        %v1567 = vunpack.c.0.s8 %v1566
        %v1568 = vlaneseq
        %v1569 = vshrl.u32 %v1568, 7
        %v1570 = vsub.s32 %v1567, %v1569
        %v1571 = vrot.slane %v1557, %v1570
        %v1572 = vcombine.high %v1564, %v1564
        %v1573 = vcombine.high %v1571, %v1571
        %v1574 = vcombine.high %v1032, %v1032
        %v1576 = vunpack.c.l.s4 1983009808
        %v1577 = vunpack.c.0.s8 %v1576
        %v1578 = vlaneseq
        %v1579 = vshrl.u32 %v1578, 7
        %v1580 = vsub.s32 %v1577, %v1579
        %v1581 = vrot.slane %v1032, %v1580
        %v1583 = vunpack.c.l.s4 1983009808
        %v1584 = vunpack.c.0.s8 %v1583
        %v1585 = vlaneseq
        %v1586 = vshrl.u32 %v1585, 7
        %v1587 = vsub.s32 %v1584, %v1586
        %v1588 = vrot.slane %v1574, %v1587
        %v1589 = vcombine.high %v1581, %v1581
        %v1590 = vcombine.high %v1033, %v1033
        %v1592 = vunpack.c.l.s4 1983009808
        %v1593 = vunpack.c.0.s8 %v1592
        %v1594 = vlaneseq
        %v1595 = vshrl.u32 %v1594, 7
        %v1596 = vsub.s32 %v1593, %v1595
        %v1597 = vrot.slane %v1033, %v1596
        %v1599 = vunpack.c.l.s4 1983009808
        %v1600 = vunpack.c.0.s8 %v1599
        %v1601 = vlaneseq
        %v1602 = vshrl.u32 %v1601, 7
        %v1603 = vsub.s32 %v1600, %v1602
        %v1604 = vrot.slane %v1590, %v1603
        %v1605 = vcombine.high %v1597, %v1597
        %v1606 = vcombine.high %v1604, %v1604
        %v1607 = vcombine.high %v1034, %v1034
        %v1609 = vunpack.c.l.s4 1983009808
        %v1610 = vunpack.c.0.s8 %v1609
        %v1611 = vlaneseq
        %v1612 = vshrl.u32 %v1611, 7
        %v1613 = vsub.s32 %v1610, %v1612
        %v1614 = vrot.slane %v1034, %v1613
        %v1616 = vunpack.c.l.s4 1983009808
        %v1617 = vunpack.c.0.s8 %v1616
        %v1618 = vlaneseq
        %v1619 = vshrl.u32 %v1618, 7
        %v1620 = vsub.s32 %v1617, %v1619
        %v1621 = vrot.slane %v1607, %v1620
        %v1622 = vcombine.high %v1614, %v1614
        %v1623 = vcombine.high %v1621, %v1621
        %v1624 = vcombine.high %v1035, %v1035
        %v1626 = vunpack.c.l.s4 1983009808
        %v1627 = vunpack.c.0.s8 %v1626
        %v1628 = vlaneseq
        %v1629 = vshrl.u32 %v1628, 7
        %v1630 = vsub.s32 %v1627, %v1629
        %v1631 = vrot.slane %v1035, %v1630
        %v1633 = vunpack.c.l.s4 1983009808
        %v1634 = vunpack.c.0.s8 %v1633
        %v1635 = vlaneseq
        %v1636 = vshrl.u32 %v1635, 7
        %v1637 = vsub.s32 %v1634, %v1636
        %v1638 = vrot.slane %v1624, %v1637
        %v1639 = vcombine.high %v1631, %v1631
        %v1640 = vcombine.high %v1638, %v1638
        %v1641 = vcombine.high %v1036, %v1036
        %v1643 = vunpack.c.l.s4 1983009808
        %v1644 = vunpack.c.0.s8 %v1643
        %v1645 = vlaneseq
        %v1646 = vshrl.u32 %v1645, 7
        %v1647 = vsub.s32 %v1644, %v1646
        %v1648 = vrot.slane %v1036, %v1647
        %v1650 = vunpack.c.l.s4 1983009808
        %v1651 = vunpack.c.0.s8 %v1650
        %v1652 = vlaneseq
        %v1653 = vshrl.u32 %v1652, 7
        %v1654 = vsub.s32 %v1651, %v1653
        %v1655 = vrot.slane %v1641, %v1654
        %v1656 = vcombine.high %v1648, %v1648
        %v1657 = vcombine.high %v1655, %v1655
        %v1658 = vcombine.high %v1037, %v1037
        %v1660 = vunpack.c.l.s4 1983009808
        %v1661 = vunpack.c.0.s8 %v1660
        %v1662 = vlaneseq
        %v1663 = vshrl.u32 %v1662, 7
        %v1664 = vsub.s32 %v1661, %v1663
        %v1665 = vrot.slane %v1037, %v1664
        %v1667 = vunpack.c.l.s4 1983009808
        %v1668 = vunpack.c.0.s8 %v1667
        %v1669 = vlaneseq
        %v1670 = vshrl.u32 %v1669, 7
        %v1671 = vsub.s32 %v1668, %v1670
        %v1672 = vrot.slane %v1658, %v1671
        %v1673 = vcombine.high %v1665, %v1665
        %v1674 = vcombine.high %v1672, %v1672
        %v1675 = vcombine.high %v1038, %v1038
        %v1677 = vunpack.c.l.s4 1983009808
        %v1678 = vunpack.c.0.s8 %v1677
        %v1679 = vlaneseq
        %v1680 = vshrl.u32 %v1679, 7
        %v1681 = vsub.s32 %v1678, %v1680
        %v1682 = vrot.slane %v1038, %v1681
        %v1684 = vunpack.c.l.s4 1983009808
        %v1685 = vunpack.c.0.s8 %v1684
        %v1686 = vlaneseq
        %v1687 = vshrl.u32 %v1686, 7
        %v1688 = vsub.s32 %v1685, %v1687
        %v1689 = vrot.slane %v1675, %v1688
        %v1690 = vcombine.high %v1682, %v1682
        %v1691 = vcombine.high %v1689, %v1689
        %v1692 = vcombine.high %v1039, %v1039
        %v1694 = vunpack.c.l.s4 1983009808
        %v1695 = vunpack.c.0.s8 %v1694
        %v1696 = vlaneseq
        %v1697 = vshrl.u32 %v1696, 7
        %v1698 = vsub.s32 %v1695, %v1697
        %v1699 = vrot.slane %v1039, %v1698
        %v1701 = vunpack.c.l.s4 1983009808
        %v1702 = vunpack.c.0.s8 %v1701
        %v1703 = vlaneseq
        %v1704 = vshrl.u32 %v1703, 7
        %v1705 = vsub.s32 %v1702, %v1704
        %v1706 = vrot.slane %v1692, %v1705
        %v1707 = vcombine.high %v1699, %v1699
        %v1708 = vcombine.high %v1706, %v1706
        %v1709 = vcombine.high %v1040, %v1040
        %v1711 = vunpack.c.l.s4 1983009808
        %v1712 = vunpack.c.0.s8 %v1711
        %v1713 = vlaneseq
        %v1714 = vshrl.u32 %v1713, 7
        %v1715 = vsub.s32 %v1712, %v1714
        %v1716 = vrot.slane %v1040, %v1715
        %v1718 = vunpack.c.l.s4 1983009808
        %v1719 = vunpack.c.0.s8 %v1718
        %v1720 = vlaneseq
        %v1721 = vshrl.u32 %v1720, 7
        %v1722 = vsub.s32 %v1719, %v1721
        %v1723 = vrot.slane %v1709, %v1722
        %v1724 = vcombine.high %v1716, %v1716
        %v1725 = vcombine.high %v1723, %v1723
        %v1726 = vcombine.high %v1041, %v1041
        %v1728 = vunpack.c.l.s4 1983009808
        %v1729 = vunpack.c.0.s8 %v1728
        %v1730 = vlaneseq
        %v1731 = vshrl.u32 %v1730, 7
        %v1732 = vsub.s32 %v1729, %v1731
        %v1733 = vrot.slane %v1041, %v1732
        %v1735 = vunpack.c.l.s4 1983009808
        %v1736 = vunpack.c.0.s8 %v1735
        %v1737 = vlaneseq
        %v1738 = vshrl.u32 %v1737, 7
        %v1739 = vsub.s32 %v1736, %v1738
        %v1740 = vrot.slane %v1726, %v1739
        %v1741 = vcombine.high %v1733, %v1733
        %v1742 = vcombine.high %v1740, %v1740
        %v1743 = vcombine.high %v1042, %v1042
        %v1745 = vunpack.c.l.s4 1983009808
        %v1746 = vunpack.c.0.s8 %v1745
        %v1747 = vlaneseq
        %v1748 = vshrl.u32 %v1747, 7
        %v1749 = vsub.s32 %v1746, %v1748
        %v1750 = vrot.slane %v1042, %v1749
        %v1752 = vunpack.c.l.s4 1983009808
        %v1753 = vunpack.c.0.s8 %v1752
        %v1754 = vlaneseq
        %v1755 = vshrl.u32 %v1754, 7
        %v1756 = vsub.s32 %v1753, %v1755
        %v1757 = vrot.slane %v1743, %v1756
        %v1758 = vcombine.high %v1750, %v1750
        %v1759 = vld [vmem:[#allocation2] sm:$0xff]
        %v1760 = vld [vmem:[#allocation2 + $0x8] sm:$0xff]
        %v1761 = vld [vmem:[#allocation2 + $0x10] sm:$0xff]
        %v1762 = vld [vmem:[#allocation2 + $0x18] sm:$0xff]
        %v1763 = vld [vmem:[#allocation2 + $0x20] sm:$0xff]
        %v1764 = vld [vmem:[#allocation2 + $0x28] sm:$0xff]
        %v1765 = vld [vmem:[#allocation2 + $0x30] sm:$0xff]
        %v1766 = vld [vmem:[#allocation2 + $0x38] sm:$0xff]
        %v1767 = vld [vmem:[#allocation2 + $0x40] sm:$0xff]
        %v1768 = vld [vmem:[#allocation2 + $0x48] sm:$0xff]
        %v1769 = vld [vmem:[#allocation2 + $0x50] sm:$0xff]
        %v1770 = vld [vmem:[#allocation2 + $0x58] sm:$0xff]
        %v1771 = vld [vmem:[#allocation2 + $0x60] sm:$0xff]
        %v1772 = vld [vmem:[#allocation2 + $0x68] sm:$0xff]
        %v1773 = vld [vmem:[#allocation2 + $0x70] sm:$0xff]
        %v1774 = vld [vmem:[#allocation2 + $0x78] sm:$0xff]
        %v1775 = vld [vmem:[#allocation4] sm:$0x1]
        %v1777 = vlaneseq
        %v1778 = vshrl.u32 %v1777, 7
        %v1779 = vsub.s32 0, %v1778
        %v1780 = vrot.slane %v1775, %v1779
        %v1782 = vcombine.low %v1090, %v1098
        %v1783 = vcombine.low %v1097, %v1099
        %v1785 = vunpack.c.l.s4 1983009808
        %v1786 = vunpack.c.0.s8 %v1785
        %v1787 = vlaneseq
        %v1788 = vshrl.u32 %v1787, 7
        %v1789 = vsub.s32 %v1786, %v1788
        %v1790 = vrot.slane %v1782, %v1789
        %v1792 = vunpack.c.l.s4 1983009808
        %v1793 = vunpack.c.0.s8 %v1792
        %v1794 = vlaneseq
        %v1795 = vshrl.u32 %v1794, 7
        %v1796 = vsub.s32 %v1793, %v1795
        %v1797 = vrot.slane %v1783, %v1796
        %v1798 = vcombine.low %v1790, %v1797
        %v1799 = vcombine.low %v1107, %v1115
        %v1800 = vcombine.low %v1114, %v1116
        %v1802 = vunpack.c.l.s4 1983009808
        %v1803 = vunpack.c.0.s8 %v1802
        %v1804 = vlaneseq
        %v1805 = vshrl.u32 %v1804, 7
        %v1806 = vsub.s32 %v1803, %v1805
        %v1807 = vrot.slane %v1799, %v1806
        %v1809 = vunpack.c.l.s4 1983009808
        %v1810 = vunpack.c.0.s8 %v1809
        %v1811 = vlaneseq
        %v1812 = vshrl.u32 %v1811, 7
        %v1813 = vsub.s32 %v1810, %v1812
        %v1814 = vrot.slane %v1800, %v1813
        %v1815 = vcombine.low %v1807, %v1814
        %v1816 = vcombine.low %v1124, %v1132
        %v1817 = vcombine.low %v1131, %v1133
        %v1819 = vunpack.c.l.s4 1983009808
        %v1820 = vunpack.c.0.s8 %v1819
        %v1821 = vlaneseq
        %v1822 = vshrl.u32 %v1821, 7
        %v1823 = vsub.s32 %v1820, %v1822
        %v1824 = vrot.slane %v1816, %v1823
        %v1826 = vunpack.c.l.s4 1983009808
        %v1827 = vunpack.c.0.s8 %v1826
        %v1828 = vlaneseq
        %v1829 = vshrl.u32 %v1828, 7
        %v1830 = vsub.s32 %v1827, %v1829
        %v1831 = vrot.slane %v1817, %v1830
        %v1832 = vcombine.low %v1824, %v1831
        %v1833 = vcombine.low %v1141, %v1149
        %v1834 = vcombine.low %v1148, %v1150
        %v1836 = vunpack.c.l.s4 1983009808
        %v1837 = vunpack.c.0.s8 %v1836
        %v1838 = vlaneseq
        %v1839 = vshrl.u32 %v1838, 7
        %v1840 = vsub.s32 %v1837, %v1839
        %v1841 = vrot.slane %v1833, %v1840
        %v1843 = vunpack.c.l.s4 1983009808
        %v1844 = vunpack.c.0.s8 %v1843
        %v1845 = vlaneseq
        %v1846 = vshrl.u32 %v1845, 7
        %v1847 = vsub.s32 %v1844, %v1846
        %v1848 = vrot.slane %v1834, %v1847
        %v1849 = vcombine.low %v1841, %v1848
        %v1850 = vcombine.low %v1158, %v1166
        %v1851 = vcombine.low %v1165, %v1167
        %v1853 = vunpack.c.l.s4 1983009808
        %v1854 = vunpack.c.0.s8 %v1853
        %v1855 = vlaneseq
        %v1856 = vshrl.u32 %v1855, 7
        %v1857 = vsub.s32 %v1854, %v1856
        %v1858 = vrot.slane %v1850, %v1857
        %v1860 = vunpack.c.l.s4 1983009808
        %v1861 = vunpack.c.0.s8 %v1860
        %v1862 = vlaneseq
        %v1863 = vshrl.u32 %v1862, 7
        %v1864 = vsub.s32 %v1861, %v1863
        %v1865 = vrot.slane %v1851, %v1864
        %v1866 = vcombine.low %v1858, %v1865
        %v1867 = vcombine.low %v1175, %v1183
        %v1868 = vcombine.low %v1182, %v1184
        %v1870 = vunpack.c.l.s4 1983009808
        %v1871 = vunpack.c.0.s8 %v1870
        %v1872 = vlaneseq
        %v1873 = vshrl.u32 %v1872, 7
        %v1874 = vsub.s32 %v1871, %v1873
        %v1875 = vrot.slane %v1867, %v1874
        %v1877 = vunpack.c.l.s4 1983009808
        %v1878 = vunpack.c.0.s8 %v1877
        %v1879 = vlaneseq
        %v1880 = vshrl.u32 %v1879, 7
        %v1881 = vsub.s32 %v1878, %v1880
        %v1882 = vrot.slane %v1868, %v1881
        %v1883 = vcombine.low %v1875, %v1882
        %v1884 = vcombine.low %v1192, %v1200
        %v1885 = vcombine.low %v1199, %v1201
        %v1887 = vunpack.c.l.s4 1983009808
        %v1888 = vunpack.c.0.s8 %v1887
        %v1889 = vlaneseq
        %v1890 = vshrl.u32 %v1889, 7
        %v1891 = vsub.s32 %v1888, %v1890
        %v1892 = vrot.slane %v1884, %v1891
        %v1894 = vunpack.c.l.s4 1983009808
        %v1895 = vunpack.c.0.s8 %v1894
        %v1896 = vlaneseq
        %v1897 = vshrl.u32 %v1896, 7
        %v1898 = vsub.s32 %v1895, %v1897
        %v1899 = vrot.slane %v1885, %v1898
        %v1900 = vcombine.low %v1892, %v1899
        %v1901 = vcombine.low %v1209, %v1217
        %v1902 = vcombine.low %v1216, %v1218
        %v1904 = vunpack.c.l.s4 1983009808
        %v1905 = vunpack.c.0.s8 %v1904
        %v1906 = vlaneseq
        %v1907 = vshrl.u32 %v1906, 7
        %v1908 = vsub.s32 %v1905, %v1907
        %v1909 = vrot.slane %v1901, %v1908
        %v1911 = vunpack.c.l.s4 1983009808
        %v1912 = vunpack.c.0.s8 %v1911
        %v1913 = vlaneseq
        %v1914 = vshrl.u32 %v1913, 7
        %v1915 = vsub.s32 %v1912, %v1914
        %v1916 = vrot.slane %v1902, %v1915
        %v1917 = vcombine.low %v1909, %v1916
        %v1918 = vcombine.low %v1226, %v1234
        %v1919 = vcombine.low %v1233, %v1235
        %v1921 = vunpack.c.l.s4 1983009808
        %v1922 = vunpack.c.0.s8 %v1921
        %v1923 = vlaneseq
        %v1924 = vshrl.u32 %v1923, 7
        %v1925 = vsub.s32 %v1922, %v1924
        %v1926 = vrot.slane %v1918, %v1925
        %v1928 = vunpack.c.l.s4 1983009808
        %v1929 = vunpack.c.0.s8 %v1928
        %v1930 = vlaneseq
        %v1931 = vshrl.u32 %v1930, 7
        %v1932 = vsub.s32 %v1929, %v1931
        %v1933 = vrot.slane %v1919, %v1932
        %v1934 = vcombine.low %v1926, %v1933
        %v1935 = vcombine.low %v1243, %v1251
        %v1936 = vcombine.low %v1250, %v1259
        %v1938 = vunpack.c.l.s4 1983009808
        %v1939 = vunpack.c.0.s8 %v1938
        %v1940 = vlaneseq
        %v1941 = vshrl.u32 %v1940, 7
        %v1942 = vsub.s32 %v1939, %v1941
        %v1943 = vrot.slane %v1935, %v1942
        %v1945 = vunpack.c.l.s4 1983009808
        %v1946 = vunpack.c.0.s8 %v1945
        %v1947 = vlaneseq
        %v1948 = vshrl.u32 %v1947, 7
        %v1949 = vsub.s32 %v1946, %v1948
        %v1950 = vrot.slane %v1936, %v1949
        %v1951 = vcombine.low %v1943, %v1950
        %v1952 = vcombine.low %v1267, %v1266
        %v1953 = vcombine.low %v1268, %v1276
        %v1955 = vunpack.c.l.s4 1983009808
        %v1956 = vunpack.c.0.s8 %v1955
        %v1957 = vlaneseq
        %v1958 = vshrl.u32 %v1957, 7
        %v1959 = vsub.s32 %v1956, %v1958
        %v1960 = vrot.slane %v1952, %v1959
        %v1962 = vunpack.c.l.s4 1983009808
        %v1963 = vunpack.c.0.s8 %v1962
        %v1964 = vlaneseq
        %v1965 = vshrl.u32 %v1964, 7
        %v1966 = vsub.s32 %v1963, %v1965
        %v1967 = vrot.slane %v1953, %v1966
        %v1968 = vcombine.low %v1960, %v1967
        %v1969 = vcombine.low %v1284, %v1283
        %v1970 = vcombine.low %v1285, %v1293
        %v1972 = vunpack.c.l.s4 1983009808
        %v1973 = vunpack.c.0.s8 %v1972
        %v1974 = vlaneseq
        %v1975 = vshrl.u32 %v1974, 7
        %v1976 = vsub.s32 %v1973, %v1975
        %v1977 = vrot.slane %v1969, %v1976
        %v1979 = vunpack.c.l.s4 1983009808
        %v1980 = vunpack.c.0.s8 %v1979
        %v1981 = vlaneseq
        %v1982 = vshrl.u32 %v1981, 7
        %v1983 = vsub.s32 %v1980, %v1982
        %v1984 = vrot.slane %v1970, %v1983
        %v1985 = vcombine.low %v1977, %v1984
        %v1986 = vcombine.low %v1301, %v1300
        %v1987 = vcombine.low %v1302, %v1310
        %v1989 = vunpack.c.l.s4 1983009808
        %v1990 = vunpack.c.0.s8 %v1989
        %v1991 = vlaneseq
        %v1992 = vshrl.u32 %v1991, 7
        %v1993 = vsub.s32 %v1990, %v1992
        %v1994 = vrot.slane %v1986, %v1993
        %v1996 = vunpack.c.l.s4 1983009808
        %v1997 = vunpack.c.0.s8 %v1996
        %v1998 = vlaneseq
        %v1999 = vshrl.u32 %v1998, 7
        %v2000 = vsub.s32 %v1997, %v1999
        %v2001 = vrot.slane %v1987, %v2000
        %v2002 = vcombine.low %v1994, %v2001
        %v2003 = vcombine.low %v1318, %v1317
        %v2004 = vcombine.low %v1319, %v1327
        %v2006 = vunpack.c.l.s4 1983009808
        %v2007 = vunpack.c.0.s8 %v2006
        %v2008 = vlaneseq
        %v2009 = vshrl.u32 %v2008, 7
        %v2010 = vsub.s32 %v2007, %v2009
        %v2011 = vrot.slane %v2003, %v2010
        %v2013 = vunpack.c.l.s4 1983009808
        %v2014 = vunpack.c.0.s8 %v2013
        %v2015 = vlaneseq
        %v2016 = vshrl.u32 %v2015, 7
        %v2017 = vsub.s32 %v2014, %v2016
        %v2018 = vrot.slane %v2004, %v2017
        %v2019 = vcombine.low %v2011, %v2018
        %v2020 = vcombine.low %v1335, %v1334
        %v2021 = vcombine.low %v1336, %v1344
        %v2023 = vunpack.c.l.s4 1983009808
        %v2024 = vunpack.c.0.s8 %v2023
        %v2025 = vlaneseq
        %v2026 = vshrl.u32 %v2025, 7
        %v2027 = vsub.s32 %v2024, %v2026
        %v2028 = vrot.slane %v2020, %v2027
        %v2030 = vunpack.c.l.s4 1983009808
        %v2031 = vunpack.c.0.s8 %v2030
        %v2032 = vlaneseq
        %v2033 = vshrl.u32 %v2032, 7
        %v2034 = vsub.s32 %v2031, %v2033
        %v2035 = vrot.slane %v2021, %v2034
        %v2036 = vcombine.low %v2028, %v2035
        %v2037 = vcombine.low %v1352, %v1351
        %v2038 = vcombine.low %v1353, %v1361
        %v2040 = vunpack.c.l.s4 1983009808
        %v2041 = vunpack.c.0.s8 %v2040
        %v2042 = vlaneseq
        %v2043 = vshrl.u32 %v2042, 7
        %v2044 = vsub.s32 %v2041, %v2043
        %v2045 = vrot.slane %v2037, %v2044
        %v2047 = vunpack.c.l.s4 1983009808
        %v2048 = vunpack.c.0.s8 %v2047
        %v2049 = vlaneseq
        %v2050 = vshrl.u32 %v2049, 7
        %v2051 = vsub.s32 %v2048, %v2050
        %v2052 = vrot.slane %v2038, %v2051
        %v2053 = vcombine.low %v2045, %v2052
        %v2054 = vcombine.low %v1369, %v1368
        %v2055 = vcombine.low %v1370, %v1378
        %v2057 = vunpack.c.l.s4 1983009808
        %v2058 = vunpack.c.0.s8 %v2057
        %v2059 = vlaneseq
        %v2060 = vshrl.u32 %v2059, 7
        %v2061 = vsub.s32 %v2058, %v2060
        %v2062 = vrot.slane %v2054, %v2061
        %v2064 = vunpack.c.l.s4 1983009808
        %v2065 = vunpack.c.0.s8 %v2064
        %v2066 = vlaneseq
        %v2067 = vshrl.u32 %v2066, 7
        %v2068 = vsub.s32 %v2065, %v2067
        %v2069 = vrot.slane %v2055, %v2068
        %v2070 = vcombine.low %v2062, %v2069
        %v2071 = vcombine.low %v1386, %v1385
        %v2072 = vcombine.low %v1387, %v1395
        %v2074 = vunpack.c.l.s4 1983009808
        %v2075 = vunpack.c.0.s8 %v2074
        %v2076 = vlaneseq
        %v2077 = vshrl.u32 %v2076, 7
        %v2078 = vsub.s32 %v2075, %v2077
        %v2079 = vrot.slane %v2071, %v2078
        %v2081 = vunpack.c.l.s4 1983009808
        %v2082 = vunpack.c.0.s8 %v2081
        %v2083 = vlaneseq
        %v2084 = vshrl.u32 %v2083, 7
        %v2085 = vsub.s32 %v2082, %v2084
        %v2086 = vrot.slane %v2072, %v2085
        %v2087 = vcombine.low %v2079, %v2086
        %v2088 = vcombine.low %v1403, %v1402
        %v2089 = vcombine.low %v1404, %v1412
        %v2091 = vunpack.c.l.s4 1983009808
        %v2092 = vunpack.c.0.s8 %v2091
        %v2093 = vlaneseq
        %v2094 = vshrl.u32 %v2093, 7
        %v2095 = vsub.s32 %v2092, %v2094
        %v2096 = vrot.slane %v2088, %v2095
        %v2098 = vunpack.c.l.s4 1983009808
        %v2099 = vunpack.c.0.s8 %v2098
        %v2100 = vlaneseq
        %v2101 = vshrl.u32 %v2100, 7
        %v2102 = vsub.s32 %v2099, %v2101
        %v2103 = vrot.slane %v2089, %v2102
        %v2104 = vcombine.low %v2096, %v2103
        %v2105 = vcombine.low %v1420, %v1419
        %v2106 = vcombine.low %v1428, %v1436
        %v2108 = vunpack.c.l.s4 1983009808
        %v2109 = vunpack.c.0.s8 %v2108
        %v2110 = vlaneseq
        %v2111 = vshrl.u32 %v2110, 7
        %v2112 = vsub.s32 %v2109, %v2111
        %v2113 = vrot.slane %v2105, %v2112
        %v2115 = vunpack.c.l.s4 1983009808
        %v2116 = vunpack.c.0.s8 %v2115
        %v2117 = vlaneseq
        %v2118 = vshrl.u32 %v2117, 7
        %v2119 = vsub.s32 %v2116, %v2118
        %v2120 = vrot.slane %v2106, %v2119
        %v2121 = vcombine.low %v2113, %v2120
        %v2122 = vcombine.low %v1435, %v1437
        %v2123 = vcombine.low %v1445, %v1453
        %v2125 = vunpack.c.l.s4 1983009808
        %v2126 = vunpack.c.0.s8 %v2125
        %v2127 = vlaneseq
        %v2128 = vshrl.u32 %v2127, 7
        %v2129 = vsub.s32 %v2126, %v2128
        %v2130 = vrot.slane %v2122, %v2129
        %v2132 = vunpack.c.l.s4 1983009808
        %v2133 = vunpack.c.0.s8 %v2132
        %v2134 = vlaneseq
        %v2135 = vshrl.u32 %v2134, 7
        %v2136 = vsub.s32 %v2133, %v2135
        %v2137 = vrot.slane %v2123, %v2136
        %v2138 = vcombine.low %v2130, %v2137
        %v2139 = vcombine.low %v1452, %v1454
        %v2140 = vcombine.low %v1462, %v1470
        %v2142 = vunpack.c.l.s4 1983009808
        %v2143 = vunpack.c.0.s8 %v2142
        %v2144 = vlaneseq
        %v2145 = vshrl.u32 %v2144, 7
        %v2146 = vsub.s32 %v2143, %v2145
        %v2147 = vrot.slane %v2139, %v2146
        %v2149 = vunpack.c.l.s4 1983009808
        %v2150 = vunpack.c.0.s8 %v2149
        %v2151 = vlaneseq
        %v2152 = vshrl.u32 %v2151, 7
        %v2153 = vsub.s32 %v2150, %v2152
        %v2154 = vrot.slane %v2140, %v2153
        %v2155 = vcombine.low %v2147, %v2154
        %v2156 = vcombine.low %v1469, %v1471
        %v2157 = vcombine.low %v1479, %v1487
        %v2159 = vunpack.c.l.s4 1983009808
        %v2160 = vunpack.c.0.s8 %v2159
        %v2161 = vlaneseq
        %v2162 = vshrl.u32 %v2161, 7
        %v2163 = vsub.s32 %v2160, %v2162
        %v2164 = vrot.slane %v2156, %v2163
        %v2166 = vunpack.c.l.s4 1983009808
        %v2167 = vunpack.c.0.s8 %v2166
        %v2168 = vlaneseq
        %v2169 = vshrl.u32 %v2168, 7
        %v2170 = vsub.s32 %v2167, %v2169
        %v2171 = vrot.slane %v2157, %v2170
        %v2172 = vcombine.low %v2164, %v2171
        %v2173 = vcombine.low %v1486, %v1488
        %v2174 = vcombine.low %v1496, %v1504
        %v2176 = vunpack.c.l.s4 1983009808
        %v2177 = vunpack.c.0.s8 %v2176
        %v2178 = vlaneseq
        %v2179 = vshrl.u32 %v2178, 7
        %v2180 = vsub.s32 %v2177, %v2179
        %v2181 = vrot.slane %v2173, %v2180
        %v2183 = vunpack.c.l.s4 1983009808
        %v2184 = vunpack.c.0.s8 %v2183
        %v2185 = vlaneseq
        %v2186 = vshrl.u32 %v2185, 7
        %v2187 = vsub.s32 %v2184, %v2186
        %v2188 = vrot.slane %v2174, %v2187
        %v2189 = vcombine.low %v2181, %v2188
        %v2190 = vcombine.low %v1503, %v1505
        %v2191 = vcombine.low %v1513, %v1521
        %v2193 = vunpack.c.l.s4 1983009808
        %v2194 = vunpack.c.0.s8 %v2193
        %v2195 = vlaneseq
        %v2196 = vshrl.u32 %v2195, 7
        %v2197 = vsub.s32 %v2194, %v2196
        %v2198 = vrot.slane %v2190, %v2197
        %v2200 = vunpack.c.l.s4 1983009808
        %v2201 = vunpack.c.0.s8 %v2200
        %v2202 = vlaneseq
        %v2203 = vshrl.u32 %v2202, 7
        %v2204 = vsub.s32 %v2201, %v2203
        %v2205 = vrot.slane %v2191, %v2204
        %v2206 = vcombine.low %v2198, %v2205
        %v2207 = vcombine.low %v1520, %v1522
        %v2208 = vcombine.low %v1530, %v1538
        %v2210 = vunpack.c.l.s4 1983009808
        %v2211 = vunpack.c.0.s8 %v2210
        %v2212 = vlaneseq
        %v2213 = vshrl.u32 %v2212, 7
        %v2214 = vsub.s32 %v2211, %v2213
        %v2215 = vrot.slane %v2207, %v2214
        %v2217 = vunpack.c.l.s4 1983009808
        %v2218 = vunpack.c.0.s8 %v2217
        %v2219 = vlaneseq
        %v2220 = vshrl.u32 %v2219, 7
        %v2221 = vsub.s32 %v2218, %v2220
        %v2222 = vrot.slane %v2208, %v2221
        %v2223 = vcombine.low %v2215, %v2222
        %v2224 = vcombine.low %v1537, %v1539
        %v2225 = vcombine.low %v1547, %v1555
        %v2227 = vunpack.c.l.s4 1983009808
        %v2228 = vunpack.c.0.s8 %v2227
        %v2229 = vlaneseq
        %v2230 = vshrl.u32 %v2229, 7
        %v2231 = vsub.s32 %v2228, %v2230
        %v2232 = vrot.slane %v2224, %v2231
        %v2234 = vunpack.c.l.s4 1983009808
        %v2235 = vunpack.c.0.s8 %v2234
        %v2236 = vlaneseq
        %v2237 = vshrl.u32 %v2236, 7
        %v2238 = vsub.s32 %v2235, %v2237
        %v2239 = vrot.slane %v2225, %v2238
        %v2240 = vcombine.low %v2232, %v2239
        %v2241 = vcombine.low %v1554, %v1556
        %v2242 = vcombine.low %v1564, %v1572
        %v2244 = vunpack.c.l.s4 1983009808
        %v2245 = vunpack.c.0.s8 %v2244
        %v2246 = vlaneseq
        %v2247 = vshrl.u32 %v2246, 7
        %v2248 = vsub.s32 %v2245, %v2247
        %v2249 = vrot.slane %v2241, %v2248
        %v2251 = vunpack.c.l.s4 1983009808
        %v2252 = vunpack.c.0.s8 %v2251
        %v2253 = vlaneseq
        %v2254 = vshrl.u32 %v2253, 7
        %v2255 = vsub.s32 %v2252, %v2254
        %v2256 = vrot.slane %v2242, %v2255
        %v2257 = vcombine.low %v2249, %v2256
        %v2258 = vcombine.low %v1571, %v1573
        %v2259 = vcombine.low %v1581, %v1589
        %v2261 = vunpack.c.l.s4 1983009808
        %v2262 = vunpack.c.0.s8 %v2261
        %v2263 = vlaneseq
        %v2264 = vshrl.u32 %v2263, 7
        %v2265 = vsub.s32 %v2262, %v2264
        %v2266 = vrot.slane %v2258, %v2265
        %v2268 = vunpack.c.l.s4 1983009808
        %v2269 = vunpack.c.0.s8 %v2268
        %v2270 = vlaneseq
        %v2271 = vshrl.u32 %v2270, 7
        %v2272 = vsub.s32 %v2269, %v2271
        %v2273 = vrot.slane %v2259, %v2272
        %v2274 = vcombine.low %v2266, %v2273
        %v2275 = vcombine.low %v1588, %v1597
        %v2276 = vcombine.low %v1605, %v1604
        %v2278 = vunpack.c.l.s4 1983009808
        %v2279 = vunpack.c.0.s8 %v2278
        %v2280 = vlaneseq
        %v2281 = vshrl.u32 %v2280, 7
        %v2282 = vsub.s32 %v2279, %v2281
        %v2283 = vrot.slane %v2275, %v2282
        %v2285 = vunpack.c.l.s4 1983009808
        %v2286 = vunpack.c.0.s8 %v2285
        %v2287 = vlaneseq
        %v2288 = vshrl.u32 %v2287, 7
        %v2289 = vsub.s32 %v2286, %v2288
        %v2290 = vrot.slane %v2276, %v2289
        %v2291 = vcombine.low %v2283, %v2290
        %v2292 = vcombine.low %v1606, %v1614
        %v2293 = vcombine.low %v1622, %v1621
        %v2295 = vunpack.c.l.s4 1983009808
        %v2296 = vunpack.c.0.s8 %v2295
        %v2297 = vlaneseq
        %v2298 = vshrl.u32 %v2297, 7
        %v2299 = vsub.s32 %v2296, %v2298
        %v2300 = vrot.slane %v2292, %v2299
        %v2302 = vunpack.c.l.s4 1983009808
        %v2303 = vunpack.c.0.s8 %v2302
        %v2304 = vlaneseq
        %v2305 = vshrl.u32 %v2304, 7
        %v2306 = vsub.s32 %v2303, %v2305
        %v2307 = vrot.slane %v2293, %v2306
        %v2308 = vcombine.low %v2300, %v2307
        %v2309 = vcombine.low %v1623, %v1631
        %v2310 = vcombine.low %v1639, %v1638
        %v2312 = vunpack.c.l.s4 1983009808
        %v2313 = vunpack.c.0.s8 %v2312
        %v2314 = vlaneseq
        %v2315 = vshrl.u32 %v2314, 7
        %v2316 = vsub.s32 %v2313, %v2315
        %v2317 = vrot.slane %v2309, %v2316
        %v2319 = vunpack.c.l.s4 1983009808
        %v2320 = vunpack.c.0.s8 %v2319
        %v2321 = vlaneseq
        %v2322 = vshrl.u32 %v2321, 7
        %v2323 = vsub.s32 %v2320, %v2322
        %v2324 = vrot.slane %v2310, %v2323
        %v2325 = vcombine.low %v2317, %v2324
        %v2326 = vcombine.low %v1640, %v1648
        %v2327 = vcombine.low %v1656, %v1655
        %v2329 = vunpack.c.l.s4 1983009808
        %v2330 = vunpack.c.0.s8 %v2329
        %v2331 = vlaneseq
        %v2332 = vshrl.u32 %v2331, 7
        %v2333 = vsub.s32 %v2330, %v2332
        %v2334 = vrot.slane %v2326, %v2333
        %v2336 = vunpack.c.l.s4 1983009808
        %v2337 = vunpack.c.0.s8 %v2336
        %v2338 = vlaneseq
        %v2339 = vshrl.u32 %v2338, 7
        %v2340 = vsub.s32 %v2337, %v2339
        %v2341 = vrot.slane %v2327, %v2340
        %v2342 = vcombine.low %v2334, %v2341
        %v2343 = vcombine.low %v1657, %v1665
        %v2344 = vcombine.low %v1673, %v1672
        %v2346 = vunpack.c.l.s4 1983009808
        %v2347 = vunpack.c.0.s8 %v2346
        %v2348 = vlaneseq
        %v2349 = vshrl.u32 %v2348, 7
        %v2350 = vsub.s32 %v2347, %v2349
        %v2351 = vrot.slane %v2343, %v2350
        %v2353 = vunpack.c.l.s4 1983009808
        %v2354 = vunpack.c.0.s8 %v2353
        %v2355 = vlaneseq
        %v2356 = vshrl.u32 %v2355, 7
        %v2357 = vsub.s32 %v2354, %v2356
        %v2358 = vrot.slane %v2344, %v2357
        %v2359 = vcombine.low %v2351, %v2358
        %v2360 = vcombine.low %v1674, %v1682
        %v2361 = vcombine.low %v1690, %v1689
        %v2363 = vunpack.c.l.s4 1983009808
        %v2364 = vunpack.c.0.s8 %v2363
        %v2365 = vlaneseq
        %v2366 = vshrl.u32 %v2365, 7
        %v2367 = vsub.s32 %v2364, %v2366
        %v2368 = vrot.slane %v2360, %v2367
        %v2370 = vunpack.c.l.s4 1983009808
        %v2371 = vunpack.c.0.s8 %v2370
        %v2372 = vlaneseq
        %v2373 = vshrl.u32 %v2372, 7
        %v2374 = vsub.s32 %v2371, %v2373
        %v2375 = vrot.slane %v2361, %v2374
        %v2376 = vcombine.low %v2368, %v2375
        %v2377 = vcombine.low %v1691, %v1699
        %v2378 = vcombine.low %v1707, %v1706
        %v2380 = vunpack.c.l.s4 1983009808
        %v2381 = vunpack.c.0.s8 %v2380
        %v2382 = vlaneseq
        %v2383 = vshrl.u32 %v2382, 7
        %v2384 = vsub.s32 %v2381, %v2383
        %v2385 = vrot.slane %v2377, %v2384
        %v2387 = vunpack.c.l.s4 1983009808
        %v2388 = vunpack.c.0.s8 %v2387
        %v2389 = vlaneseq
        %v2390 = vshrl.u32 %v2389, 7
        %v2391 = vsub.s32 %v2388, %v2390
        %v2392 = vrot.slane %v2378, %v2391
        %v2393 = vcombine.low %v2385, %v2392
        %v2394 = vcombine.low %v1708, %v1716
        %v2395 = vcombine.low %v1724, %v1723
        %v2397 = vunpack.c.l.s4 1983009808
        %v2398 = vunpack.c.0.s8 %v2397
        %v2399 = vlaneseq
        %v2400 = vshrl.u32 %v2399, 7
        %v2401 = vsub.s32 %v2398, %v2400
        %v2402 = vrot.slane %v2394, %v2401
        %v2404 = vunpack.c.l.s4 1983009808
        %v2405 = vunpack.c.0.s8 %v2404
        %v2406 = vlaneseq
        %v2407 = vshrl.u32 %v2406, 7
        %v2408 = vsub.s32 %v2405, %v2407
        %v2409 = vrot.slane %v2395, %v2408
        %v2410 = vcombine.low %v2402, %v2409
        %v2411 = vcombine.low %v1725, %v1733
        %v2412 = vcombine.low %v1741, %v1740
        %v2414 = vunpack.c.l.s4 1983009808
        %v2415 = vunpack.c.0.s8 %v2414
        %v2416 = vlaneseq
        %v2417 = vshrl.u32 %v2416, 7
        %v2418 = vsub.s32 %v2415, %v2417
        %v2419 = vrot.slane %v2411, %v2418
        %v2421 = vunpack.c.l.s4 1983009808
        %v2422 = vunpack.c.0.s8 %v2421
        %v2423 = vlaneseq
        %v2424 = vshrl.u32 %v2423, 7
        %v2425 = vsub.s32 %v2422, %v2424
        %v2426 = vrot.slane %v2412, %v2425
        %v2427 = vcombine.low %v2419, %v2426
        %v2428 = vcombine.low %v1742, %v1750
        %v2429 = vcombine.low %v1758, %v1757
        %v2431 = vunpack.c.l.s4 1983009808
        %v2432 = vunpack.c.0.s8 %v2431
        %v2433 = vlaneseq
        %v2434 = vshrl.u32 %v2433, 7
        %v2435 = vsub.s32 %v2432, %v2434
        %v2436 = vrot.slane %v2428, %v2435
        %v2438 = vunpack.c.l.s4 1983009808
        %v2439 = vunpack.c.0.s8 %v2438
        %v2440 = vlaneseq
        %v2441 = vshrl.u32 %v2440, 7
        %v2442 = vsub.s32 %v2439, %v2441
        %v2443 = vrot.slane %v2429, %v2442
        %v2444 = vcombine.low %v2436, %v2443
        %2484 = vmatprep.subr.mxu0 0.0
        %2485 = vmatpush1.msra.mxu0 %v1759
        %2486 = vmatprep.subr.mxu0 0.0
        %2487 = vmatpush1.msra.mxu0 %v1760
        %2488 = vmatprep.subr.mxu0 0.0
        %2489 = vmatpush1.msra.mxu0 %v1761
        %2490 = vmatprep.subr.mxu0 0.0
        %2491 = vmatpush1.msra.mxu0 %v1762
        %2492 = vmatprep.subr.mxu0 0.0
        %2493 = vmatpush1.msra.mxu0 %v1763
        %2494 = vmatprep.subr.mxu0 0.0
        %2495 = vmatpush1.msra.mxu0 %v1764
        %2496 = vmatprep.subr.mxu0 0.0
        %2497 = vmatpush1.msra.mxu0 %v1765
        %2498 = vmatprep.subr.mxu0 0.0
        %2499 = vmatpush1.msra.mxu0 %v1766
        %2500 = vmatprep.subr.mxu0 0.0
        %2501 = vmatpush1.msra.mxu0 %v1767
        %2502 = vmatprep.subr.mxu0 0.0
        %2503 = vmatpush1.msra.mxu0 %v1768
        %2504 = vmatprep.subr.mxu0 0.0
        %2505 = vmatpush1.msra.mxu0 %v1769
        %2506 = vmatprep.subr.mxu0 0.0
        %2507 = vmatpush1.msra.mxu0 %v1770
        %2508 = vmatprep.subr.mxu0 0.0
        %2509 = vmatpush1.msra.mxu0 %v1771
        %2510 = vmatprep.subr.mxu0 0.0
        %2511 = vmatpush1.msra.mxu0 %v1772
        %2512 = vmatprep.subr.mxu0 0.0
        %2513 = vmatpush1.msra.mxu0 %v1773
        %2514 = vmatprep.subr.mxu0 0.0
        %2515 = vmatpush1.msra.mxu0 %v1774
        %2516 = vmatprep.subr.mxu0 0.0
        %2517 = vmatpush1.msra.mxu0 0.0
        %2518 = vmatprep.subr.mxu0 0.0
        %2519 = vmatpush1.msra.mxu0 0.0
        %2520 = vmatprep.subr.mxu0 0.0
        %2521 = vmatpush1.msra.mxu0 0.0
        %2522 = vmatprep.subr.mxu0 0.0
        %2523 = vmatpush1.msra.mxu0 0.0
        %2524 = vmatprep.subr.mxu0 0.0
        %2525 = vmatpush1.msra.mxu0 0.0
        %2526 = vmatprep.subr.mxu0 0.0
        %2527 = vmatpush1.msra.mxu0 0.0
        %2528 = vmatprep.subr.mxu0 0.0
        %2529 = vmatpush1.msra.mxu0 0.0
        %2530 = vmatprep.subr.mxu0 0.0
        %2531 = vmatpush1.msra.mxu0 0.0
        %2532 = vmatprep.subr.mxu0 0.0
        %2533 = vmatpush1.msra.mxu0 0.0
        %2534 = vmatprep.subr.mxu0 0.0
        %2535 = vmatpush1.msra.mxu0 0.0
        %2536 = vmatprep.subr.mxu0 0.0
        %2537 = vmatpush1.msra.mxu0 0.0
        %2538 = vmatprep.subr.mxu0 0.0
        %2539 = vmatpush1.msra.mxu0 0.0
        %2540 = vmatprep.subr.mxu0 0.0
        %2541 = vmatpush1.msra.mxu0 0.0
        %2542 = vmatprep.subr.mxu0 0.0
        %2543 = vmatpush1.msra.mxu0 0.0
        %2544 = vmatprep.subr.mxu0 0.0
        %2545 = vmatpush1.msra.mxu0 0.0
        %2546 = vmatprep.subr.mxu0 0.0
        %2547 = vmatpush1.msra.mxu0 0.0
        %2548 = vmatprep.mubr.f32.mxu0 0.0
        %2549 = vmatmul.mubr.f32.gmra.mrb[0].mxu0 %v1798
        %v2550 = vpop.f32.mrb[0].mxu0
        %v2551 = vadd.f32 %v1780, %v2550
        %v2552 = vpop.f32.mrb[0].mxu0
        %2553 = vmatprep.mubr.f32.mxu0 0.0
        %2554 = vmatmul.mubr.f32.gmra.mrb[0].mxu0 %v1815
        %v2555 = vpop.f32.mrb[0].mxu0
        %v2556 = vadd.f32 %v1780, %v2555
        %v2557 = vpop.f32.mrb[0].mxu0
        %2558 = vmatprep.mubr.f32.mxu0 0.0
        %2559 = vmatmul.mubr.f32.gmra.mrb[0].mxu0 %v1832
        %v2560 = vpop.f32.mrb[0].mxu0
        %v2561 = vadd.f32 %v1780, %v2560
        %v2562 = vpop.f32.mrb[0].mxu0
        %2563 = vmatprep.mubr.f32.mxu0 0.0
        %2564 = vmatmul.mubr.f32.gmra.mrb[0].mxu0 %v1849
        %v2565 = vpop.f32.mrb[0].mxu0
        %v2566 = vadd.f32 %v1780, %v2565
        %v2567 = vpop.f32.mrb[0].mxu0
        %2568 = vmatprep.mubr.f32.mxu0 0.0
        %2569 = vmatmul.mubr.f32.gmra.mrb[0].mxu0 %v1866
        %v2570 = vpop.f32.mrb[0].mxu0
        %v2571 = vadd.f32 %v1780, %v2570
        %v2572 = vpop.f32.mrb[0].mxu0
        %2573 = vmatprep.mubr.f32.mxu0 0.0
        %2574 = vmatmul.mubr.f32.gmra.mrb[0].mxu0 %v1883
        %v2575 = vpop.f32.mrb[0].mxu0
        %v2576 = vadd.f32 %v1780, %v2575
        %v2577 = vpop.f32.mrb[0].mxu0
        %2578 = vmatprep.mubr.f32.mxu0 0.0
        %2579 = vmatmul.mubr.f32.gmra.mrb[0].mxu0 %v1900
        %v2580 = vpop.f32.mrb[0].mxu0
        %v2581 = vadd.f32 %v1780, %v2580
        %v2582 = vpop.f32.mrb[0].mxu0
        %2583 = vmatprep.mubr.f32.mxu0 0.0
        %2584 = vmatmul.mubr.f32.gmra.mrb[0].mxu0 %v1917
        %v2585 = vpop.f32.mrb[0].mxu0
        %v2586 = vadd.f32 %v1780, %v2585
        %v2587 = vpop.f32.mrb[0].mxu0
        %2588 = vmatprep.mubr.f32.mxu0 0.0
        %2589 = vmatmul.mubr.f32.gmra.mrb[0].mxu0 %v1934
        %v2590 = vpop.f32.mrb[0].mxu0
        %v2591 = vadd.f32 %v1780, %v2590
        %v2592 = vpop.f32.mrb[0].mxu0
        %2593 = vmatprep.mubr.f32.mxu0 0.0
        %2594 = vmatmul.mubr.f32.gmra.mrb[0].mxu0 %v1951
        %v2595 = vpop.f32.mrb[0].mxu0
        %v2596 = vadd.f32 %v1780, %v2595
        %v2597 = vpop.f32.mrb[0].mxu0
        %2598 = vmatprep.mubr.f32.mxu0 0.0
        %2599 = vmatmul.mubr.f32.gmra.mrb[0].mxu0 %v1968
        %v2600 = vpop.f32.mrb[0].mxu0
        %v2601 = vadd.f32 %v1780, %v2600
        %v2602 = vpop.f32.mrb[0].mxu0
        %2603 = vmatprep.mubr.f32.mxu0 0.0
        %2604 = vmatmul.mubr.f32.gmra.mrb[0].mxu0 %v1985
        %v2605 = vpop.f32.mrb[0].mxu0
        %v2606 = vadd.f32 %v1780, %v2605
        %v2607 = vpop.f32.mrb[0].mxu0
        %2608 = vmatprep.mubr.f32.mxu0 0.0
        %2609 = vmatmul.mubr.f32.gmra.mrb[0].mxu0 %v2002
        %v2610 = vpop.f32.mrb[0].mxu0
        %v2611 = vadd.f32 %v1780, %v2610
        %v2612 = vpop.f32.mrb[0].mxu0
        %2613 = vmatprep.mubr.f32.mxu0 0.0
        %2614 = vmatmul.mubr.f32.gmra.mrb[0].mxu0 %v2019
        %v2615 = vpop.f32.mrb[0].mxu0
        %v2616 = vadd.f32 %v1780, %v2615
        %v2617 = vpop.f32.mrb[0].mxu0
        %2618 = vmatprep.mubr.f32.mxu0 0.0
        %2619 = vmatmul.mubr.f32.gmra.mrb[0].mxu0 %v2036
        %v2620 = vpop.f32.mrb[0].mxu0
        %v2621 = vadd.f32 %v1780, %v2620
        %v2622 = vpop.f32.mrb[0].mxu0
        %2623 = vmatprep.mubr.f32.mxu0 0.0
        %2624 = vmatmul.mubr.f32.gmra.mrb[0].mxu0 %v2053
        %v2625 = vpop.f32.mrb[0].mxu0
        %v2626 = vadd.f32 %v1780, %v2625
        %v2627 = vpop.f32.mrb[0].mxu0
        %2628 = vmatprep.mubr.f32.mxu0 0.0
        %2629 = vmatmul.mubr.f32.gmra.mrb[0].mxu0 %v2070
        %v2630 = vpop.f32.mrb[0].mxu0
        %v2631 = vadd.f32 %v1780, %v2630
        %v2632 = vpop.f32.mrb[0].mxu0
        %2633 = vmatprep.mubr.f32.mxu0 0.0
        %2634 = vmatmul.mubr.f32.gmra.mrb[0].mxu0 %v2087
        %v2635 = vpop.f32.mrb[0].mxu0
        %v2636 = vadd.f32 %v1780, %v2635
        %v2637 = vpop.f32.mrb[0].mxu0
        %2638 = vmatprep.mubr.f32.mxu0 0.0
        %2639 = vmatmul.mubr.f32.gmra.mrb[0].mxu0 %v2104
        %v2640 = vpop.f32.mrb[0].mxu0
        %v2641 = vadd.f32 %v1780, %v2640
        %v2642 = vpop.f32.mrb[0].mxu0
        %2643 = vmatprep.mubr.f32.mxu0 0.0
        %2644 = vmatmul.mubr.f32.gmra.mrb[0].mxu0 %v2121
        %v2645 = vpop.f32.mrb[0].mxu0
        %v2646 = vadd.f32 %v1780, %v2645
        %v2647 = vpop.f32.mrb[0].mxu0
        %2648 = vmatprep.mubr.f32.mxu0 0.0
        %2649 = vmatmul.mubr.f32.gmra.mrb[0].mxu0 %v2138
        %v2650 = vpop.f32.mrb[0].mxu0
        %v2651 = vadd.f32 %v1780, %v2650
        %v2652 = vpop.f32.mrb[0].mxu0
        %2653 = vmatprep.mubr.f32.mxu0 0.0
        %2654 = vmatmul.mubr.f32.gmra.mrb[0].mxu0 %v2155
        %v2655 = vpop.f32.mrb[0].mxu0
        %v2656 = vadd.f32 %v1780, %v2655
        %v2657 = vpop.f32.mrb[0].mxu0
        %2658 = vmatprep.mubr.f32.mxu0 0.0
        %2659 = vmatmul.mubr.f32.gmra.mrb[0].mxu0 %v2172
        %v2660 = vpop.f32.mrb[0].mxu0
        %v2661 = vadd.f32 %v1780, %v2660
        %v2662 = vpop.f32.mrb[0].mxu0
        %2663 = vmatprep.mubr.f32.mxu0 0.0
        %2664 = vmatmul.mubr.f32.gmra.mrb[0].mxu0 %v2189
        %v2665 = vpop.f32.mrb[0].mxu0
        %v2666 = vadd.f32 %v1780, %v2665
        %v2667 = vpop.f32.mrb[0].mxu0
        %2668 = vmatprep.mubr.f32.mxu0 0.0
        %2669 = vmatmul.mubr.f32.gmra.mrb[0].mxu0 %v2206
        %v2670 = vpop.f32.mrb[0].mxu0
        %v2671 = vadd.f32 %v1780, %v2670
        %v2672 = vpop.f32.mrb[0].mxu0
        %2673 = vmatprep.mubr.f32.mxu0 0.0
        %2674 = vmatmul.mubr.f32.gmra.mrb[0].mxu0 %v2223
        %v2675 = vpop.f32.mrb[0].mxu0
        %v2676 = vadd.f32 %v1780, %v2675
        %v2677 = vpop.f32.mrb[0].mxu0
        %2678 = vmatprep.mubr.f32.mxu0 0.0
        %2679 = vmatmul.mubr.f32.gmra.mrb[0].mxu0 %v2240
        %v2680 = vpop.f32.mrb[0].mxu0
        %v2681 = vadd.f32 %v1780, %v2680
        %v2682 = vpop.f32.mrb[0].mxu0
        %2683 = vmatprep.mubr.f32.mxu0 0.0
        %2684 = vmatmul.mubr.f32.gmra.mrb[0].mxu0 %v2257
        %v2685 = vpop.f32.mrb[0].mxu0
        %v2686 = vadd.f32 %v1780, %v2685
        %v2687 = vpop.f32.mrb[0].mxu0
        %2688 = vmatprep.mubr.f32.mxu0 0.0
        %2689 = vmatmul.mubr.f32.gmra.mrb[0].mxu0 %v2274
        %v2690 = vpop.f32.mrb[0].mxu0
        %v2691 = vadd.f32 %v1780, %v2690
        %v2692 = vpop.f32.mrb[0].mxu0
        %2693 = vmatprep.mubr.f32.mxu0 0.0
        %2694 = vmatmul.mubr.f32.gmra.mrb[0].mxu0 %v2291
        %v2695 = vpop.f32.mrb[0].mxu0
        %v2696 = vadd.f32 %v1780, %v2695
        %v2697 = vpop.f32.mrb[0].mxu0
        %2698 = vmatprep.mubr.f32.mxu0 0.0
        %2699 = vmatmul.mubr.f32.gmra.mrb[0].mxu0 %v2308
        %v2700 = vpop.f32.mrb[0].mxu0
        %v2701 = vadd.f32 %v1780, %v2700
        %v2702 = vpop.f32.mrb[0].mxu0
        %2703 = vmatprep.mubr.f32.mxu0 0.0
        %2704 = vmatmul.mubr.f32.gmra.mrb[0].mxu0 %v2325
        %v2705 = vpop.f32.mrb[0].mxu0
        %v2706 = vadd.f32 %v1780, %v2705
        %v2707 = vpop.f32.mrb[0].mxu0
        %2708 = vmatprep.mubr.f32.mxu0 0.0
        %2709 = vmatmul.mubr.f32.gmra.mrb[0].mxu0 %v2342
        %v2710 = vpop.f32.mrb[0].mxu0
        %v2711 = vadd.f32 %v1780, %v2710
        %v2712 = vpop.f32.mrb[0].mxu0
        %2713 = vmatprep.mubr.f32.mxu0 0.0
        %2714 = vmatmul.mubr.f32.gmra.mrb[0].mxu0 %v2359
        %v2715 = vpop.f32.mrb[0].mxu0
        %v2716 = vadd.f32 %v1780, %v2715
        %v2717 = vpop.f32.mrb[0].mxu0
        %2718 = vmatprep.mubr.f32.mxu0 0.0
        %2719 = vmatmul.mubr.f32.gmra.mrb[0].mxu0 %v2376
        %v2720 = vpop.f32.mrb[0].mxu0
        %v2721 = vadd.f32 %v1780, %v2720
        %v2722 = vpop.f32.mrb[0].mxu0
        %2723 = vmatprep.mubr.f32.mxu0 0.0
        %2724 = vmatmul.mubr.f32.gmra.mrb[0].mxu0 %v2393
        %v2725 = vpop.f32.mrb[0].mxu0
        %v2726 = vadd.f32 %v1780, %v2725
        %v2727 = vpop.f32.mrb[0].mxu0
        %2728 = vmatprep.mubr.f32.mxu0 0.0
        %2729 = vmatmul.mubr.f32.gmra.mrb[0].mxu0 %v2410
        %v2730 = vpop.f32.mrb[0].mxu0
        %v2731 = vadd.f32 %v1780, %v2730
        %v2732 = vpop.f32.mrb[0].mxu0
        %2733 = vmatprep.mubr.f32.mxu0 0.0
        %2734 = vmatmul.mubr.f32.gmra.mrb[0].mxu0 %v2427
        %v2735 = vpop.f32.mrb[0].mxu0
        %v2736 = vadd.f32 %v1780, %v2735
        %v2737 = vpop.f32.mrb[0].mxu0
        %2738 = vmatprep.mubr.f32.mxu0 0.0
        %2739 = vmatmul.mubr.f32.gmra.mrb[0].mxu0 %v2444
        %v2740 = vpop.f32.mrb[0].mxu0
        %v2741 = vadd.f32 %v1780, %v2740
        %v2742 = vpop.f32.mrb[0].mxu0
        %2743 = vdwg.mxu0
        %v2783 = vcombine.high %v2551, %v2551
        %v2785 = vunpack.c.l.s4 1966171168
        %v2786 = vunpack.c.0.s8 %v2785
        %v2787 = vlaneseq
        %v2788 = vshrl.u32 %v2787, 7
        %v2789 = vsub.s32 %v2786, %v2788
        %v2790 = vrot.slane %v2551, %v2789
        %v2792 = vunpack.c.l.s4 1966171168
        %v2793 = vunpack.c.0.s8 %v2792
        %v2794 = vlaneseq
        %v2795 = vshrl.u32 %v2794, 7
        %v2796 = vsub.s32 %v2793, %v2795
        %v2797 = vrot.slane %v2783, %v2796
        %v2798 = vcombine.high %v2790, %v2790
        %v2799 = vcombine.high %v2797, %v2797
        %v2801 = vunpack.c.l.s4 1966171168
        %v2802 = vunpack.c.0.s8 %v2801
        %v2803 = vlaneseq
        %v2804 = vshrl.u32 %v2803, 7
        %v2805 = vsub.s32 %v2802, %v2804
        %v2806 = vrot.slane %v2790, %v2805
        %v2808 = vunpack.c.l.s4 1966171168
        %v2809 = vunpack.c.0.s8 %v2808
        %v2810 = vlaneseq
        %v2811 = vshrl.u32 %v2810, 7
        %v2812 = vsub.s32 %v2809, %v2811
        %v2813 = vrot.slane %v2797, %v2812
        %v2815 = vunpack.c.l.s4 1966171168
        %v2816 = vunpack.c.0.s8 %v2815
        %v2817 = vlaneseq
        %v2818 = vshrl.u32 %v2817, 7
        %v2819 = vsub.s32 %v2816, %v2818
        %v2820 = vrot.slane %v2798, %v2819
        %v2822 = vunpack.c.l.s4 1966171168
        %v2823 = vunpack.c.0.s8 %v2822
        %v2824 = vlaneseq
        %v2825 = vshrl.u32 %v2824, 7
        %v2826 = vsub.s32 %v2823, %v2825
        %v2827 = vrot.slane %v2799, %v2826
        %v2828 = vcombine.high %v2806, %v2806
        %v2829 = vcombine.high %v2813, %v2813
        %v2830 = vcombine.high %v2820, %v2820
        %v2831 = vcombine.high %v2827, %v2827
        %v2832 = vcombine.high %v2556, %v2556
        %v2834 = vunpack.c.l.s4 1966171168
        %v2835 = vunpack.c.0.s8 %v2834
        %v2836 = vlaneseq
        %v2837 = vshrl.u32 %v2836, 7
        %v2838 = vsub.s32 %v2835, %v2837
        %v2839 = vrot.slane %v2556, %v2838
        %v2841 = vunpack.c.l.s4 1966171168
        %v2842 = vunpack.c.0.s8 %v2841
        %v2843 = vlaneseq
        %v2844 = vshrl.u32 %v2843, 7
        %v2845 = vsub.s32 %v2842, %v2844
        %v2846 = vrot.slane %v2832, %v2845
        %v2847 = vcombine.high %v2839, %v2839
        %v2848 = vcombine.high %v2846, %v2846
        %v2850 = vunpack.c.l.s4 1966171168
        %v2851 = vunpack.c.0.s8 %v2850
        %v2852 = vlaneseq
        %v2853 = vshrl.u32 %v2852, 7
        %v2854 = vsub.s32 %v2851, %v2853
        %v2855 = vrot.slane %v2839, %v2854
        %v2857 = vunpack.c.l.s4 1966171168
        %v2858 = vunpack.c.0.s8 %v2857
        %v2859 = vlaneseq
        %v2860 = vshrl.u32 %v2859, 7
        %v2861 = vsub.s32 %v2858, %v2860
        %v2862 = vrot.slane %v2846, %v2861
        %v2864 = vunpack.c.l.s4 1966171168
        %v2865 = vunpack.c.0.s8 %v2864
        %v2866 = vlaneseq
        %v2867 = vshrl.u32 %v2866, 7
        %v2868 = vsub.s32 %v2865, %v2867
        %v2869 = vrot.slane %v2847, %v2868
        %v2871 = vunpack.c.l.s4 1966171168
        %v2872 = vunpack.c.0.s8 %v2871
        %v2873 = vlaneseq
        %v2874 = vshrl.u32 %v2873, 7
        %v2875 = vsub.s32 %v2872, %v2874
        %v2876 = vrot.slane %v2848, %v2875
        %v2877 = vcombine.high %v2855, %v2855
        %v2878 = vcombine.high %v2862, %v2862
        %v2879 = vcombine.high %v2869, %v2869
        %v2880 = vcombine.high %v2876, %v2876
        %v2881 = vcombine.high %v2561, %v2561
        %v2883 = vunpack.c.l.s4 1966171168
        %v2884 = vunpack.c.0.s8 %v2883
        %v2885 = vlaneseq
        %v2886 = vshrl.u32 %v2885, 7
        %v2887 = vsub.s32 %v2884, %v2886
        %v2888 = vrot.slane %v2561, %v2887
        %v2890 = vunpack.c.l.s4 1966171168
        %v2891 = vunpack.c.0.s8 %v2890
        %v2892 = vlaneseq
        %v2893 = vshrl.u32 %v2892, 7
        %v2894 = vsub.s32 %v2891, %v2893
        %v2895 = vrot.slane %v2881, %v2894
        %v2896 = vcombine.high %v2888, %v2888
        %v2897 = vcombine.high %v2895, %v2895
        %v2899 = vunpack.c.l.s4 1966171168
        %v2900 = vunpack.c.0.s8 %v2899
        %v2901 = vlaneseq
        %v2902 = vshrl.u32 %v2901, 7
        %v2903 = vsub.s32 %v2900, %v2902
        %v2904 = vrot.slane %v2888, %v2903
        %v2906 = vunpack.c.l.s4 1966171168
        %v2907 = vunpack.c.0.s8 %v2906
        %v2908 = vlaneseq
        %v2909 = vshrl.u32 %v2908, 7
        %v2910 = vsub.s32 %v2907, %v2909
        %v2911 = vrot.slane %v2895, %v2910
        %v2913 = vunpack.c.l.s4 1966171168
        %v2914 = vunpack.c.0.s8 %v2913
        %v2915 = vlaneseq
        %v2916 = vshrl.u32 %v2915, 7
        %v2917 = vsub.s32 %v2914, %v2916
        %v2918 = vrot.slane %v2896, %v2917
        %v2920 = vunpack.c.l.s4 1966171168
        %v2921 = vunpack.c.0.s8 %v2920
        %v2922 = vlaneseq
        %v2923 = vshrl.u32 %v2922, 7
        %v2924 = vsub.s32 %v2921, %v2923
        %v2925 = vrot.slane %v2897, %v2924
        %v2926 = vcombine.high %v2904, %v2904
        %v2927 = vcombine.high %v2911, %v2911
        %v2928 = vcombine.high %v2918, %v2918
        %v2929 = vcombine.high %v2925, %v2925
        %v2930 = vcombine.high %v2566, %v2566
        %v2932 = vunpack.c.l.s4 1966171168
        %v2933 = vunpack.c.0.s8 %v2932
        %v2934 = vlaneseq
        %v2935 = vshrl.u32 %v2934, 7
        %v2936 = vsub.s32 %v2933, %v2935
        %v2937 = vrot.slane %v2566, %v2936
        %v2939 = vunpack.c.l.s4 1966171168
        %v2940 = vunpack.c.0.s8 %v2939
        %v2941 = vlaneseq
        %v2942 = vshrl.u32 %v2941, 7
        %v2943 = vsub.s32 %v2940, %v2942
        %v2944 = vrot.slane %v2930, %v2943
        %v2945 = vcombine.high %v2937, %v2937
        %v2946 = vcombine.high %v2944, %v2944
        %v2948 = vunpack.c.l.s4 1966171168
        %v2949 = vunpack.c.0.s8 %v2948
        %v2950 = vlaneseq
        %v2951 = vshrl.u32 %v2950, 7
        %v2952 = vsub.s32 %v2949, %v2951
        %v2953 = vrot.slane %v2937, %v2952
        %v2955 = vunpack.c.l.s4 1966171168
        %v2956 = vunpack.c.0.s8 %v2955
        %v2957 = vlaneseq
        %v2958 = vshrl.u32 %v2957, 7
        %v2959 = vsub.s32 %v2956, %v2958
        %v2960 = vrot.slane %v2944, %v2959
        %v2962 = vunpack.c.l.s4 1966171168
        %v2963 = vunpack.c.0.s8 %v2962
        %v2964 = vlaneseq
        %v2965 = vshrl.u32 %v2964, 7
        %v2966 = vsub.s32 %v2963, %v2965
        %v2967 = vrot.slane %v2945, %v2966
        %v2969 = vunpack.c.l.s4 1966171168
        %v2970 = vunpack.c.0.s8 %v2969
        %v2971 = vlaneseq
        %v2972 = vshrl.u32 %v2971, 7
        %v2973 = vsub.s32 %v2970, %v2972
        %v2974 = vrot.slane %v2946, %v2973
        %v2975 = vcombine.high %v2953, %v2953
        %v2976 = vcombine.high %v2960, %v2960
        %v2977 = vcombine.high %v2967, %v2967
        %v2978 = vcombine.high %v2974, %v2974
        %v2979 = vcombine.high %v2571, %v2571
        %v2981 = vunpack.c.l.s4 1966171168
        %v2982 = vunpack.c.0.s8 %v2981
        %v2983 = vlaneseq
        %v2984 = vshrl.u32 %v2983, 7
        %v2985 = vsub.s32 %v2982, %v2984
        %v2986 = vrot.slane %v2571, %v2985
        %v2988 = vunpack.c.l.s4 1966171168
        %v2989 = vunpack.c.0.s8 %v2988
        %v2990 = vlaneseq
        %v2991 = vshrl.u32 %v2990, 7
        %v2992 = vsub.s32 %v2989, %v2991
        %v2993 = vrot.slane %v2979, %v2992
        %v2994 = vcombine.high %v2986, %v2986
        %v2995 = vcombine.high %v2993, %v2993
        %v2997 = vunpack.c.l.s4 1966171168
        %v2998 = vunpack.c.0.s8 %v2997
        %v2999 = vlaneseq
        %v3000 = vshrl.u32 %v2999, 7
        %v3001 = vsub.s32 %v2998, %v3000
        %v3002 = vrot.slane %v2986, %v3001
        %v3004 = vunpack.c.l.s4 1966171168
        %v3005 = vunpack.c.0.s8 %v3004
        %v3006 = vlaneseq
        %v3007 = vshrl.u32 %v3006, 7
        %v3008 = vsub.s32 %v3005, %v3007
        %v3009 = vrot.slane %v2993, %v3008
        %v3011 = vunpack.c.l.s4 1966171168
        %v3012 = vunpack.c.0.s8 %v3011
        %v3013 = vlaneseq
        %v3014 = vshrl.u32 %v3013, 7
        %v3015 = vsub.s32 %v3012, %v3014
        %v3016 = vrot.slane %v2994, %v3015
        %v3018 = vunpack.c.l.s4 1966171168
        %v3019 = vunpack.c.0.s8 %v3018
        %v3020 = vlaneseq
        %v3021 = vshrl.u32 %v3020, 7
        %v3022 = vsub.s32 %v3019, %v3021
        %v3023 = vrot.slane %v2995, %v3022
        %v3024 = vcombine.high %v3002, %v3002
        %v3025 = vcombine.high %v3009, %v3009
        %v3026 = vcombine.high %v3016, %v3016
        %v3027 = vcombine.high %v3023, %v3023
        %v3028 = vcombine.high %v2576, %v2576
        %v3030 = vunpack.c.l.s4 1966171168
        %v3031 = vunpack.c.0.s8 %v3030
        %v3032 = vlaneseq
        %v3033 = vshrl.u32 %v3032, 7
        %v3034 = vsub.s32 %v3031, %v3033
        %v3035 = vrot.slane %v2576, %v3034
        %v3037 = vunpack.c.l.s4 1966171168
        %v3038 = vunpack.c.0.s8 %v3037
        %v3039 = vlaneseq
        %v3040 = vshrl.u32 %v3039, 7
        %v3041 = vsub.s32 %v3038, %v3040
        %v3042 = vrot.slane %v3028, %v3041
        %v3043 = vcombine.high %v3035, %v3035
        %v3044 = vcombine.high %v3042, %v3042
        %v3046 = vunpack.c.l.s4 1966171168
        %v3047 = vunpack.c.0.s8 %v3046
        %v3048 = vlaneseq
        %v3049 = vshrl.u32 %v3048, 7
        %v3050 = vsub.s32 %v3047, %v3049
        %v3051 = vrot.slane %v3035, %v3050
        %v3053 = vunpack.c.l.s4 1966171168
        %v3054 = vunpack.c.0.s8 %v3053
        %v3055 = vlaneseq
        %v3056 = vshrl.u32 %v3055, 7
        %v3057 = vsub.s32 %v3054, %v3056
        %v3058 = vrot.slane %v3042, %v3057
        %v3060 = vunpack.c.l.s4 1966171168
        %v3061 = vunpack.c.0.s8 %v3060
        %v3062 = vlaneseq
        %v3063 = vshrl.u32 %v3062, 7
        %v3064 = vsub.s32 %v3061, %v3063
        %v3065 = vrot.slane %v3043, %v3064
        %v3067 = vunpack.c.l.s4 1966171168
        %v3068 = vunpack.c.0.s8 %v3067
        %v3069 = vlaneseq
        %v3070 = vshrl.u32 %v3069, 7
        %v3071 = vsub.s32 %v3068, %v3070
        %v3072 = vrot.slane %v3044, %v3071
        %v3073 = vcombine.high %v3051, %v3051
        %v3074 = vcombine.high %v3058, %v3058
        %v3075 = vcombine.high %v3065, %v3065
        %v3076 = vcombine.high %v3072, %v3072
        %v3077 = vcombine.high %v2581, %v2581
        %v3079 = vunpack.c.l.s4 1966171168
        %v3080 = vunpack.c.0.s8 %v3079
        %v3081 = vlaneseq
        %v3082 = vshrl.u32 %v3081, 7
        %v3083 = vsub.s32 %v3080, %v3082
        %v3084 = vrot.slane %v2581, %v3083
        %v3086 = vunpack.c.l.s4 1966171168
        %v3087 = vunpack.c.0.s8 %v3086
        %v3088 = vlaneseq
        %v3089 = vshrl.u32 %v3088, 7
        %v3090 = vsub.s32 %v3087, %v3089
        %v3091 = vrot.slane %v3077, %v3090
        %v3092 = vcombine.high %v3084, %v3084
        %v3093 = vcombine.high %v3091, %v3091
        %v3095 = vunpack.c.l.s4 1966171168
        %v3096 = vunpack.c.0.s8 %v3095
        %v3097 = vlaneseq
        %v3098 = vshrl.u32 %v3097, 7
        %v3099 = vsub.s32 %v3096, %v3098
        %v3100 = vrot.slane %v3084, %v3099
        %v3102 = vunpack.c.l.s4 1966171168
        %v3103 = vunpack.c.0.s8 %v3102
        %v3104 = vlaneseq
        %v3105 = vshrl.u32 %v3104, 7
        %v3106 = vsub.s32 %v3103, %v3105
        %v3107 = vrot.slane %v3091, %v3106
        %v3109 = vunpack.c.l.s4 1966171168
        %v3110 = vunpack.c.0.s8 %v3109
        %v3111 = vlaneseq
        %v3112 = vshrl.u32 %v3111, 7
        %v3113 = vsub.s32 %v3110, %v3112
        %v3114 = vrot.slane %v3092, %v3113
        %v3116 = vunpack.c.l.s4 1966171168
        %v3117 = vunpack.c.0.s8 %v3116
        %v3118 = vlaneseq
        %v3119 = vshrl.u32 %v3118, 7
        %v3120 = vsub.s32 %v3117, %v3119
        %v3121 = vrot.slane %v3093, %v3120
        %v3122 = vcombine.high %v3100, %v3100
        %v3123 = vcombine.high %v3107, %v3107
        %v3124 = vcombine.high %v3114, %v3114
        %v3125 = vcombine.high %v3121, %v3121
        %v3126 = vcombine.high %v2586, %v2586
        %v3128 = vunpack.c.l.s4 1966171168
        %v3129 = vunpack.c.0.s8 %v3128
        %v3130 = vlaneseq
        %v3131 = vshrl.u32 %v3130, 7
        %v3132 = vsub.s32 %v3129, %v3131
        %v3133 = vrot.slane %v2586, %v3132
        %v3135 = vunpack.c.l.s4 1966171168
        %v3136 = vunpack.c.0.s8 %v3135
        %v3137 = vlaneseq
        %v3138 = vshrl.u32 %v3137, 7
        %v3139 = vsub.s32 %v3136, %v3138
        %v3140 = vrot.slane %v3126, %v3139
        %v3141 = vcombine.high %v3133, %v3133
        %v3142 = vcombine.high %v3140, %v3140
        %v3144 = vunpack.c.l.s4 1966171168
        %v3145 = vunpack.c.0.s8 %v3144
        %v3146 = vlaneseq
        %v3147 = vshrl.u32 %v3146, 7
        %v3148 = vsub.s32 %v3145, %v3147
        %v3149 = vrot.slane %v3133, %v3148
        %v3151 = vunpack.c.l.s4 1966171168
        %v3152 = vunpack.c.0.s8 %v3151
        %v3153 = vlaneseq
        %v3154 = vshrl.u32 %v3153, 7
        %v3155 = vsub.s32 %v3152, %v3154
        %v3156 = vrot.slane %v3140, %v3155
        %v3158 = vunpack.c.l.s4 1966171168
        %v3159 = vunpack.c.0.s8 %v3158
        %v3160 = vlaneseq
        %v3161 = vshrl.u32 %v3160, 7
        %v3162 = vsub.s32 %v3159, %v3161
        %v3163 = vrot.slane %v3141, %v3162
        %v3165 = vunpack.c.l.s4 1966171168
        %v3166 = vunpack.c.0.s8 %v3165
        %v3167 = vlaneseq
        %v3168 = vshrl.u32 %v3167, 7
        %v3169 = vsub.s32 %v3166, %v3168
        %v3170 = vrot.slane %v3142, %v3169
        %v3171 = vcombine.high %v3149, %v3149
        %v3172 = vcombine.high %v3156, %v3156
        %v3173 = vcombine.high %v3163, %v3163
        %v3174 = vcombine.high %v3170, %v3170
        %v3175 = vcombine.high %v2591, %v2591
        %v3177 = vunpack.c.l.s4 1966171168
        %v3178 = vunpack.c.0.s8 %v3177
        %v3179 = vlaneseq
        %v3180 = vshrl.u32 %v3179, 7
        %v3181 = vsub.s32 %v3178, %v3180
        %v3182 = vrot.slane %v2591, %v3181
        %v3184 = vunpack.c.l.s4 1966171168
        %v3185 = vunpack.c.0.s8 %v3184
        %v3186 = vlaneseq
        %v3187 = vshrl.u32 %v3186, 7
        %v3188 = vsub.s32 %v3185, %v3187
        %v3189 = vrot.slane %v3175, %v3188
        %v3190 = vcombine.high %v3182, %v3182
        %v3191 = vcombine.high %v3189, %v3189
        %v3193 = vunpack.c.l.s4 1966171168
        %v3194 = vunpack.c.0.s8 %v3193
        %v3195 = vlaneseq
        %v3196 = vshrl.u32 %v3195, 7
        %v3197 = vsub.s32 %v3194, %v3196
        %v3198 = vrot.slane %v3182, %v3197
        %v3200 = vunpack.c.l.s4 1966171168
        %v3201 = vunpack.c.0.s8 %v3200
        %v3202 = vlaneseq
        %v3203 = vshrl.u32 %v3202, 7
        %v3204 = vsub.s32 %v3201, %v3203
        %v3205 = vrot.slane %v3189, %v3204
        %v3207 = vunpack.c.l.s4 1966171168
        %v3208 = vunpack.c.0.s8 %v3207
        %v3209 = vlaneseq
        %v3210 = vshrl.u32 %v3209, 7
        %v3211 = vsub.s32 %v3208, %v3210
        %v3212 = vrot.slane %v3190, %v3211
        %v3214 = vunpack.c.l.s4 1966171168
        %v3215 = vunpack.c.0.s8 %v3214
        %v3216 = vlaneseq
        %v3217 = vshrl.u32 %v3216, 7
        %v3218 = vsub.s32 %v3215, %v3217
        %v3219 = vrot.slane %v3191, %v3218
        %v3220 = vcombine.high %v3198, %v3198
        %v3221 = vcombine.high %v3205, %v3205
        %v3222 = vcombine.high %v3212, %v3212
        %v3223 = vcombine.high %v3219, %v3219
        %v3224 = vcombine.high %v2596, %v2596
        %v3226 = vunpack.c.l.s4 1966171168
        %v3227 = vunpack.c.0.s8 %v3226
        %v3228 = vlaneseq
        %v3229 = vshrl.u32 %v3228, 7
        %v3230 = vsub.s32 %v3227, %v3229
        %v3231 = vrot.slane %v2596, %v3230
        %v3233 = vunpack.c.l.s4 1966171168
        %v3234 = vunpack.c.0.s8 %v3233
        %v3235 = vlaneseq
        %v3236 = vshrl.u32 %v3235, 7
        %v3237 = vsub.s32 %v3234, %v3236
        %v3238 = vrot.slane %v3224, %v3237
        %v3239 = vcombine.high %v3231, %v3231
        %v3240 = vcombine.high %v3238, %v3238
        %v3242 = vunpack.c.l.s4 1966171168
        %v3243 = vunpack.c.0.s8 %v3242
        %v3244 = vlaneseq
        %v3245 = vshrl.u32 %v3244, 7
        %v3246 = vsub.s32 %v3243, %v3245
        %v3247 = vrot.slane %v3231, %v3246
        %v3249 = vunpack.c.l.s4 1966171168
        %v3250 = vunpack.c.0.s8 %v3249
        %v3251 = vlaneseq
        %v3252 = vshrl.u32 %v3251, 7
        %v3253 = vsub.s32 %v3250, %v3252
        %v3254 = vrot.slane %v3238, %v3253
        %v3256 = vunpack.c.l.s4 1966171168
        %v3257 = vunpack.c.0.s8 %v3256
        %v3258 = vlaneseq
        %v3259 = vshrl.u32 %v3258, 7
        %v3260 = vsub.s32 %v3257, %v3259
        %v3261 = vrot.slane %v3239, %v3260
        %v3263 = vunpack.c.l.s4 1966171168
        %v3264 = vunpack.c.0.s8 %v3263
        %v3265 = vlaneseq
        %v3266 = vshrl.u32 %v3265, 7
        %v3267 = vsub.s32 %v3264, %v3266
        %v3268 = vrot.slane %v3240, %v3267
        %v3269 = vcombine.high %v3247, %v3247
        %v3270 = vcombine.high %v3254, %v3254
        %v3271 = vcombine.high %v3261, %v3261
        %v3272 = vcombine.high %v3268, %v3268
        %v3273 = vcombine.high %v2601, %v2601
        %v3275 = vunpack.c.l.s4 1966171168
        %v3276 = vunpack.c.0.s8 %v3275
        %v3277 = vlaneseq
        %v3278 = vshrl.u32 %v3277, 7
        %v3279 = vsub.s32 %v3276, %v3278
        %v3280 = vrot.slane %v2601, %v3279
        %v3282 = vunpack.c.l.s4 1966171168
        %v3283 = vunpack.c.0.s8 %v3282
        %v3284 = vlaneseq
        %v3285 = vshrl.u32 %v3284, 7
        %v3286 = vsub.s32 %v3283, %v3285
        %v3287 = vrot.slane %v3273, %v3286
        %v3288 = vcombine.high %v3280, %v3280
        %v3289 = vcombine.high %v3287, %v3287
        %v3291 = vunpack.c.l.s4 1966171168
        %v3292 = vunpack.c.0.s8 %v3291
        %v3293 = vlaneseq
        %v3294 = vshrl.u32 %v3293, 7
        %v3295 = vsub.s32 %v3292, %v3294
        %v3296 = vrot.slane %v3280, %v3295
        %v3298 = vunpack.c.l.s4 1966171168
        %v3299 = vunpack.c.0.s8 %v3298
        %v3300 = vlaneseq
        %v3301 = vshrl.u32 %v3300, 7
        %v3302 = vsub.s32 %v3299, %v3301
        %v3303 = vrot.slane %v3287, %v3302
        %v3305 = vunpack.c.l.s4 1966171168
        %v3306 = vunpack.c.0.s8 %v3305
        %v3307 = vlaneseq
        %v3308 = vshrl.u32 %v3307, 7
        %v3309 = vsub.s32 %v3306, %v3308
        %v3310 = vrot.slane %v3288, %v3309
        %v3312 = vunpack.c.l.s4 1966171168
        %v3313 = vunpack.c.0.s8 %v3312
        %v3314 = vlaneseq
        %v3315 = vshrl.u32 %v3314, 7
        %v3316 = vsub.s32 %v3313, %v3315
        %v3317 = vrot.slane %v3289, %v3316
        %v3318 = vcombine.high %v3296, %v3296
        %v3319 = vcombine.high %v3303, %v3303
        %v3320 = vcombine.high %v3310, %v3310
        %v3321 = vcombine.high %v3317, %v3317
        %v3322 = vcombine.high %v2606, %v2606
        %v3324 = vunpack.c.l.s4 1966171168
        %v3325 = vunpack.c.0.s8 %v3324
        %v3326 = vlaneseq
        %v3327 = vshrl.u32 %v3326, 7
        %v3328 = vsub.s32 %v3325, %v3327
        %v3329 = vrot.slane %v2606, %v3328
        %v3331 = vunpack.c.l.s4 1966171168
        %v3332 = vunpack.c.0.s8 %v3331
        %v3333 = vlaneseq
        %v3334 = vshrl.u32 %v3333, 7
        %v3335 = vsub.s32 %v3332, %v3334
        %v3336 = vrot.slane %v3322, %v3335
        %v3337 = vcombine.high %v3329, %v3329
        %v3338 = vcombine.high %v3336, %v3336
        %v3340 = vunpack.c.l.s4 1966171168
        %v3341 = vunpack.c.0.s8 %v3340
        %v3342 = vlaneseq
        %v3343 = vshrl.u32 %v3342, 7
        %v3344 = vsub.s32 %v3341, %v3343
        %v3345 = vrot.slane %v3329, %v3344
        %v3347 = vunpack.c.l.s4 1966171168
        %v3348 = vunpack.c.0.s8 %v3347
        %v3349 = vlaneseq
        %v3350 = vshrl.u32 %v3349, 7
        %v3351 = vsub.s32 %v3348, %v3350
        %v3352 = vrot.slane %v3336, %v3351
        %v3354 = vunpack.c.l.s4 1966171168
        %v3355 = vunpack.c.0.s8 %v3354
        %v3356 = vlaneseq
        %v3357 = vshrl.u32 %v3356, 7
        %v3358 = vsub.s32 %v3355, %v3357
        %v3359 = vrot.slane %v3337, %v3358
        %v3361 = vunpack.c.l.s4 1966171168
        %v3362 = vunpack.c.0.s8 %v3361
        %v3363 = vlaneseq
        %v3364 = vshrl.u32 %v3363, 7
        %v3365 = vsub.s32 %v3362, %v3364
        %v3366 = vrot.slane %v3338, %v3365
        %v3367 = vcombine.high %v3345, %v3345
        %v3368 = vcombine.high %v3352, %v3352
        %v3369 = vcombine.high %v3359, %v3359
        %v3370 = vcombine.high %v3366, %v3366
        %v3371 = vcombine.high %v2611, %v2611
        %v3373 = vunpack.c.l.s4 1966171168
        %v3374 = vunpack.c.0.s8 %v3373
        %v3375 = vlaneseq
        %v3376 = vshrl.u32 %v3375, 7
        %v3377 = vsub.s32 %v3374, %v3376
        %v3378 = vrot.slane %v2611, %v3377
        %v3380 = vunpack.c.l.s4 1966171168
        %v3381 = vunpack.c.0.s8 %v3380
        %v3382 = vlaneseq
        %v3383 = vshrl.u32 %v3382, 7
        %v3384 = vsub.s32 %v3381, %v3383
        %v3385 = vrot.slane %v3371, %v3384
        %v3386 = vcombine.high %v3378, %v3378
        %v3387 = vcombine.high %v3385, %v3385
        %v3389 = vunpack.c.l.s4 1966171168
        %v3390 = vunpack.c.0.s8 %v3389
        %v3391 = vlaneseq
        %v3392 = vshrl.u32 %v3391, 7
        %v3393 = vsub.s32 %v3390, %v3392
        %v3394 = vrot.slane %v3378, %v3393
        %v3396 = vunpack.c.l.s4 1966171168
        %v3397 = vunpack.c.0.s8 %v3396
        %v3398 = vlaneseq
        %v3399 = vshrl.u32 %v3398, 7
        %v3400 = vsub.s32 %v3397, %v3399
        %v3401 = vrot.slane %v3385, %v3400
        %v3403 = vunpack.c.l.s4 1966171168
        %v3404 = vunpack.c.0.s8 %v3403
        %v3405 = vlaneseq
        %v3406 = vshrl.u32 %v3405, 7
        %v3407 = vsub.s32 %v3404, %v3406
        %v3408 = vrot.slane %v3386, %v3407
        %v3410 = vunpack.c.l.s4 1966171168
        %v3411 = vunpack.c.0.s8 %v3410
        %v3412 = vlaneseq
        %v3413 = vshrl.u32 %v3412, 7
        %v3414 = vsub.s32 %v3411, %v3413
        %v3415 = vrot.slane %v3387, %v3414
        %v3416 = vcombine.high %v3394, %v3394
        %v3417 = vcombine.high %v3401, %v3401
        %v3418 = vcombine.high %v3408, %v3408
        %v3419 = vcombine.high %v3415, %v3415
        %v3420 = vcombine.high %v2616, %v2616
        %v3422 = vunpack.c.l.s4 1966171168
        %v3423 = vunpack.c.0.s8 %v3422
        %v3424 = vlaneseq
        %v3425 = vshrl.u32 %v3424, 7
        %v3426 = vsub.s32 %v3423, %v3425
        %v3427 = vrot.slane %v2616, %v3426
        %v3429 = vunpack.c.l.s4 1966171168
        %v3430 = vunpack.c.0.s8 %v3429
        %v3431 = vlaneseq
        %v3432 = vshrl.u32 %v3431, 7
        %v3433 = vsub.s32 %v3430, %v3432
        %v3434 = vrot.slane %v3420, %v3433
        %v3435 = vcombine.high %v3427, %v3427
        %v3436 = vcombine.high %v3434, %v3434
        %v3438 = vunpack.c.l.s4 1966171168
        %v3439 = vunpack.c.0.s8 %v3438
        %v3440 = vlaneseq
        %v3441 = vshrl.u32 %v3440, 7
        %v3442 = vsub.s32 %v3439, %v3441
        %v3443 = vrot.slane %v3427, %v3442
        %v3445 = vunpack.c.l.s4 1966171168
        %v3446 = vunpack.c.0.s8 %v3445
        %v3447 = vlaneseq
        %v3448 = vshrl.u32 %v3447, 7
        %v3449 = vsub.s32 %v3446, %v3448
        %v3450 = vrot.slane %v3434, %v3449
        %v3452 = vunpack.c.l.s4 1966171168
        %v3453 = vunpack.c.0.s8 %v3452
        %v3454 = vlaneseq
        %v3455 = vshrl.u32 %v3454, 7
        %v3456 = vsub.s32 %v3453, %v3455
        %v3457 = vrot.slane %v3435, %v3456
        %v3459 = vunpack.c.l.s4 1966171168
        %v3460 = vunpack.c.0.s8 %v3459
        %v3461 = vlaneseq
        %v3462 = vshrl.u32 %v3461, 7
        %v3463 = vsub.s32 %v3460, %v3462
        %v3464 = vrot.slane %v3436, %v3463
        %v3465 = vcombine.high %v3443, %v3443
        %v3466 = vcombine.high %v3450, %v3450
        %v3467 = vcombine.high %v3457, %v3457
        %v3468 = vcombine.high %v3464, %v3464
        %v3469 = vcombine.high %v2621, %v2621
        %v3471 = vunpack.c.l.s4 1966171168
        %v3472 = vunpack.c.0.s8 %v3471
        %v3473 = vlaneseq
        %v3474 = vshrl.u32 %v3473, 7
        %v3475 = vsub.s32 %v3472, %v3474
        %v3476 = vrot.slane %v2621, %v3475
        %v3478 = vunpack.c.l.s4 1966171168
        %v3479 = vunpack.c.0.s8 %v3478
        %v3480 = vlaneseq
        %v3481 = vshrl.u32 %v3480, 7
        %v3482 = vsub.s32 %v3479, %v3481
        %v3483 = vrot.slane %v3469, %v3482
        %v3484 = vcombine.high %v3476, %v3476
        %v3485 = vcombine.high %v3483, %v3483
        %v3487 = vunpack.c.l.s4 1966171168
        %v3488 = vunpack.c.0.s8 %v3487
        %v3489 = vlaneseq
        %v3490 = vshrl.u32 %v3489, 7
        %v3491 = vsub.s32 %v3488, %v3490
        %v3492 = vrot.slane %v3476, %v3491
        %v3494 = vunpack.c.l.s4 1966171168
        %v3495 = vunpack.c.0.s8 %v3494
        %v3496 = vlaneseq
        %v3497 = vshrl.u32 %v3496, 7
        %v3498 = vsub.s32 %v3495, %v3497
        %v3499 = vrot.slane %v3483, %v3498
        %v3501 = vunpack.c.l.s4 1966171168
        %v3502 = vunpack.c.0.s8 %v3501
        %v3503 = vlaneseq
        %v3504 = vshrl.u32 %v3503, 7
        %v3505 = vsub.s32 %v3502, %v3504
        %v3506 = vrot.slane %v3484, %v3505
        %v3508 = vunpack.c.l.s4 1966171168
        %v3509 = vunpack.c.0.s8 %v3508
        %v3510 = vlaneseq
        %v3511 = vshrl.u32 %v3510, 7
        %v3512 = vsub.s32 %v3509, %v3511
        %v3513 = vrot.slane %v3485, %v3512
        %v3514 = vcombine.high %v3492, %v3492
        %v3515 = vcombine.high %v3499, %v3499
        %v3516 = vcombine.high %v3506, %v3506
        %v3517 = vcombine.high %v3513, %v3513
        %v3518 = vcombine.high %v2626, %v2626
        %v3520 = vunpack.c.l.s4 1966171168
        %v3521 = vunpack.c.0.s8 %v3520
        %v3522 = vlaneseq
        %v3523 = vshrl.u32 %v3522, 7
        %v3524 = vsub.s32 %v3521, %v3523
        %v3525 = vrot.slane %v2626, %v3524
        %v3527 = vunpack.c.l.s4 1966171168
        %v3528 = vunpack.c.0.s8 %v3527
        %v3529 = vlaneseq
        %v3530 = vshrl.u32 %v3529, 7
        %v3531 = vsub.s32 %v3528, %v3530
        %v3532 = vrot.slane %v3518, %v3531
        %v3533 = vcombine.high %v3525, %v3525
        %v3534 = vcombine.high %v3532, %v3532
        %v3536 = vunpack.c.l.s4 1966171168
        %v3537 = vunpack.c.0.s8 %v3536
        %v3538 = vlaneseq
        %v3539 = vshrl.u32 %v3538, 7
        %v3540 = vsub.s32 %v3537, %v3539
        %v3541 = vrot.slane %v3525, %v3540
        %v3543 = vunpack.c.l.s4 1966171168
        %v3544 = vunpack.c.0.s8 %v3543
        %v3545 = vlaneseq
        %v3546 = vshrl.u32 %v3545, 7
        %v3547 = vsub.s32 %v3544, %v3546
        %v3548 = vrot.slane %v3532, %v3547
        %v3550 = vunpack.c.l.s4 1966171168
        %v3551 = vunpack.c.0.s8 %v3550
        %v3552 = vlaneseq
        %v3553 = vshrl.u32 %v3552, 7
        %v3554 = vsub.s32 %v3551, %v3553
        %v3555 = vrot.slane %v3533, %v3554
        %v3557 = vunpack.c.l.s4 1966171168
        %v3558 = vunpack.c.0.s8 %v3557
        %v3559 = vlaneseq
        %v3560 = vshrl.u32 %v3559, 7
        %v3561 = vsub.s32 %v3558, %v3560
        %v3562 = vrot.slane %v3534, %v3561
        %v3563 = vcombine.high %v3541, %v3541
        %v3564 = vcombine.high %v3548, %v3548
        %v3565 = vcombine.high %v3555, %v3555
        %v3566 = vcombine.high %v3562, %v3562
        %v3567 = vcombine.high %v2631, %v2631
        %v3569 = vunpack.c.l.s4 1966171168
        %v3570 = vunpack.c.0.s8 %v3569
        %v3571 = vlaneseq
        %v3572 = vshrl.u32 %v3571, 7
        %v3573 = vsub.s32 %v3570, %v3572
        %v3574 = vrot.slane %v2631, %v3573
        %v3576 = vunpack.c.l.s4 1966171168
        %v3577 = vunpack.c.0.s8 %v3576
        %v3578 = vlaneseq
        %v3579 = vshrl.u32 %v3578, 7
        %v3580 = vsub.s32 %v3577, %v3579
        %v3581 = vrot.slane %v3567, %v3580
        %v3582 = vcombine.high %v3574, %v3574
        %v3583 = vcombine.high %v3581, %v3581
        %v3585 = vunpack.c.l.s4 1966171168
        %v3586 = vunpack.c.0.s8 %v3585
        %v3587 = vlaneseq
        %v3588 = vshrl.u32 %v3587, 7
        %v3589 = vsub.s32 %v3586, %v3588
        %v3590 = vrot.slane %v3574, %v3589
        %v3592 = vunpack.c.l.s4 1966171168
        %v3593 = vunpack.c.0.s8 %v3592
        %v3594 = vlaneseq
        %v3595 = vshrl.u32 %v3594, 7
        %v3596 = vsub.s32 %v3593, %v3595
        %v3597 = vrot.slane %v3581, %v3596
        %v3599 = vunpack.c.l.s4 1966171168
        %v3600 = vunpack.c.0.s8 %v3599
        %v3601 = vlaneseq
        %v3602 = vshrl.u32 %v3601, 7
        %v3603 = vsub.s32 %v3600, %v3602
        %v3604 = vrot.slane %v3582, %v3603
        %v3606 = vunpack.c.l.s4 1966171168
        %v3607 = vunpack.c.0.s8 %v3606
        %v3608 = vlaneseq
        %v3609 = vshrl.u32 %v3608, 7
        %v3610 = vsub.s32 %v3607, %v3609
        %v3611 = vrot.slane %v3583, %v3610
        %v3612 = vcombine.high %v3590, %v3590
        %v3613 = vcombine.high %v3597, %v3597
        %v3614 = vcombine.high %v3604, %v3604
        %v3615 = vcombine.high %v3611, %v3611
        %v3616 = vcombine.high %v2636, %v2636
        %v3618 = vunpack.c.l.s4 1966171168
        %v3619 = vunpack.c.0.s8 %v3618
        %v3620 = vlaneseq
        %v3621 = vshrl.u32 %v3620, 7
        %v3622 = vsub.s32 %v3619, %v3621
        %v3623 = vrot.slane %v2636, %v3622
        %v3625 = vunpack.c.l.s4 1966171168
        %v3626 = vunpack.c.0.s8 %v3625
        %v3627 = vlaneseq
        %v3628 = vshrl.u32 %v3627, 7
        %v3629 = vsub.s32 %v3626, %v3628
        %v3630 = vrot.slane %v3616, %v3629
        %v3631 = vcombine.high %v3623, %v3623
        %v3632 = vcombine.high %v3630, %v3630
        %v3634 = vunpack.c.l.s4 1966171168
        %v3635 = vunpack.c.0.s8 %v3634
        %v3636 = vlaneseq
        %v3637 = vshrl.u32 %v3636, 7
        %v3638 = vsub.s32 %v3635, %v3637
        %v3639 = vrot.slane %v3623, %v3638
        %v3641 = vunpack.c.l.s4 1966171168
        %v3642 = vunpack.c.0.s8 %v3641
        %v3643 = vlaneseq
        %v3644 = vshrl.u32 %v3643, 7
        %v3645 = vsub.s32 %v3642, %v3644
        %v3646 = vrot.slane %v3630, %v3645
        %v3648 = vunpack.c.l.s4 1966171168
        %v3649 = vunpack.c.0.s8 %v3648
        %v3650 = vlaneseq
        %v3651 = vshrl.u32 %v3650, 7
        %v3652 = vsub.s32 %v3649, %v3651
        %v3653 = vrot.slane %v3631, %v3652
        %v3655 = vunpack.c.l.s4 1966171168
        %v3656 = vunpack.c.0.s8 %v3655
        %v3657 = vlaneseq
        %v3658 = vshrl.u32 %v3657, 7
        %v3659 = vsub.s32 %v3656, %v3658
        %v3660 = vrot.slane %v3632, %v3659
        %v3661 = vcombine.high %v3639, %v3639
        %v3662 = vcombine.high %v3646, %v3646
        %v3663 = vcombine.high %v3653, %v3653
        %v3664 = vcombine.high %v3660, %v3660
        %v3665 = vcombine.high %v2641, %v2641
        %v3667 = vunpack.c.l.s4 1966171168
        %v3668 = vunpack.c.0.s8 %v3667
        %v3669 = vlaneseq
        %v3670 = vshrl.u32 %v3669, 7
        %v3671 = vsub.s32 %v3668, %v3670
        %v3672 = vrot.slane %v2641, %v3671
        %v3674 = vunpack.c.l.s4 1966171168
        %v3675 = vunpack.c.0.s8 %v3674
        %v3676 = vlaneseq
        %v3677 = vshrl.u32 %v3676, 7
        %v3678 = vsub.s32 %v3675, %v3677
        %v3679 = vrot.slane %v3665, %v3678
        %v3680 = vcombine.high %v3672, %v3672
        %v3681 = vcombine.high %v3679, %v3679
        %v3683 = vunpack.c.l.s4 1966171168
        %v3684 = vunpack.c.0.s8 %v3683
        %v3685 = vlaneseq
        %v3686 = vshrl.u32 %v3685, 7
        %v3687 = vsub.s32 %v3684, %v3686
        %v3688 = vrot.slane %v3672, %v3687
        %v3690 = vunpack.c.l.s4 1966171168
        %v3691 = vunpack.c.0.s8 %v3690
        %v3692 = vlaneseq
        %v3693 = vshrl.u32 %v3692, 7
        %v3694 = vsub.s32 %v3691, %v3693
        %v3695 = vrot.slane %v3679, %v3694
        %v3697 = vunpack.c.l.s4 1966171168
        %v3698 = vunpack.c.0.s8 %v3697
        %v3699 = vlaneseq
        %v3700 = vshrl.u32 %v3699, 7
        %v3701 = vsub.s32 %v3698, %v3700
        %v3702 = vrot.slane %v3680, %v3701
        %v3704 = vunpack.c.l.s4 1966171168
        %v3705 = vunpack.c.0.s8 %v3704
        %v3706 = vlaneseq
        %v3707 = vshrl.u32 %v3706, 7
        %v3708 = vsub.s32 %v3705, %v3707
        %v3709 = vrot.slane %v3681, %v3708
        %v3710 = vcombine.high %v3688, %v3688
        %v3711 = vcombine.high %v3695, %v3695
        %v3712 = vcombine.high %v3702, %v3702
        %v3713 = vcombine.high %v3709, %v3709
        %v3714 = vcombine.high %v2646, %v2646
        %v3716 = vunpack.c.l.s4 1966171168
        %v3717 = vunpack.c.0.s8 %v3716
        %v3718 = vlaneseq
        %v3719 = vshrl.u32 %v3718, 7
        %v3720 = vsub.s32 %v3717, %v3719
        %v3721 = vrot.slane %v2646, %v3720
        %v3723 = vunpack.c.l.s4 1966171168
        %v3724 = vunpack.c.0.s8 %v3723
        %v3725 = vlaneseq
        %v3726 = vshrl.u32 %v3725, 7
        %v3727 = vsub.s32 %v3724, %v3726
        %v3728 = vrot.slane %v3714, %v3727
        %v3729 = vcombine.high %v3721, %v3721
        %v3730 = vcombine.high %v3728, %v3728
        %v3732 = vunpack.c.l.s4 1966171168
        %v3733 = vunpack.c.0.s8 %v3732
        %v3734 = vlaneseq
        %v3735 = vshrl.u32 %v3734, 7
        %v3736 = vsub.s32 %v3733, %v3735
        %v3737 = vrot.slane %v3721, %v3736
        %v3739 = vunpack.c.l.s4 1966171168
        %v3740 = vunpack.c.0.s8 %v3739
        %v3741 = vlaneseq
        %v3742 = vshrl.u32 %v3741, 7
        %v3743 = vsub.s32 %v3740, %v3742
        %v3744 = vrot.slane %v3728, %v3743
        %v3746 = vunpack.c.l.s4 1966171168
        %v3747 = vunpack.c.0.s8 %v3746
        %v3748 = vlaneseq
        %v3749 = vshrl.u32 %v3748, 7
        %v3750 = vsub.s32 %v3747, %v3749
        %v3751 = vrot.slane %v3729, %v3750
        %v3753 = vunpack.c.l.s4 1966171168
        %v3754 = vunpack.c.0.s8 %v3753
        %v3755 = vlaneseq
        %v3756 = vshrl.u32 %v3755, 7
        %v3757 = vsub.s32 %v3754, %v3756
        %v3758 = vrot.slane %v3730, %v3757
        %v3759 = vcombine.high %v3737, %v3737
        %v3760 = vcombine.high %v3744, %v3744
        %v3761 = vcombine.high %v3751, %v3751
        %v3762 = vcombine.high %v3758, %v3758
        %v3763 = vcombine.high %v2651, %v2651
        %v3765 = vunpack.c.l.s4 1966171168
        %v3766 = vunpack.c.0.s8 %v3765
        %v3767 = vlaneseq
        %v3768 = vshrl.u32 %v3767, 7
        %v3769 = vsub.s32 %v3766, %v3768
        %v3770 = vrot.slane %v2651, %v3769
        %v3772 = vunpack.c.l.s4 1966171168
        %v3773 = vunpack.c.0.s8 %v3772
        %v3774 = vlaneseq
        %v3775 = vshrl.u32 %v3774, 7
        %v3776 = vsub.s32 %v3773, %v3775
        %v3777 = vrot.slane %v3763, %v3776
        %v3778 = vcombine.high %v3770, %v3770
        %v3779 = vcombine.high %v3777, %v3777
        %v3781 = vunpack.c.l.s4 1966171168
        %v3782 = vunpack.c.0.s8 %v3781
        %v3783 = vlaneseq
        %v3784 = vshrl.u32 %v3783, 7
        %v3785 = vsub.s32 %v3782, %v3784
        %v3786 = vrot.slane %v3770, %v3785
        %v3788 = vunpack.c.l.s4 1966171168
        %v3789 = vunpack.c.0.s8 %v3788
        %v3790 = vlaneseq
        %v3791 = vshrl.u32 %v3790, 7
        %v3792 = vsub.s32 %v3789, %v3791
        %v3793 = vrot.slane %v3777, %v3792
        %v3795 = vunpack.c.l.s4 1966171168
        %v3796 = vunpack.c.0.s8 %v3795
        %v3797 = vlaneseq
        %v3798 = vshrl.u32 %v3797, 7
        %v3799 = vsub.s32 %v3796, %v3798
        %v3800 = vrot.slane %v3778, %v3799
        %v3802 = vunpack.c.l.s4 1966171168
        %v3803 = vunpack.c.0.s8 %v3802
        %v3804 = vlaneseq
        %v3805 = vshrl.u32 %v3804, 7
        %v3806 = vsub.s32 %v3803, %v3805
        %v3807 = vrot.slane %v3779, %v3806
        %v3808 = vcombine.high %v3786, %v3786
        %v3809 = vcombine.high %v3793, %v3793
        %v3810 = vcombine.high %v3800, %v3800
        %v3811 = vcombine.high %v3807, %v3807
        %v3812 = vcombine.high %v2656, %v2656
        %v3814 = vunpack.c.l.s4 1966171168
        %v3815 = vunpack.c.0.s8 %v3814
        %v3816 = vlaneseq
        %v3817 = vshrl.u32 %v3816, 7
        %v3818 = vsub.s32 %v3815, %v3817
        %v3819 = vrot.slane %v2656, %v3818
        %v3821 = vunpack.c.l.s4 1966171168
        %v3822 = vunpack.c.0.s8 %v3821
        %v3823 = vlaneseq
        %v3824 = vshrl.u32 %v3823, 7
        %v3825 = vsub.s32 %v3822, %v3824
        %v3826 = vrot.slane %v3812, %v3825
        %v3827 = vcombine.high %v3819, %v3819
        %v3828 = vcombine.high %v3826, %v3826
        %v3830 = vunpack.c.l.s4 1966171168
        %v3831 = vunpack.c.0.s8 %v3830
        %v3832 = vlaneseq
        %v3833 = vshrl.u32 %v3832, 7
        %v3834 = vsub.s32 %v3831, %v3833
        %v3835 = vrot.slane %v3819, %v3834
        %v3837 = vunpack.c.l.s4 1966171168
        %v3838 = vunpack.c.0.s8 %v3837
        %v3839 = vlaneseq
        %v3840 = vshrl.u32 %v3839, 7
        %v3841 = vsub.s32 %v3838, %v3840
        %v3842 = vrot.slane %v3826, %v3841
        %v3844 = vunpack.c.l.s4 1966171168
        %v3845 = vunpack.c.0.s8 %v3844
        %v3846 = vlaneseq
        %v3847 = vshrl.u32 %v3846, 7
        %v3848 = vsub.s32 %v3845, %v3847
        %v3849 = vrot.slane %v3827, %v3848
        %v3851 = vunpack.c.l.s4 1966171168
        %v3852 = vunpack.c.0.s8 %v3851
        %v3853 = vlaneseq
        %v3854 = vshrl.u32 %v3853, 7
        %v3855 = vsub.s32 %v3852, %v3854
        %v3856 = vrot.slane %v3828, %v3855
        %v3857 = vcombine.high %v3835, %v3835
        %v3858 = vcombine.high %v3842, %v3842
        %v3859 = vcombine.high %v3849, %v3849
        %v3860 = vcombine.high %v3856, %v3856
        %v3861 = vcombine.high %v2661, %v2661
        %v3863 = vunpack.c.l.s4 1966171168
        %v3864 = vunpack.c.0.s8 %v3863
        %v3865 = vlaneseq
        %v3866 = vshrl.u32 %v3865, 7
        %v3867 = vsub.s32 %v3864, %v3866
        %v3868 = vrot.slane %v2661, %v3867
        %v3870 = vunpack.c.l.s4 1966171168
        %v3871 = vunpack.c.0.s8 %v3870
        %v3872 = vlaneseq
        %v3873 = vshrl.u32 %v3872, 7
        %v3874 = vsub.s32 %v3871, %v3873
        %v3875 = vrot.slane %v3861, %v3874
        %v3876 = vcombine.high %v3868, %v3868
        %v3877 = vcombine.high %v3875, %v3875
        %v3879 = vunpack.c.l.s4 1966171168
        %v3880 = vunpack.c.0.s8 %v3879
        %v3881 = vlaneseq
        %v3882 = vshrl.u32 %v3881, 7
        %v3883 = vsub.s32 %v3880, %v3882
        %v3884 = vrot.slane %v3868, %v3883
        %v3886 = vunpack.c.l.s4 1966171168
        %v3887 = vunpack.c.0.s8 %v3886
        %v3888 = vlaneseq
        %v3889 = vshrl.u32 %v3888, 7
        %v3890 = vsub.s32 %v3887, %v3889
        %v3891 = vrot.slane %v3875, %v3890
        %v3893 = vunpack.c.l.s4 1966171168
        %v3894 = vunpack.c.0.s8 %v3893
        %v3895 = vlaneseq
        %v3896 = vshrl.u32 %v3895, 7
        %v3897 = vsub.s32 %v3894, %v3896
        %v3898 = vrot.slane %v3876, %v3897
        %v3900 = vunpack.c.l.s4 1966171168
        %v3901 = vunpack.c.0.s8 %v3900
        %v3902 = vlaneseq
        %v3903 = vshrl.u32 %v3902, 7
        %v3904 = vsub.s32 %v3901, %v3903
        %v3905 = vrot.slane %v3877, %v3904
        %v3906 = vcombine.high %v3884, %v3884
        %v3907 = vcombine.high %v3891, %v3891
        %v3908 = vcombine.high %v3898, %v3898
        %v3909 = vcombine.high %v3905, %v3905
        %v3910 = vcombine.high %v2666, %v2666
        %v3912 = vunpack.c.l.s4 1966171168
        %v3913 = vunpack.c.0.s8 %v3912
        %v3914 = vlaneseq
        %v3915 = vshrl.u32 %v3914, 7
        %v3916 = vsub.s32 %v3913, %v3915
        %v3917 = vrot.slane %v2666, %v3916
        %v3919 = vunpack.c.l.s4 1966171168
        %v3920 = vunpack.c.0.s8 %v3919
        %v3921 = vlaneseq
        %v3922 = vshrl.u32 %v3921, 7
        %v3923 = vsub.s32 %v3920, %v3922
        %v3924 = vrot.slane %v3910, %v3923
        %v3925 = vcombine.high %v3917, %v3917
        %v3926 = vcombine.high %v3924, %v3924
        %v3928 = vunpack.c.l.s4 1966171168
        %v3929 = vunpack.c.0.s8 %v3928
        %v3930 = vlaneseq
        %v3931 = vshrl.u32 %v3930, 7
        %v3932 = vsub.s32 %v3929, %v3931
        %v3933 = vrot.slane %v3917, %v3932
        %v3935 = vunpack.c.l.s4 1966171168
        %v3936 = vunpack.c.0.s8 %v3935
        %v3937 = vlaneseq
        %v3938 = vshrl.u32 %v3937, 7
        %v3939 = vsub.s32 %v3936, %v3938
        %v3940 = vrot.slane %v3924, %v3939
        %v3942 = vunpack.c.l.s4 1966171168
        %v3943 = vunpack.c.0.s8 %v3942
        %v3944 = vlaneseq
        %v3945 = vshrl.u32 %v3944, 7
        %v3946 = vsub.s32 %v3943, %v3945
        %v3947 = vrot.slane %v3925, %v3946
        %v3949 = vunpack.c.l.s4 1966171168
        %v3950 = vunpack.c.0.s8 %v3949
        %v3951 = vlaneseq
        %v3952 = vshrl.u32 %v3951, 7
        %v3953 = vsub.s32 %v3950, %v3952
        %v3954 = vrot.slane %v3926, %v3953
        %v3955 = vcombine.high %v3933, %v3933
        %v3956 = vcombine.high %v3940, %v3940
        %v3957 = vcombine.high %v3947, %v3947
        %v3958 = vcombine.high %v3954, %v3954
        %v3959 = vcombine.high %v2671, %v2671
        %v3961 = vunpack.c.l.s4 1966171168
        %v3962 = vunpack.c.0.s8 %v3961
        %v3963 = vlaneseq
        %v3964 = vshrl.u32 %v3963, 7
        %v3965 = vsub.s32 %v3962, %v3964
        %v3966 = vrot.slane %v2671, %v3965
        %v3968 = vunpack.c.l.s4 1966171168
        %v3969 = vunpack.c.0.s8 %v3968
        %v3970 = vlaneseq
        %v3971 = vshrl.u32 %v3970, 7
        %v3972 = vsub.s32 %v3969, %v3971
        %v3973 = vrot.slane %v3959, %v3972
        %v3974 = vcombine.high %v3966, %v3966
        %v3975 = vcombine.high %v3973, %v3973
        %v3977 = vunpack.c.l.s4 1966171168
        %v3978 = vunpack.c.0.s8 %v3977
        %v3979 = vlaneseq
        %v3980 = vshrl.u32 %v3979, 7
        %v3981 = vsub.s32 %v3978, %v3980
        %v3982 = vrot.slane %v3966, %v3981
        %v3984 = vunpack.c.l.s4 1966171168
        %v3985 = vunpack.c.0.s8 %v3984
        %v3986 = vlaneseq
        %v3987 = vshrl.u32 %v3986, 7
        %v3988 = vsub.s32 %v3985, %v3987
        %v3989 = vrot.slane %v3973, %v3988
        %v3991 = vunpack.c.l.s4 1966171168
        %v3992 = vunpack.c.0.s8 %v3991
        %v3993 = vlaneseq
        %v3994 = vshrl.u32 %v3993, 7
        %v3995 = vsub.s32 %v3992, %v3994
        %v3996 = vrot.slane %v3974, %v3995
        %v3998 = vunpack.c.l.s4 1966171168
        %v3999 = vunpack.c.0.s8 %v3998
        %v4000 = vlaneseq
        %v4001 = vshrl.u32 %v4000, 7
        %v4002 = vsub.s32 %v3999, %v4001
        %v4003 = vrot.slane %v3975, %v4002
        %v4004 = vcombine.high %v3982, %v3982
        %v4005 = vcombine.high %v3989, %v3989
        %v4006 = vcombine.high %v3996, %v3996
        %v4007 = vcombine.high %v4003, %v4003
        %v4008 = vcombine.high %v2676, %v2676
        %v4010 = vunpack.c.l.s4 1966171168
        %v4011 = vunpack.c.0.s8 %v4010
        %v4012 = vlaneseq
        %v4013 = vshrl.u32 %v4012, 7
        %v4014 = vsub.s32 %v4011, %v4013
        %v4015 = vrot.slane %v2676, %v4014
        %v4017 = vunpack.c.l.s4 1966171168
        %v4018 = vunpack.c.0.s8 %v4017
        %v4019 = vlaneseq
        %v4020 = vshrl.u32 %v4019, 7
        %v4021 = vsub.s32 %v4018, %v4020
        %v4022 = vrot.slane %v4008, %v4021
        %v4023 = vcombine.high %v4015, %v4015
        %v4024 = vcombine.high %v4022, %v4022
        %v4026 = vunpack.c.l.s4 1966171168
        %v4027 = vunpack.c.0.s8 %v4026
        %v4028 = vlaneseq
        %v4029 = vshrl.u32 %v4028, 7
        %v4030 = vsub.s32 %v4027, %v4029
        %v4031 = vrot.slane %v4015, %v4030
        %v4033 = vunpack.c.l.s4 1966171168
        %v4034 = vunpack.c.0.s8 %v4033
        %v4035 = vlaneseq
        %v4036 = vshrl.u32 %v4035, 7
        %v4037 = vsub.s32 %v4034, %v4036
        %v4038 = vrot.slane %v4022, %v4037
        %v4040 = vunpack.c.l.s4 1966171168
        %v4041 = vunpack.c.0.s8 %v4040
        %v4042 = vlaneseq
        %v4043 = vshrl.u32 %v4042, 7
        %v4044 = vsub.s32 %v4041, %v4043
        %v4045 = vrot.slane %v4023, %v4044
        %v4047 = vunpack.c.l.s4 1966171168
        %v4048 = vunpack.c.0.s8 %v4047
        %v4049 = vlaneseq
        %v4050 = vshrl.u32 %v4049, 7
        %v4051 = vsub.s32 %v4048, %v4050
        %v4052 = vrot.slane %v4024, %v4051
        %v4053 = vcombine.high %v4031, %v4031
        %v4054 = vcombine.high %v4038, %v4038
        %v4055 = vcombine.high %v4045, %v4045
        %v4056 = vcombine.high %v4052, %v4052
        %v4057 = vcombine.high %v2681, %v2681
        %v4059 = vunpack.c.l.s4 1966171168
        %v4060 = vunpack.c.0.s8 %v4059
        %v4061 = vlaneseq
        %v4062 = vshrl.u32 %v4061, 7
        %v4063 = vsub.s32 %v4060, %v4062
        %v4064 = vrot.slane %v2681, %v4063
        %v4066 = vunpack.c.l.s4 1966171168
        %v4067 = vunpack.c.0.s8 %v4066
        %v4068 = vlaneseq
        %v4069 = vshrl.u32 %v4068, 7
        %v4070 = vsub.s32 %v4067, %v4069
        %v4071 = vrot.slane %v4057, %v4070
        %v4072 = vcombine.high %v4064, %v4064
        %v4073 = vcombine.high %v4071, %v4071
        %v4075 = vunpack.c.l.s4 1966171168
        %v4076 = vunpack.c.0.s8 %v4075
        %v4077 = vlaneseq
        %v4078 = vshrl.u32 %v4077, 7
        %v4079 = vsub.s32 %v4076, %v4078
        %v4080 = vrot.slane %v4064, %v4079
        %v4082 = vunpack.c.l.s4 1966171168
        %v4083 = vunpack.c.0.s8 %v4082
        %v4084 = vlaneseq
        %v4085 = vshrl.u32 %v4084, 7
        %v4086 = vsub.s32 %v4083, %v4085
        %v4087 = vrot.slane %v4071, %v4086
        %v4089 = vunpack.c.l.s4 1966171168
        %v4090 = vunpack.c.0.s8 %v4089
        %v4091 = vlaneseq
        %v4092 = vshrl.u32 %v4091, 7
        %v4093 = vsub.s32 %v4090, %v4092
        %v4094 = vrot.slane %v4072, %v4093
        %v4096 = vunpack.c.l.s4 1966171168
        %v4097 = vunpack.c.0.s8 %v4096
        %v4098 = vlaneseq
        %v4099 = vshrl.u32 %v4098, 7
        %v4100 = vsub.s32 %v4097, %v4099
        %v4101 = vrot.slane %v4073, %v4100
        %v4102 = vcombine.high %v4080, %v4080
        %v4103 = vcombine.high %v4087, %v4087
        %v4104 = vcombine.high %v4094, %v4094
        %v4105 = vcombine.high %v4101, %v4101
        %v4106 = vcombine.high %v2686, %v2686
        %v4108 = vunpack.c.l.s4 1966171168
        %v4109 = vunpack.c.0.s8 %v4108
        %v4110 = vlaneseq
        %v4111 = vshrl.u32 %v4110, 7
        %v4112 = vsub.s32 %v4109, %v4111
        %v4113 = vrot.slane %v2686, %v4112
        %v4115 = vunpack.c.l.s4 1966171168
        %v4116 = vunpack.c.0.s8 %v4115
        %v4117 = vlaneseq
        %v4118 = vshrl.u32 %v4117, 7
        %v4119 = vsub.s32 %v4116, %v4118
        %v4120 = vrot.slane %v4106, %v4119
        %v4121 = vcombine.high %v4113, %v4113
        %v4122 = vcombine.high %v4120, %v4120
        %v4124 = vunpack.c.l.s4 1966171168
        %v4125 = vunpack.c.0.s8 %v4124
        %v4126 = vlaneseq
        %v4127 = vshrl.u32 %v4126, 7
        %v4128 = vsub.s32 %v4125, %v4127
        %v4129 = vrot.slane %v4113, %v4128
        %v4131 = vunpack.c.l.s4 1966171168
        %v4132 = vunpack.c.0.s8 %v4131
        %v4133 = vlaneseq
        %v4134 = vshrl.u32 %v4133, 7
        %v4135 = vsub.s32 %v4132, %v4134
        %v4136 = vrot.slane %v4120, %v4135
        %v4138 = vunpack.c.l.s4 1966171168
        %v4139 = vunpack.c.0.s8 %v4138
        %v4140 = vlaneseq
        %v4141 = vshrl.u32 %v4140, 7
        %v4142 = vsub.s32 %v4139, %v4141
        %v4143 = vrot.slane %v4121, %v4142
        %v4145 = vunpack.c.l.s4 1966171168
        %v4146 = vunpack.c.0.s8 %v4145
        %v4147 = vlaneseq
        %v4148 = vshrl.u32 %v4147, 7
        %v4149 = vsub.s32 %v4146, %v4148
        %v4150 = vrot.slane %v4122, %v4149
        %v4151 = vcombine.high %v4129, %v4129
        %v4152 = vcombine.high %v4136, %v4136
        %v4153 = vcombine.high %v4143, %v4143
        %v4154 = vcombine.high %v4150, %v4150
        %v4155 = vcombine.high %v2691, %v2691
        %v4157 = vunpack.c.l.s4 1966171168
        %v4158 = vunpack.c.0.s8 %v4157
        %v4159 = vlaneseq
        %v4160 = vshrl.u32 %v4159, 7
        %v4161 = vsub.s32 %v4158, %v4160
        %v4162 = vrot.slane %v2691, %v4161
        %v4164 = vunpack.c.l.s4 1966171168
        %v4165 = vunpack.c.0.s8 %v4164
        %v4166 = vlaneseq
        %v4167 = vshrl.u32 %v4166, 7
        %v4168 = vsub.s32 %v4165, %v4167
        %v4169 = vrot.slane %v4155, %v4168
        %v4170 = vcombine.high %v4162, %v4162
        %v4171 = vcombine.high %v4169, %v4169
        %v4173 = vunpack.c.l.s4 1966171168
        %v4174 = vunpack.c.0.s8 %v4173
        %v4175 = vlaneseq
        %v4176 = vshrl.u32 %v4175, 7
        %v4177 = vsub.s32 %v4174, %v4176
        %v4178 = vrot.slane %v4162, %v4177
        %v4180 = vunpack.c.l.s4 1966171168
        %v4181 = vunpack.c.0.s8 %v4180
        %v4182 = vlaneseq
        %v4183 = vshrl.u32 %v4182, 7
        %v4184 = vsub.s32 %v4181, %v4183
        %v4185 = vrot.slane %v4169, %v4184
        %v4187 = vunpack.c.l.s4 1966171168
        %v4188 = vunpack.c.0.s8 %v4187
        %v4189 = vlaneseq
        %v4190 = vshrl.u32 %v4189, 7
        %v4191 = vsub.s32 %v4188, %v4190
        %v4192 = vrot.slane %v4170, %v4191
        %v4194 = vunpack.c.l.s4 1966171168
        %v4195 = vunpack.c.0.s8 %v4194
        %v4196 = vlaneseq
        %v4197 = vshrl.u32 %v4196, 7
        %v4198 = vsub.s32 %v4195, %v4197
        %v4199 = vrot.slane %v4171, %v4198
        %v4200 = vcombine.high %v4178, %v4178
        %v4201 = vcombine.high %v4185, %v4185
        %v4202 = vcombine.high %v4192, %v4192
        %v4203 = vcombine.high %v4199, %v4199
        %v4204 = vcombine.high %v2696, %v2696
        %v4206 = vunpack.c.l.s4 1966171168
        %v4207 = vunpack.c.0.s8 %v4206
        %v4208 = vlaneseq
        %v4209 = vshrl.u32 %v4208, 7
        %v4210 = vsub.s32 %v4207, %v4209
        %v4211 = vrot.slane %v2696, %v4210
        %v4213 = vunpack.c.l.s4 1966171168
        %v4214 = vunpack.c.0.s8 %v4213
        %v4215 = vlaneseq
        %v4216 = vshrl.u32 %v4215, 7
        %v4217 = vsub.s32 %v4214, %v4216
        %v4218 = vrot.slane %v4204, %v4217
        %v4219 = vcombine.high %v4211, %v4211
        %v4220 = vcombine.high %v4218, %v4218
        %v4222 = vunpack.c.l.s4 1966171168
        %v4223 = vunpack.c.0.s8 %v4222
        %v4224 = vlaneseq
        %v4225 = vshrl.u32 %v4224, 7
        %v4226 = vsub.s32 %v4223, %v4225
        %v4227 = vrot.slane %v4211, %v4226
        %v4229 = vunpack.c.l.s4 1966171168
        %v4230 = vunpack.c.0.s8 %v4229
        %v4231 = vlaneseq
        %v4232 = vshrl.u32 %v4231, 7
        %v4233 = vsub.s32 %v4230, %v4232
        %v4234 = vrot.slane %v4218, %v4233
        %v4236 = vunpack.c.l.s4 1966171168
        %v4237 = vunpack.c.0.s8 %v4236
        %v4238 = vlaneseq
        %v4239 = vshrl.u32 %v4238, 7
        %v4240 = vsub.s32 %v4237, %v4239
        %v4241 = vrot.slane %v4219, %v4240
        %v4243 = vunpack.c.l.s4 1966171168
        %v4244 = vunpack.c.0.s8 %v4243
        %v4245 = vlaneseq
        %v4246 = vshrl.u32 %v4245, 7
        %v4247 = vsub.s32 %v4244, %v4246
        %v4248 = vrot.slane %v4220, %v4247
        %v4249 = vcombine.high %v4227, %v4227
        %v4250 = vcombine.high %v4234, %v4234
        %v4251 = vcombine.high %v4241, %v4241
        %v4252 = vcombine.high %v4248, %v4248
        %v4253 = vcombine.high %v2701, %v2701
        %v4255 = vunpack.c.l.s4 1966171168
        %v4256 = vunpack.c.0.s8 %v4255
        %v4257 = vlaneseq
        %v4258 = vshrl.u32 %v4257, 7
        %v4259 = vsub.s32 %v4256, %v4258
        %v4260 = vrot.slane %v2701, %v4259
        %v4262 = vunpack.c.l.s4 1966171168
        %v4263 = vunpack.c.0.s8 %v4262
        %v4264 = vlaneseq
        %v4265 = vshrl.u32 %v4264, 7
        %v4266 = vsub.s32 %v4263, %v4265
        %v4267 = vrot.slane %v4253, %v4266
        %v4268 = vcombine.high %v4260, %v4260
        %v4269 = vcombine.high %v4267, %v4267
        %v4271 = vunpack.c.l.s4 1966171168
        %v4272 = vunpack.c.0.s8 %v4271
        %v4273 = vlaneseq
        %v4274 = vshrl.u32 %v4273, 7
        %v4275 = vsub.s32 %v4272, %v4274
        %v4276 = vrot.slane %v4260, %v4275
        %v4278 = vunpack.c.l.s4 1966171168
        %v4279 = vunpack.c.0.s8 %v4278
        %v4280 = vlaneseq
        %v4281 = vshrl.u32 %v4280, 7
        %v4282 = vsub.s32 %v4279, %v4281
        %v4283 = vrot.slane %v4267, %v4282
        %v4285 = vunpack.c.l.s4 1966171168
        %v4286 = vunpack.c.0.s8 %v4285
        %v4287 = vlaneseq
        %v4288 = vshrl.u32 %v4287, 7
        %v4289 = vsub.s32 %v4286, %v4288
        %v4290 = vrot.slane %v4268, %v4289
        %v4292 = vunpack.c.l.s4 1966171168
        %v4293 = vunpack.c.0.s8 %v4292
        %v4294 = vlaneseq
        %v4295 = vshrl.u32 %v4294, 7
        %v4296 = vsub.s32 %v4293, %v4295
        %v4297 = vrot.slane %v4269, %v4296
        %v4298 = vcombine.high %v4276, %v4276
        %v4299 = vcombine.high %v4283, %v4283
        %v4300 = vcombine.high %v4290, %v4290
        %v4301 = vcombine.high %v4297, %v4297
        %v4302 = vcombine.high %v2706, %v2706
        %v4304 = vunpack.c.l.s4 1966171168
        %v4305 = vunpack.c.0.s8 %v4304
        %v4306 = vlaneseq
        %v4307 = vshrl.u32 %v4306, 7
        %v4308 = vsub.s32 %v4305, %v4307
        %v4309 = vrot.slane %v2706, %v4308
        %v4311 = vunpack.c.l.s4 1966171168
        %v4312 = vunpack.c.0.s8 %v4311
        %v4313 = vlaneseq
        %v4314 = vshrl.u32 %v4313, 7
        %v4315 = vsub.s32 %v4312, %v4314
        %v4316 = vrot.slane %v4302, %v4315
        %v4317 = vcombine.high %v4309, %v4309
        %v4318 = vcombine.high %v4316, %v4316
        %v4320 = vunpack.c.l.s4 1966171168
        %v4321 = vunpack.c.0.s8 %v4320
        %v4322 = vlaneseq
        %v4323 = vshrl.u32 %v4322, 7
        %v4324 = vsub.s32 %v4321, %v4323
        %v4325 = vrot.slane %v4309, %v4324
        %v4327 = vunpack.c.l.s4 1966171168
        %v4328 = vunpack.c.0.s8 %v4327
        %v4329 = vlaneseq
        %v4330 = vshrl.u32 %v4329, 7
        %v4331 = vsub.s32 %v4328, %v4330
        %v4332 = vrot.slane %v4316, %v4331
        %v4334 = vunpack.c.l.s4 1966171168
        %v4335 = vunpack.c.0.s8 %v4334
        %v4336 = vlaneseq
        %v4337 = vshrl.u32 %v4336, 7
        %v4338 = vsub.s32 %v4335, %v4337
        %v4339 = vrot.slane %v4317, %v4338
        %v4341 = vunpack.c.l.s4 1966171168
        %v4342 = vunpack.c.0.s8 %v4341
        %v4343 = vlaneseq
        %v4344 = vshrl.u32 %v4343, 7
        %v4345 = vsub.s32 %v4342, %v4344
        %v4346 = vrot.slane %v4318, %v4345
        %v4347 = vcombine.high %v4325, %v4325
        %v4348 = vcombine.high %v4332, %v4332
        %v4349 = vcombine.high %v4339, %v4339
        %v4350 = vcombine.high %v4346, %v4346
        %v4351 = vcombine.high %v2711, %v2711
        %v4353 = vunpack.c.l.s4 1966171168
        %v4354 = vunpack.c.0.s8 %v4353
        %v4355 = vlaneseq
        %v4356 = vshrl.u32 %v4355, 7
        %v4357 = vsub.s32 %v4354, %v4356
        %v4358 = vrot.slane %v2711, %v4357
        %v4360 = vunpack.c.l.s4 1966171168
        %v4361 = vunpack.c.0.s8 %v4360
        %v4362 = vlaneseq
        %v4363 = vshrl.u32 %v4362, 7
        %v4364 = vsub.s32 %v4361, %v4363
        %v4365 = vrot.slane %v4351, %v4364
        %v4366 = vcombine.high %v4358, %v4358
        %v4367 = vcombine.high %v4365, %v4365
        %v4369 = vunpack.c.l.s4 1966171168
        %v4370 = vunpack.c.0.s8 %v4369
        %v4371 = vlaneseq
        %v4372 = vshrl.u32 %v4371, 7
        %v4373 = vsub.s32 %v4370, %v4372
        %v4374 = vrot.slane %v4358, %v4373
        %v4376 = vunpack.c.l.s4 1966171168
        %v4377 = vunpack.c.0.s8 %v4376
        %v4378 = vlaneseq
        %v4379 = vshrl.u32 %v4378, 7
        %v4380 = vsub.s32 %v4377, %v4379
        %v4381 = vrot.slane %v4365, %v4380
        %v4383 = vunpack.c.l.s4 1966171168
        %v4384 = vunpack.c.0.s8 %v4383
        %v4385 = vlaneseq
        %v4386 = vshrl.u32 %v4385, 7
        %v4387 = vsub.s32 %v4384, %v4386
        %v4388 = vrot.slane %v4366, %v4387
        %v4390 = vunpack.c.l.s4 1966171168
        %v4391 = vunpack.c.0.s8 %v4390
        %v4392 = vlaneseq
        %v4393 = vshrl.u32 %v4392, 7
        %v4394 = vsub.s32 %v4391, %v4393
        %v4395 = vrot.slane %v4367, %v4394
        %v4396 = vcombine.high %v4374, %v4374
        %v4397 = vcombine.high %v4381, %v4381
        %v4398 = vcombine.high %v4388, %v4388
        %v4399 = vcombine.high %v4395, %v4395
        %v4400 = vcombine.high %v2716, %v2716
        %v4402 = vunpack.c.l.s4 1966171168
        %v4403 = vunpack.c.0.s8 %v4402
        %v4404 = vlaneseq
        %v4405 = vshrl.u32 %v4404, 7
        %v4406 = vsub.s32 %v4403, %v4405
        %v4407 = vrot.slane %v2716, %v4406
        %v4409 = vunpack.c.l.s4 1966171168
        %v4410 = vunpack.c.0.s8 %v4409
        %v4411 = vlaneseq
        %v4412 = vshrl.u32 %v4411, 7
        %v4413 = vsub.s32 %v4410, %v4412
        %v4414 = vrot.slane %v4400, %v4413
        %v4415 = vcombine.high %v4407, %v4407
        %v4416 = vcombine.high %v4414, %v4414
        %v4418 = vunpack.c.l.s4 1966171168
        %v4419 = vunpack.c.0.s8 %v4418
        %v4420 = vlaneseq
        %v4421 = vshrl.u32 %v4420, 7
        %v4422 = vsub.s32 %v4419, %v4421
        %v4423 = vrot.slane %v4407, %v4422
        %v4425 = vunpack.c.l.s4 1966171168
        %v4426 = vunpack.c.0.s8 %v4425
        %v4427 = vlaneseq
        %v4428 = vshrl.u32 %v4427, 7
        %v4429 = vsub.s32 %v4426, %v4428
        %v4430 = vrot.slane %v4414, %v4429
        %v4432 = vunpack.c.l.s4 1966171168
        %v4433 = vunpack.c.0.s8 %v4432
        %v4434 = vlaneseq
        %v4435 = vshrl.u32 %v4434, 7
        %v4436 = vsub.s32 %v4433, %v4435
        %v4437 = vrot.slane %v4415, %v4436
        %v4439 = vunpack.c.l.s4 1966171168
        %v4440 = vunpack.c.0.s8 %v4439
        %v4441 = vlaneseq
        %v4442 = vshrl.u32 %v4441, 7
        %v4443 = vsub.s32 %v4440, %v4442
        %v4444 = vrot.slane %v4416, %v4443
        %v4445 = vcombine.high %v4423, %v4423
        %v4446 = vcombine.high %v4430, %v4430
        %v4447 = vcombine.high %v4437, %v4437
        %v4448 = vcombine.high %v4444, %v4444
        %v4449 = vcombine.high %v2721, %v2721
        %v4451 = vunpack.c.l.s4 1966171168
        %v4452 = vunpack.c.0.s8 %v4451
        %v4453 = vlaneseq
        %v4454 = vshrl.u32 %v4453, 7
        %v4455 = vsub.s32 %v4452, %v4454
        %v4456 = vrot.slane %v2721, %v4455
        %v4458 = vunpack.c.l.s4 1966171168
        %v4459 = vunpack.c.0.s8 %v4458
        %v4460 = vlaneseq
        %v4461 = vshrl.u32 %v4460, 7
        %v4462 = vsub.s32 %v4459, %v4461
        %v4463 = vrot.slane %v4449, %v4462
        %v4464 = vcombine.high %v4456, %v4456
        %v4465 = vcombine.high %v4463, %v4463
        %v4467 = vunpack.c.l.s4 1966171168
        %v4468 = vunpack.c.0.s8 %v4467
        %v4469 = vlaneseq
        %v4470 = vshrl.u32 %v4469, 7
        %v4471 = vsub.s32 %v4468, %v4470
        %v4472 = vrot.slane %v4456, %v4471
        %v4474 = vunpack.c.l.s4 1966171168
        %v4475 = vunpack.c.0.s8 %v4474
        %v4476 = vlaneseq
        %v4477 = vshrl.u32 %v4476, 7
        %v4478 = vsub.s32 %v4475, %v4477
        %v4479 = vrot.slane %v4463, %v4478
        %v4481 = vunpack.c.l.s4 1966171168
        %v4482 = vunpack.c.0.s8 %v4481
        %v4483 = vlaneseq
        %v4484 = vshrl.u32 %v4483, 7
        %v4485 = vsub.s32 %v4482, %v4484
        %v4486 = vrot.slane %v4464, %v4485
        %v4488 = vunpack.c.l.s4 1966171168
        %v4489 = vunpack.c.0.s8 %v4488
        %v4490 = vlaneseq
        %v4491 = vshrl.u32 %v4490, 7
        %v4492 = vsub.s32 %v4489, %v4491
        %v4493 = vrot.slane %v4465, %v4492
        %v4494 = vcombine.high %v4472, %v4472
        %v4495 = vcombine.high %v4479, %v4479
        %v4496 = vcombine.high %v4486, %v4486
        %v4497 = vcombine.high %v4493, %v4493
        %v4498 = vcombine.high %v2726, %v2726
        %v4500 = vunpack.c.l.s4 1966171168
        %v4501 = vunpack.c.0.s8 %v4500
        %v4502 = vlaneseq
        %v4503 = vshrl.u32 %v4502, 7
        %v4504 = vsub.s32 %v4501, %v4503
        %v4505 = vrot.slane %v2726, %v4504
        %v4507 = vunpack.c.l.s4 1966171168
        %v4508 = vunpack.c.0.s8 %v4507
        %v4509 = vlaneseq
        %v4510 = vshrl.u32 %v4509, 7
        %v4511 = vsub.s32 %v4508, %v4510
        %v4512 = vrot.slane %v4498, %v4511
        %v4513 = vcombine.high %v4505, %v4505
        %v4514 = vcombine.high %v4512, %v4512
        %v4516 = vunpack.c.l.s4 1966171168
        %v4517 = vunpack.c.0.s8 %v4516
        %v4518 = vlaneseq
        %v4519 = vshrl.u32 %v4518, 7
        %v4520 = vsub.s32 %v4517, %v4519
        %v4521 = vrot.slane %v4505, %v4520
        %v4523 = vunpack.c.l.s4 1966171168
        %v4524 = vunpack.c.0.s8 %v4523
        %v4525 = vlaneseq
        %v4526 = vshrl.u32 %v4525, 7
        %v4527 = vsub.s32 %v4524, %v4526
        %v4528 = vrot.slane %v4512, %v4527
        %v4530 = vunpack.c.l.s4 1966171168
        %v4531 = vunpack.c.0.s8 %v4530
        %v4532 = vlaneseq
        %v4533 = vshrl.u32 %v4532, 7
        %v4534 = vsub.s32 %v4531, %v4533
        %v4535 = vrot.slane %v4513, %v4534
        %v4537 = vunpack.c.l.s4 1966171168
        %v4538 = vunpack.c.0.s8 %v4537
        %v4539 = vlaneseq
        %v4540 = vshrl.u32 %v4539, 7
        %v4541 = vsub.s32 %v4538, %v4540
        %v4542 = vrot.slane %v4514, %v4541
        %v4543 = vcombine.high %v4521, %v4521
        %v4544 = vcombine.high %v4528, %v4528
        %v4545 = vcombine.high %v4535, %v4535
        %v4546 = vcombine.high %v4542, %v4542
        %v4547 = vcombine.high %v2731, %v2731
        %v4549 = vunpack.c.l.s4 1966171168
        %v4550 = vunpack.c.0.s8 %v4549
        %v4551 = vlaneseq
        %v4552 = vshrl.u32 %v4551, 7
        %v4553 = vsub.s32 %v4550, %v4552
        %v4554 = vrot.slane %v2731, %v4553
        %v4556 = vunpack.c.l.s4 1966171168
        %v4557 = vunpack.c.0.s8 %v4556
        %v4558 = vlaneseq
        %v4559 = vshrl.u32 %v4558, 7
        %v4560 = vsub.s32 %v4557, %v4559
        %v4561 = vrot.slane %v4547, %v4560
        %v4562 = vcombine.high %v4554, %v4554
        %v4563 = vcombine.high %v4561, %v4561
        %v4565 = vunpack.c.l.s4 1966171168
        %v4566 = vunpack.c.0.s8 %v4565
        %v4567 = vlaneseq
        %v4568 = vshrl.u32 %v4567, 7
        %v4569 = vsub.s32 %v4566, %v4568
        %v4570 = vrot.slane %v4554, %v4569
        %v4572 = vunpack.c.l.s4 1966171168
        %v4573 = vunpack.c.0.s8 %v4572
        %v4574 = vlaneseq
        %v4575 = vshrl.u32 %v4574, 7
        %v4576 = vsub.s32 %v4573, %v4575
        %v4577 = vrot.slane %v4561, %v4576
        %v4579 = vunpack.c.l.s4 1966171168
        %v4580 = vunpack.c.0.s8 %v4579
        %v4581 = vlaneseq
        %v4582 = vshrl.u32 %v4581, 7
        %v4583 = vsub.s32 %v4580, %v4582
        %v4584 = vrot.slane %v4562, %v4583
        %v4586 = vunpack.c.l.s4 1966171168
        %v4587 = vunpack.c.0.s8 %v4586
        %v4588 = vlaneseq
        %v4589 = vshrl.u32 %v4588, 7
        %v4590 = vsub.s32 %v4587, %v4589
        %v4591 = vrot.slane %v4563, %v4590
        %v4592 = vcombine.high %v4570, %v4570
        %v4593 = vcombine.high %v4577, %v4577
        %v4594 = vcombine.high %v4584, %v4584
        %v4595 = vcombine.high %v4591, %v4591
        %v4596 = vcombine.high %v2736, %v2736
        %v4598 = vunpack.c.l.s4 1966171168
        %v4599 = vunpack.c.0.s8 %v4598
        %v4600 = vlaneseq
        %v4601 = vshrl.u32 %v4600, 7
        %v4602 = vsub.s32 %v4599, %v4601
        %v4603 = vrot.slane %v2736, %v4602
        %v4605 = vunpack.c.l.s4 1966171168
        %v4606 = vunpack.c.0.s8 %v4605
        %v4607 = vlaneseq
        %v4608 = vshrl.u32 %v4607, 7
        %v4609 = vsub.s32 %v4606, %v4608
        %v4610 = vrot.slane %v4596, %v4609
        %v4611 = vcombine.high %v4603, %v4603
        %v4612 = vcombine.high %v4610, %v4610
        %v4614 = vunpack.c.l.s4 1966171168
        %v4615 = vunpack.c.0.s8 %v4614
        %v4616 = vlaneseq
        %v4617 = vshrl.u32 %v4616, 7
        %v4618 = vsub.s32 %v4615, %v4617
        %v4619 = vrot.slane %v4603, %v4618
        %v4621 = vunpack.c.l.s4 1966171168
        %v4622 = vunpack.c.0.s8 %v4621
        %v4623 = vlaneseq
        %v4624 = vshrl.u32 %v4623, 7
        %v4625 = vsub.s32 %v4622, %v4624
        %v4626 = vrot.slane %v4610, %v4625
        %v4628 = vunpack.c.l.s4 1966171168
        %v4629 = vunpack.c.0.s8 %v4628
        %v4630 = vlaneseq
        %v4631 = vshrl.u32 %v4630, 7
        %v4632 = vsub.s32 %v4629, %v4631
        %v4633 = vrot.slane %v4611, %v4632
        %v4635 = vunpack.c.l.s4 1966171168
        %v4636 = vunpack.c.0.s8 %v4635
        %v4637 = vlaneseq
        %v4638 = vshrl.u32 %v4637, 7
        %v4639 = vsub.s32 %v4636, %v4638
        %v4640 = vrot.slane %v4612, %v4639
        %v4641 = vcombine.high %v4619, %v4619
        %v4642 = vcombine.high %v4626, %v4626
        %v4643 = vcombine.high %v4633, %v4633
        %v4644 = vcombine.high %v4640, %v4640
        %v4645 = vcombine.high %v2741, %v2741
        %v4647 = vunpack.c.l.s4 1966171168
        %v4648 = vunpack.c.0.s8 %v4647
        %v4649 = vlaneseq
        %v4650 = vshrl.u32 %v4649, 7
        %v4651 = vsub.s32 %v4648, %v4650
        %v4652 = vrot.slane %v2741, %v4651
        %v4654 = vunpack.c.l.s4 1966171168
        %v4655 = vunpack.c.0.s8 %v4654
        %v4656 = vlaneseq
        %v4657 = vshrl.u32 %v4656, 7
        %v4658 = vsub.s32 %v4655, %v4657
        %v4659 = vrot.slane %v4645, %v4658
        %v4660 = vcombine.high %v4652, %v4652
        %v4661 = vcombine.high %v4659, %v4659
        %v4663 = vunpack.c.l.s4 1966171168
        %v4664 = vunpack.c.0.s8 %v4663
        %v4665 = vlaneseq
        %v4666 = vshrl.u32 %v4665, 7
        %v4667 = vsub.s32 %v4664, %v4666
        %v4668 = vrot.slane %v4652, %v4667
        %v4670 = vunpack.c.l.s4 1966171168
        %v4671 = vunpack.c.0.s8 %v4670
        %v4672 = vlaneseq
        %v4673 = vshrl.u32 %v4672, 7
        %v4674 = vsub.s32 %v4671, %v4673
        %v4675 = vrot.slane %v4659, %v4674
        %v4677 = vunpack.c.l.s4 1966171168
        %v4678 = vunpack.c.0.s8 %v4677
        %v4679 = vlaneseq
        %v4680 = vshrl.u32 %v4679, 7
        %v4681 = vsub.s32 %v4678, %v4680
        %v4682 = vrot.slane %v4660, %v4681
        %v4684 = vunpack.c.l.s4 1966171168
        %v4685 = vunpack.c.0.s8 %v4684
        %v4686 = vlaneseq
        %v4687 = vshrl.u32 %v4686, 7
        %v4688 = vsub.s32 %v4685, %v4687
        %v4689 = vrot.slane %v4661, %v4688
        %v4690 = vcombine.high %v4668, %v4668
        %v4691 = vcombine.high %v4675, %v4675
        %v4692 = vcombine.high %v4682, %v4682
        %v4693 = vcombine.high %v4689, %v4689
        %v4694 = vcombine.low %v2806, %v2820
        %v4696 = vunpack.c.l.s4 1966171168
        %v4697 = vunpack.c.0.s8 %v4696
        %v4698 = vlaneseq
        %v4699 = vshrl.u32 %v4698, 7
        %v4700 = vsub.s32 %v4697, %v4699
        %v4701 = vrot.slane %v4694, %v4700
        %v4703 = vunpack.c.l.s4 1966171168
        %v4704 = vunpack.c.0.s8 %v4703
        %v4705 = vlaneseq
        %v4706 = vshrl.u32 %v4705, 7
        %v4707 = vsub.s32 %v4704, %v4706
        %v4708 = vrot.slane %v2828, %v4707
        %v4709 = vcombine.low %v4701, %v4708
        %v4711 = vunpack.c.l.s4 1966171168
        %v4712 = vunpack.c.0.s8 %v4711
        %v4713 = vlaneseq
        %v4714 = vshrl.u32 %v4713, 7
        %v4715 = vsub.s32 %v4712, %v4714
        %v4716 = vrot.slane %v4709, %v4715
        %v4717 = vcombine.low %v2830, %v2813
        %v4719 = vunpack.c.l.s4 1966171168
        %v4720 = vunpack.c.0.s8 %v4719
        %v4721 = vlaneseq
        %v4722 = vshrl.u32 %v4721, 7
        %v4723 = vsub.s32 %v4720, %v4722
        %v4724 = vrot.slane %v4717, %v4723
        %v4726 = vunpack.c.l.s4 1966171168
        %v4727 = vunpack.c.0.s8 %v4726
        %v4728 = vlaneseq
        %v4729 = vshrl.u32 %v4728, 7
        %v4730 = vsub.s32 %v4727, %v4729
        %v4731 = vrot.slane %v2827, %v4730
        %v4732 = vcombine.low %v4724, %v4731
        %v4734 = vunpack.c.l.s4 1966171168
        %v4735 = vunpack.c.0.s8 %v4734
        %v4736 = vlaneseq
        %v4737 = vshrl.u32 %v4736, 7
        %v4738 = vsub.s32 %v4735, %v4737
        %v4739 = vrot.slane %v4732, %v4738
        %v4740 = vcombine.low %v2829, %v2831
        %v4742 = vunpack.c.l.s4 1966171168
        %v4743 = vunpack.c.0.s8 %v4742
        %v4744 = vlaneseq
        %v4745 = vshrl.u32 %v4744, 7
        %v4746 = vsub.s32 %v4743, %v4745
        %v4747 = vrot.slane %v4740, %v4746
        %v4749 = vunpack.c.l.s4 1966171168
        %v4750 = vunpack.c.0.s8 %v4749
        %v4751 = vlaneseq
        %v4752 = vshrl.u32 %v4751, 7
        %v4753 = vsub.s32 %v4750, %v4752
        %v4754 = vrot.slane %v2855, %v4753
        %v4755 = vcombine.low %v4747, %v4754
        %v4757 = vunpack.c.l.s4 1966171168
        %v4758 = vunpack.c.0.s8 %v4757
        %v4759 = vlaneseq
        %v4760 = vshrl.u32 %v4759, 7
        %v4761 = vsub.s32 %v4758, %v4760
        %v4762 = vrot.slane %v4755, %v4761
        %v4763 = vcombine.low %v2869, %v2877
        %v4765 = vunpack.c.l.s4 1966171168
        %v4766 = vunpack.c.0.s8 %v4765
        %v4767 = vlaneseq
        %v4768 = vshrl.u32 %v4767, 7
        %v4769 = vsub.s32 %v4766, %v4768
        %v4770 = vrot.slane %v4763, %v4769
        %v4772 = vunpack.c.l.s4 1966171168
        %v4773 = vunpack.c.0.s8 %v4772
        %v4774 = vlaneseq
        %v4775 = vshrl.u32 %v4774, 7
        %v4776 = vsub.s32 %v4773, %v4775
        %v4777 = vrot.slane %v2879, %v4776
        %v4778 = vcombine.low %v4770, %v4777
        %v4780 = vunpack.c.l.s4 1966171168
        %v4781 = vunpack.c.0.s8 %v4780
        %v4782 = vlaneseq
        %v4783 = vshrl.u32 %v4782, 7
        %v4784 = vsub.s32 %v4781, %v4783
        %v4785 = vrot.slane %v4778, %v4784
        %v4786 = vcombine.low %v2862, %v2876
        %v4788 = vunpack.c.l.s4 1966171168
        %v4789 = vunpack.c.0.s8 %v4788
        %v4790 = vlaneseq
        %v4791 = vshrl.u32 %v4790, 7
        %v4792 = vsub.s32 %v4789, %v4791
        %v4793 = vrot.slane %v4786, %v4792
        %v4795 = vunpack.c.l.s4 1966171168
        %v4796 = vunpack.c.0.s8 %v4795
        %v4797 = vlaneseq
        %v4798 = vshrl.u32 %v4797, 7
        %v4799 = vsub.s32 %v4796, %v4798
        %v4800 = vrot.slane %v2878, %v4799
        %v4801 = vcombine.low %v4793, %v4800
        %v4803 = vunpack.c.l.s4 1966171168
        %v4804 = vunpack.c.0.s8 %v4803
        %v4805 = vlaneseq
        %v4806 = vshrl.u32 %v4805, 7
        %v4807 = vsub.s32 %v4804, %v4806
        %v4808 = vrot.slane %v4801, %v4807
        %v4809 = vcombine.low %v2880, %v2904
        %v4811 = vunpack.c.l.s4 1966171168
        %v4812 = vunpack.c.0.s8 %v4811
        %v4813 = vlaneseq
        %v4814 = vshrl.u32 %v4813, 7
        %v4815 = vsub.s32 %v4812, %v4814
        %v4816 = vrot.slane %v4809, %v4815
        %v4818 = vunpack.c.l.s4 1966171168
        %v4819 = vunpack.c.0.s8 %v4818
        %v4820 = vlaneseq
        %v4821 = vshrl.u32 %v4820, 7
        %v4822 = vsub.s32 %v4819, %v4821
        %v4823 = vrot.slane %v2918, %v4822
        %v4824 = vcombine.low %v4816, %v4823
        %v4826 = vunpack.c.l.s4 1966171168
        %v4827 = vunpack.c.0.s8 %v4826
        %v4828 = vlaneseq
        %v4829 = vshrl.u32 %v4828, 7
        %v4830 = vsub.s32 %v4827, %v4829
        %v4831 = vrot.slane %v4824, %v4830
        %v4832 = vcombine.low %v2926, %v2928
        %v4834 = vunpack.c.l.s4 1966171168
        %v4835 = vunpack.c.0.s8 %v4834
        %v4836 = vlaneseq
        %v4837 = vshrl.u32 %v4836, 7
        %v4838 = vsub.s32 %v4835, %v4837
        %v4839 = vrot.slane %v4832, %v4838
        %v4841 = vunpack.c.l.s4 1966171168
        %v4842 = vunpack.c.0.s8 %v4841
        %v4843 = vlaneseq
        %v4844 = vshrl.u32 %v4843, 7
        %v4845 = vsub.s32 %v4842, %v4844
        %v4846 = vrot.slane %v2911, %v4845
        %v4847 = vcombine.low %v4839, %v4846
        %v4849 = vunpack.c.l.s4 1966171168
        %v4850 = vunpack.c.0.s8 %v4849
        %v4851 = vlaneseq
        %v4852 = vshrl.u32 %v4851, 7
        %v4853 = vsub.s32 %v4850, %v4852
        %v4854 = vrot.slane %v4847, %v4853
        %v4855 = vcombine.low %v2925, %v2927
        %v4857 = vunpack.c.l.s4 1966171168
        %v4858 = vunpack.c.0.s8 %v4857
        %v4859 = vlaneseq
        %v4860 = vshrl.u32 %v4859, 7
        %v4861 = vsub.s32 %v4858, %v4860
        %v4862 = vrot.slane %v4855, %v4861
        %v4864 = vunpack.c.l.s4 1966171168
        %v4865 = vunpack.c.0.s8 %v4864
        %v4866 = vlaneseq
        %v4867 = vshrl.u32 %v4866, 7
        %v4868 = vsub.s32 %v4865, %v4867
        %v4869 = vrot.slane %v2929, %v4868
        %v4870 = vcombine.low %v4862, %v4869
        %v4872 = vunpack.c.l.s4 1966171168
        %v4873 = vunpack.c.0.s8 %v4872
        %v4874 = vlaneseq
        %v4875 = vshrl.u32 %v4874, 7
        %v4876 = vsub.s32 %v4873, %v4875
        %v4877 = vrot.slane %v4870, %v4876
        %v4878 = vcombine.low %v2953, %v2967
        %v4880 = vunpack.c.l.s4 1966171168
        %v4881 = vunpack.c.0.s8 %v4880
        %v4882 = vlaneseq
        %v4883 = vshrl.u32 %v4882, 7
        %v4884 = vsub.s32 %v4881, %v4883
        %v4885 = vrot.slane %v4878, %v4884
        %v4887 = vunpack.c.l.s4 1966171168
        %v4888 = vunpack.c.0.s8 %v4887
        %v4889 = vlaneseq
        %v4890 = vshrl.u32 %v4889, 7
        %v4891 = vsub.s32 %v4888, %v4890
        %v4892 = vrot.slane %v2975, %v4891
        %v4893 = vcombine.low %v4885, %v4892
        %v4895 = vunpack.c.l.s4 1966171168
        %v4896 = vunpack.c.0.s8 %v4895
        %v4897 = vlaneseq
        %v4898 = vshrl.u32 %v4897, 7
        %v4899 = vsub.s32 %v4896, %v4898
        %v4900 = vrot.slane %v4893, %v4899
        %v4901 = vcombine.low %v2977, %v2960
        %v4903 = vunpack.c.l.s4 1966171168
        %v4904 = vunpack.c.0.s8 %v4903
        %v4905 = vlaneseq
        %v4906 = vshrl.u32 %v4905, 7
        %v4907 = vsub.s32 %v4904, %v4906
        %v4908 = vrot.slane %v4901, %v4907
        %v4910 = vunpack.c.l.s4 1966171168
        %v4911 = vunpack.c.0.s8 %v4910
        %v4912 = vlaneseq
        %v4913 = vshrl.u32 %v4912, 7
        %v4914 = vsub.s32 %v4911, %v4913
        %v4915 = vrot.slane %v2974, %v4914
        %v4916 = vcombine.low %v4908, %v4915
        %v4918 = vunpack.c.l.s4 1966171168
        %v4919 = vunpack.c.0.s8 %v4918
        %v4920 = vlaneseq
        %v4921 = vshrl.u32 %v4920, 7
        %v4922 = vsub.s32 %v4919, %v4921
        %v4923 = vrot.slane %v4916, %v4922
        %v4924 = vcombine.low %v2976, %v2978
        %v4926 = vunpack.c.l.s4 1966171168
        %v4927 = vunpack.c.0.s8 %v4926
        %v4928 = vlaneseq
        %v4929 = vshrl.u32 %v4928, 7
        %v4930 = vsub.s32 %v4927, %v4929
        %v4931 = vrot.slane %v4924, %v4930
        %v4933 = vunpack.c.l.s4 1966171168
        %v4934 = vunpack.c.0.s8 %v4933
        %v4935 = vlaneseq
        %v4936 = vshrl.u32 %v4935, 7
        %v4937 = vsub.s32 %v4934, %v4936
        %v4938 = vrot.slane %v3002, %v4937
        %v4939 = vcombine.low %v4931, %v4938
        %v4941 = vunpack.c.l.s4 1966171168
        %v4942 = vunpack.c.0.s8 %v4941
        %v4943 = vlaneseq
        %v4944 = vshrl.u32 %v4943, 7
        %v4945 = vsub.s32 %v4942, %v4944
        %v4946 = vrot.slane %v4939, %v4945
        %v4947 = vcombine.low %v3016, %v3024
        %v4949 = vunpack.c.l.s4 1966171168
        %v4950 = vunpack.c.0.s8 %v4949
        %v4951 = vlaneseq
        %v4952 = vshrl.u32 %v4951, 7
        %v4953 = vsub.s32 %v4950, %v4952
        %v4954 = vrot.slane %v4947, %v4953
        %v4956 = vunpack.c.l.s4 1966171168
        %v4957 = vunpack.c.0.s8 %v4956
        %v4958 = vlaneseq
        %v4959 = vshrl.u32 %v4958, 7
        %v4960 = vsub.s32 %v4957, %v4959
        %v4961 = vrot.slane %v3026, %v4960
        %v4962 = vcombine.low %v4954, %v4961
        %v4964 = vunpack.c.l.s4 1966171168
        %v4965 = vunpack.c.0.s8 %v4964
        %v4966 = vlaneseq
        %v4967 = vshrl.u32 %v4966, 7
        %v4968 = vsub.s32 %v4965, %v4967
        %v4969 = vrot.slane %v4962, %v4968
        %v4970 = vcombine.low %v3009, %v3023
        %v4972 = vunpack.c.l.s4 1966171168
        %v4973 = vunpack.c.0.s8 %v4972
        %v4974 = vlaneseq
        %v4975 = vshrl.u32 %v4974, 7
        %v4976 = vsub.s32 %v4973, %v4975
        %v4977 = vrot.slane %v4970, %v4976
        %v4979 = vunpack.c.l.s4 1966171168
        %v4980 = vunpack.c.0.s8 %v4979
        %v4981 = vlaneseq
        %v4982 = vshrl.u32 %v4981, 7
        %v4983 = vsub.s32 %v4980, %v4982
        %v4984 = vrot.slane %v3025, %v4983
        %v4985 = vcombine.low %v4977, %v4984
        %v4987 = vunpack.c.l.s4 1966171168
        %v4988 = vunpack.c.0.s8 %v4987
        %v4989 = vlaneseq
        %v4990 = vshrl.u32 %v4989, 7
        %v4991 = vsub.s32 %v4988, %v4990
        %v4992 = vrot.slane %v4985, %v4991
        %v4993 = vcombine.low %v3027, %v3051
        %v4995 = vunpack.c.l.s4 1966171168
        %v4996 = vunpack.c.0.s8 %v4995
        %v4997 = vlaneseq
        %v4998 = vshrl.u32 %v4997, 7
        %v4999 = vsub.s32 %v4996, %v4998
        %v5000 = vrot.slane %v4993, %v4999
        %v5002 = vunpack.c.l.s4 1966171168
        %v5003 = vunpack.c.0.s8 %v5002
        %v5004 = vlaneseq
        %v5005 = vshrl.u32 %v5004, 7
        %v5006 = vsub.s32 %v5003, %v5005
        %v5007 = vrot.slane %v3065, %v5006
        %v5008 = vcombine.low %v5000, %v5007
        %v5010 = vunpack.c.l.s4 1966171168
        %v5011 = vunpack.c.0.s8 %v5010
        %v5012 = vlaneseq
        %v5013 = vshrl.u32 %v5012, 7
        %v5014 = vsub.s32 %v5011, %v5013
        %v5015 = vrot.slane %v5008, %v5014
        %v5016 = vcombine.low %v3073, %v3075
        %v5018 = vunpack.c.l.s4 1966171168
        %v5019 = vunpack.c.0.s8 %v5018
        %v5020 = vlaneseq
        %v5021 = vshrl.u32 %v5020, 7
        %v5022 = vsub.s32 %v5019, %v5021
        %v5023 = vrot.slane %v5016, %v5022
        %v5025 = vunpack.c.l.s4 1966171168
        %v5026 = vunpack.c.0.s8 %v5025
        %v5027 = vlaneseq
        %v5028 = vshrl.u32 %v5027, 7
        %v5029 = vsub.s32 %v5026, %v5028
        %v5030 = vrot.slane %v3058, %v5029
        %v5031 = vcombine.low %v5023, %v5030
        %v5033 = vunpack.c.l.s4 1966171168
        %v5034 = vunpack.c.0.s8 %v5033
        %v5035 = vlaneseq
        %v5036 = vshrl.u32 %v5035, 7
        %v5037 = vsub.s32 %v5034, %v5036
        %v5038 = vrot.slane %v5031, %v5037
        %v5039 = vcombine.low %v3072, %v3074
        %v5041 = vunpack.c.l.s4 1966171168
        %v5042 = vunpack.c.0.s8 %v5041
        %v5043 = vlaneseq
        %v5044 = vshrl.u32 %v5043, 7
        %v5045 = vsub.s32 %v5042, %v5044
        %v5046 = vrot.slane %v5039, %v5045
        %v5048 = vunpack.c.l.s4 1966171168
        %v5049 = vunpack.c.0.s8 %v5048
        %v5050 = vlaneseq
        %v5051 = vshrl.u32 %v5050, 7
        %v5052 = vsub.s32 %v5049, %v5051
        %v5053 = vrot.slane %v3076, %v5052
        %v5054 = vcombine.low %v5046, %v5053
        %v5056 = vunpack.c.l.s4 1966171168
        %v5057 = vunpack.c.0.s8 %v5056
        %v5058 = vlaneseq
        %v5059 = vshrl.u32 %v5058, 7
        %v5060 = vsub.s32 %v5057, %v5059
        %v5061 = vrot.slane %v5054, %v5060
        %v5062 = vcombine.low %v3100, %v3114
        %v5064 = vunpack.c.l.s4 1966171168
        %v5065 = vunpack.c.0.s8 %v5064
        %v5066 = vlaneseq
        %v5067 = vshrl.u32 %v5066, 7
        %v5068 = vsub.s32 %v5065, %v5067
        %v5069 = vrot.slane %v5062, %v5068
        %v5071 = vunpack.c.l.s4 1966171168
        %v5072 = vunpack.c.0.s8 %v5071
        %v5073 = vlaneseq
        %v5074 = vshrl.u32 %v5073, 7
        %v5075 = vsub.s32 %v5072, %v5074
        %v5076 = vrot.slane %v3122, %v5075
        %v5077 = vcombine.low %v5069, %v5076
        %v5079 = vunpack.c.l.s4 1966171168
        %v5080 = vunpack.c.0.s8 %v5079
        %v5081 = vlaneseq
        %v5082 = vshrl.u32 %v5081, 7
        %v5083 = vsub.s32 %v5080, %v5082
        %v5084 = vrot.slane %v5077, %v5083
        %v5085 = vcombine.low %v3124, %v3107
        %v5087 = vunpack.c.l.s4 1966171168
        %v5088 = vunpack.c.0.s8 %v5087
        %v5089 = vlaneseq
        %v5090 = vshrl.u32 %v5089, 7
        %v5091 = vsub.s32 %v5088, %v5090
        %v5092 = vrot.slane %v5085, %v5091
        %v5094 = vunpack.c.l.s4 1966171168
        %v5095 = vunpack.c.0.s8 %v5094
        %v5096 = vlaneseq
        %v5097 = vshrl.u32 %v5096, 7
        %v5098 = vsub.s32 %v5095, %v5097
        %v5099 = vrot.slane %v3121, %v5098
        %v5100 = vcombine.low %v5092, %v5099
        %v5102 = vunpack.c.l.s4 1966171168
        %v5103 = vunpack.c.0.s8 %v5102
        %v5104 = vlaneseq
        %v5105 = vshrl.u32 %v5104, 7
        %v5106 = vsub.s32 %v5103, %v5105
        %v5107 = vrot.slane %v5100, %v5106
        %v5108 = vcombine.low %v3123, %v3125
        %v5110 = vunpack.c.l.s4 1966171168
        %v5111 = vunpack.c.0.s8 %v5110
        %v5112 = vlaneseq
        %v5113 = vshrl.u32 %v5112, 7
        %v5114 = vsub.s32 %v5111, %v5113
        %v5115 = vrot.slane %v5108, %v5114
        %v5117 = vunpack.c.l.s4 1966171168
        %v5118 = vunpack.c.0.s8 %v5117
        %v5119 = vlaneseq
        %v5120 = vshrl.u32 %v5119, 7
        %v5121 = vsub.s32 %v5118, %v5120
        %v5122 = vrot.slane %v3149, %v5121
        %v5123 = vcombine.low %v5115, %v5122
        %v5125 = vunpack.c.l.s4 1966171168
        %v5126 = vunpack.c.0.s8 %v5125
        %v5127 = vlaneseq
        %v5128 = vshrl.u32 %v5127, 7
        %v5129 = vsub.s32 %v5126, %v5128
        %v5130 = vrot.slane %v5123, %v5129
        %v5131 = vcombine.low %v3163, %v3171
        %v5133 = vunpack.c.l.s4 1966171168
        %v5134 = vunpack.c.0.s8 %v5133
        %v5135 = vlaneseq
        %v5136 = vshrl.u32 %v5135, 7
        %v5137 = vsub.s32 %v5134, %v5136
        %v5138 = vrot.slane %v5131, %v5137
        %v5140 = vunpack.c.l.s4 1966171168
        %v5141 = vunpack.c.0.s8 %v5140
        %v5142 = vlaneseq
        %v5143 = vshrl.u32 %v5142, 7
        %v5144 = vsub.s32 %v5141, %v5143
        %v5145 = vrot.slane %v3173, %v5144
        %v5146 = vcombine.low %v5138, %v5145
        %v5148 = vunpack.c.l.s4 1966171168
        %v5149 = vunpack.c.0.s8 %v5148
        %v5150 = vlaneseq
        %v5151 = vshrl.u32 %v5150, 7
        %v5152 = vsub.s32 %v5149, %v5151
        %v5153 = vrot.slane %v5146, %v5152
        %v5154 = vcombine.low %v3156, %v3170
        %v5156 = vunpack.c.l.s4 1966171168
        %v5157 = vunpack.c.0.s8 %v5156
        %v5158 = vlaneseq
        %v5159 = vshrl.u32 %v5158, 7
        %v5160 = vsub.s32 %v5157, %v5159
        %v5161 = vrot.slane %v5154, %v5160
        %v5163 = vunpack.c.l.s4 1966171168
        %v5164 = vunpack.c.0.s8 %v5163
        %v5165 = vlaneseq
        %v5166 = vshrl.u32 %v5165, 7
        %v5167 = vsub.s32 %v5164, %v5166
        %v5168 = vrot.slane %v3172, %v5167
        %v5169 = vcombine.low %v5161, %v5168
        %v5171 = vunpack.c.l.s4 1966171168
        %v5172 = vunpack.c.0.s8 %v5171
        %v5173 = vlaneseq
        %v5174 = vshrl.u32 %v5173, 7
        %v5175 = vsub.s32 %v5172, %v5174
        %v5176 = vrot.slane %v5169, %v5175
        %v5177 = vcombine.low %v3174, %v3198
        %v5179 = vunpack.c.l.s4 1966171168
        %v5180 = vunpack.c.0.s8 %v5179
        %v5181 = vlaneseq
        %v5182 = vshrl.u32 %v5181, 7
        %v5183 = vsub.s32 %v5180, %v5182
        %v5184 = vrot.slane %v5177, %v5183
        %v5186 = vunpack.c.l.s4 1966171168
        %v5187 = vunpack.c.0.s8 %v5186
        %v5188 = vlaneseq
        %v5189 = vshrl.u32 %v5188, 7
        %v5190 = vsub.s32 %v5187, %v5189
        %v5191 = vrot.slane %v3212, %v5190
        %v5192 = vcombine.low %v5184, %v5191
        %v5194 = vunpack.c.l.s4 1966171168
        %v5195 = vunpack.c.0.s8 %v5194
        %v5196 = vlaneseq
        %v5197 = vshrl.u32 %v5196, 7
        %v5198 = vsub.s32 %v5195, %v5197
        %v5199 = vrot.slane %v5192, %v5198
        %v5200 = vcombine.low %v3220, %v3222
        %v5202 = vunpack.c.l.s4 1966171168
        %v5203 = vunpack.c.0.s8 %v5202
        %v5204 = vlaneseq
        %v5205 = vshrl.u32 %v5204, 7
        %v5206 = vsub.s32 %v5203, %v5205
        %v5207 = vrot.slane %v5200, %v5206
        %v5209 = vunpack.c.l.s4 1966171168
        %v5210 = vunpack.c.0.s8 %v5209
        %v5211 = vlaneseq
        %v5212 = vshrl.u32 %v5211, 7
        %v5213 = vsub.s32 %v5210, %v5212
        %v5214 = vrot.slane %v3205, %v5213
        %v5215 = vcombine.low %v5207, %v5214
        %v5217 = vunpack.c.l.s4 1966171168
        %v5218 = vunpack.c.0.s8 %v5217
        %v5219 = vlaneseq
        %v5220 = vshrl.u32 %v5219, 7
        %v5221 = vsub.s32 %v5218, %v5220
        %v5222 = vrot.slane %v5215, %v5221
        %v5223 = vcombine.low %v3219, %v3221
        %v5225 = vunpack.c.l.s4 1966171168
        %v5226 = vunpack.c.0.s8 %v5225
        %v5227 = vlaneseq
        %v5228 = vshrl.u32 %v5227, 7
        %v5229 = vsub.s32 %v5226, %v5228
        %v5230 = vrot.slane %v5223, %v5229
        %v5232 = vunpack.c.l.s4 1966171168
        %v5233 = vunpack.c.0.s8 %v5232
        %v5234 = vlaneseq
        %v5235 = vshrl.u32 %v5234, 7
        %v5236 = vsub.s32 %v5233, %v5235
        %v5237 = vrot.slane %v3223, %v5236
        %v5238 = vcombine.low %v5230, %v5237
        %v5240 = vunpack.c.l.s4 1966171168
        %v5241 = vunpack.c.0.s8 %v5240
        %v5242 = vlaneseq
        %v5243 = vshrl.u32 %v5242, 7
        %v5244 = vsub.s32 %v5241, %v5243
        %v5245 = vrot.slane %v5238, %v5244
        %v5246 = vcombine.low %v3247, %v3261
        %v5248 = vunpack.c.l.s4 1966171168
        %v5249 = vunpack.c.0.s8 %v5248
        %v5250 = vlaneseq
        %v5251 = vshrl.u32 %v5250, 7
        %v5252 = vsub.s32 %v5249, %v5251
        %v5253 = vrot.slane %v5246, %v5252
        %v5255 = vunpack.c.l.s4 1966171168
        %v5256 = vunpack.c.0.s8 %v5255
        %v5257 = vlaneseq
        %v5258 = vshrl.u32 %v5257, 7
        %v5259 = vsub.s32 %v5256, %v5258
        %v5260 = vrot.slane %v3269, %v5259
        %v5261 = vcombine.low %v5253, %v5260
        %v5263 = vunpack.c.l.s4 1966171168
        %v5264 = vunpack.c.0.s8 %v5263
        %v5265 = vlaneseq
        %v5266 = vshrl.u32 %v5265, 7
        %v5267 = vsub.s32 %v5264, %v5266
        %v5268 = vrot.slane %v5261, %v5267
        %v5269 = vcombine.low %v3271, %v3254
        %v5271 = vunpack.c.l.s4 1966171168
        %v5272 = vunpack.c.0.s8 %v5271
        %v5273 = vlaneseq
        %v5274 = vshrl.u32 %v5273, 7
        %v5275 = vsub.s32 %v5272, %v5274
        %v5276 = vrot.slane %v5269, %v5275
        %v5278 = vunpack.c.l.s4 1966171168
        %v5279 = vunpack.c.0.s8 %v5278
        %v5280 = vlaneseq
        %v5281 = vshrl.u32 %v5280, 7
        %v5282 = vsub.s32 %v5279, %v5281
        %v5283 = vrot.slane %v3268, %v5282
        %v5284 = vcombine.low %v5276, %v5283
        %v5286 = vunpack.c.l.s4 1966171168
        %v5287 = vunpack.c.0.s8 %v5286
        %v5288 = vlaneseq
        %v5289 = vshrl.u32 %v5288, 7
        %v5290 = vsub.s32 %v5287, %v5289
        %v5291 = vrot.slane %v5284, %v5290
        %v5292 = vcombine.low %v3270, %v3272
        %v5294 = vunpack.c.l.s4 1966171168
        %v5295 = vunpack.c.0.s8 %v5294
        %v5296 = vlaneseq
        %v5297 = vshrl.u32 %v5296, 7
        %v5298 = vsub.s32 %v5295, %v5297
        %v5299 = vrot.slane %v5292, %v5298
        %v5301 = vunpack.c.l.s4 1966171168
        %v5302 = vunpack.c.0.s8 %v5301
        %v5303 = vlaneseq
        %v5304 = vshrl.u32 %v5303, 7
        %v5305 = vsub.s32 %v5302, %v5304
        %v5306 = vrot.slane %v3296, %v5305
        %v5307 = vcombine.low %v5299, %v5306
        %v5309 = vunpack.c.l.s4 1966171168
        %v5310 = vunpack.c.0.s8 %v5309
        %v5311 = vlaneseq
        %v5312 = vshrl.u32 %v5311, 7
        %v5313 = vsub.s32 %v5310, %v5312
        %v5314 = vrot.slane %v5307, %v5313
        %v5315 = vcombine.low %v3310, %v3318
        %v5317 = vunpack.c.l.s4 1966171168
        %v5318 = vunpack.c.0.s8 %v5317
        %v5319 = vlaneseq
        %v5320 = vshrl.u32 %v5319, 7
        %v5321 = vsub.s32 %v5318, %v5320
        %v5322 = vrot.slane %v5315, %v5321
        %v5324 = vunpack.c.l.s4 1966171168
        %v5325 = vunpack.c.0.s8 %v5324
        %v5326 = vlaneseq
        %v5327 = vshrl.u32 %v5326, 7
        %v5328 = vsub.s32 %v5325, %v5327
        %v5329 = vrot.slane %v3320, %v5328
        %v5330 = vcombine.low %v5322, %v5329
        %v5332 = vunpack.c.l.s4 1966171168
        %v5333 = vunpack.c.0.s8 %v5332
        %v5334 = vlaneseq
        %v5335 = vshrl.u32 %v5334, 7
        %v5336 = vsub.s32 %v5333, %v5335
        %v5337 = vrot.slane %v5330, %v5336
        %v5338 = vcombine.low %v3303, %v3317
        %v5340 = vunpack.c.l.s4 1966171168
        %v5341 = vunpack.c.0.s8 %v5340
        %v5342 = vlaneseq
        %v5343 = vshrl.u32 %v5342, 7
        %v5344 = vsub.s32 %v5341, %v5343
        %v5345 = vrot.slane %v5338, %v5344
        %v5347 = vunpack.c.l.s4 1966171168
        %v5348 = vunpack.c.0.s8 %v5347
        %v5349 = vlaneseq
        %v5350 = vshrl.u32 %v5349, 7
        %v5351 = vsub.s32 %v5348, %v5350
        %v5352 = vrot.slane %v3319, %v5351
        %v5353 = vcombine.low %v5345, %v5352
        %v5355 = vunpack.c.l.s4 1966171168
        %v5356 = vunpack.c.0.s8 %v5355
        %v5357 = vlaneseq
        %v5358 = vshrl.u32 %v5357, 7
        %v5359 = vsub.s32 %v5356, %v5358
        %v5360 = vrot.slane %v5353, %v5359
        %v5361 = vcombine.low %v3321, %v3345
        %v5363 = vunpack.c.l.s4 1966171168
        %v5364 = vunpack.c.0.s8 %v5363
        %v5365 = vlaneseq
        %v5366 = vshrl.u32 %v5365, 7
        %v5367 = vsub.s32 %v5364, %v5366
        %v5368 = vrot.slane %v5361, %v5367
        %v5370 = vunpack.c.l.s4 1966171168
        %v5371 = vunpack.c.0.s8 %v5370
        %v5372 = vlaneseq
        %v5373 = vshrl.u32 %v5372, 7
        %v5374 = vsub.s32 %v5371, %v5373
        %v5375 = vrot.slane %v3359, %v5374
        %v5376 = vcombine.low %v5368, %v5375
        %v5378 = vunpack.c.l.s4 1966171168
        %v5379 = vunpack.c.0.s8 %v5378
        %v5380 = vlaneseq
        %v5381 = vshrl.u32 %v5380, 7
        %v5382 = vsub.s32 %v5379, %v5381
        %v5383 = vrot.slane %v5376, %v5382
        %v5384 = vcombine.low %v3367, %v3369
        %v5386 = vunpack.c.l.s4 1966171168
        %v5387 = vunpack.c.0.s8 %v5386
        %v5388 = vlaneseq
        %v5389 = vshrl.u32 %v5388, 7
        %v5390 = vsub.s32 %v5387, %v5389
        %v5391 = vrot.slane %v5384, %v5390
        %v5393 = vunpack.c.l.s4 1966171168
        %v5394 = vunpack.c.0.s8 %v5393
        %v5395 = vlaneseq
        %v5396 = vshrl.u32 %v5395, 7
        %v5397 = vsub.s32 %v5394, %v5396
        %v5398 = vrot.slane %v3352, %v5397
        %v5399 = vcombine.low %v5391, %v5398
        %v5401 = vunpack.c.l.s4 1966171168
        %v5402 = vunpack.c.0.s8 %v5401
        %v5403 = vlaneseq
        %v5404 = vshrl.u32 %v5403, 7
        %v5405 = vsub.s32 %v5402, %v5404
        %v5406 = vrot.slane %v5399, %v5405
        %v5407 = vcombine.low %v3366, %v3368
        %v5409 = vunpack.c.l.s4 1966171168
        %v5410 = vunpack.c.0.s8 %v5409
        %v5411 = vlaneseq
        %v5412 = vshrl.u32 %v5411, 7
        %v5413 = vsub.s32 %v5410, %v5412
        %v5414 = vrot.slane %v5407, %v5413
        %v5416 = vunpack.c.l.s4 1966171168
        %v5417 = vunpack.c.0.s8 %v5416
        %v5418 = vlaneseq
        %v5419 = vshrl.u32 %v5418, 7
        %v5420 = vsub.s32 %v5417, %v5419
        %v5421 = vrot.slane %v3370, %v5420
        %v5422 = vcombine.low %v5414, %v5421
        %v5424 = vunpack.c.l.s4 1966171168
        %v5425 = vunpack.c.0.s8 %v5424
        %v5426 = vlaneseq
        %v5427 = vshrl.u32 %v5426, 7
        %v5428 = vsub.s32 %v5425, %v5427
        %v5429 = vrot.slane %v5422, %v5428
        %v5430 = vcombine.low %v3394, %v3408
        %v5432 = vunpack.c.l.s4 1966171168
        %v5433 = vunpack.c.0.s8 %v5432
        %v5434 = vlaneseq
        %v5435 = vshrl.u32 %v5434, 7
        %v5436 = vsub.s32 %v5433, %v5435
        %v5437 = vrot.slane %v5430, %v5436
        %v5439 = vunpack.c.l.s4 1966171168
        %v5440 = vunpack.c.0.s8 %v5439
        %v5441 = vlaneseq
        %v5442 = vshrl.u32 %v5441, 7
        %v5443 = vsub.s32 %v5440, %v5442
        %v5444 = vrot.slane %v3416, %v5443
        %v5445 = vcombine.low %v5437, %v5444
        %v5447 = vunpack.c.l.s4 1966171168
        %v5448 = vunpack.c.0.s8 %v5447
        %v5449 = vlaneseq
        %v5450 = vshrl.u32 %v5449, 7
        %v5451 = vsub.s32 %v5448, %v5450
        %v5452 = vrot.slane %v5445, %v5451
        %v5453 = vcombine.low %v3418, %v3401
        %v5455 = vunpack.c.l.s4 1966171168
        %v5456 = vunpack.c.0.s8 %v5455
        %v5457 = vlaneseq
        %v5458 = vshrl.u32 %v5457, 7
        %v5459 = vsub.s32 %v5456, %v5458
        %v5460 = vrot.slane %v5453, %v5459
        %v5462 = vunpack.c.l.s4 1966171168
        %v5463 = vunpack.c.0.s8 %v5462
        %v5464 = vlaneseq
        %v5465 = vshrl.u32 %v5464, 7
        %v5466 = vsub.s32 %v5463, %v5465
        %v5467 = vrot.slane %v3415, %v5466
        %v5468 = vcombine.low %v5460, %v5467
        %v5470 = vunpack.c.l.s4 1966171168
        %v5471 = vunpack.c.0.s8 %v5470
        %v5472 = vlaneseq
        %v5473 = vshrl.u32 %v5472, 7
        %v5474 = vsub.s32 %v5471, %v5473
        %v5475 = vrot.slane %v5468, %v5474
        %v5476 = vcombine.low %v3417, %v3419
        %v5478 = vunpack.c.l.s4 1966171168
        %v5479 = vunpack.c.0.s8 %v5478
        %v5480 = vlaneseq
        %v5481 = vshrl.u32 %v5480, 7
        %v5482 = vsub.s32 %v5479, %v5481
        %v5483 = vrot.slane %v5476, %v5482
        %v5485 = vunpack.c.l.s4 1966171168
        %v5486 = vunpack.c.0.s8 %v5485
        %v5487 = vlaneseq
        %v5488 = vshrl.u32 %v5487, 7
        %v5489 = vsub.s32 %v5486, %v5488
        %v5490 = vrot.slane %v3443, %v5489
        %v5491 = vcombine.low %v5483, %v5490
        %v5493 = vunpack.c.l.s4 1966171168
        %v5494 = vunpack.c.0.s8 %v5493
        %v5495 = vlaneseq
        %v5496 = vshrl.u32 %v5495, 7
        %v5497 = vsub.s32 %v5494, %v5496
        %v5498 = vrot.slane %v5491, %v5497
        %v5499 = vcombine.low %v3457, %v3465
        %v5501 = vunpack.c.l.s4 1966171168
        %v5502 = vunpack.c.0.s8 %v5501
        %v5503 = vlaneseq
        %v5504 = vshrl.u32 %v5503, 7
        %v5505 = vsub.s32 %v5502, %v5504
        %v5506 = vrot.slane %v5499, %v5505
        %v5508 = vunpack.c.l.s4 1966171168
        %v5509 = vunpack.c.0.s8 %v5508
        %v5510 = vlaneseq
        %v5511 = vshrl.u32 %v5510, 7
        %v5512 = vsub.s32 %v5509, %v5511
        %v5513 = vrot.slane %v3467, %v5512
        %v5514 = vcombine.low %v5506, %v5513
        %v5516 = vunpack.c.l.s4 1966171168
        %v5517 = vunpack.c.0.s8 %v5516
        %v5518 = vlaneseq
        %v5519 = vshrl.u32 %v5518, 7
        %v5520 = vsub.s32 %v5517, %v5519
        %v5521 = vrot.slane %v5514, %v5520
        %v5522 = vcombine.low %v3450, %v3464
        %v5524 = vunpack.c.l.s4 1966171168
        %v5525 = vunpack.c.0.s8 %v5524
        %v5526 = vlaneseq
        %v5527 = vshrl.u32 %v5526, 7
        %v5528 = vsub.s32 %v5525, %v5527
        %v5529 = vrot.slane %v5522, %v5528
        %v5531 = vunpack.c.l.s4 1966171168
        %v5532 = vunpack.c.0.s8 %v5531
        %v5533 = vlaneseq
        %v5534 = vshrl.u32 %v5533, 7
        %v5535 = vsub.s32 %v5532, %v5534
        %v5536 = vrot.slane %v3466, %v5535
        %v5537 = vcombine.low %v5529, %v5536
        %v5539 = vunpack.c.l.s4 1966171168
        %v5540 = vunpack.c.0.s8 %v5539
        %v5541 = vlaneseq
        %v5542 = vshrl.u32 %v5541, 7
        %v5543 = vsub.s32 %v5540, %v5542
        %v5544 = vrot.slane %v5537, %v5543
        %v5545 = vcombine.low %v3468, %v3492
        %v5547 = vunpack.c.l.s4 1966171168
        %v5548 = vunpack.c.0.s8 %v5547
        %v5549 = vlaneseq
        %v5550 = vshrl.u32 %v5549, 7
        %v5551 = vsub.s32 %v5548, %v5550
        %v5552 = vrot.slane %v5545, %v5551
        %v5554 = vunpack.c.l.s4 1966171168
        %v5555 = vunpack.c.0.s8 %v5554
        %v5556 = vlaneseq
        %v5557 = vshrl.u32 %v5556, 7
        %v5558 = vsub.s32 %v5555, %v5557
        %v5559 = vrot.slane %v3506, %v5558
        %v5560 = vcombine.low %v5552, %v5559
        %v5562 = vunpack.c.l.s4 1966171168
        %v5563 = vunpack.c.0.s8 %v5562
        %v5564 = vlaneseq
        %v5565 = vshrl.u32 %v5564, 7
        %v5566 = vsub.s32 %v5563, %v5565
        %v5567 = vrot.slane %v5560, %v5566
        %v5568 = vcombine.low %v3514, %v3516
        %v5570 = vunpack.c.l.s4 1966171168
        %v5571 = vunpack.c.0.s8 %v5570
        %v5572 = vlaneseq
        %v5573 = vshrl.u32 %v5572, 7
        %v5574 = vsub.s32 %v5571, %v5573
        %v5575 = vrot.slane %v5568, %v5574
        %v5577 = vunpack.c.l.s4 1966171168
        %v5578 = vunpack.c.0.s8 %v5577
        %v5579 = vlaneseq
        %v5580 = vshrl.u32 %v5579, 7
        %v5581 = vsub.s32 %v5578, %v5580
        %v5582 = vrot.slane %v3499, %v5581
        %v5583 = vcombine.low %v5575, %v5582
        %v5585 = vunpack.c.l.s4 1966171168
        %v5586 = vunpack.c.0.s8 %v5585
        %v5587 = vlaneseq
        %v5588 = vshrl.u32 %v5587, 7
        %v5589 = vsub.s32 %v5586, %v5588
        %v5590 = vrot.slane %v5583, %v5589
        %v5591 = vcombine.low %v3513, %v3515
        %v5593 = vunpack.c.l.s4 1966171168
        %v5594 = vunpack.c.0.s8 %v5593
        %v5595 = vlaneseq
        %v5596 = vshrl.u32 %v5595, 7
        %v5597 = vsub.s32 %v5594, %v5596
        %v5598 = vrot.slane %v5591, %v5597
        %v5600 = vunpack.c.l.s4 1966171168
        %v5601 = vunpack.c.0.s8 %v5600
        %v5602 = vlaneseq
        %v5603 = vshrl.u32 %v5602, 7
        %v5604 = vsub.s32 %v5601, %v5603
        %v5605 = vrot.slane %v3517, %v5604
        %v5606 = vcombine.low %v5598, %v5605
        %v5608 = vunpack.c.l.s4 1966171168
        %v5609 = vunpack.c.0.s8 %v5608
        %v5610 = vlaneseq
        %v5611 = vshrl.u32 %v5610, 7
        %v5612 = vsub.s32 %v5609, %v5611
        %v5613 = vrot.slane %v5606, %v5612
        %v5614 = vcombine.low %v3541, %v3555
        %v5616 = vunpack.c.l.s4 1966171168
        %v5617 = vunpack.c.0.s8 %v5616
        %v5618 = vlaneseq
        %v5619 = vshrl.u32 %v5618, 7
        %v5620 = vsub.s32 %v5617, %v5619
        %v5621 = vrot.slane %v5614, %v5620
        %v5623 = vunpack.c.l.s4 1966171168
        %v5624 = vunpack.c.0.s8 %v5623
        %v5625 = vlaneseq
        %v5626 = vshrl.u32 %v5625, 7
        %v5627 = vsub.s32 %v5624, %v5626
        %v5628 = vrot.slane %v3563, %v5627
        %v5629 = vcombine.low %v5621, %v5628
        %v5631 = vunpack.c.l.s4 1966171168
        %v5632 = vunpack.c.0.s8 %v5631
        %v5633 = vlaneseq
        %v5634 = vshrl.u32 %v5633, 7
        %v5635 = vsub.s32 %v5632, %v5634
        %v5636 = vrot.slane %v5629, %v5635
        %v5637 = vcombine.low %v3565, %v3548
        %v5639 = vunpack.c.l.s4 1966171168
        %v5640 = vunpack.c.0.s8 %v5639
        %v5641 = vlaneseq
        %v5642 = vshrl.u32 %v5641, 7
        %v5643 = vsub.s32 %v5640, %v5642
        %v5644 = vrot.slane %v5637, %v5643
        %v5646 = vunpack.c.l.s4 1966171168
        %v5647 = vunpack.c.0.s8 %v5646
        %v5648 = vlaneseq
        %v5649 = vshrl.u32 %v5648, 7
        %v5650 = vsub.s32 %v5647, %v5649
        %v5651 = vrot.slane %v3562, %v5650
        %v5652 = vcombine.low %v5644, %v5651
        %v5654 = vunpack.c.l.s4 1966171168
        %v5655 = vunpack.c.0.s8 %v5654
        %v5656 = vlaneseq
        %v5657 = vshrl.u32 %v5656, 7
        %v5658 = vsub.s32 %v5655, %v5657
        %v5659 = vrot.slane %v5652, %v5658
        %v5660 = vcombine.low %v3564, %v3566
        %v5662 = vunpack.c.l.s4 1966171168
        %v5663 = vunpack.c.0.s8 %v5662
        %v5664 = vlaneseq
        %v5665 = vshrl.u32 %v5664, 7
        %v5666 = vsub.s32 %v5663, %v5665
        %v5667 = vrot.slane %v5660, %v5666
        %v5669 = vunpack.c.l.s4 1966171168
        %v5670 = vunpack.c.0.s8 %v5669
        %v5671 = vlaneseq
        %v5672 = vshrl.u32 %v5671, 7
        %v5673 = vsub.s32 %v5670, %v5672
        %v5674 = vrot.slane %v3590, %v5673
        %v5675 = vcombine.low %v5667, %v5674
        %v5677 = vunpack.c.l.s4 1966171168
        %v5678 = vunpack.c.0.s8 %v5677
        %v5679 = vlaneseq
        %v5680 = vshrl.u32 %v5679, 7
        %v5681 = vsub.s32 %v5678, %v5680
        %v5682 = vrot.slane %v5675, %v5681
        %v5683 = vcombine.low %v3604, %v3612
        %v5685 = vunpack.c.l.s4 1966171168
        %v5686 = vunpack.c.0.s8 %v5685
        %v5687 = vlaneseq
        %v5688 = vshrl.u32 %v5687, 7
        %v5689 = vsub.s32 %v5686, %v5688
        %v5690 = vrot.slane %v5683, %v5689
        %v5692 = vunpack.c.l.s4 1966171168
        %v5693 = vunpack.c.0.s8 %v5692
        %v5694 = vlaneseq
        %v5695 = vshrl.u32 %v5694, 7
        %v5696 = vsub.s32 %v5693, %v5695
        %v5697 = vrot.slane %v3614, %v5696
        %v5698 = vcombine.low %v5690, %v5697
        %v5700 = vunpack.c.l.s4 1966171168
        %v5701 = vunpack.c.0.s8 %v5700
        %v5702 = vlaneseq
        %v5703 = vshrl.u32 %v5702, 7
        %v5704 = vsub.s32 %v5701, %v5703
        %v5705 = vrot.slane %v5698, %v5704
        %v5706 = vcombine.low %v3597, %v3611
        %v5708 = vunpack.c.l.s4 1966171168
        %v5709 = vunpack.c.0.s8 %v5708
        %v5710 = vlaneseq
        %v5711 = vshrl.u32 %v5710, 7
        %v5712 = vsub.s32 %v5709, %v5711
        %v5713 = vrot.slane %v5706, %v5712
        %v5715 = vunpack.c.l.s4 1966171168
        %v5716 = vunpack.c.0.s8 %v5715
        %v5717 = vlaneseq
        %v5718 = vshrl.u32 %v5717, 7
        %v5719 = vsub.s32 %v5716, %v5718
        %v5720 = vrot.slane %v3613, %v5719
        %v5721 = vcombine.low %v5713, %v5720
        %v5723 = vunpack.c.l.s4 1966171168
        %v5724 = vunpack.c.0.s8 %v5723
        %v5725 = vlaneseq
        %v5726 = vshrl.u32 %v5725, 7
        %v5727 = vsub.s32 %v5724, %v5726
        %v5728 = vrot.slane %v5721, %v5727
        %v5729 = vcombine.low %v3615, %v3639
        %v5731 = vunpack.c.l.s4 1966171168
        %v5732 = vunpack.c.0.s8 %v5731
        %v5733 = vlaneseq
        %v5734 = vshrl.u32 %v5733, 7
        %v5735 = vsub.s32 %v5732, %v5734
        %v5736 = vrot.slane %v5729, %v5735
        %v5738 = vunpack.c.l.s4 1966171168
        %v5739 = vunpack.c.0.s8 %v5738
        %v5740 = vlaneseq
        %v5741 = vshrl.u32 %v5740, 7
        %v5742 = vsub.s32 %v5739, %v5741
        %v5743 = vrot.slane %v3653, %v5742
        %v5744 = vcombine.low %v5736, %v5743
        %v5746 = vunpack.c.l.s4 1966171168
        %v5747 = vunpack.c.0.s8 %v5746
        %v5748 = vlaneseq
        %v5749 = vshrl.u32 %v5748, 7
        %v5750 = vsub.s32 %v5747, %v5749
        %v5751 = vrot.slane %v5744, %v5750
        %v5752 = vcombine.low %v3661, %v3663
        %v5754 = vunpack.c.l.s4 1966171168
        %v5755 = vunpack.c.0.s8 %v5754
        %v5756 = vlaneseq
        %v5757 = vshrl.u32 %v5756, 7
        %v5758 = vsub.s32 %v5755, %v5757
        %v5759 = vrot.slane %v5752, %v5758
        %v5761 = vunpack.c.l.s4 1966171168
        %v5762 = vunpack.c.0.s8 %v5761
        %v5763 = vlaneseq
        %v5764 = vshrl.u32 %v5763, 7
        %v5765 = vsub.s32 %v5762, %v5764
        %v5766 = vrot.slane %v3646, %v5765
        %v5767 = vcombine.low %v5759, %v5766
        %v5769 = vunpack.c.l.s4 1966171168
        %v5770 = vunpack.c.0.s8 %v5769
        %v5771 = vlaneseq
        %v5772 = vshrl.u32 %v5771, 7
        %v5773 = vsub.s32 %v5770, %v5772
        %v5774 = vrot.slane %v5767, %v5773
        %v5775 = vcombine.low %v3660, %v3662
        %v5777 = vunpack.c.l.s4 1966171168
        %v5778 = vunpack.c.0.s8 %v5777
        %v5779 = vlaneseq
        %v5780 = vshrl.u32 %v5779, 7
        %v5781 = vsub.s32 %v5778, %v5780
        %v5782 = vrot.slane %v5775, %v5781
        %v5784 = vunpack.c.l.s4 1966171168
        %v5785 = vunpack.c.0.s8 %v5784
        %v5786 = vlaneseq
        %v5787 = vshrl.u32 %v5786, 7
        %v5788 = vsub.s32 %v5785, %v5787
        %v5789 = vrot.slane %v3664, %v5788
        %v5790 = vcombine.low %v5782, %v5789
        %v5792 = vunpack.c.l.s4 1966171168
        %v5793 = vunpack.c.0.s8 %v5792
        %v5794 = vlaneseq
        %v5795 = vshrl.u32 %v5794, 7
        %v5796 = vsub.s32 %v5793, %v5795
        %v5797 = vrot.slane %v5790, %v5796
        %v5798 = vcombine.low %v3688, %v3702
        %v5800 = vunpack.c.l.s4 1966171168
        %v5801 = vunpack.c.0.s8 %v5800
        %v5802 = vlaneseq
        %v5803 = vshrl.u32 %v5802, 7
        %v5804 = vsub.s32 %v5801, %v5803
        %v5805 = vrot.slane %v5798, %v5804
        %v5807 = vunpack.c.l.s4 1966171168
        %v5808 = vunpack.c.0.s8 %v5807
        %v5809 = vlaneseq
        %v5810 = vshrl.u32 %v5809, 7
        %v5811 = vsub.s32 %v5808, %v5810
        %v5812 = vrot.slane %v3710, %v5811
        %v5813 = vcombine.low %v5805, %v5812
        %v5815 = vunpack.c.l.s4 1966171168
        %v5816 = vunpack.c.0.s8 %v5815
        %v5817 = vlaneseq
        %v5818 = vshrl.u32 %v5817, 7
        %v5819 = vsub.s32 %v5816, %v5818
        %v5820 = vrot.slane %v5813, %v5819
        %v5821 = vcombine.low %v3712, %v3695
        %v5823 = vunpack.c.l.s4 1966171168
        %v5824 = vunpack.c.0.s8 %v5823
        %v5825 = vlaneseq
        %v5826 = vshrl.u32 %v5825, 7
        %v5827 = vsub.s32 %v5824, %v5826
        %v5828 = vrot.slane %v5821, %v5827
        %v5830 = vunpack.c.l.s4 1966171168
        %v5831 = vunpack.c.0.s8 %v5830
        %v5832 = vlaneseq
        %v5833 = vshrl.u32 %v5832, 7
        %v5834 = vsub.s32 %v5831, %v5833
        %v5835 = vrot.slane %v3709, %v5834
        %v5836 = vcombine.low %v5828, %v5835
        %v5838 = vunpack.c.l.s4 1966171168
        %v5839 = vunpack.c.0.s8 %v5838
        %v5840 = vlaneseq
        %v5841 = vshrl.u32 %v5840, 7
        %v5842 = vsub.s32 %v5839, %v5841
        %v5843 = vrot.slane %v5836, %v5842
        %v5844 = vcombine.low %v3711, %v3713
        %v5846 = vunpack.c.l.s4 1966171168
        %v5847 = vunpack.c.0.s8 %v5846
        %v5848 = vlaneseq
        %v5849 = vshrl.u32 %v5848, 7
        %v5850 = vsub.s32 %v5847, %v5849
        %v5851 = vrot.slane %v5844, %v5850
        %v5853 = vunpack.c.l.s4 1966171168
        %v5854 = vunpack.c.0.s8 %v5853
        %v5855 = vlaneseq
        %v5856 = vshrl.u32 %v5855, 7
        %v5857 = vsub.s32 %v5854, %v5856
        %v5858 = vrot.slane %v3737, %v5857
        %v5859 = vcombine.low %v5851, %v5858
        %v5861 = vunpack.c.l.s4 1966171168
        %v5862 = vunpack.c.0.s8 %v5861
        %v5863 = vlaneseq
        %v5864 = vshrl.u32 %v5863, 7
        %v5865 = vsub.s32 %v5862, %v5864
        %v5866 = vrot.slane %v5859, %v5865
        %v5867 = vcombine.low %v3751, %v3759
        %v5869 = vunpack.c.l.s4 1966171168
        %v5870 = vunpack.c.0.s8 %v5869
        %v5871 = vlaneseq
        %v5872 = vshrl.u32 %v5871, 7
        %v5873 = vsub.s32 %v5870, %v5872
        %v5874 = vrot.slane %v5867, %v5873
        %v5876 = vunpack.c.l.s4 1966171168
        %v5877 = vunpack.c.0.s8 %v5876
        %v5878 = vlaneseq
        %v5879 = vshrl.u32 %v5878, 7
        %v5880 = vsub.s32 %v5877, %v5879
        %v5881 = vrot.slane %v3761, %v5880
        %v5882 = vcombine.low %v5874, %v5881
        %v5884 = vunpack.c.l.s4 1966171168
        %v5885 = vunpack.c.0.s8 %v5884
        %v5886 = vlaneseq
        %v5887 = vshrl.u32 %v5886, 7
        %v5888 = vsub.s32 %v5885, %v5887
        %v5889 = vrot.slane %v5882, %v5888
        %v5890 = vcombine.low %v3744, %v3758
        %v5892 = vunpack.c.l.s4 1966171168
        %v5893 = vunpack.c.0.s8 %v5892
        %v5894 = vlaneseq
        %v5895 = vshrl.u32 %v5894, 7
        %v5896 = vsub.s32 %v5893, %v5895
        %v5897 = vrot.slane %v5890, %v5896
        %v5899 = vunpack.c.l.s4 1966171168
        %v5900 = vunpack.c.0.s8 %v5899
        %v5901 = vlaneseq
        %v5902 = vshrl.u32 %v5901, 7
        %v5903 = vsub.s32 %v5900, %v5902
        %v5904 = vrot.slane %v3760, %v5903
        %v5905 = vcombine.low %v5897, %v5904
        %v5907 = vunpack.c.l.s4 1966171168
        %v5908 = vunpack.c.0.s8 %v5907
        %v5909 = vlaneseq
        %v5910 = vshrl.u32 %v5909, 7
        %v5911 = vsub.s32 %v5908, %v5910
        %v5912 = vrot.slane %v5905, %v5911
        %v5913 = vcombine.low %v3762, %v3786
        %v5915 = vunpack.c.l.s4 1966171168
        %v5916 = vunpack.c.0.s8 %v5915
        %v5917 = vlaneseq
        %v5918 = vshrl.u32 %v5917, 7
        %v5919 = vsub.s32 %v5916, %v5918
        %v5920 = vrot.slane %v5913, %v5919
        %v5922 = vunpack.c.l.s4 1966171168
        %v5923 = vunpack.c.0.s8 %v5922
        %v5924 = vlaneseq
        %v5925 = vshrl.u32 %v5924, 7
        %v5926 = vsub.s32 %v5923, %v5925
        %v5927 = vrot.slane %v3800, %v5926
        %v5928 = vcombine.low %v5920, %v5927
        %v5930 = vunpack.c.l.s4 1966171168
        %v5931 = vunpack.c.0.s8 %v5930
        %v5932 = vlaneseq
        %v5933 = vshrl.u32 %v5932, 7
        %v5934 = vsub.s32 %v5931, %v5933
        %v5935 = vrot.slane %v5928, %v5934
        %v5936 = vcombine.low %v3808, %v3810
        %v5938 = vunpack.c.l.s4 1966171168
        %v5939 = vunpack.c.0.s8 %v5938
        %v5940 = vlaneseq
        %v5941 = vshrl.u32 %v5940, 7
        %v5942 = vsub.s32 %v5939, %v5941
        %v5943 = vrot.slane %v5936, %v5942
        %v5945 = vunpack.c.l.s4 1966171168
        %v5946 = vunpack.c.0.s8 %v5945
        %v5947 = vlaneseq
        %v5948 = vshrl.u32 %v5947, 7
        %v5949 = vsub.s32 %v5946, %v5948
        %v5950 = vrot.slane %v3793, %v5949
        %v5951 = vcombine.low %v5943, %v5950
        %v5953 = vunpack.c.l.s4 1966171168
        %v5954 = vunpack.c.0.s8 %v5953
        %v5955 = vlaneseq
        %v5956 = vshrl.u32 %v5955, 7
        %v5957 = vsub.s32 %v5954, %v5956
        %v5958 = vrot.slane %v5951, %v5957
        %v5959 = vcombine.low %v3807, %v3809
        %v5961 = vunpack.c.l.s4 1966171168
        %v5962 = vunpack.c.0.s8 %v5961
        %v5963 = vlaneseq
        %v5964 = vshrl.u32 %v5963, 7
        %v5965 = vsub.s32 %v5962, %v5964
        %v5966 = vrot.slane %v5959, %v5965
        %v5968 = vunpack.c.l.s4 1966171168
        %v5969 = vunpack.c.0.s8 %v5968
        %v5970 = vlaneseq
        %v5971 = vshrl.u32 %v5970, 7
        %v5972 = vsub.s32 %v5969, %v5971
        %v5973 = vrot.slane %v3811, %v5972
        %v5974 = vcombine.low %v5966, %v5973
        %v5976 = vunpack.c.l.s4 1966171168
        %v5977 = vunpack.c.0.s8 %v5976
        %v5978 = vlaneseq
        %v5979 = vshrl.u32 %v5978, 7
        %v5980 = vsub.s32 %v5977, %v5979
        %v5981 = vrot.slane %v5974, %v5980
        %v5982 = vcombine.low %v3835, %v3849
        %v5984 = vunpack.c.l.s4 1966171168
        %v5985 = vunpack.c.0.s8 %v5984
        %v5986 = vlaneseq
        %v5987 = vshrl.u32 %v5986, 7
        %v5988 = vsub.s32 %v5985, %v5987
        %v5989 = vrot.slane %v5982, %v5988
        %v5991 = vunpack.c.l.s4 1966171168
        %v5992 = vunpack.c.0.s8 %v5991
        %v5993 = vlaneseq
        %v5994 = vshrl.u32 %v5993, 7
        %v5995 = vsub.s32 %v5992, %v5994
        %v5996 = vrot.slane %v3857, %v5995
        %v5997 = vcombine.low %v5989, %v5996
        %v5999 = vunpack.c.l.s4 1966171168
        %v6000 = vunpack.c.0.s8 %v5999
        %v6001 = vlaneseq
        %v6002 = vshrl.u32 %v6001, 7
        %v6003 = vsub.s32 %v6000, %v6002
        %v6004 = vrot.slane %v5997, %v6003
        %v6005 = vcombine.low %v3859, %v3842
        %v6007 = vunpack.c.l.s4 1966171168
        %v6008 = vunpack.c.0.s8 %v6007
        %v6009 = vlaneseq
        %v6010 = vshrl.u32 %v6009, 7
        %v6011 = vsub.s32 %v6008, %v6010
        %v6012 = vrot.slane %v6005, %v6011
        %v6014 = vunpack.c.l.s4 1966171168
        %v6015 = vunpack.c.0.s8 %v6014
        %v6016 = vlaneseq
        %v6017 = vshrl.u32 %v6016, 7
        %v6018 = vsub.s32 %v6015, %v6017
        %v6019 = vrot.slane %v3856, %v6018
        %v6020 = vcombine.low %v6012, %v6019
        %v6022 = vunpack.c.l.s4 1966171168
        %v6023 = vunpack.c.0.s8 %v6022
        %v6024 = vlaneseq
        %v6025 = vshrl.u32 %v6024, 7
        %v6026 = vsub.s32 %v6023, %v6025
        %v6027 = vrot.slane %v6020, %v6026
        %v6028 = vcombine.low %v3858, %v3860
        %v6030 = vunpack.c.l.s4 1966171168
        %v6031 = vunpack.c.0.s8 %v6030
        %v6032 = vlaneseq
        %v6033 = vshrl.u32 %v6032, 7
        %v6034 = vsub.s32 %v6031, %v6033
        %v6035 = vrot.slane %v6028, %v6034
        %v6037 = vunpack.c.l.s4 1966171168
        %v6038 = vunpack.c.0.s8 %v6037
        %v6039 = vlaneseq
        %v6040 = vshrl.u32 %v6039, 7
        %v6041 = vsub.s32 %v6038, %v6040
        %v6042 = vrot.slane %v3884, %v6041
        %v6043 = vcombine.low %v6035, %v6042
        %v6045 = vunpack.c.l.s4 1966171168
        %v6046 = vunpack.c.0.s8 %v6045
        %v6047 = vlaneseq
        %v6048 = vshrl.u32 %v6047, 7
        %v6049 = vsub.s32 %v6046, %v6048
        %v6050 = vrot.slane %v6043, %v6049
        %v6051 = vcombine.low %v3898, %v3906
        %v6053 = vunpack.c.l.s4 1966171168
        %v6054 = vunpack.c.0.s8 %v6053
        %v6055 = vlaneseq
        %v6056 = vshrl.u32 %v6055, 7
        %v6057 = vsub.s32 %v6054, %v6056
        %v6058 = vrot.slane %v6051, %v6057
        %v6060 = vunpack.c.l.s4 1966171168
        %v6061 = vunpack.c.0.s8 %v6060
        %v6062 = vlaneseq
        %v6063 = vshrl.u32 %v6062, 7
        %v6064 = vsub.s32 %v6061, %v6063
        %v6065 = vrot.slane %v3908, %v6064
        %v6066 = vcombine.low %v6058, %v6065
        %v6068 = vunpack.c.l.s4 1966171168
        %v6069 = vunpack.c.0.s8 %v6068
        %v6070 = vlaneseq
        %v6071 = vshrl.u32 %v6070, 7
        %v6072 = vsub.s32 %v6069, %v6071
        %v6073 = vrot.slane %v6066, %v6072
        %v6074 = vcombine.low %v3891, %v3905
        %v6076 = vunpack.c.l.s4 1966171168
        %v6077 = vunpack.c.0.s8 %v6076
        %v6078 = vlaneseq
        %v6079 = vshrl.u32 %v6078, 7
        %v6080 = vsub.s32 %v6077, %v6079
        %v6081 = vrot.slane %v6074, %v6080
        %v6083 = vunpack.c.l.s4 1966171168
        %v6084 = vunpack.c.0.s8 %v6083
        %v6085 = vlaneseq
        %v6086 = vshrl.u32 %v6085, 7
        %v6087 = vsub.s32 %v6084, %v6086
        %v6088 = vrot.slane %v3907, %v6087
        %v6089 = vcombine.low %v6081, %v6088
        %v6091 = vunpack.c.l.s4 1966171168
        %v6092 = vunpack.c.0.s8 %v6091
        %v6093 = vlaneseq
        %v6094 = vshrl.u32 %v6093, 7
        %v6095 = vsub.s32 %v6092, %v6094
        %v6096 = vrot.slane %v6089, %v6095
        %v6097 = vcombine.low %v3909, %v3933
        %v6099 = vunpack.c.l.s4 1966171168
        %v6100 = vunpack.c.0.s8 %v6099
        %v6101 = vlaneseq
        %v6102 = vshrl.u32 %v6101, 7
        %v6103 = vsub.s32 %v6100, %v6102
        %v6104 = vrot.slane %v6097, %v6103
        %v6106 = vunpack.c.l.s4 1966171168
        %v6107 = vunpack.c.0.s8 %v6106
        %v6108 = vlaneseq
        %v6109 = vshrl.u32 %v6108, 7
        %v6110 = vsub.s32 %v6107, %v6109
        %v6111 = vrot.slane %v3947, %v6110
        %v6112 = vcombine.low %v6104, %v6111
        %v6114 = vunpack.c.l.s4 1966171168
        %v6115 = vunpack.c.0.s8 %v6114
        %v6116 = vlaneseq
        %v6117 = vshrl.u32 %v6116, 7
        %v6118 = vsub.s32 %v6115, %v6117
        %v6119 = vrot.slane %v6112, %v6118
        %v6120 = vcombine.low %v3955, %v3957
        %v6122 = vunpack.c.l.s4 1966171168
        %v6123 = vunpack.c.0.s8 %v6122
        %v6124 = vlaneseq
        %v6125 = vshrl.u32 %v6124, 7
        %v6126 = vsub.s32 %v6123, %v6125
        %v6127 = vrot.slane %v6120, %v6126
        %v6129 = vunpack.c.l.s4 1966171168
        %v6130 = vunpack.c.0.s8 %v6129
        %v6131 = vlaneseq
        %v6132 = vshrl.u32 %v6131, 7
        %v6133 = vsub.s32 %v6130, %v6132
        %v6134 = vrot.slane %v3940, %v6133
        %v6135 = vcombine.low %v6127, %v6134
        %v6137 = vunpack.c.l.s4 1966171168
        %v6138 = vunpack.c.0.s8 %v6137
        %v6139 = vlaneseq
        %v6140 = vshrl.u32 %v6139, 7
        %v6141 = vsub.s32 %v6138, %v6140
        %v6142 = vrot.slane %v6135, %v6141
        %v6143 = vcombine.low %v3954, %v3956
        %v6145 = vunpack.c.l.s4 1966171168
        %v6146 = vunpack.c.0.s8 %v6145
        %v6147 = vlaneseq
        %v6148 = vshrl.u32 %v6147, 7
        %v6149 = vsub.s32 %v6146, %v6148
        %v6150 = vrot.slane %v6143, %v6149
        %v6152 = vunpack.c.l.s4 1966171168
        %v6153 = vunpack.c.0.s8 %v6152
        %v6154 = vlaneseq
        %v6155 = vshrl.u32 %v6154, 7
        %v6156 = vsub.s32 %v6153, %v6155
        %v6157 = vrot.slane %v3958, %v6156
        %v6158 = vcombine.low %v6150, %v6157
        %v6160 = vunpack.c.l.s4 1966171168
        %v6161 = vunpack.c.0.s8 %v6160
        %v6162 = vlaneseq
        %v6163 = vshrl.u32 %v6162, 7
        %v6164 = vsub.s32 %v6161, %v6163
        %v6165 = vrot.slane %v6158, %v6164
        %v6166 = vcombine.low %v3982, %v3996
        %v6168 = vunpack.c.l.s4 1966171168
        %v6169 = vunpack.c.0.s8 %v6168
        %v6170 = vlaneseq
        %v6171 = vshrl.u32 %v6170, 7
        %v6172 = vsub.s32 %v6169, %v6171
        %v6173 = vrot.slane %v6166, %v6172
        %v6175 = vunpack.c.l.s4 1966171168
        %v6176 = vunpack.c.0.s8 %v6175
        %v6177 = vlaneseq
        %v6178 = vshrl.u32 %v6177, 7
        %v6179 = vsub.s32 %v6176, %v6178
        %v6180 = vrot.slane %v4004, %v6179
        %v6181 = vcombine.low %v6173, %v6180
        %v6183 = vunpack.c.l.s4 1966171168
        %v6184 = vunpack.c.0.s8 %v6183
        %v6185 = vlaneseq
        %v6186 = vshrl.u32 %v6185, 7
        %v6187 = vsub.s32 %v6184, %v6186
        %v6188 = vrot.slane %v6181, %v6187
        %v6189 = vcombine.low %v4006, %v3989
        %v6191 = vunpack.c.l.s4 1966171168
        %v6192 = vunpack.c.0.s8 %v6191
        %v6193 = vlaneseq
        %v6194 = vshrl.u32 %v6193, 7
        %v6195 = vsub.s32 %v6192, %v6194
        %v6196 = vrot.slane %v6189, %v6195
        %v6198 = vunpack.c.l.s4 1966171168
        %v6199 = vunpack.c.0.s8 %v6198
        %v6200 = vlaneseq
        %v6201 = vshrl.u32 %v6200, 7
        %v6202 = vsub.s32 %v6199, %v6201
        %v6203 = vrot.slane %v4003, %v6202
        %v6204 = vcombine.low %v6196, %v6203
        %v6206 = vunpack.c.l.s4 1966171168
        %v6207 = vunpack.c.0.s8 %v6206
        %v6208 = vlaneseq
        %v6209 = vshrl.u32 %v6208, 7
        %v6210 = vsub.s32 %v6207, %v6209
        %v6211 = vrot.slane %v6204, %v6210
        %v6212 = vcombine.low %v4005, %v4007
        %v6214 = vunpack.c.l.s4 1966171168
        %v6215 = vunpack.c.0.s8 %v6214
        %v6216 = vlaneseq
        %v6217 = vshrl.u32 %v6216, 7
        %v6218 = vsub.s32 %v6215, %v6217
        %v6219 = vrot.slane %v6212, %v6218
        %v6221 = vunpack.c.l.s4 1966171168
        %v6222 = vunpack.c.0.s8 %v6221
        %v6223 = vlaneseq
        %v6224 = vshrl.u32 %v6223, 7
        %v6225 = vsub.s32 %v6222, %v6224
        %v6226 = vrot.slane %v4031, %v6225
        %v6227 = vcombine.low %v6219, %v6226
        %v6229 = vunpack.c.l.s4 1966171168
        %v6230 = vunpack.c.0.s8 %v6229
        %v6231 = vlaneseq
        %v6232 = vshrl.u32 %v6231, 7
        %v6233 = vsub.s32 %v6230, %v6232
        %v6234 = vrot.slane %v6227, %v6233
        %v6235 = vcombine.low %v4045, %v4053
        %v6237 = vunpack.c.l.s4 1966171168
        %v6238 = vunpack.c.0.s8 %v6237
        %v6239 = vlaneseq
        %v6240 = vshrl.u32 %v6239, 7
        %v6241 = vsub.s32 %v6238, %v6240
        %v6242 = vrot.slane %v6235, %v6241
        %v6244 = vunpack.c.l.s4 1966171168
        %v6245 = vunpack.c.0.s8 %v6244
        %v6246 = vlaneseq
        %v6247 = vshrl.u32 %v6246, 7
        %v6248 = vsub.s32 %v6245, %v6247
        %v6249 = vrot.slane %v4055, %v6248
        %v6250 = vcombine.low %v6242, %v6249
        %v6252 = vunpack.c.l.s4 1966171168
        %v6253 = vunpack.c.0.s8 %v6252
        %v6254 = vlaneseq
        %v6255 = vshrl.u32 %v6254, 7
        %v6256 = vsub.s32 %v6253, %v6255
        %v6257 = vrot.slane %v6250, %v6256
        %v6258 = vcombine.low %v4038, %v4052
        %v6260 = vunpack.c.l.s4 1966171168
        %v6261 = vunpack.c.0.s8 %v6260
        %v6262 = vlaneseq
        %v6263 = vshrl.u32 %v6262, 7
        %v6264 = vsub.s32 %v6261, %v6263
        %v6265 = vrot.slane %v6258, %v6264
        %v6267 = vunpack.c.l.s4 1966171168
        %v6268 = vunpack.c.0.s8 %v6267
        %v6269 = vlaneseq
        %v6270 = vshrl.u32 %v6269, 7
        %v6271 = vsub.s32 %v6268, %v6270
        %v6272 = vrot.slane %v4054, %v6271
        %v6273 = vcombine.low %v6265, %v6272
        %v6275 = vunpack.c.l.s4 1966171168
        %v6276 = vunpack.c.0.s8 %v6275
        %v6277 = vlaneseq
        %v6278 = vshrl.u32 %v6277, 7
        %v6279 = vsub.s32 %v6276, %v6278
        %v6280 = vrot.slane %v6273, %v6279
        %v6281 = vcombine.low %v4056, %v4080
        %v6283 = vunpack.c.l.s4 1966171168
        %v6284 = vunpack.c.0.s8 %v6283
        %v6285 = vlaneseq
        %v6286 = vshrl.u32 %v6285, 7
        %v6287 = vsub.s32 %v6284, %v6286
        %v6288 = vrot.slane %v6281, %v6287
        %v6290 = vunpack.c.l.s4 1966171168
        %v6291 = vunpack.c.0.s8 %v6290
        %v6292 = vlaneseq
        %v6293 = vshrl.u32 %v6292, 7
        %v6294 = vsub.s32 %v6291, %v6293
        %v6295 = vrot.slane %v4094, %v6294
        %v6296 = vcombine.low %v6288, %v6295
        %v6298 = vunpack.c.l.s4 1966171168
        %v6299 = vunpack.c.0.s8 %v6298
        %v6300 = vlaneseq
        %v6301 = vshrl.u32 %v6300, 7
        %v6302 = vsub.s32 %v6299, %v6301
        %v6303 = vrot.slane %v6296, %v6302
        %v6304 = vcombine.low %v4102, %v4104
        %v6306 = vunpack.c.l.s4 1966171168
        %v6307 = vunpack.c.0.s8 %v6306
        %v6308 = vlaneseq
        %v6309 = vshrl.u32 %v6308, 7
        %v6310 = vsub.s32 %v6307, %v6309
        %v6311 = vrot.slane %v6304, %v6310
        %v6313 = vunpack.c.l.s4 1966171168
        %v6314 = vunpack.c.0.s8 %v6313
        %v6315 = vlaneseq
        %v6316 = vshrl.u32 %v6315, 7
        %v6317 = vsub.s32 %v6314, %v6316
        %v6318 = vrot.slane %v4087, %v6317
        %v6319 = vcombine.low %v6311, %v6318
        %v6321 = vunpack.c.l.s4 1966171168
        %v6322 = vunpack.c.0.s8 %v6321
        %v6323 = vlaneseq
        %v6324 = vshrl.u32 %v6323, 7
        %v6325 = vsub.s32 %v6322, %v6324
        %v6326 = vrot.slane %v6319, %v6325
        %v6327 = vcombine.low %v4101, %v4103
        %v6329 = vunpack.c.l.s4 1966171168
        %v6330 = vunpack.c.0.s8 %v6329
        %v6331 = vlaneseq
        %v6332 = vshrl.u32 %v6331, 7
        %v6333 = vsub.s32 %v6330, %v6332
        %v6334 = vrot.slane %v6327, %v6333
        %v6336 = vunpack.c.l.s4 1966171168
        %v6337 = vunpack.c.0.s8 %v6336
        %v6338 = vlaneseq
        %v6339 = vshrl.u32 %v6338, 7
        %v6340 = vsub.s32 %v6337, %v6339
        %v6341 = vrot.slane %v4105, %v6340
        %v6342 = vcombine.low %v6334, %v6341
        %v6344 = vunpack.c.l.s4 1966171168
        %v6345 = vunpack.c.0.s8 %v6344
        %v6346 = vlaneseq
        %v6347 = vshrl.u32 %v6346, 7
        %v6348 = vsub.s32 %v6345, %v6347
        %v6349 = vrot.slane %v6342, %v6348
        %v6350 = vcombine.low %v4129, %v4143
        %v6352 = vunpack.c.l.s4 1966171168
        %v6353 = vunpack.c.0.s8 %v6352
        %v6354 = vlaneseq
        %v6355 = vshrl.u32 %v6354, 7
        %v6356 = vsub.s32 %v6353, %v6355
        %v6357 = vrot.slane %v6350, %v6356
        %v6359 = vunpack.c.l.s4 1966171168
        %v6360 = vunpack.c.0.s8 %v6359
        %v6361 = vlaneseq
        %v6362 = vshrl.u32 %v6361, 7
        %v6363 = vsub.s32 %v6360, %v6362
        %v6364 = vrot.slane %v4151, %v6363
        %v6365 = vcombine.low %v6357, %v6364
        %v6367 = vunpack.c.l.s4 1966171168
        %v6368 = vunpack.c.0.s8 %v6367
        %v6369 = vlaneseq
        %v6370 = vshrl.u32 %v6369, 7
        %v6371 = vsub.s32 %v6368, %v6370
        %v6372 = vrot.slane %v6365, %v6371
        %v6373 = vcombine.low %v4153, %v4136
        %v6375 = vunpack.c.l.s4 1966171168
        %v6376 = vunpack.c.0.s8 %v6375
        %v6377 = vlaneseq
        %v6378 = vshrl.u32 %v6377, 7
        %v6379 = vsub.s32 %v6376, %v6378
        %v6380 = vrot.slane %v6373, %v6379
        %v6382 = vunpack.c.l.s4 1966171168
        %v6383 = vunpack.c.0.s8 %v6382
        %v6384 = vlaneseq
        %v6385 = vshrl.u32 %v6384, 7
        %v6386 = vsub.s32 %v6383, %v6385
        %v6387 = vrot.slane %v4150, %v6386
        %v6388 = vcombine.low %v6380, %v6387
        %v6390 = vunpack.c.l.s4 1966171168
        %v6391 = vunpack.c.0.s8 %v6390
        %v6392 = vlaneseq
        %v6393 = vshrl.u32 %v6392, 7
        %v6394 = vsub.s32 %v6391, %v6393
        %v6395 = vrot.slane %v6388, %v6394
        %v6396 = vcombine.low %v4152, %v4154
        %v6398 = vunpack.c.l.s4 1966171168
        %v6399 = vunpack.c.0.s8 %v6398
        %v6400 = vlaneseq
        %v6401 = vshrl.u32 %v6400, 7
        %v6402 = vsub.s32 %v6399, %v6401
        %v6403 = vrot.slane %v6396, %v6402
        %v6405 = vunpack.c.l.s4 1966171168
        %v6406 = vunpack.c.0.s8 %v6405
        %v6407 = vlaneseq
        %v6408 = vshrl.u32 %v6407, 7
        %v6409 = vsub.s32 %v6406, %v6408
        %v6410 = vrot.slane %v4178, %v6409
        %v6411 = vcombine.low %v6403, %v6410
        %v6413 = vunpack.c.l.s4 1966171168
        %v6414 = vunpack.c.0.s8 %v6413
        %v6415 = vlaneseq
        %v6416 = vshrl.u32 %v6415, 7
        %v6417 = vsub.s32 %v6414, %v6416
        %v6418 = vrot.slane %v6411, %v6417
        %v6419 = vcombine.low %v4192, %v4200
        %v6421 = vunpack.c.l.s4 1966171168
        %v6422 = vunpack.c.0.s8 %v6421
        %v6423 = vlaneseq
        %v6424 = vshrl.u32 %v6423, 7
        %v6425 = vsub.s32 %v6422, %v6424
        %v6426 = vrot.slane %v6419, %v6425
        %v6428 = vunpack.c.l.s4 1966171168
        %v6429 = vunpack.c.0.s8 %v6428
        %v6430 = vlaneseq
        %v6431 = vshrl.u32 %v6430, 7
        %v6432 = vsub.s32 %v6429, %v6431
        %v6433 = vrot.slane %v4202, %v6432
        %v6434 = vcombine.low %v6426, %v6433
        %v6436 = vunpack.c.l.s4 1966171168
        %v6437 = vunpack.c.0.s8 %v6436
        %v6438 = vlaneseq
        %v6439 = vshrl.u32 %v6438, 7
        %v6440 = vsub.s32 %v6437, %v6439
        %v6441 = vrot.slane %v6434, %v6440
        %v6442 = vcombine.low %v4185, %v4199
        %v6444 = vunpack.c.l.s4 1966171168
        %v6445 = vunpack.c.0.s8 %v6444
        %v6446 = vlaneseq
        %v6447 = vshrl.u32 %v6446, 7
        %v6448 = vsub.s32 %v6445, %v6447
        %v6449 = vrot.slane %v6442, %v6448
        %v6451 = vunpack.c.l.s4 1966171168
        %v6452 = vunpack.c.0.s8 %v6451
        %v6453 = vlaneseq
        %v6454 = vshrl.u32 %v6453, 7
        %v6455 = vsub.s32 %v6452, %v6454
        %v6456 = vrot.slane %v4201, %v6455
        %v6457 = vcombine.low %v6449, %v6456
        %v6459 = vunpack.c.l.s4 1966171168
        %v6460 = vunpack.c.0.s8 %v6459
        %v6461 = vlaneseq
        %v6462 = vshrl.u32 %v6461, 7
        %v6463 = vsub.s32 %v6460, %v6462
        %v6464 = vrot.slane %v6457, %v6463
        %v6465 = vcombine.low %v4203, %v4227
        %v6467 = vunpack.c.l.s4 1966171168
        %v6468 = vunpack.c.0.s8 %v6467
        %v6469 = vlaneseq
        %v6470 = vshrl.u32 %v6469, 7
        %v6471 = vsub.s32 %v6468, %v6470
        %v6472 = vrot.slane %v6465, %v6471
        %v6474 = vunpack.c.l.s4 1966171168
        %v6475 = vunpack.c.0.s8 %v6474
        %v6476 = vlaneseq
        %v6477 = vshrl.u32 %v6476, 7
        %v6478 = vsub.s32 %v6475, %v6477
        %v6479 = vrot.slane %v4241, %v6478
        %v6480 = vcombine.low %v6472, %v6479
        %v6482 = vunpack.c.l.s4 1966171168
        %v6483 = vunpack.c.0.s8 %v6482
        %v6484 = vlaneseq
        %v6485 = vshrl.u32 %v6484, 7
        %v6486 = vsub.s32 %v6483, %v6485
        %v6487 = vrot.slane %v6480, %v6486
        %v6488 = vcombine.low %v4249, %v4251
        %v6490 = vunpack.c.l.s4 1966171168
        %v6491 = vunpack.c.0.s8 %v6490
        %v6492 = vlaneseq
        %v6493 = vshrl.u32 %v6492, 7
        %v6494 = vsub.s32 %v6491, %v6493
        %v6495 = vrot.slane %v6488, %v6494
        %v6497 = vunpack.c.l.s4 1966171168
        %v6498 = vunpack.c.0.s8 %v6497
        %v6499 = vlaneseq
        %v6500 = vshrl.u32 %v6499, 7
        %v6501 = vsub.s32 %v6498, %v6500
        %v6502 = vrot.slane %v4234, %v6501
        %v6503 = vcombine.low %v6495, %v6502
        %v6505 = vunpack.c.l.s4 1966171168
        %v6506 = vunpack.c.0.s8 %v6505
        %v6507 = vlaneseq
        %v6508 = vshrl.u32 %v6507, 7
        %v6509 = vsub.s32 %v6506, %v6508
        %v6510 = vrot.slane %v6503, %v6509
        %v6511 = vcombine.low %v4248, %v4250
        %v6513 = vunpack.c.l.s4 1966171168
        %v6514 = vunpack.c.0.s8 %v6513
        %v6515 = vlaneseq
        %v6516 = vshrl.u32 %v6515, 7
        %v6517 = vsub.s32 %v6514, %v6516
        %v6518 = vrot.slane %v6511, %v6517
        %v6520 = vunpack.c.l.s4 1966171168
        %v6521 = vunpack.c.0.s8 %v6520
        %v6522 = vlaneseq
        %v6523 = vshrl.u32 %v6522, 7
        %v6524 = vsub.s32 %v6521, %v6523
        %v6525 = vrot.slane %v4252, %v6524
        %v6526 = vcombine.low %v6518, %v6525
        %v6528 = vunpack.c.l.s4 1966171168
        %v6529 = vunpack.c.0.s8 %v6528
        %v6530 = vlaneseq
        %v6531 = vshrl.u32 %v6530, 7
        %v6532 = vsub.s32 %v6529, %v6531
        %v6533 = vrot.slane %v6526, %v6532
        %v6534 = vcombine.low %v4276, %v4290
        %v6536 = vunpack.c.l.s4 1966171168
        %v6537 = vunpack.c.0.s8 %v6536
        %v6538 = vlaneseq
        %v6539 = vshrl.u32 %v6538, 7
        %v6540 = vsub.s32 %v6537, %v6539
        %v6541 = vrot.slane %v6534, %v6540
        %v6543 = vunpack.c.l.s4 1966171168
        %v6544 = vunpack.c.0.s8 %v6543
        %v6545 = vlaneseq
        %v6546 = vshrl.u32 %v6545, 7
        %v6547 = vsub.s32 %v6544, %v6546
        %v6548 = vrot.slane %v4298, %v6547
        %v6549 = vcombine.low %v6541, %v6548
        %v6551 = vunpack.c.l.s4 1966171168
        %v6552 = vunpack.c.0.s8 %v6551
        %v6553 = vlaneseq
        %v6554 = vshrl.u32 %v6553, 7
        %v6555 = vsub.s32 %v6552, %v6554
        %v6556 = vrot.slane %v6549, %v6555
        %v6557 = vcombine.low %v4300, %v4283
        %v6559 = vunpack.c.l.s4 1966171168
        %v6560 = vunpack.c.0.s8 %v6559
        %v6561 = vlaneseq
        %v6562 = vshrl.u32 %v6561, 7
        %v6563 = vsub.s32 %v6560, %v6562
        %v6564 = vrot.slane %v6557, %v6563
        %v6566 = vunpack.c.l.s4 1966171168
        %v6567 = vunpack.c.0.s8 %v6566
        %v6568 = vlaneseq
        %v6569 = vshrl.u32 %v6568, 7
        %v6570 = vsub.s32 %v6567, %v6569
        %v6571 = vrot.slane %v4297, %v6570
        %v6572 = vcombine.low %v6564, %v6571
        %v6574 = vunpack.c.l.s4 1966171168
        %v6575 = vunpack.c.0.s8 %v6574
        %v6576 = vlaneseq
        %v6577 = vshrl.u32 %v6576, 7
        %v6578 = vsub.s32 %v6575, %v6577
        %v6579 = vrot.slane %v6572, %v6578
        %v6580 = vcombine.low %v4299, %v4301
        %v6582 = vunpack.c.l.s4 1966171168
        %v6583 = vunpack.c.0.s8 %v6582
        %v6584 = vlaneseq
        %v6585 = vshrl.u32 %v6584, 7
        %v6586 = vsub.s32 %v6583, %v6585
        %v6587 = vrot.slane %v6580, %v6586
        %v6589 = vunpack.c.l.s4 1966171168
        %v6590 = vunpack.c.0.s8 %v6589
        %v6591 = vlaneseq
        %v6592 = vshrl.u32 %v6591, 7
        %v6593 = vsub.s32 %v6590, %v6592
        %v6594 = vrot.slane %v4325, %v6593
        %v6595 = vcombine.low %v6587, %v6594
        %v6597 = vunpack.c.l.s4 1966171168
        %v6598 = vunpack.c.0.s8 %v6597
        %v6599 = vlaneseq
        %v6600 = vshrl.u32 %v6599, 7
        %v6601 = vsub.s32 %v6598, %v6600
        %v6602 = vrot.slane %v6595, %v6601
        %v6603 = vcombine.low %v4339, %v4347
        %v6605 = vunpack.c.l.s4 1966171168
        %v6606 = vunpack.c.0.s8 %v6605
        %v6607 = vlaneseq
        %v6608 = vshrl.u32 %v6607, 7
        %v6609 = vsub.s32 %v6606, %v6608
        %v6610 = vrot.slane %v6603, %v6609
        %v6612 = vunpack.c.l.s4 1966171168
        %v6613 = vunpack.c.0.s8 %v6612
        %v6614 = vlaneseq
        %v6615 = vshrl.u32 %v6614, 7
        %v6616 = vsub.s32 %v6613, %v6615
        %v6617 = vrot.slane %v4349, %v6616
        %v6618 = vcombine.low %v6610, %v6617
        %v6620 = vunpack.c.l.s4 1966171168
        %v6621 = vunpack.c.0.s8 %v6620
        %v6622 = vlaneseq
        %v6623 = vshrl.u32 %v6622, 7
        %v6624 = vsub.s32 %v6621, %v6623
        %v6625 = vrot.slane %v6618, %v6624
        %v6626 = vcombine.low %v4332, %v4346
        %v6628 = vunpack.c.l.s4 1966171168
        %v6629 = vunpack.c.0.s8 %v6628
        %v6630 = vlaneseq
        %v6631 = vshrl.u32 %v6630, 7
        %v6632 = vsub.s32 %v6629, %v6631
        %v6633 = vrot.slane %v6626, %v6632
        %v6635 = vunpack.c.l.s4 1966171168
        %v6636 = vunpack.c.0.s8 %v6635
        %v6637 = vlaneseq
        %v6638 = vshrl.u32 %v6637, 7
        %v6639 = vsub.s32 %v6636, %v6638
        %v6640 = vrot.slane %v4348, %v6639
        %v6641 = vcombine.low %v6633, %v6640
        %v6643 = vunpack.c.l.s4 1966171168
        %v6644 = vunpack.c.0.s8 %v6643
        %v6645 = vlaneseq
        %v6646 = vshrl.u32 %v6645, 7
        %v6647 = vsub.s32 %v6644, %v6646
        %v6648 = vrot.slane %v6641, %v6647
        %v6649 = vcombine.low %v4350, %v4374
        %v6651 = vunpack.c.l.s4 1966171168
        %v6652 = vunpack.c.0.s8 %v6651
        %v6653 = vlaneseq
        %v6654 = vshrl.u32 %v6653, 7
        %v6655 = vsub.s32 %v6652, %v6654
        %v6656 = vrot.slane %v6649, %v6655
        %v6658 = vunpack.c.l.s4 1966171168
        %v6659 = vunpack.c.0.s8 %v6658
        %v6660 = vlaneseq
        %v6661 = vshrl.u32 %v6660, 7
        %v6662 = vsub.s32 %v6659, %v6661
        %v6663 = vrot.slane %v4388, %v6662
        %v6664 = vcombine.low %v6656, %v6663
        %v6666 = vunpack.c.l.s4 1966171168
        %v6667 = vunpack.c.0.s8 %v6666
        %v6668 = vlaneseq
        %v6669 = vshrl.u32 %v6668, 7
        %v6670 = vsub.s32 %v6667, %v6669
        %v6671 = vrot.slane %v6664, %v6670
        %v6672 = vcombine.low %v4396, %v4398
        %v6674 = vunpack.c.l.s4 1966171168
        %v6675 = vunpack.c.0.s8 %v6674
        %v6676 = vlaneseq
        %v6677 = vshrl.u32 %v6676, 7
        %v6678 = vsub.s32 %v6675, %v6677
        %v6679 = vrot.slane %v6672, %v6678
        %v6681 = vunpack.c.l.s4 1966171168
        %v6682 = vunpack.c.0.s8 %v6681
        %v6683 = vlaneseq
        %v6684 = vshrl.u32 %v6683, 7
        %v6685 = vsub.s32 %v6682, %v6684
        %v6686 = vrot.slane %v4381, %v6685
        %v6687 = vcombine.low %v6679, %v6686
        %v6689 = vunpack.c.l.s4 1966171168
        %v6690 = vunpack.c.0.s8 %v6689
        %v6691 = vlaneseq
        %v6692 = vshrl.u32 %v6691, 7
        %v6693 = vsub.s32 %v6690, %v6692
        %v6694 = vrot.slane %v6687, %v6693
        %v6695 = vcombine.low %v4395, %v4397
        %v6697 = vunpack.c.l.s4 1966171168
        %v6698 = vunpack.c.0.s8 %v6697
        %v6699 = vlaneseq
        %v6700 = vshrl.u32 %v6699, 7
        %v6701 = vsub.s32 %v6698, %v6700
        %v6702 = vrot.slane %v6695, %v6701
        %v6704 = vunpack.c.l.s4 1966171168
        %v6705 = vunpack.c.0.s8 %v6704
        %v6706 = vlaneseq
        %v6707 = vshrl.u32 %v6706, 7
        %v6708 = vsub.s32 %v6705, %v6707
        %v6709 = vrot.slane %v4399, %v6708
        %v6710 = vcombine.low %v6702, %v6709
        %v6712 = vunpack.c.l.s4 1966171168
        %v6713 = vunpack.c.0.s8 %v6712
        %v6714 = vlaneseq
        %v6715 = vshrl.u32 %v6714, 7
        %v6716 = vsub.s32 %v6713, %v6715
        %v6717 = vrot.slane %v6710, %v6716
        %v6718 = vcombine.low %v4423, %v4437
        %v6720 = vunpack.c.l.s4 1966171168
        %v6721 = vunpack.c.0.s8 %v6720
        %v6722 = vlaneseq
        %v6723 = vshrl.u32 %v6722, 7
        %v6724 = vsub.s32 %v6721, %v6723
        %v6725 = vrot.slane %v6718, %v6724
        %v6727 = vunpack.c.l.s4 1966171168
        %v6728 = vunpack.c.0.s8 %v6727
        %v6729 = vlaneseq
        %v6730 = vshrl.u32 %v6729, 7
        %v6731 = vsub.s32 %v6728, %v6730
        %v6732 = vrot.slane %v4445, %v6731
        %v6733 = vcombine.low %v6725, %v6732
        %v6735 = vunpack.c.l.s4 1966171168
        %v6736 = vunpack.c.0.s8 %v6735
        %v6737 = vlaneseq
        %v6738 = vshrl.u32 %v6737, 7
        %v6739 = vsub.s32 %v6736, %v6738
        %v6740 = vrot.slane %v6733, %v6739
        %v6741 = vcombine.low %v4447, %v4430
        %v6743 = vunpack.c.l.s4 1966171168
        %v6744 = vunpack.c.0.s8 %v6743
        %v6745 = vlaneseq
        %v6746 = vshrl.u32 %v6745, 7
        %v6747 = vsub.s32 %v6744, %v6746
        %v6748 = vrot.slane %v6741, %v6747
        %v6750 = vunpack.c.l.s4 1966171168
        %v6751 = vunpack.c.0.s8 %v6750
        %v6752 = vlaneseq
        %v6753 = vshrl.u32 %v6752, 7
        %v6754 = vsub.s32 %v6751, %v6753
        %v6755 = vrot.slane %v4444, %v6754
        %v6756 = vcombine.low %v6748, %v6755
        %v6758 = vunpack.c.l.s4 1966171168
        %v6759 = vunpack.c.0.s8 %v6758
        %v6760 = vlaneseq
        %v6761 = vshrl.u32 %v6760, 7
        %v6762 = vsub.s32 %v6759, %v6761
        %v6763 = vrot.slane %v6756, %v6762
        %v6764 = vcombine.low %v4446, %v4448
        %v6766 = vunpack.c.l.s4 1966171168
        %v6767 = vunpack.c.0.s8 %v6766
        %v6768 = vlaneseq
        %v6769 = vshrl.u32 %v6768, 7
        %v6770 = vsub.s32 %v6767, %v6769
        %v6771 = vrot.slane %v6764, %v6770
        %v6773 = vunpack.c.l.s4 1966171168
        %v6774 = vunpack.c.0.s8 %v6773
        %v6775 = vlaneseq
        %v6776 = vshrl.u32 %v6775, 7
        %v6777 = vsub.s32 %v6774, %v6776
        %v6778 = vrot.slane %v4472, %v6777
        %v6779 = vcombine.low %v6771, %v6778
        %v6781 = vunpack.c.l.s4 1966171168
        %v6782 = vunpack.c.0.s8 %v6781
        %v6783 = vlaneseq
        %v6784 = vshrl.u32 %v6783, 7
        %v6785 = vsub.s32 %v6782, %v6784
        %v6786 = vrot.slane %v6779, %v6785
        %v6787 = vcombine.low %v4486, %v4494
        %v6789 = vunpack.c.l.s4 1966171168
        %v6790 = vunpack.c.0.s8 %v6789
        %v6791 = vlaneseq
        %v6792 = vshrl.u32 %v6791, 7
        %v6793 = vsub.s32 %v6790, %v6792
        %v6794 = vrot.slane %v6787, %v6793
        %v6796 = vunpack.c.l.s4 1966171168
        %v6797 = vunpack.c.0.s8 %v6796
        %v6798 = vlaneseq
        %v6799 = vshrl.u32 %v6798, 7
        %v6800 = vsub.s32 %v6797, %v6799
        %v6801 = vrot.slane %v4496, %v6800
        %v6802 = vcombine.low %v6794, %v6801
        %v6804 = vunpack.c.l.s4 1966171168
        %v6805 = vunpack.c.0.s8 %v6804
        %v6806 = vlaneseq
        %v6807 = vshrl.u32 %v6806, 7
        %v6808 = vsub.s32 %v6805, %v6807
        %v6809 = vrot.slane %v6802, %v6808
        %v6810 = vcombine.low %v4479, %v4493
        %v6812 = vunpack.c.l.s4 1966171168
        %v6813 = vunpack.c.0.s8 %v6812
        %v6814 = vlaneseq
        %v6815 = vshrl.u32 %v6814, 7
        %v6816 = vsub.s32 %v6813, %v6815
        %v6817 = vrot.slane %v6810, %v6816
        %v6819 = vunpack.c.l.s4 1966171168
        %v6820 = vunpack.c.0.s8 %v6819
        %v6821 = vlaneseq
        %v6822 = vshrl.u32 %v6821, 7
        %v6823 = vsub.s32 %v6820, %v6822
        %v6824 = vrot.slane %v4495, %v6823
        %v6825 = vcombine.low %v6817, %v6824
        %v6827 = vunpack.c.l.s4 1966171168
        %v6828 = vunpack.c.0.s8 %v6827
        %v6829 = vlaneseq
        %v6830 = vshrl.u32 %v6829, 7
        %v6831 = vsub.s32 %v6828, %v6830
        %v6832 = vrot.slane %v6825, %v6831
        %v6833 = vcombine.low %v4497, %v4521
        %v6835 = vunpack.c.l.s4 1966171168
        %v6836 = vunpack.c.0.s8 %v6835
        %v6837 = vlaneseq
        %v6838 = vshrl.u32 %v6837, 7
        %v6839 = vsub.s32 %v6836, %v6838
        %v6840 = vrot.slane %v6833, %v6839
        %v6842 = vunpack.c.l.s4 1966171168
        %v6843 = vunpack.c.0.s8 %v6842
        %v6844 = vlaneseq
        %v6845 = vshrl.u32 %v6844, 7
        %v6846 = vsub.s32 %v6843, %v6845
        %v6847 = vrot.slane %v4535, %v6846
        %v6848 = vcombine.low %v6840, %v6847
        %v6850 = vunpack.c.l.s4 1966171168
        %v6851 = vunpack.c.0.s8 %v6850
        %v6852 = vlaneseq
        %v6853 = vshrl.u32 %v6852, 7
        %v6854 = vsub.s32 %v6851, %v6853
        %v6855 = vrot.slane %v6848, %v6854
        %v6856 = vcombine.low %v4543, %v4545
        %v6858 = vunpack.c.l.s4 1966171168
        %v6859 = vunpack.c.0.s8 %v6858
        %v6860 = vlaneseq
        %v6861 = vshrl.u32 %v6860, 7
        %v6862 = vsub.s32 %v6859, %v6861
        %v6863 = vrot.slane %v6856, %v6862
        %v6865 = vunpack.c.l.s4 1966171168
        %v6866 = vunpack.c.0.s8 %v6865
        %v6867 = vlaneseq
        %v6868 = vshrl.u32 %v6867, 7
        %v6869 = vsub.s32 %v6866, %v6868
        %v6870 = vrot.slane %v4528, %v6869
        %v6871 = vcombine.low %v6863, %v6870
        %v6873 = vunpack.c.l.s4 1966171168
        %v6874 = vunpack.c.0.s8 %v6873
        %v6875 = vlaneseq
        %v6876 = vshrl.u32 %v6875, 7
        %v6877 = vsub.s32 %v6874, %v6876
        %v6878 = vrot.slane %v6871, %v6877
        %v6879 = vcombine.low %v4542, %v4544
        %v6881 = vunpack.c.l.s4 1966171168
        %v6882 = vunpack.c.0.s8 %v6881
        %v6883 = vlaneseq
        %v6884 = vshrl.u32 %v6883, 7
        %v6885 = vsub.s32 %v6882, %v6884
        %v6886 = vrot.slane %v6879, %v6885
        %v6888 = vunpack.c.l.s4 1966171168
        %v6889 = vunpack.c.0.s8 %v6888
        %v6890 = vlaneseq
        %v6891 = vshrl.u32 %v6890, 7
        %v6892 = vsub.s32 %v6889, %v6891
        %v6893 = vrot.slane %v4546, %v6892
        %v6894 = vcombine.low %v6886, %v6893
        %v6896 = vunpack.c.l.s4 1966171168
        %v6897 = vunpack.c.0.s8 %v6896
        %v6898 = vlaneseq
        %v6899 = vshrl.u32 %v6898, 7
        %v6900 = vsub.s32 %v6897, %v6899
        %v6901 = vrot.slane %v6894, %v6900
        %v6902 = vcombine.low %v4570, %v4584
        %v6904 = vunpack.c.l.s4 1966171168
        %v6905 = vunpack.c.0.s8 %v6904
        %v6906 = vlaneseq
        %v6907 = vshrl.u32 %v6906, 7
        %v6908 = vsub.s32 %v6905, %v6907
        %v6909 = vrot.slane %v6902, %v6908
        %v6911 = vunpack.c.l.s4 1966171168
        %v6912 = vunpack.c.0.s8 %v6911
        %v6913 = vlaneseq
        %v6914 = vshrl.u32 %v6913, 7
        %v6915 = vsub.s32 %v6912, %v6914
        %v6916 = vrot.slane %v4592, %v6915
        %v6917 = vcombine.low %v6909, %v6916
        %v6919 = vunpack.c.l.s4 1966171168
        %v6920 = vunpack.c.0.s8 %v6919
        %v6921 = vlaneseq
        %v6922 = vshrl.u32 %v6921, 7
        %v6923 = vsub.s32 %v6920, %v6922
        %v6924 = vrot.slane %v6917, %v6923
        %v6925 = vcombine.low %v4594, %v4577
        %v6927 = vunpack.c.l.s4 1966171168
        %v6928 = vunpack.c.0.s8 %v6927
        %v6929 = vlaneseq
        %v6930 = vshrl.u32 %v6929, 7
        %v6931 = vsub.s32 %v6928, %v6930
        %v6932 = vrot.slane %v6925, %v6931
        %v6934 = vunpack.c.l.s4 1966171168
        %v6935 = vunpack.c.0.s8 %v6934
        %v6936 = vlaneseq
        %v6937 = vshrl.u32 %v6936, 7
        %v6938 = vsub.s32 %v6935, %v6937
        %v6939 = vrot.slane %v4591, %v6938
        %v6940 = vcombine.low %v6932, %v6939
        %v6942 = vunpack.c.l.s4 1966171168
        %v6943 = vunpack.c.0.s8 %v6942
        %v6944 = vlaneseq
        %v6945 = vshrl.u32 %v6944, 7
        %v6946 = vsub.s32 %v6943, %v6945
        %v6947 = vrot.slane %v6940, %v6946
        %v6948 = vcombine.low %v4593, %v4595
        %v6950 = vunpack.c.l.s4 1966171168
        %v6951 = vunpack.c.0.s8 %v6950
        %v6952 = vlaneseq
        %v6953 = vshrl.u32 %v6952, 7
        %v6954 = vsub.s32 %v6951, %v6953
        %v6955 = vrot.slane %v6948, %v6954
        %v6957 = vunpack.c.l.s4 1966171168
        %v6958 = vunpack.c.0.s8 %v6957
        %v6959 = vlaneseq
        %v6960 = vshrl.u32 %v6959, 7
        %v6961 = vsub.s32 %v6958, %v6960
        %v6962 = vrot.slane %v4619, %v6961
        %v6963 = vcombine.low %v6955, %v6962
        %v6965 = vunpack.c.l.s4 1966171168
        %v6966 = vunpack.c.0.s8 %v6965
        %v6967 = vlaneseq
        %v6968 = vshrl.u32 %v6967, 7
        %v6969 = vsub.s32 %v6966, %v6968
        %v6970 = vrot.slane %v6963, %v6969
        %v6971 = vcombine.low %v4633, %v4641
        %v6973 = vunpack.c.l.s4 1966171168
        %v6974 = vunpack.c.0.s8 %v6973
        %v6975 = vlaneseq
        %v6976 = vshrl.u32 %v6975, 7
        %v6977 = vsub.s32 %v6974, %v6976
        %v6978 = vrot.slane %v6971, %v6977
        %v6980 = vunpack.c.l.s4 1966171168
        %v6981 = vunpack.c.0.s8 %v6980
        %v6982 = vlaneseq
        %v6983 = vshrl.u32 %v6982, 7
        %v6984 = vsub.s32 %v6981, %v6983
        %v6985 = vrot.slane %v4643, %v6984
        %v6986 = vcombine.low %v6978, %v6985
        %v6988 = vunpack.c.l.s4 1966171168
        %v6989 = vunpack.c.0.s8 %v6988
        %v6990 = vlaneseq
        %v6991 = vshrl.u32 %v6990, 7
        %v6992 = vsub.s32 %v6989, %v6991
        %v6993 = vrot.slane %v6986, %v6992
        %v6994 = vcombine.low %v4626, %v4640
        %v6996 = vunpack.c.l.s4 1966171168
        %v6997 = vunpack.c.0.s8 %v6996
        %v6998 = vlaneseq
        %v6999 = vshrl.u32 %v6998, 7
        %v7000 = vsub.s32 %v6997, %v6999
        %v7001 = vrot.slane %v6994, %v7000
        %v7003 = vunpack.c.l.s4 1966171168
        %v7004 = vunpack.c.0.s8 %v7003
        %v7005 = vlaneseq
        %v7006 = vshrl.u32 %v7005, 7
        %v7007 = vsub.s32 %v7004, %v7006
        %v7008 = vrot.slane %v4642, %v7007
        %v7009 = vcombine.low %v7001, %v7008
        %v7011 = vunpack.c.l.s4 1966171168
        %v7012 = vunpack.c.0.s8 %v7011
        %v7013 = vlaneseq
        %v7014 = vshrl.u32 %v7013, 7
        %v7015 = vsub.s32 %v7012, %v7014
        %v7016 = vrot.slane %v7009, %v7015
        %v7017 = vcombine.low %v4644, %v4668
        %v7019 = vunpack.c.l.s4 1966171168
        %v7020 = vunpack.c.0.s8 %v7019
        %v7021 = vlaneseq
        %v7022 = vshrl.u32 %v7021, 7
        %v7023 = vsub.s32 %v7020, %v7022
        %v7024 = vrot.slane %v7017, %v7023
        %v7026 = vunpack.c.l.s4 1966171168
        %v7027 = vunpack.c.0.s8 %v7026
        %v7028 = vlaneseq
        %v7029 = vshrl.u32 %v7028, 7
        %v7030 = vsub.s32 %v7027, %v7029
        %v7031 = vrot.slane %v4682, %v7030
        %v7032 = vcombine.low %v7024, %v7031
        %v7034 = vunpack.c.l.s4 1966171168
        %v7035 = vunpack.c.0.s8 %v7034
        %v7036 = vlaneseq
        %v7037 = vshrl.u32 %v7036, 7
        %v7038 = vsub.s32 %v7035, %v7037
        %v7039 = vrot.slane %v7032, %v7038
        %v7040 = vcombine.low %v4690, %v4692
        %v7042 = vunpack.c.l.s4 1966171168
        %v7043 = vunpack.c.0.s8 %v7042
        %v7044 = vlaneseq
        %v7045 = vshrl.u32 %v7044, 7
        %v7046 = vsub.s32 %v7043, %v7045
        %v7047 = vrot.slane %v7040, %v7046
        %v7049 = vunpack.c.l.s4 1966171168
        %v7050 = vunpack.c.0.s8 %v7049
        %v7051 = vlaneseq
        %v7052 = vshrl.u32 %v7051, 7
        %v7053 = vsub.s32 %v7050, %v7052
        %v7054 = vrot.slane %v4675, %v7053
        %v7055 = vcombine.low %v7047, %v7054
        %v7057 = vunpack.c.l.s4 1966171168
        %v7058 = vunpack.c.0.s8 %v7057
        %v7059 = vlaneseq
        %v7060 = vshrl.u32 %v7059, 7
        %v7061 = vsub.s32 %v7058, %v7060
        %v7062 = vrot.slane %v7055, %v7061
        %v7063 = vcombine.low %v4689, %v4691
        %v7065 = vunpack.c.l.s4 1966171168
        %v7066 = vunpack.c.0.s8 %v7065
        %v7067 = vlaneseq
        %v7068 = vshrl.u32 %v7067, 7
        %v7069 = vsub.s32 %v7066, %v7068
        %v7070 = vrot.slane %v7063, %v7069
        %v7072 = vunpack.c.l.s4 1966171168
        %v7073 = vunpack.c.0.s8 %v7072
        %v7074 = vlaneseq
        %v7075 = vshrl.u32 %v7074, 7
        %v7076 = vsub.s32 %v7073, %v7075
        %v7077 = vrot.slane %v4693, %v7076
        %v7078 = vcombine.low %v7070, %v7077
        %v7080 = vunpack.c.l.s4 1966171168
        %v7081 = vunpack.c.0.s8 %v7080
        %v7082 = vlaneseq
        %v7083 = vshrl.u32 %v7082, 7
        %v7084 = vsub.s32 %v7081, %v7083
        %v7085 = vrot.slane %v7078, %v7084
        %vm7190 = vcmask 1042432
        %v7191 = vsel %vm7190, %v4716, -inf
        %v7192 = vrot.slane %v7191, 4
        %v7193 = vmax.f32 %v7191, %v7192
        %v7194 = vrot.slane %v7193, 2
        %v7195 = vmax.f32 %v7193, %v7194
        %v7196 = vrot.slane %v7195, 1
        %v7197 = vmax.f32 %v7195, %v7196
        %v7198 = vsel %vm7190, %v4739, -inf
        %v7199 = vrot.slane %v7198, 4
        %v7200 = vmax.f32 %v7198, %v7199
        %v7201 = vrot.slane %v7200, 2
        %v7202 = vmax.f32 %v7200, %v7201
        %v7203 = vrot.slane %v7202, 1
        %v7204 = vmax.f32 %v7202, %v7203
        %v7205 = vsel %vm7190, %v4762, -inf
        %v7206 = vrot.slane %v7205, 4
        %v7207 = vmax.f32 %v7205, %v7206
        %v7208 = vrot.slane %v7207, 2
        %v7209 = vmax.f32 %v7207, %v7208
        %v7210 = vrot.slane %v7209, 1
        %v7211 = vmax.f32 %v7209, %v7210
        %v7212 = vsel %vm7190, %v4785, -inf
        %v7213 = vrot.slane %v7212, 4
        %v7214 = vmax.f32 %v7212, %v7213
        %v7215 = vrot.slane %v7214, 2
        %v7216 = vmax.f32 %v7214, %v7215
        %v7217 = vrot.slane %v7216, 1
        %v7218 = vmax.f32 %v7216, %v7217
        %v7219 = vsel %vm7190, %v4808, -inf
        %v7220 = vrot.slane %v7219, 4
        %v7221 = vmax.f32 %v7219, %v7220
        %v7222 = vrot.slane %v7221, 2
        %v7223 = vmax.f32 %v7221, %v7222
        %v7224 = vrot.slane %v7223, 1
        %v7225 = vmax.f32 %v7223, %v7224
        %v7226 = vsel %vm7190, %v4831, -inf
        %v7227 = vrot.slane %v7226, 4
        %v7228 = vmax.f32 %v7226, %v7227
        %v7229 = vrot.slane %v7228, 2
        %v7230 = vmax.f32 %v7228, %v7229
        %v7231 = vrot.slane %v7230, 1
        %v7232 = vmax.f32 %v7230, %v7231
        %v7233 = vsel %vm7190, %v4854, -inf
        %v7234 = vrot.slane %v7233, 4
        %v7235 = vmax.f32 %v7233, %v7234
        %v7236 = vrot.slane %v7235, 2
        %v7237 = vmax.f32 %v7235, %v7236
        %v7238 = vrot.slane %v7237, 1
        %v7239 = vmax.f32 %v7237, %v7238
        %v7240 = vsel %vm7190, %v4877, -inf
        %v7241 = vrot.slane %v7240, 4
        %v7242 = vmax.f32 %v7240, %v7241
        %v7243 = vrot.slane %v7242, 2
        %v7244 = vmax.f32 %v7242, %v7243
        %v7245 = vrot.slane %v7244, 1
        %v7246 = vmax.f32 %v7244, %v7245
        %v7247 = vsel %vm7190, %v4900, -inf
        %v7248 = vrot.slane %v7247, 4
        %v7249 = vmax.f32 %v7247, %v7248
        %v7250 = vrot.slane %v7249, 2
        %v7251 = vmax.f32 %v7249, %v7250
        %v7252 = vrot.slane %v7251, 1
        %v7253 = vmax.f32 %v7251, %v7252
        %v7254 = vsel %vm7190, %v4923, -inf
        %v7255 = vrot.slane %v7254, 4
        %v7256 = vmax.f32 %v7254, %v7255
        %v7257 = vrot.slane %v7256, 2
        %v7258 = vmax.f32 %v7256, %v7257
        %v7259 = vrot.slane %v7258, 1
        %v7260 = vmax.f32 %v7258, %v7259
        %v7261 = vsel %vm7190, %v4946, -inf
        %v7262 = vrot.slane %v7261, 4
        %v7263 = vmax.f32 %v7261, %v7262
        %v7264 = vrot.slane %v7263, 2
        %v7265 = vmax.f32 %v7263, %v7264
        %v7266 = vrot.slane %v7265, 1
        %v7267 = vmax.f32 %v7265, %v7266
        %v7268 = vsel %vm7190, %v4969, -inf
        %v7269 = vrot.slane %v7268, 4
        %v7270 = vmax.f32 %v7268, %v7269
        %v7271 = vrot.slane %v7270, 2
        %v7272 = vmax.f32 %v7270, %v7271
        %v7273 = vrot.slane %v7272, 1
        %v7274 = vmax.f32 %v7272, %v7273
        %v7275 = vsel %vm7190, %v4992, -inf
        %v7276 = vrot.slane %v7275, 4
        %v7277 = vmax.f32 %v7275, %v7276
        %v7278 = vrot.slane %v7277, 2
        %v7279 = vmax.f32 %v7277, %v7278
        %v7280 = vrot.slane %v7279, 1
        %v7281 = vmax.f32 %v7279, %v7280
        %v7282 = vsel %vm7190, %v5015, -inf
        %v7283 = vrot.slane %v7282, 4
        %v7284 = vmax.f32 %v7282, %v7283
        %v7285 = vrot.slane %v7284, 2
        %v7286 = vmax.f32 %v7284, %v7285
        %v7287 = vrot.slane %v7286, 1
        %v7288 = vmax.f32 %v7286, %v7287
        %v7289 = vsel %vm7190, %v5038, -inf
        %v7290 = vrot.slane %v7289, 4
        %v7291 = vmax.f32 %v7289, %v7290
        %v7292 = vrot.slane %v7291, 2
        %v7293 = vmax.f32 %v7291, %v7292
        %v7294 = vrot.slane %v7293, 1
        %v7295 = vmax.f32 %v7293, %v7294
        %v7296 = vsel %vm7190, %v5061, -inf
        %v7297 = vrot.slane %v7296, 4
        %v7298 = vmax.f32 %v7296, %v7297
        %v7299 = vrot.slane %v7298, 2
        %v7300 = vmax.f32 %v7298, %v7299
        %v7301 = vrot.slane %v7300, 1
        %v7302 = vmax.f32 %v7300, %v7301
        %v7303 = vsel %vm7190, %v5084, -inf
        %v7304 = vrot.slane %v7303, 4
        %v7305 = vmax.f32 %v7303, %v7304
        %v7306 = vrot.slane %v7305, 2
        %v7307 = vmax.f32 %v7305, %v7306
        %v7308 = vrot.slane %v7307, 1
        %v7309 = vmax.f32 %v7307, %v7308
        %v7310 = vsel %vm7190, %v5107, -inf
        %v7311 = vrot.slane %v7310, 4
        %v7312 = vmax.f32 %v7310, %v7311
        %v7313 = vrot.slane %v7312, 2
        %v7314 = vmax.f32 %v7312, %v7313
        %v7315 = vrot.slane %v7314, 1
        %v7316 = vmax.f32 %v7314, %v7315
        %v7317 = vsel %vm7190, %v5130, -inf
        %v7318 = vrot.slane %v7317, 4
        %v7319 = vmax.f32 %v7317, %v7318
        %v7320 = vrot.slane %v7319, 2
        %v7321 = vmax.f32 %v7319, %v7320
        %v7322 = vrot.slane %v7321, 1
        %v7323 = vmax.f32 %v7321, %v7322
        %v7324 = vsel %vm7190, %v5153, -inf
        %v7325 = vrot.slane %v7324, 4
        %v7326 = vmax.f32 %v7324, %v7325
        %v7327 = vrot.slane %v7326, 2
        %v7328 = vmax.f32 %v7326, %v7327
        %v7329 = vrot.slane %v7328, 1
        %v7330 = vmax.f32 %v7328, %v7329
        %v7331 = vsel %vm7190, %v5176, -inf
        %v7332 = vrot.slane %v7331, 4
        %v7333 = vmax.f32 %v7331, %v7332
        %v7334 = vrot.slane %v7333, 2
        %v7335 = vmax.f32 %v7333, %v7334
        %v7336 = vrot.slane %v7335, 1
        %v7337 = vmax.f32 %v7335, %v7336
        %v7338 = vsel %vm7190, %v5199, -inf
        %v7339 = vrot.slane %v7338, 4
        %v7340 = vmax.f32 %v7338, %v7339
        %v7341 = vrot.slane %v7340, 2
        %v7342 = vmax.f32 %v7340, %v7341
        %v7343 = vrot.slane %v7342, 1
        %v7344 = vmax.f32 %v7342, %v7343
        %v7345 = vsel %vm7190, %v5222, -inf
        %v7346 = vrot.slane %v7345, 4
        %v7347 = vmax.f32 %v7345, %v7346
        %v7348 = vrot.slane %v7347, 2
        %v7349 = vmax.f32 %v7347, %v7348
        %v7350 = vrot.slane %v7349, 1
        %v7351 = vmax.f32 %v7349, %v7350
        %v7352 = vsel %vm7190, %v5245, -inf
        %v7353 = vrot.slane %v7352, 4
        %v7354 = vmax.f32 %v7352, %v7353
        %v7355 = vrot.slane %v7354, 2
        %v7356 = vmax.f32 %v7354, %v7355
        %v7357 = vrot.slane %v7356, 1
        %v7358 = vmax.f32 %v7356, %v7357
        %v7359 = vsel %vm7190, %v5268, -inf
        %v7360 = vrot.slane %v7359, 4
        %v7361 = vmax.f32 %v7359, %v7360
        %v7362 = vrot.slane %v7361, 2
        %v7363 = vmax.f32 %v7361, %v7362
        %v7364 = vrot.slane %v7363, 1
        %v7365 = vmax.f32 %v7363, %v7364
        %v7366 = vsel %vm7190, %v5291, -inf
        %v7367 = vrot.slane %v7366, 4
        %v7368 = vmax.f32 %v7366, %v7367
        %v7369 = vrot.slane %v7368, 2
        %v7370 = vmax.f32 %v7368, %v7369
        %v7371 = vrot.slane %v7370, 1
        %v7372 = vmax.f32 %v7370, %v7371
        %v7373 = vsel %vm7190, %v5314, -inf
        %v7374 = vrot.slane %v7373, 4
        %v7375 = vmax.f32 %v7373, %v7374
        %v7376 = vrot.slane %v7375, 2
        %v7377 = vmax.f32 %v7375, %v7376
        %v7378 = vrot.slane %v7377, 1
        %v7379 = vmax.f32 %v7377, %v7378
        %v7380 = vsel %vm7190, %v5337, -inf
        %v7381 = vrot.slane %v7380, 4
        %v7382 = vmax.f32 %v7380, %v7381
        %v7383 = vrot.slane %v7382, 2
        %v7384 = vmax.f32 %v7382, %v7383
        %v7385 = vrot.slane %v7384, 1
        %v7386 = vmax.f32 %v7384, %v7385
        %v7387 = vsel %vm7190, %v5360, -inf
        %v7388 = vrot.slane %v7387, 4
        %v7389 = vmax.f32 %v7387, %v7388
        %v7390 = vrot.slane %v7389, 2
        %v7391 = vmax.f32 %v7389, %v7390
        %v7392 = vrot.slane %v7391, 1
        %v7393 = vmax.f32 %v7391, %v7392
        %v7394 = vsel %vm7190, %v5383, -inf
        %v7395 = vrot.slane %v7394, 4
        %v7396 = vmax.f32 %v7394, %v7395
        %v7397 = vrot.slane %v7396, 2
        %v7398 = vmax.f32 %v7396, %v7397
        %v7399 = vrot.slane %v7398, 1
        %v7400 = vmax.f32 %v7398, %v7399
        %v7401 = vsel %vm7190, %v5406, -inf
        %v7402 = vrot.slane %v7401, 4
        %v7403 = vmax.f32 %v7401, %v7402
        %v7404 = vrot.slane %v7403, 2
        %v7405 = vmax.f32 %v7403, %v7404
        %v7406 = vrot.slane %v7405, 1
        %v7407 = vmax.f32 %v7405, %v7406
        %v7408 = vsel %vm7190, %v5429, -inf
        %v7409 = vrot.slane %v7408, 4
        %v7410 = vmax.f32 %v7408, %v7409
        %v7411 = vrot.slane %v7410, 2
        %v7412 = vmax.f32 %v7410, %v7411
        %v7413 = vrot.slane %v7412, 1
        %v7414 = vmax.f32 %v7412, %v7413
        %v7415 = vsel %vm7190, %v5452, -inf
        %v7416 = vrot.slane %v7415, 4
        %v7417 = vmax.f32 %v7415, %v7416
        %v7418 = vrot.slane %v7417, 2
        %v7419 = vmax.f32 %v7417, %v7418
        %v7420 = vrot.slane %v7419, 1
        %v7421 = vmax.f32 %v7419, %v7420
        %v7422 = vsel %vm7190, %v5475, -inf
        %v7423 = vrot.slane %v7422, 4
        %v7424 = vmax.f32 %v7422, %v7423
        %v7425 = vrot.slane %v7424, 2
        %v7426 = vmax.f32 %v7424, %v7425
        %v7427 = vrot.slane %v7426, 1
        %v7428 = vmax.f32 %v7426, %v7427
        %v7429 = vsel %vm7190, %v5498, -inf
        %v7430 = vrot.slane %v7429, 4
        %v7431 = vmax.f32 %v7429, %v7430
        %v7432 = vrot.slane %v7431, 2
        %v7433 = vmax.f32 %v7431, %v7432
        %v7434 = vrot.slane %v7433, 1
        %v7435 = vmax.f32 %v7433, %v7434
        %v7436 = vsel %vm7190, %v5521, -inf
        %v7437 = vrot.slane %v7436, 4
        %v7438 = vmax.f32 %v7436, %v7437
        %v7439 = vrot.slane %v7438, 2
        %v7440 = vmax.f32 %v7438, %v7439
        %v7441 = vrot.slane %v7440, 1
        %v7442 = vmax.f32 %v7440, %v7441
        %v7443 = vsel %vm7190, %v5544, -inf
        %v7444 = vrot.slane %v7443, 4
        %v7445 = vmax.f32 %v7443, %v7444
        %v7446 = vrot.slane %v7445, 2
        %v7447 = vmax.f32 %v7445, %v7446
        %v7448 = vrot.slane %v7447, 1
        %v7449 = vmax.f32 %v7447, %v7448
        %v7450 = vsel %vm7190, %v5567, -inf
        %v7451 = vrot.slane %v7450, 4
        %v7452 = vmax.f32 %v7450, %v7451
        %v7453 = vrot.slane %v7452, 2
        %v7454 = vmax.f32 %v7452, %v7453
        %v7455 = vrot.slane %v7454, 1
        %v7456 = vmax.f32 %v7454, %v7455
        %v7457 = vsel %vm7190, %v5590, -inf
        %v7458 = vrot.slane %v7457, 4
        %v7459 = vmax.f32 %v7457, %v7458
        %v7460 = vrot.slane %v7459, 2
        %v7461 = vmax.f32 %v7459, %v7460
        %v7462 = vrot.slane %v7461, 1
        %v7463 = vmax.f32 %v7461, %v7462
        %v7464 = vsel %vm7190, %v5613, -inf
        %v7465 = vrot.slane %v7464, 4
        %v7466 = vmax.f32 %v7464, %v7465
        %v7467 = vrot.slane %v7466, 2
        %v7468 = vmax.f32 %v7466, %v7467
        %v7469 = vrot.slane %v7468, 1
        %v7470 = vmax.f32 %v7468, %v7469
        %v7471 = vsel %vm7190, %v5636, -inf
        %v7472 = vrot.slane %v7471, 4
        %v7473 = vmax.f32 %v7471, %v7472
        %v7474 = vrot.slane %v7473, 2
        %v7475 = vmax.f32 %v7473, %v7474
        %v7476 = vrot.slane %v7475, 1
        %v7477 = vmax.f32 %v7475, %v7476
        %v7478 = vsel %vm7190, %v5659, -inf
        %v7479 = vrot.slane %v7478, 4
        %v7480 = vmax.f32 %v7478, %v7479
        %v7481 = vrot.slane %v7480, 2
        %v7482 = vmax.f32 %v7480, %v7481
        %v7483 = vrot.slane %v7482, 1
        %v7484 = vmax.f32 %v7482, %v7483
        %v7485 = vsel %vm7190, %v5682, -inf
        %v7486 = vrot.slane %v7485, 4
        %v7487 = vmax.f32 %v7485, %v7486
        %v7488 = vrot.slane %v7487, 2
        %v7489 = vmax.f32 %v7487, %v7488
        %v7490 = vrot.slane %v7489, 1
        %v7491 = vmax.f32 %v7489, %v7490
        %v7492 = vsel %vm7190, %v5705, -inf
        %v7493 = vrot.slane %v7492, 4
        %v7494 = vmax.f32 %v7492, %v7493
        %v7495 = vrot.slane %v7494, 2
        %v7496 = vmax.f32 %v7494, %v7495
        %v7497 = vrot.slane %v7496, 1
        %v7498 = vmax.f32 %v7496, %v7497
        %v7499 = vsel %vm7190, %v5728, -inf
        %v7500 = vrot.slane %v7499, 4
        %v7501 = vmax.f32 %v7499, %v7500
        %v7502 = vrot.slane %v7501, 2
        %v7503 = vmax.f32 %v7501, %v7502
        %v7504 = vrot.slane %v7503, 1
        %v7505 = vmax.f32 %v7503, %v7504
        %v7506 = vsel %vm7190, %v5751, -inf
        %v7507 = vrot.slane %v7506, 4
        %v7508 = vmax.f32 %v7506, %v7507
        %v7509 = vrot.slane %v7508, 2
        %v7510 = vmax.f32 %v7508, %v7509
        %v7511 = vrot.slane %v7510, 1
        %v7512 = vmax.f32 %v7510, %v7511
        %v7513 = vsel %vm7190, %v5774, -inf
        %v7514 = vrot.slane %v7513, 4
        %v7515 = vmax.f32 %v7513, %v7514
        %v7516 = vrot.slane %v7515, 2
        %v7517 = vmax.f32 %v7515, %v7516
        %v7518 = vrot.slane %v7517, 1
        %v7519 = vmax.f32 %v7517, %v7518
        %v7520 = vsel %vm7190, %v5797, -inf
        %v7521 = vrot.slane %v7520, 4
        %v7522 = vmax.f32 %v7520, %v7521
        %v7523 = vrot.slane %v7522, 2
        %v7524 = vmax.f32 %v7522, %v7523
        %v7525 = vrot.slane %v7524, 1
        %v7526 = vmax.f32 %v7524, %v7525
        %v7527 = vsel %vm7190, %v5820, -inf
        %v7528 = vrot.slane %v7527, 4
        %v7529 = vmax.f32 %v7527, %v7528
        %v7530 = vrot.slane %v7529, 2
        %v7531 = vmax.f32 %v7529, %v7530
        %v7532 = vrot.slane %v7531, 1
        %v7533 = vmax.f32 %v7531, %v7532
        %v7534 = vsel %vm7190, %v5843, -inf
        %v7535 = vrot.slane %v7534, 4
        %v7536 = vmax.f32 %v7534, %v7535
        %v7537 = vrot.slane %v7536, 2
        %v7538 = vmax.f32 %v7536, %v7537
        %v7539 = vrot.slane %v7538, 1
        %v7540 = vmax.f32 %v7538, %v7539
        %v7541 = vsel %vm7190, %v5866, -inf
        %v7542 = vrot.slane %v7541, 4
        %v7543 = vmax.f32 %v7541, %v7542
        %v7544 = vrot.slane %v7543, 2
        %v7545 = vmax.f32 %v7543, %v7544
        %v7546 = vrot.slane %v7545, 1
        %v7547 = vmax.f32 %v7545, %v7546
        %v7548 = vsel %vm7190, %v5889, -inf
        %v7549 = vrot.slane %v7548, 4
        %v7550 = vmax.f32 %v7548, %v7549
        %v7551 = vrot.slane %v7550, 2
        %v7552 = vmax.f32 %v7550, %v7551
        %v7553 = vrot.slane %v7552, 1
        %v7554 = vmax.f32 %v7552, %v7553
        %v7555 = vsel %vm7190, %v5912, -inf
        %v7556 = vrot.slane %v7555, 4
        %v7557 = vmax.f32 %v7555, %v7556
        %v7558 = vrot.slane %v7557, 2
        %v7559 = vmax.f32 %v7557, %v7558
        %v7560 = vrot.slane %v7559, 1
        %v7561 = vmax.f32 %v7559, %v7560
        %v7562 = vsel %vm7190, %v5935, -inf
        %v7563 = vrot.slane %v7562, 4
        %v7564 = vmax.f32 %v7562, %v7563
        %v7565 = vrot.slane %v7564, 2
        %v7566 = vmax.f32 %v7564, %v7565
        %v7567 = vrot.slane %v7566, 1
        %v7568 = vmax.f32 %v7566, %v7567
        %v7569 = vsel %vm7190, %v5958, -inf
        %v7570 = vrot.slane %v7569, 4
        %v7571 = vmax.f32 %v7569, %v7570
        %v7572 = vrot.slane %v7571, 2
        %v7573 = vmax.f32 %v7571, %v7572
        %v7574 = vrot.slane %v7573, 1
        %v7575 = vmax.f32 %v7573, %v7574
        %v7576 = vsel %vm7190, %v5981, -inf
        %v7577 = vrot.slane %v7576, 4
        %v7578 = vmax.f32 %v7576, %v7577
        %v7579 = vrot.slane %v7578, 2
        %v7580 = vmax.f32 %v7578, %v7579
        %v7581 = vrot.slane %v7580, 1
        %v7582 = vmax.f32 %v7580, %v7581
        %v7583 = vsel %vm7190, %v6004, -inf
        %v7584 = vrot.slane %v7583, 4
        %v7585 = vmax.f32 %v7583, %v7584
        %v7586 = vrot.slane %v7585, 2
        %v7587 = vmax.f32 %v7585, %v7586
        %v7588 = vrot.slane %v7587, 1
        %v7589 = vmax.f32 %v7587, %v7588
        %v7590 = vsel %vm7190, %v6027, -inf
        %v7591 = vrot.slane %v7590, 4
        %v7592 = vmax.f32 %v7590, %v7591
        %v7593 = vrot.slane %v7592, 2
        %v7594 = vmax.f32 %v7592, %v7593
        %v7595 = vrot.slane %v7594, 1
        %v7596 = vmax.f32 %v7594, %v7595
        %v7597 = vsel %vm7190, %v6050, -inf
        %v7598 = vrot.slane %v7597, 4
        %v7599 = vmax.f32 %v7597, %v7598
        %v7600 = vrot.slane %v7599, 2
        %v7601 = vmax.f32 %v7599, %v7600
        %v7602 = vrot.slane %v7601, 1
        %v7603 = vmax.f32 %v7601, %v7602
        %v7604 = vsel %vm7190, %v6073, -inf
        %v7605 = vrot.slane %v7604, 4
        %v7606 = vmax.f32 %v7604, %v7605
        %v7607 = vrot.slane %v7606, 2
        %v7608 = vmax.f32 %v7606, %v7607
        %v7609 = vrot.slane %v7608, 1
        %v7610 = vmax.f32 %v7608, %v7609
        %v7611 = vsel %vm7190, %v6096, -inf
        %v7612 = vrot.slane %v7611, 4
        %v7613 = vmax.f32 %v7611, %v7612
        %v7614 = vrot.slane %v7613, 2
        %v7615 = vmax.f32 %v7613, %v7614
        %v7616 = vrot.slane %v7615, 1
        %v7617 = vmax.f32 %v7615, %v7616
        %v7618 = vsel %vm7190, %v6119, -inf
        %v7619 = vrot.slane %v7618, 4
        %v7620 = vmax.f32 %v7618, %v7619
        %v7621 = vrot.slane %v7620, 2
        %v7622 = vmax.f32 %v7620, %v7621
        %v7623 = vrot.slane %v7622, 1
        %v7624 = vmax.f32 %v7622, %v7623
        %v7625 = vsel %vm7190, %v6142, -inf
        %v7626 = vrot.slane %v7625, 4
        %v7627 = vmax.f32 %v7625, %v7626
        %v7628 = vrot.slane %v7627, 2
        %v7629 = vmax.f32 %v7627, %v7628
        %v7630 = vrot.slane %v7629, 1
        %v7631 = vmax.f32 %v7629, %v7630
        %v7632 = vsel %vm7190, %v6165, -inf
        %v7633 = vrot.slane %v7632, 4
        %v7634 = vmax.f32 %v7632, %v7633
        %v7635 = vrot.slane %v7634, 2
        %v7636 = vmax.f32 %v7634, %v7635
        %v7637 = vrot.slane %v7636, 1
        %v7638 = vmax.f32 %v7636, %v7637
        %v7639 = vsel %vm7190, %v6188, -inf
        %v7640 = vrot.slane %v7639, 4
        %v7641 = vmax.f32 %v7639, %v7640
        %v7642 = vrot.slane %v7641, 2
        %v7643 = vmax.f32 %v7641, %v7642
        %v7644 = vrot.slane %v7643, 1
        %v7645 = vmax.f32 %v7643, %v7644
        %v7646 = vsel %vm7190, %v6211, -inf
        %v7647 = vrot.slane %v7646, 4
        %v7648 = vmax.f32 %v7646, %v7647
        %v7649 = vrot.slane %v7648, 2
        %v7650 = vmax.f32 %v7648, %v7649
        %v7651 = vrot.slane %v7650, 1
        %v7652 = vmax.f32 %v7650, %v7651
        %v7653 = vsel %vm7190, %v6234, -inf
        %v7654 = vrot.slane %v7653, 4
        %v7655 = vmax.f32 %v7653, %v7654
        %v7656 = vrot.slane %v7655, 2
        %v7657 = vmax.f32 %v7655, %v7656
        %v7658 = vrot.slane %v7657, 1
        %v7659 = vmax.f32 %v7657, %v7658
        %v7660 = vsel %vm7190, %v6257, -inf
        %v7661 = vrot.slane %v7660, 4
        %v7662 = vmax.f32 %v7660, %v7661
        %v7663 = vrot.slane %v7662, 2
        %v7664 = vmax.f32 %v7662, %v7663
        %v7665 = vrot.slane %v7664, 1
        %v7666 = vmax.f32 %v7664, %v7665
        %v7667 = vsel %vm7190, %v6280, -inf
        %v7668 = vrot.slane %v7667, 4
        %v7669 = vmax.f32 %v7667, %v7668
        %v7670 = vrot.slane %v7669, 2
        %v7671 = vmax.f32 %v7669, %v7670
        %v7672 = vrot.slane %v7671, 1
        %v7673 = vmax.f32 %v7671, %v7672
        %v7674 = vsel %vm7190, %v6303, -inf
        %v7675 = vrot.slane %v7674, 4
        %v7676 = vmax.f32 %v7674, %v7675
        %v7677 = vrot.slane %v7676, 2
        %v7678 = vmax.f32 %v7676, %v7677
        %v7679 = vrot.slane %v7678, 1
        %v7680 = vmax.f32 %v7678, %v7679
        %v7681 = vsel %vm7190, %v6326, -inf
        %v7682 = vrot.slane %v7681, 4
        %v7683 = vmax.f32 %v7681, %v7682
        %v7684 = vrot.slane %v7683, 2
        %v7685 = vmax.f32 %v7683, %v7684
        %v7686 = vrot.slane %v7685, 1
        %v7687 = vmax.f32 %v7685, %v7686
        %v7688 = vsel %vm7190, %v6349, -inf
        %v7689 = vrot.slane %v7688, 4
        %v7690 = vmax.f32 %v7688, %v7689
        %v7691 = vrot.slane %v7690, 2
        %v7692 = vmax.f32 %v7690, %v7691
        %v7693 = vrot.slane %v7692, 1
        %v7694 = vmax.f32 %v7692, %v7693
        %v7695 = vsel %vm7190, %v6372, -inf
        %v7696 = vrot.slane %v7695, 4
        %v7697 = vmax.f32 %v7695, %v7696
        %v7698 = vrot.slane %v7697, 2
        %v7699 = vmax.f32 %v7697, %v7698
        %v7700 = vrot.slane %v7699, 1
        %v7701 = vmax.f32 %v7699, %v7700
        %v7702 = vsel %vm7190, %v6395, -inf
        %v7703 = vrot.slane %v7702, 4
        %v7704 = vmax.f32 %v7702, %v7703
        %v7705 = vrot.slane %v7704, 2
        %v7706 = vmax.f32 %v7704, %v7705
        %v7707 = vrot.slane %v7706, 1
        %v7708 = vmax.f32 %v7706, %v7707
        %v7709 = vsel %vm7190, %v6418, -inf
        %v7710 = vrot.slane %v7709, 4
        %v7711 = vmax.f32 %v7709, %v7710
        %v7712 = vrot.slane %v7711, 2
        %v7713 = vmax.f32 %v7711, %v7712
        %v7714 = vrot.slane %v7713, 1
        %v7715 = vmax.f32 %v7713, %v7714
        %v7716 = vsel %vm7190, %v6441, -inf
        %v7717 = vrot.slane %v7716, 4
        %v7718 = vmax.f32 %v7716, %v7717
        %v7719 = vrot.slane %v7718, 2
        %v7720 = vmax.f32 %v7718, %v7719
        %v7721 = vrot.slane %v7720, 1
        %v7722 = vmax.f32 %v7720, %v7721
        %v7723 = vsel %vm7190, %v6464, -inf
        %v7724 = vrot.slane %v7723, 4
        %v7725 = vmax.f32 %v7723, %v7724
        %v7726 = vrot.slane %v7725, 2
        %v7727 = vmax.f32 %v7725, %v7726
        %v7728 = vrot.slane %v7727, 1
        %v7729 = vmax.f32 %v7727, %v7728
        %v7730 = vsel %vm7190, %v6487, -inf
        %v7731 = vrot.slane %v7730, 4
        %v7732 = vmax.f32 %v7730, %v7731
        %v7733 = vrot.slane %v7732, 2
        %v7734 = vmax.f32 %v7732, %v7733
        %v7735 = vrot.slane %v7734, 1
        %v7736 = vmax.f32 %v7734, %v7735
        %v7737 = vsel %vm7190, %v6510, -inf
        %v7738 = vrot.slane %v7737, 4
        %v7739 = vmax.f32 %v7737, %v7738
        %v7740 = vrot.slane %v7739, 2
        %v7741 = vmax.f32 %v7739, %v7740
        %v7742 = vrot.slane %v7741, 1
        %v7743 = vmax.f32 %v7741, %v7742
        %v7744 = vsel %vm7190, %v6533, -inf
        %v7745 = vrot.slane %v7744, 4
        %v7746 = vmax.f32 %v7744, %v7745
        %v7747 = vrot.slane %v7746, 2
        %v7748 = vmax.f32 %v7746, %v7747
        %v7749 = vrot.slane %v7748, 1
        %v7750 = vmax.f32 %v7748, %v7749
        %v7751 = vsel %vm7190, %v6556, -inf
        %v7752 = vrot.slane %v7751, 4
        %v7753 = vmax.f32 %v7751, %v7752
        %v7754 = vrot.slane %v7753, 2
        %v7755 = vmax.f32 %v7753, %v7754
        %v7756 = vrot.slane %v7755, 1
        %v7757 = vmax.f32 %v7755, %v7756
        %v7758 = vsel %vm7190, %v6579, -inf
        %v7759 = vrot.slane %v7758, 4
        %v7760 = vmax.f32 %v7758, %v7759
        %v7761 = vrot.slane %v7760, 2
        %v7762 = vmax.f32 %v7760, %v7761
        %v7763 = vrot.slane %v7762, 1
        %v7764 = vmax.f32 %v7762, %v7763
        %v7765 = vsel %vm7190, %v6602, -inf
        %v7766 = vrot.slane %v7765, 4
        %v7767 = vmax.f32 %v7765, %v7766
        %v7768 = vrot.slane %v7767, 2
        %v7769 = vmax.f32 %v7767, %v7768
        %v7770 = vrot.slane %v7769, 1
        %v7771 = vmax.f32 %v7769, %v7770
        %v7772 = vsel %vm7190, %v6625, -inf
        %v7773 = vrot.slane %v7772, 4
        %v7774 = vmax.f32 %v7772, %v7773
        %v7775 = vrot.slane %v7774, 2
        %v7776 = vmax.f32 %v7774, %v7775
        %v7777 = vrot.slane %v7776, 1
        %v7778 = vmax.f32 %v7776, %v7777
        %v7779 = vsel %vm7190, %v6648, -inf
        %v7780 = vrot.slane %v7779, 4
        %v7781 = vmax.f32 %v7779, %v7780
        %v7782 = vrot.slane %v7781, 2
        %v7783 = vmax.f32 %v7781, %v7782
        %v7784 = vrot.slane %v7783, 1
        %v7785 = vmax.f32 %v7783, %v7784
        %v7786 = vsel %vm7190, %v6671, -inf
        %v7787 = vrot.slane %v7786, 4
        %v7788 = vmax.f32 %v7786, %v7787
        %v7789 = vrot.slane %v7788, 2
        %v7790 = vmax.f32 %v7788, %v7789
        %v7791 = vrot.slane %v7790, 1
        %v7792 = vmax.f32 %v7790, %v7791
        %v7793 = vsel %vm7190, %v6694, -inf
        %v7794 = vrot.slane %v7793, 4
        %v7795 = vmax.f32 %v7793, %v7794
        %v7796 = vrot.slane %v7795, 2
        %v7797 = vmax.f32 %v7795, %v7796
        %v7798 = vrot.slane %v7797, 1
        %v7799 = vmax.f32 %v7797, %v7798
        %v7800 = vsel %vm7190, %v6717, -inf
        %v7801 = vrot.slane %v7800, 4
        %v7802 = vmax.f32 %v7800, %v7801
        %v7803 = vrot.slane %v7802, 2
        %v7804 = vmax.f32 %v7802, %v7803
        %v7805 = vrot.slane %v7804, 1
        %v7806 = vmax.f32 %v7804, %v7805
        %v7807 = vsel %vm7190, %v6740, -inf
        %v7808 = vrot.slane %v7807, 4
        %v7809 = vmax.f32 %v7807, %v7808
        %v7810 = vrot.slane %v7809, 2
        %v7811 = vmax.f32 %v7809, %v7810
        %v7812 = vrot.slane %v7811, 1
        %v7813 = vmax.f32 %v7811, %v7812
        %v7814 = vsel %vm7190, %v6763, -inf
        %v7815 = vrot.slane %v7814, 4
        %v7816 = vmax.f32 %v7814, %v7815
        %v7817 = vrot.slane %v7816, 2
        %v7818 = vmax.f32 %v7816, %v7817
        %v7819 = vrot.slane %v7818, 1
        %v7820 = vmax.f32 %v7818, %v7819
        %v7821 = vsel %vm7190, %v6786, -inf
        %v7822 = vrot.slane %v7821, 4
        %v7823 = vmax.f32 %v7821, %v7822
        %v7824 = vrot.slane %v7823, 2
        %v7825 = vmax.f32 %v7823, %v7824
        %v7826 = vrot.slane %v7825, 1
        %v7827 = vmax.f32 %v7825, %v7826
        %v7828 = vsel %vm7190, %v6809, -inf
        %v7829 = vrot.slane %v7828, 4
        %v7830 = vmax.f32 %v7828, %v7829
        %v7831 = vrot.slane %v7830, 2
        %v7832 = vmax.f32 %v7830, %v7831
        %v7833 = vrot.slane %v7832, 1
        %v7834 = vmax.f32 %v7832, %v7833
        %v7835 = vsel %vm7190, %v6832, -inf
        %v7836 = vrot.slane %v7835, 4
        %v7837 = vmax.f32 %v7835, %v7836
        %v7838 = vrot.slane %v7837, 2
        %v7839 = vmax.f32 %v7837, %v7838
        %v7840 = vrot.slane %v7839, 1
        %v7841 = vmax.f32 %v7839, %v7840
        %v7842 = vsel %vm7190, %v6855, -inf
        %v7843 = vrot.slane %v7842, 4
        %v7844 = vmax.f32 %v7842, %v7843
        %v7845 = vrot.slane %v7844, 2
        %v7846 = vmax.f32 %v7844, %v7845
        %v7847 = vrot.slane %v7846, 1
        %v7848 = vmax.f32 %v7846, %v7847
        %v7849 = vsel %vm7190, %v6878, -inf
        %v7850 = vrot.slane %v7849, 4
        %v7851 = vmax.f32 %v7849, %v7850
        %v7852 = vrot.slane %v7851, 2
        %v7853 = vmax.f32 %v7851, %v7852
        %v7854 = vrot.slane %v7853, 1
        %v7855 = vmax.f32 %v7853, %v7854
        %v7856 = vsel %vm7190, %v6901, -inf
        %v7857 = vrot.slane %v7856, 4
        %v7858 = vmax.f32 %v7856, %v7857
        %v7859 = vrot.slane %v7858, 2
        %v7860 = vmax.f32 %v7858, %v7859
        %v7861 = vrot.slane %v7860, 1
        %v7862 = vmax.f32 %v7860, %v7861
        %v7863 = vsel %vm7190, %v6924, -inf
        %v7864 = vrot.slane %v7863, 4
        %v7865 = vmax.f32 %v7863, %v7864
        %v7866 = vrot.slane %v7865, 2
        %v7867 = vmax.f32 %v7865, %v7866
        %v7868 = vrot.slane %v7867, 1
        %v7869 = vmax.f32 %v7867, %v7868
        %v7870 = vsel %vm7190, %v6947, -inf
        %v7871 = vrot.slane %v7870, 4
        %v7872 = vmax.f32 %v7870, %v7871
        %v7873 = vrot.slane %v7872, 2
        %v7874 = vmax.f32 %v7872, %v7873
        %v7875 = vrot.slane %v7874, 1
        %v7876 = vmax.f32 %v7874, %v7875
        %v7877 = vsel %vm7190, %v6970, -inf
        %v7878 = vrot.slane %v7877, 4
        %v7879 = vmax.f32 %v7877, %v7878
        %v7880 = vrot.slane %v7879, 2
        %v7881 = vmax.f32 %v7879, %v7880
        %v7882 = vrot.slane %v7881, 1
        %v7883 = vmax.f32 %v7881, %v7882
        %v7884 = vsel %vm7190, %v6993, -inf
        %v7885 = vrot.slane %v7884, 4
        %v7886 = vmax.f32 %v7884, %v7885
        %v7887 = vrot.slane %v7886, 2
        %v7888 = vmax.f32 %v7886, %v7887
        %v7889 = vrot.slane %v7888, 1
        %v7890 = vmax.f32 %v7888, %v7889
        %v7891 = vsel %vm7190, %v7016, -inf
        %v7892 = vrot.slane %v7891, 4
        %v7893 = vmax.f32 %v7891, %v7892
        %v7894 = vrot.slane %v7893, 2
        %v7895 = vmax.f32 %v7893, %v7894
        %v7896 = vrot.slane %v7895, 1
        %v7897 = vmax.f32 %v7895, %v7896
        %v7898 = vsel %vm7190, %v7039, -inf
        %v7899 = vrot.slane %v7898, 4
        %v7900 = vmax.f32 %v7898, %v7899
        %v7901 = vrot.slane %v7900, 2
        %v7902 = vmax.f32 %v7900, %v7901
        %v7903 = vrot.slane %v7902, 1
        %v7904 = vmax.f32 %v7902, %v7903
        %v7905 = vsel %vm7190, %v7062, -inf
        %v7906 = vrot.slane %v7905, 4
        %v7907 = vmax.f32 %v7905, %v7906
        %v7908 = vrot.slane %v7907, 2
        %v7909 = vmax.f32 %v7907, %v7908
        %v7910 = vrot.slane %v7909, 1
        %v7911 = vmax.f32 %v7909, %v7910
        %v7912 = vsel %vm7190, %v7085, -inf
        %v7913 = vrot.slane %v7912, 4
        %v7914 = vmax.f32 %v7912, %v7913
        %v7915 = vrot.slane %v7914, 2
        %v7916 = vmax.f32 %v7914, %v7915
        %v7917 = vrot.slane %v7916, 1
        %v7918 = vmax.f32 %v7916, %v7917
        %v7919 = vtanh.pop %v7197
        %v7920 = vtanh.pop %v7204
        %v7921 = vtanh.pop %v7211
        %v7922 = vtanh.pop %v7218
        %v7923 = vtanh.pop %v7225
        %v7924 = vtanh.pop %v7232
        %v7925 = vtanh.pop %v7239
        %v7926 = vtanh.pop %v7246
        %v7927 = vtanh.pop %v7253
        %v7928 = vtanh.pop %v7260
        %v7929 = vtanh.pop %v7267
        %v7930 = vtanh.pop %v7274
        %v7931 = vtanh.pop %v7281
        %v7932 = vtanh.pop %v7288
        %v7933 = vtanh.pop %v7295
        %v7934 = vtanh.pop %v7302
        %v7935 = vtanh.pop %v7309
        %v7936 = vtanh.pop %v7316
        %v7937 = vtanh.pop %v7323
        %v7938 = vtanh.pop %v7330
        %v7939 = vtanh.pop %v7337
        %v7940 = vtanh.pop %v7344
        %v7941 = vtanh.pop %v7351
        %v7942 = vtanh.pop %v7358
        %v7943 = vtanh.pop %v7365
        %v7944 = vtanh.pop %v7372
        %v7945 = vtanh.pop %v7379
        %v7946 = vtanh.pop %v7386
        %v7947 = vtanh.pop %v7393
        %v7948 = vtanh.pop %v7400
        %v7949 = vtanh.pop %v7407
        %v7950 = vtanh.pop %v7414
        %v7951 = vtanh.pop %v7421
        %v7952 = vtanh.pop %v7428
        %v7953 = vtanh.pop %v7435
        %v7954 = vtanh.pop %v7442
        %v7955 = vtanh.pop %v7449
        %v7956 = vtanh.pop %v7456
        %v7957 = vtanh.pop %v7463
        %v7958 = vtanh.pop %v7470
        %v7959 = vtanh.pop %v7477
        %v7960 = vtanh.pop %v7484
        %v7961 = vtanh.pop %v7491
        %v7962 = vtanh.pop %v7498
        %v7963 = vtanh.pop %v7505
        %v7964 = vtanh.pop %v7512
        %v7965 = vtanh.pop %v7519
        %v7966 = vtanh.pop %v7526
        %v7967 = vtanh.pop %v7533
        %v7968 = vtanh.pop %v7540
        %v7969 = vtanh.pop %v7547
        %v7970 = vtanh.pop %v7554
        %v7971 = vtanh.pop %v7561
        %v7972 = vtanh.pop %v7568
        %v7973 = vtanh.pop %v7575
        %v7974 = vtanh.pop %v7582
        %v7975 = vtanh.pop %v7589
        %v7976 = vtanh.pop %v7596
        %v7977 = vtanh.pop %v7603
        %v7978 = vtanh.pop %v7610
        %v7979 = vtanh.pop %v7617
        %v7980 = vtanh.pop %v7624
        %v7981 = vtanh.pop %v7631
        %v7982 = vtanh.pop %v7638
        %v7983 = vtanh.pop %v7645
        %v7984 = vtanh.pop %v7652
        %v7985 = vtanh.pop %v7659
        %v7986 = vtanh.pop %v7666
        %v7987 = vtanh.pop %v7673
        %v7988 = vtanh.pop %v7680
        %v7989 = vtanh.pop %v7687
        %v7990 = vtanh.pop %v7694
        %v7991 = vtanh.pop %v7701
        %v7992 = vtanh.pop %v7708
        %v7993 = vtanh.pop %v7715
        %v7994 = vtanh.pop %v7722
        %v7995 = vtanh.pop %v7729
        %v7996 = vtanh.pop %v7736
        %v7997 = vtanh.pop %v7743
        %v7998 = vtanh.pop %v7750
        %v7999 = vtanh.pop %v7757
        %v8000 = vtanh.pop %v7764
        %v8001 = vtanh.pop %v7771
        %v8002 = vtanh.pop %v7778
        %v8003 = vtanh.pop %v7785
        %v8004 = vtanh.pop %v7792
        %v8005 = vtanh.pop %v7799
        %v8006 = vtanh.pop %v7806
        %v8007 = vtanh.pop %v7813
        %v8008 = vtanh.pop %v7820
        %v8009 = vtanh.pop %v7827
        %v8010 = vtanh.pop %v7834
        %v8011 = vtanh.pop %v7841
        %v8012 = vtanh.pop %v7848
        %v8013 = vtanh.pop %v7855
        %v8014 = vtanh.pop %v7862
        %v8015 = vtanh.pop %v7869
        %v8016 = vtanh.pop %v7876
        %v8017 = vtanh.pop %v7883
        %v8018 = vtanh.pop %v7890
        %v8019 = vtanh.pop %v7897
        %v8020 = vtanh.pop %v7904
        %v8021 = vtanh.pop %v7911
        %v8022 = vtanh.pop %v7918
        %vm8119 = vcmask 1041409
        %v8120 = vsel %vm8119, %v7920, %v7919
        %vm8121 = vcmask 1042434
        %v8122 = vsel %vm8121, %v7921, %v8120
        %vm8123 = vcmask 1043459
        %v8124 = vsel %vm8123, %v7922, %v8122
        %vm8125 = vcmask 1044484
        %v8126 = vsel %vm8125, %v7923, %v8124
        %vm8127 = vcmask 1045509
        %v8128 = vsel %vm8127, %v7924, %v8126
        %vm8129 = vcmask 1046534
        %v8130 = vsel %vm8129, %v7925, %v8128
        %vm8131 = vcmask 1047559
        %v8132 = vsel %vm8131, %v7926, %v8130
        %v8133 = vsel %vm8119, %v7928, %v7927
        %v8134 = vsel %vm8121, %v7929, %v8133
        %v8135 = vsel %vm8123, %v7930, %v8134
        %v8136 = vsel %vm8125, %v7931, %v8135
        %v8137 = vsel %vm8127, %v7932, %v8136
        %v8138 = vsel %vm8129, %v7933, %v8137
        %v8139 = vsel %vm8131, %v7934, %v8138
        %v8140 = vsel %vm8119, %v7936, %v7935
        %v8141 = vsel %vm8121, %v7937, %v8140
        %v8142 = vsel %vm8123, %v7938, %v8141
        %v8143 = vsel %vm8125, %v7939, %v8142
        %v8144 = vsel %vm8127, %v7940, %v8143
        %v8145 = vsel %vm8129, %v7941, %v8144
        %v8146 = vsel %vm8131, %v7942, %v8145
        %v8147 = vsel %vm8119, %v7946, %v7945
        %v8148 = vsel %vm8121, %v7947, %v8147
        %v8149 = vsel %vm8123, %v7948, %v8148
        %v8150 = vsel %vm8125, %v7949, %v8149
        %v8151 = vsel %vm8127, %v7950, %v8150
        %v8152 = vsel %vm8129, %v7951, %v8151
        %v8153 = vsel %vm8131, %v7952, %v8152
        %v8154 = vsel %vm8119, %v7954, %v7953
        %v8155 = vsel %vm8121, %v7955, %v8154
        %v8156 = vsel %vm8123, %v7956, %v8155
        %v8157 = vsel %vm8125, %v7957, %v8156
        %v8158 = vsel %vm8127, %v7958, %v8157
        %v8159 = vsel %vm8129, %v7959, %v8158
        %v8160 = vsel %vm8131, %v7960, %v8159
        %v8161 = vsel %vm8119, %v7962, %v7961
        %v8162 = vsel %vm8121, %v7963, %v8161
        %v8163 = vsel %vm8123, %v7964, %v8162
        %v8164 = vsel %vm8125, %v7965, %v8163
        %v8165 = vsel %vm8127, %v7966, %v8164
        %v8166 = vsel %vm8129, %v7967, %v8165
        %v8167 = vsel %vm8131, %v7968, %v8166
        %v8168 = vsel %vm8119, %v7972, %v7971
        %v8169 = vsel %vm8121, %v7973, %v8168
        %v8170 = vsel %vm8123, %v7974, %v8169
        %v8171 = vsel %vm8125, %v7975, %v8170
        %v8172 = vsel %vm8127, %v7976, %v8171
        %v8173 = vsel %vm8129, %v7977, %v8172
        %v8174 = vsel %vm8131, %v7978, %v8173
        %v8175 = vsel %vm8119, %v7980, %v7979
        %v8176 = vsel %vm8121, %v7981, %v8175
        %v8177 = vsel %vm8123, %v7982, %v8176
        %v8178 = vsel %vm8125, %v7983, %v8177
        %v8179 = vsel %vm8127, %v7984, %v8178
        %v8180 = vsel %vm8129, %v7985, %v8179
        %v8181 = vsel %vm8131, %v7986, %v8180
        %v8182 = vsel %vm8119, %v7988, %v7987
        %v8183 = vsel %vm8121, %v7989, %v8182
        %v8184 = vsel %vm8123, %v7990, %v8183
        %v8185 = vsel %vm8125, %v7991, %v8184
        %v8186 = vsel %vm8127, %v7992, %v8185
        %v8187 = vsel %vm8129, %v7993, %v8186
        %v8188 = vsel %vm8131, %v7994, %v8187
        %v8189 = vsel %vm8119, %v7998, %v7997
        %v8190 = vsel %vm8121, %v7999, %v8189
        %v8191 = vsel %vm8123, %v8000, %v8190
        %v8192 = vsel %vm8125, %v8001, %v8191
        %v8193 = vsel %vm8127, %v8002, %v8192
        %v8194 = vsel %vm8129, %v8003, %v8193
        %v8195 = vsel %vm8131, %v8004, %v8194
        %v8196 = vsel %vm8119, %v8006, %v8005
        %v8197 = vsel %vm8121, %v8007, %v8196
        %v8198 = vsel %vm8123, %v8008, %v8197
        %v8199 = vsel %vm8125, %v8009, %v8198
        %v8200 = vsel %vm8127, %v8010, %v8199
        %v8201 = vsel %vm8129, %v8011, %v8200
        %v8202 = vsel %vm8131, %v8012, %v8201
        %v8203 = vsel %vm8119, %v8014, %v8013
        %v8204 = vsel %vm8121, %v8015, %v8203
        %v8205 = vsel %vm8123, %v8016, %v8204
        %v8206 = vsel %vm8125, %v8017, %v8205
        %v8207 = vsel %vm8127, %v8018, %v8206
        %v8208 = vsel %vm8129, %v8019, %v8207
        %v8209 = vsel %vm8131, %v8020, %v8208
        %v8226 = vsel %vm8119, %v7921, %v7920
        %v8227 = vsel %vm8121, %v7922, %v8226
        %v8228 = vsel %vm8123, %v7923, %v8227
        %v8229 = vsel %vm8125, %v7924, %v8228
        %v8230 = vsel %vm8127, %v7925, %v8229
        %v8231 = vsel %vm8129, %v7926, %v8230
        %v8232 = vsel %vm8131, %v7927, %v8231
        %v8233 = vsel %vm8119, %v7929, %v7928
        %v8234 = vsel %vm8121, %v7930, %v8233
        %v8235 = vsel %vm8123, %v7931, %v8234
        %v8236 = vsel %vm8125, %v7932, %v8235
        %v8237 = vsel %vm8127, %v7933, %v8236
        %v8238 = vsel %vm8129, %v7934, %v8237
        %v8239 = vsel %vm8131, %v7935, %v8238
        %v8240 = vsel %vm8119, %v7937, %v7936
        %v8241 = vsel %vm8121, %v7938, %v8240
        %v8242 = vsel %vm8123, %v7939, %v8241
        %v8243 = vsel %vm8125, %v7940, %v8242
        %v8244 = vsel %vm8127, %v7941, %v8243
        %v8245 = vsel %vm8129, %v7942, %v8244
        %v8246 = vsel %vm8131, %v7943, %v8245
        %v8247 = vsel %vm8119, %v7947, %v7946
        %v8248 = vsel %vm8121, %v7948, %v8247
        %v8249 = vsel %vm8123, %v7949, %v8248
        %v8250 = vsel %vm8125, %v7950, %v8249
        %v8251 = vsel %vm8127, %v7951, %v8250
        %v8252 = vsel %vm8129, %v7952, %v8251
        %v8253 = vsel %vm8131, %v7953, %v8252
        %v8254 = vsel %vm8119, %v7955, %v7954
        %v8255 = vsel %vm8121, %v7956, %v8254
        %v8256 = vsel %vm8123, %v7957, %v8255
        %v8257 = vsel %vm8125, %v7958, %v8256
        %v8258 = vsel %vm8127, %v7959, %v8257
        %v8259 = vsel %vm8129, %v7960, %v8258
        %v8260 = vsel %vm8131, %v7961, %v8259
        %v8261 = vsel %vm8119, %v7963, %v7962
        %v8262 = vsel %vm8121, %v7964, %v8261
        %v8263 = vsel %vm8123, %v7965, %v8262
        %v8264 = vsel %vm8125, %v7966, %v8263
        %v8265 = vsel %vm8127, %v7967, %v8264
        %v8266 = vsel %vm8129, %v7968, %v8265
        %v8267 = vsel %vm8131, %v7969, %v8266
        %v8268 = vsel %vm8119, %v7973, %v7972
        %v8269 = vsel %vm8121, %v7974, %v8268
        %v8270 = vsel %vm8123, %v7975, %v8269
        %v8271 = vsel %vm8125, %v7976, %v8270
        %v8272 = vsel %vm8127, %v7977, %v8271
        %v8273 = vsel %vm8129, %v7978, %v8272
        %v8274 = vsel %vm8131, %v7979, %v8273
        %v8275 = vsel %vm8119, %v7981, %v7980
        %v8276 = vsel %vm8121, %v7982, %v8275
        %v8277 = vsel %vm8123, %v7983, %v8276
        %v8278 = vsel %vm8125, %v7984, %v8277
        %v8279 = vsel %vm8127, %v7985, %v8278
        %v8280 = vsel %vm8129, %v7986, %v8279
        %v8281 = vsel %vm8131, %v7987, %v8280
        %v8282 = vsel %vm8119, %v7989, %v7988
        %v8283 = vsel %vm8121, %v7990, %v8282
        %v8284 = vsel %vm8123, %v7991, %v8283
        %v8285 = vsel %vm8125, %v7992, %v8284
        %v8286 = vsel %vm8127, %v7993, %v8285
        %v8287 = vsel %vm8129, %v7994, %v8286
        %v8288 = vsel %vm8131, %v7995, %v8287
        %v8289 = vsel %vm8119, %v7999, %v7998
        %v8290 = vsel %vm8121, %v8000, %v8289
        %v8291 = vsel %vm8123, %v8001, %v8290
        %v8292 = vsel %vm8125, %v8002, %v8291
        %v8293 = vsel %vm8127, %v8003, %v8292
        %v8294 = vsel %vm8129, %v8004, %v8293
        %v8295 = vsel %vm8131, %v8005, %v8294
        %v8296 = vsel %vm8119, %v8007, %v8006
        %v8297 = vsel %vm8121, %v8008, %v8296
        %v8298 = vsel %vm8123, %v8009, %v8297
        %v8299 = vsel %vm8125, %v8010, %v8298
        %v8300 = vsel %vm8127, %v8011, %v8299
        %v8301 = vsel %vm8129, %v8012, %v8300
        %v8302 = vsel %vm8131, %v8013, %v8301
        %v8303 = vsel %vm8119, %v8015, %v8014
        %v8304 = vsel %vm8121, %v8016, %v8303
        %v8305 = vsel %vm8123, %v8017, %v8304
        %v8306 = vsel %vm8125, %v8018, %v8305
        %v8307 = vsel %vm8127, %v8019, %v8306
        %v8308 = vsel %vm8129, %v8020, %v8307
        %v8309 = vsel %vm8131, %v8021, %v8308
        %v8326 = vsel %vm8119, %v7922, %v7921
        %v8327 = vsel %vm8121, %v7923, %v8326
        %v8328 = vsel %vm8123, %v7924, %v8327
        %v8329 = vsel %vm8125, %v7925, %v8328
        %v8330 = vsel %vm8127, %v7926, %v8329
        %v8331 = vsel %vm8129, %v7927, %v8330
        %v8332 = vsel %vm8131, %v7928, %v8331
        %v8333 = vsel %vm8119, %v7930, %v7929
        %v8334 = vsel %vm8121, %v7931, %v8333
        %v8335 = vsel %vm8123, %v7932, %v8334
        %v8336 = vsel %vm8125, %v7933, %v8335
        %v8337 = vsel %vm8127, %v7934, %v8336
        %v8338 = vsel %vm8129, %v7935, %v8337
        %v8339 = vsel %vm8131, %v7936, %v8338
        %v8340 = vsel %vm8119, %v7938, %v7937
        %v8341 = vsel %vm8121, %v7939, %v8340
        %v8342 = vsel %vm8123, %v7940, %v8341
        %v8343 = vsel %vm8125, %v7941, %v8342
        %v8344 = vsel %vm8127, %v7942, %v8343
        %v8345 = vsel %vm8129, %v7943, %v8344
        %v8346 = vsel %vm8131, %v7944, %v8345
        %v8347 = vsel %vm8119, %v7948, %v7947
        %v8348 = vsel %vm8121, %v7949, %v8347
        %v8349 = vsel %vm8123, %v7950, %v8348
        %v8350 = vsel %vm8125, %v7951, %v8349
        %v8351 = vsel %vm8127, %v7952, %v8350
        %v8352 = vsel %vm8129, %v7953, %v8351
        %v8353 = vsel %vm8131, %v7954, %v8352
        %v8354 = vsel %vm8119, %v7956, %v7955
        %v8355 = vsel %vm8121, %v7957, %v8354
        %v8356 = vsel %vm8123, %v7958, %v8355
        %v8357 = vsel %vm8125, %v7959, %v8356
        %v8358 = vsel %vm8127, %v7960, %v8357
        %v8359 = vsel %vm8129, %v7961, %v8358
        %v8360 = vsel %vm8131, %v7962, %v8359
        %v8361 = vsel %vm8119, %v7964, %v7963
        %v8362 = vsel %vm8121, %v7965, %v8361
        %v8363 = vsel %vm8123, %v7966, %v8362
        %v8364 = vsel %vm8125, %v7967, %v8363
        %v8365 = vsel %vm8127, %v7968, %v8364
        %v8366 = vsel %vm8129, %v7969, %v8365
        %v8367 = vsel %vm8131, %v7970, %v8366
        %v8368 = vsel %vm8119, %v7974, %v7973
        %v8369 = vsel %vm8121, %v7975, %v8368
        %v8370 = vsel %vm8123, %v7976, %v8369
        %v8371 = vsel %vm8125, %v7977, %v8370
        %v8372 = vsel %vm8127, %v7978, %v8371
        %v8373 = vsel %vm8129, %v7979, %v8372
        %v8374 = vsel %vm8131, %v7980, %v8373
        %v8375 = vsel %vm8119, %v7982, %v7981
        %v8376 = vsel %vm8121, %v7983, %v8375
        %v8377 = vsel %vm8123, %v7984, %v8376
        %v8378 = vsel %vm8125, %v7985, %v8377
        %v8379 = vsel %vm8127, %v7986, %v8378
        %v8380 = vsel %vm8129, %v7987, %v8379
        %v8381 = vsel %vm8131, %v7988, %v8380
        %v8382 = vsel %vm8119, %v7990, %v7989
        %v8383 = vsel %vm8121, %v7991, %v8382
        %v8384 = vsel %vm8123, %v7992, %v8383
        %v8385 = vsel %vm8125, %v7993, %v8384
        %v8386 = vsel %vm8127, %v7994, %v8385
        %v8387 = vsel %vm8129, %v7995, %v8386
        %v8388 = vsel %vm8131, %v7996, %v8387
        %v8389 = vsel %vm8119, %v8000, %v7999
        %v8390 = vsel %vm8121, %v8001, %v8389
        %v8391 = vsel %vm8123, %v8002, %v8390
        %v8392 = vsel %vm8125, %v8003, %v8391
        %v8393 = vsel %vm8127, %v8004, %v8392
        %v8394 = vsel %vm8129, %v8005, %v8393
        %v8395 = vsel %vm8131, %v8006, %v8394
        %v8396 = vsel %vm8119, %v8008, %v8007
        %v8397 = vsel %vm8121, %v8009, %v8396
        %v8398 = vsel %vm8123, %v8010, %v8397
        %v8399 = vsel %vm8125, %v8011, %v8398
        %v8400 = vsel %vm8127, %v8012, %v8399
        %v8401 = vsel %vm8129, %v8013, %v8400
        %v8402 = vsel %vm8131, %v8014, %v8401
        %v8403 = vsel %vm8119, %v8016, %v8015
        %v8404 = vsel %vm8121, %v8017, %v8403
        %v8405 = vsel %vm8123, %v8018, %v8404
        %v8406 = vsel %vm8125, %v8019, %v8405
        %v8407 = vsel %vm8127, %v8020, %v8406
        %v8408 = vsel %vm8129, %v8021, %v8407
        %v8409 = vsel %vm8131, %v8022, %v8408
        %v8422 = vld [vmem:[#allocation6] sm:$0xff]
        %v8423 = vld [vmem:[#allocation6 + $0x8] sm:$0xff]
        %v8424 = vld [vmem:[#allocation6 + $0x10] sm:$0xff]
        %v8425 = vld [vmem:[#allocation6 + $0x18] sm:$0xff]
        %v8426 = vld [vmem:[#allocation6 + $0x20] sm:$0xff]
        %v8427 = vld [vmem:[#allocation6 + $0x28] sm:$0xff]
        %v8428 = vld [vmem:[#allocation6 + $0x30] sm:$0xff]
        %v8429 = vld [vmem:[#allocation6 + $0x38] sm:$0xff]
        %v8430 = vld [vmem:[#allocation6 + $0x40] sm:$0xff]
        %v8431 = vld [vmem:[#allocation6 + $0x48] sm:$0xff]
        %v8432 = vld [vmem:[#allocation6 + $0x50] sm:$0xff]
        %v8433 = vld [vmem:[#allocation6 + $0x58] sm:$0xff]
        %v8434 = vld [vmem:[#allocation6 + $0x60] sm:$0xff]
        %v8435 = vld [vmem:[#allocation6 + $0x68] sm:$0xff]
        %v8436 = vld [vmem:[#allocation6 + $0x70] sm:$0xff]
        %v8437 = vld [vmem:[#allocation6 + $0x78] sm:$0xff]
        %v8438 = vld [vmem:[#allocation6 + $0x80] sm:$0xff]
        %v8439 = vld [vmem:[#allocation6 + $0x88] sm:$0xff]
        %v8440 = vld [vmem:[#allocation6 + $0x90] sm:$0xff]
        %v8441 = vld [vmem:[#allocation6 + $0x98] sm:$0xff]
        %v8442 = vld [vmem:[#allocation6 + $0xa0] sm:$0xff]
        %v8443 = vld [vmem:[#allocation6 + $0xa8] sm:$0xff]
        %v8444 = vld [vmem:[#allocation6 + $0xb0] sm:$0xff]
        %v8445 = vld [vmem:[#allocation6 + $0xb8] sm:$0xff]
        %v8446 = vld [vmem:[#allocation6 + $0xc0] sm:$0xff]
        %v8447 = vld [vmem:[#allocation6 + $0xc8] sm:$0xff]
        %v8448 = vld [vmem:[#allocation6 + $0xd0] sm:$0xff]
        %v8449 = vld [vmem:[#allocation6 + $0xd8] sm:$0xff]
        %v8450 = vld [vmem:[#allocation6 + $0xe0] sm:$0xff]
        %v8451 = vld [vmem:[#allocation6 + $0xe8] sm:$0xff]
        %v8452 = vld [vmem:[#allocation6 + $0xf0] sm:$0xff]
        %v8453 = vld [vmem:[#allocation6 + $0xf8] sm:$0xff]
        %v8454 = vld [vmem:[#allocation6 + $0x100] sm:$0xff]
        %v8455 = vld [vmem:[#allocation6 + $0x108] sm:$0xff]
        %v8456 = vld [vmem:[#allocation6 + $0x110] sm:$0xff]
        %v8457 = vld [vmem:[#allocation6 + $0x118] sm:$0xff]
        %v8458 = vld [vmem:[#allocation6 + $0x120] sm:$0xff]
        %v8459 = vld [vmem:[#allocation6 + $0x128] sm:$0xff]
        %v8460 = vld [vmem:[#allocation6 + $0x130] sm:$0xff]
        %v8461 = vld [vmem:[#allocation6 + $0x138] sm:$0xff]
        %v8462 = vld [vmem:[#allocation6 + $0x140] sm:$0xff]
        %v8463 = vld [vmem:[#allocation6 + $0x148] sm:$0xff]
        %v8464 = vld [vmem:[#allocation6 + $0x150] sm:$0xff]
        %v8465 = vld [vmem:[#allocation6 + $0x158] sm:$0xff]
        %v8466 = vld [vmem:[#allocation6 + $0x160] sm:$0xff]
        %v8467 = vld [vmem:[#allocation6 + $0x168] sm:$0xff]
        %v8468 = vld [vmem:[#allocation6 + $0x170] sm:$0xff]
        %v8469 = vld [vmem:[#allocation6 + $0x178] sm:$0xff]
        %v8470 = vld [vmem:[#allocation6 + $0x180] sm:$0xff]
        %v8471 = vld [vmem:[#allocation6 + $0x188] sm:$0xff]
        %v8472 = vld [vmem:[#allocation6 + $0x190] sm:$0xff]
        %v8473 = vld [vmem:[#allocation6 + $0x198] sm:$0xff]
        %v8474 = vld [vmem:[#allocation6 + $0x1a0] sm:$0xff]
        %v8475 = vld [vmem:[#allocation6 + $0x1a8] sm:$0xff]
        %v8476 = vld [vmem:[#allocation6 + $0x1b0] sm:$0xff]
        %v8477 = vld [vmem:[#allocation6 + $0x1b8] sm:$0xff]
        %v8478 = vld [vmem:[#allocation6 + $0x1c0] sm:$0xff]
        %v8479 = vld [vmem:[#allocation6 + $0x1c8] sm:$0xff]
        %v8480 = vld [vmem:[#allocation6 + $0x1d0] sm:$0xff]
        %v8481 = vld [vmem:[#allocation6 + $0x1d8] sm:$0xff]
        %v8482 = vld [vmem:[#allocation6 + $0x1e0] sm:$0xff]
        %v8483 = vld [vmem:[#allocation6 + $0x1e8] sm:$0xff]
        %v8484 = vld [vmem:[#allocation6 + $0x1f0] sm:$0xff]
        %v8485 = vld [vmem:[#allocation6 + $0x1f8] sm:$0xff]
        %v8486 = vld [vmem:[#allocation6 + $0x200] sm:$0xff]
        %v8487 = vld [vmem:[#allocation6 + $0x208] sm:$0xff]
        %v8488 = vld [vmem:[#allocation6 + $0x210] sm:$0xff]
        %v8489 = vld [vmem:[#allocation6 + $0x218] sm:$0xff]
        %v8490 = vld [vmem:[#allocation6 + $0x220] sm:$0xff]
        %v8491 = vld [vmem:[#allocation6 + $0x228] sm:$0xff]
        %v8492 = vld [vmem:[#allocation6 + $0x230] sm:$0xff]
        %v8493 = vld [vmem:[#allocation6 + $0x238] sm:$0xff]
        %v8494 = vld [vmem:[#allocation6 + $0x240] sm:$0xff]
        %v8495 = vld [vmem:[#allocation6 + $0x248] sm:$0xff]
        %v8496 = vld [vmem:[#allocation6 + $0x250] sm:$0xff]
        %v8497 = vld [vmem:[#allocation6 + $0x258] sm:$0xff]
        %v8498 = vld [vmem:[#allocation6 + $0x260] sm:$0xff]
        %v8499 = vld [vmem:[#allocation6 + $0x268] sm:$0xff]
        %v8500 = vld [vmem:[#allocation6 + $0x270] sm:$0xff]
        %v8501 = vld [vmem:[#allocation6 + $0x278] sm:$0xff]
        %v8502 = vld [vmem:[#allocation6 + $0x280] sm:$0xff]
        %v8503 = vld [vmem:[#allocation6 + $0x288] sm:$0xff]
        %v8504 = vld [vmem:[#allocation6 + $0x290] sm:$0xff]
        %v8505 = vld [vmem:[#allocation6 + $0x298] sm:$0xff]
        %v8506 = vld [vmem:[#allocation6 + $0x2a0] sm:$0xff]
        %v8507 = vld [vmem:[#allocation6 + $0x2a8] sm:$0xff]
        %v8508 = vld [vmem:[#allocation6 + $0x2b0] sm:$0xff]
        %v8509 = vld [vmem:[#allocation6 + $0x2b8] sm:$0xff]
        %v8510 = vld [vmem:[#allocation6 + $0x2c0] sm:$0xff]
        %v8511 = vld [vmem:[#allocation6 + $0x2c8] sm:$0xff]
        %v8512 = vld [vmem:[#allocation6 + $0x2d0] sm:$0xff]
        %v8513 = vld [vmem:[#allocation6 + $0x2d8] sm:$0xff]
        %v8514 = vld [vmem:[#allocation6 + $0x2e0] sm:$0xff]
        %v8515 = vld [vmem:[#allocation6 + $0x2e8] sm:$0xff]
        %v8516 = vld [vmem:[#allocation6 + $0x2f0] sm:$0xff]
        %v8517 = vld [vmem:[#allocation6 + $0x2f8] sm:$0xff]
        %v8518 = vld [vmem:[#allocation7] sm:$0x3]
        %v8520 = vlaneseq
        %v8521 = vshrl.u32 %v8520, 7
        %v8522 = vsub.s32 0, %v8521
        %v8523 = vrot.slane %v8518, %v8522
        %v8524 = vlaneseq
        %v8525 = vshrl.u32 %v8524, 7
        %v8526 = vsub.s32 1, %v8525
        %v8527 = vrot.slane %v8518, %v8526
        %8530 = vmatprep.subr.mxu0 %v8423
        %8531 = vmatpush1.msra.mxu0 %v8422
        %8532 = vmatprep.subr.mxu0 %v8425
        %8533 = vmatpush1.msra.mxu0 %v8424
        %8534 = vmatprep.subr.mxu0 %v8427
        %8535 = vmatpush1.msra.mxu0 %v8426
        %8536 = vmatprep.subr.mxu0 %v8429
        %8537 = vmatpush1.msra.mxu0 %v8428
        %8538 = vmatprep.subr.mxu0 %v8431
        %8539 = vmatpush1.msra.mxu0 %v8430
        %8540 = vmatprep.subr.mxu0 %v8433
        %8541 = vmatpush1.msra.mxu0 %v8432
        %8542 = vmatprep.subr.mxu0 %v8435
        %8543 = vmatpush1.msra.mxu0 %v8434
        %8544 = vmatprep.subr.mxu0 %v8437
        %8545 = vmatpush1.msra.mxu0 %v8436
        %8546 = vmatprep.subr.mxu0 %v8439
        %8547 = vmatpush1.msra.mxu0 %v8438
        %8548 = vmatprep.subr.mxu0 %v8441
        %8549 = vmatpush1.msra.mxu0 %v8440
        %8550 = vmatprep.subr.mxu0 %v8443
        %8551 = vmatpush1.msra.mxu0 %v8442
        %8552 = vmatprep.subr.mxu0 %v8445
        %8553 = vmatpush1.msra.mxu0 %v8444
        %8554 = vmatprep.subr.mxu0 %v8447
        %8555 = vmatpush1.msra.mxu0 %v8446
        %8556 = vmatprep.subr.mxu0 %v8449
        %8557 = vmatpush1.msra.mxu0 %v8448
        %8558 = vmatprep.subr.mxu0 %v8451
        %8559 = vmatpush1.msra.mxu0 %v8450
        %8560 = vmatprep.subr.mxu0 %v8453
        %8561 = vmatpush1.msra.mxu0 %v8452
        %8562 = vmatprep.subr.mxu0 %v8455
        %8563 = vmatpush1.msra.mxu0 %v8454
        %8564 = vmatprep.subr.mxu0 %v8457
        %8565 = vmatpush1.msra.mxu0 %v8456
        %8566 = vmatprep.subr.mxu0 %v8459
        %8567 = vmatpush1.msra.mxu0 %v8458
        %8568 = vmatprep.subr.mxu0 %v8461
        %8569 = vmatpush1.msra.mxu0 %v8460
        %8570 = vmatprep.subr.mxu0 %v8463
        %8571 = vmatpush1.msra.mxu0 %v8462
        %8572 = vmatprep.subr.mxu0 %v8465
        %8573 = vmatpush1.msra.mxu0 %v8464
        %8574 = vmatprep.subr.mxu0 %v8467
        %8575 = vmatpush1.msra.mxu0 %v8466
        %8576 = vmatprep.subr.mxu0 %v8469
        %8577 = vmatpush1.msra.mxu0 %v8468
        %8578 = vmatprep.subr.mxu0 %v8471
        %8579 = vmatpush1.msra.mxu0 %v8470
        %8580 = vmatprep.subr.mxu0 %v8473
        %8581 = vmatpush1.msra.mxu0 %v8472
        %8582 = vmatprep.subr.mxu0 %v8475
        %8583 = vmatpush1.msra.mxu0 %v8474
        %8584 = vmatprep.subr.mxu0 %v8477
        %8585 = vmatpush1.msra.mxu0 %v8476
        %8586 = vmatprep.subr.mxu0 %v8479
        %8587 = vmatpush1.msra.mxu0 %v8478
        %8588 = vmatprep.subr.mxu0 %v8481
        %8589 = vmatpush1.msra.mxu0 %v8480
        %8590 = vmatprep.subr.mxu0 %v8483
        %8591 = vmatpush1.msra.mxu0 %v8482
        %8592 = vmatprep.subr.mxu0 %v8485
        %8593 = vmatpush1.msra.mxu0 %v8484
        %8594 = vmatprep.mubr.f32.mxu0 %v8232
        %8595 = vmatmul.mubr.f32.gmra.mrb[0].mxu0 %v8132
        %v8596 = vpop.f32.mrb[0].mxu0
        %v8597 = vadd.f32 %v8523, %v8596
        %v8598 = vpop.f32.mrb[0].mxu0
        %v8599 = vadd.f32 %v8527, %v8598
        %8600 = vmatprep.mubr.f32.mxu0 %v8239
        %8601 = vmatmul.mubr.f32.gmra.mrb[0].mxu0 %v8139
        %v8602 = vpop.f32.mrb[0].mxu0
        %v8603 = vadd.f32 %v8523, %v8602
        %v8604 = vpop.f32.mrb[0].mxu0
        %v8605 = vadd.f32 %v8527, %v8604
        %8606 = vmatprep.mubr.f32.mxu0 %v8246
        %8607 = vmatmul.mubr.f32.gmra.mrb[0].mxu0 %v8146
        %v8608 = vpop.f32.mrb[0].mxu0
        %v8609 = vadd.f32 %v8523, %v8608
        %v8610 = vpop.f32.mrb[0].mxu0
        %v8611 = vadd.f32 %v8527, %v8610
        %8612 = vmatprep.mubr.f32.mxu0 %v8253
        %8613 = vmatmul.mubr.f32.gmra.mrb[0].mxu0 %v8153
        %v8614 = vpop.f32.mrb[0].mxu0
        %v8615 = vadd.f32 %v8523, %v8614
        %v8616 = vpop.f32.mrb[0].mxu0
        %v8617 = vadd.f32 %v8527, %v8616
        %8618 = vmatprep.mubr.f32.mxu0 %v8260
        %8619 = vmatmul.mubr.f32.gmra.mrb[0].mxu0 %v8160
        %v8620 = vpop.f32.mrb[0].mxu0
        %v8621 = vadd.f32 %v8523, %v8620
        %v8622 = vpop.f32.mrb[0].mxu0
        %v8623 = vadd.f32 %v8527, %v8622
        %8624 = vmatprep.mubr.f32.mxu0 %v8267
        %8625 = vmatmul.mubr.f32.gmra.mrb[0].mxu0 %v8167
        %v8626 = vpop.f32.mrb[0].mxu0
        %v8627 = vadd.f32 %v8523, %v8626
        %v8628 = vpop.f32.mrb[0].mxu0
        %v8629 = vadd.f32 %v8527, %v8628
        %8630 = vmatprep.mubr.f32.mxu0 %v8274
        %8631 = vmatmul.mubr.f32.gmra.mrb[0].mxu0 %v8174
        %v8632 = vpop.f32.mrb[0].mxu0
        %v8633 = vadd.f32 %v8523, %v8632
        %v8634 = vpop.f32.mrb[0].mxu0
        %v8635 = vadd.f32 %v8527, %v8634
        %8636 = vmatprep.mubr.f32.mxu0 %v8281
        %8637 = vmatmul.mubr.f32.gmra.mrb[0].mxu0 %v8181
        %v8638 = vpop.f32.mrb[0].mxu0
        %v8639 = vadd.f32 %v8523, %v8638
        %v8640 = vpop.f32.mrb[0].mxu0
        %v8641 = vadd.f32 %v8527, %v8640
        %8642 = vmatprep.mubr.f32.mxu0 %v8288
        %8643 = vmatmul.mubr.f32.gmra.mrb[0].mxu0 %v8188
        %v8644 = vpop.f32.mrb[0].mxu0
        %v8645 = vadd.f32 %v8523, %v8644
        %v8646 = vpop.f32.mrb[0].mxu0
        %v8647 = vadd.f32 %v8527, %v8646
        %8648 = vmatprep.mubr.f32.mxu0 %v8295
        %8649 = vmatmul.mubr.f32.gmra.mrb[0].mxu0 %v8195
        %v8650 = vpop.f32.mrb[0].mxu0
        %v8651 = vadd.f32 %v8523, %v8650
        %v8652 = vpop.f32.mrb[0].mxu0
        %v8653 = vadd.f32 %v8527, %v8652
        %8654 = vmatprep.mubr.f32.mxu0 %v8302
        %8655 = vmatmul.mubr.f32.gmra.mrb[0].mxu0 %v8202
        %v8656 = vpop.f32.mrb[0].mxu0
        %v8657 = vadd.f32 %v8523, %v8656
        %v8658 = vpop.f32.mrb[0].mxu0
        %v8659 = vadd.f32 %v8527, %v8658
        %8660 = vmatprep.mubr.f32.mxu0 %v8309
        %8661 = vmatmul.mubr.f32.gmra.mrb[0].mxu0 %v8209
        %v8662 = vpop.f32.mrb[0].mxu0
        %v8663 = vadd.f32 %v8523, %v8662
        %v8664 = vpop.f32.mrb[0].mxu0
        %v8665 = vadd.f32 %v8527, %v8664
        %8666 = vdwg.mxu0
        %8667 = vmatprep.subr.mxu0 %v8487
        %8668 = vmatpush1.msra.mxu0 %v8486
        %8669 = vmatprep.subr.mxu0 %v8489
        %8670 = vmatpush1.msra.mxu0 %v8488
        %8671 = vmatprep.subr.mxu0 %v8491
        %8672 = vmatpush1.msra.mxu0 %v8490
        %8673 = vmatprep.subr.mxu0 %v8493
        %8674 = vmatpush1.msra.mxu0 %v8492
        %8675 = vmatprep.subr.mxu0 %v8495
        %8676 = vmatpush1.msra.mxu0 %v8494
        %8677 = vmatprep.subr.mxu0 %v8497
        %8678 = vmatpush1.msra.mxu0 %v8496
        %8679 = vmatprep.subr.mxu0 %v8499
        %8680 = vmatpush1.msra.mxu0 %v8498
        %8681 = vmatprep.subr.mxu0 %v8501
        %8682 = vmatpush1.msra.mxu0 %v8500
        %8683 = vmatprep.subr.mxu0 %v8503
        %8684 = vmatpush1.msra.mxu0 %v8502
        %8685 = vmatprep.subr.mxu0 %v8505
        %8686 = vmatpush1.msra.mxu0 %v8504
        %8687 = vmatprep.subr.mxu0 %v8507
        %8688 = vmatpush1.msra.mxu0 %v8506
        %8689 = vmatprep.subr.mxu0 %v8509
        %8690 = vmatpush1.msra.mxu0 %v8508
        %8691 = vmatprep.subr.mxu0 %v8511
        %8692 = vmatpush1.msra.mxu0 %v8510
        %8693 = vmatprep.subr.mxu0 %v8513
        %8694 = vmatpush1.msra.mxu0 %v8512
        %8695 = vmatprep.subr.mxu0 %v8515
        %8696 = vmatpush1.msra.mxu0 %v8514
        %8697 = vmatprep.subr.mxu0 %v8517
        %8698 = vmatpush1.msra.mxu0 %v8516
        %8699 = vmatprep.subr.mxu0 0.0
        %8700 = vmatpush1.msra.mxu0 0.0
        %8701 = vmatprep.subr.mxu0 0.0
        %8702 = vmatpush1.msra.mxu0 0.0
        %8703 = vmatprep.subr.mxu0 0.0
        %8704 = vmatpush1.msra.mxu0 0.0
        %8705 = vmatprep.subr.mxu0 0.0
        %8706 = vmatpush1.msra.mxu0 0.0
        %8707 = vmatprep.subr.mxu0 0.0
        %8708 = vmatpush1.msra.mxu0 0.0
        %8709 = vmatprep.subr.mxu0 0.0
        %8710 = vmatpush1.msra.mxu0 0.0
        %8711 = vmatprep.subr.mxu0 0.0
        %8712 = vmatpush1.msra.mxu0 0.0
        %8713 = vmatprep.subr.mxu0 0.0
        %8714 = vmatpush1.msra.mxu0 0.0
        %8715 = vmatprep.subr.mxu0 0.0
        %8716 = vmatpush1.msra.mxu0 0.0
        %8717 = vmatprep.subr.mxu0 0.0
        %8718 = vmatpush1.msra.mxu0 0.0
        %8719 = vmatprep.subr.mxu0 0.0
        %8720 = vmatpush1.msra.mxu0 0.0
        %8721 = vmatprep.subr.mxu0 0.0
        %8722 = vmatpush1.msra.mxu0 0.0
        %8723 = vmatprep.subr.mxu0 0.0
        %8724 = vmatpush1.msra.mxu0 0.0
        %8725 = vmatprep.subr.mxu0 0.0
        %8726 = vmatpush1.msra.mxu0 0.0
        %8727 = vmatprep.subr.mxu0 0.0
        %8728 = vmatpush1.msra.mxu0 0.0
        %8729 = vmatprep.subr.mxu0 0.0
        %8730 = vmatpush1.msra.mxu0 0.0
        %8731 = vmatprep.mubr.f32.mxu0 0.0
        %8732 = vmatmul.mubr.f32.gmra.mrb[0].mxu0 %v8332
        %v8733 = vpop.f32.mrb[0].mxu0
        %v8734 = vadd.f32 %v8597, %v8733
        %v8735 = vpop.f32.mrb[0].mxu0
        %v8736 = vadd.f32 %v8599, %v8735
        %8737 = vmatprep.mubr.f32.mxu0 0.0
        %8738 = vmatmul.mubr.f32.gmra.mrb[0].mxu0 %v8339
        %v8739 = vpop.f32.mrb[0].mxu0
        %v8740 = vadd.f32 %v8603, %v8739
        %v8741 = vpop.f32.mrb[0].mxu0
        %v8742 = vadd.f32 %v8605, %v8741
        %8743 = vmatprep.mubr.f32.mxu0 0.0
        %8744 = vmatmul.mubr.f32.gmra.mrb[0].mxu0 %v8346
        %v8745 = vpop.f32.mrb[0].mxu0
        %v8746 = vadd.f32 %v8609, %v8745
        %v8747 = vpop.f32.mrb[0].mxu0
        %v8748 = vadd.f32 %v8611, %v8747
        %8749 = vmatprep.mubr.f32.mxu0 0.0
        %8750 = vmatmul.mubr.f32.gmra.mrb[0].mxu0 %v8353
        %v8751 = vpop.f32.mrb[0].mxu0
        %v8752 = vadd.f32 %v8615, %v8751
        %v8753 = vpop.f32.mrb[0].mxu0
        %v8754 = vadd.f32 %v8617, %v8753
        %8755 = vmatprep.mubr.f32.mxu0 0.0
        %8756 = vmatmul.mubr.f32.gmra.mrb[0].mxu0 %v8360
        %v8757 = vpop.f32.mrb[0].mxu0
        %v8758 = vadd.f32 %v8621, %v8757
        %v8759 = vpop.f32.mrb[0].mxu0
        %v8760 = vadd.f32 %v8623, %v8759
        %8761 = vmatprep.mubr.f32.mxu0 0.0
        %8762 = vmatmul.mubr.f32.gmra.mrb[0].mxu0 %v8367
        %v8763 = vpop.f32.mrb[0].mxu0
        %v8764 = vadd.f32 %v8627, %v8763
        %v8765 = vpop.f32.mrb[0].mxu0
        %v8766 = vadd.f32 %v8629, %v8765
        %8767 = vmatprep.mubr.f32.mxu0 0.0
        %8768 = vmatmul.mubr.f32.gmra.mrb[0].mxu0 %v8374
        %v8769 = vpop.f32.mrb[0].mxu0
        %v8770 = vadd.f32 %v8633, %v8769
        %v8771 = vpop.f32.mrb[0].mxu0
        %v8772 = vadd.f32 %v8635, %v8771
        %8773 = vmatprep.mubr.f32.mxu0 0.0
        %8774 = vmatmul.mubr.f32.gmra.mrb[0].mxu0 %v8381
        %v8775 = vpop.f32.mrb[0].mxu0
        %v8776 = vadd.f32 %v8639, %v8775
        %v8777 = vpop.f32.mrb[0].mxu0
        %v8778 = vadd.f32 %v8641, %v8777
        %8779 = vmatprep.mubr.f32.mxu0 0.0
        %8780 = vmatmul.mubr.f32.gmra.mrb[0].mxu0 %v8388
        %v8781 = vpop.f32.mrb[0].mxu0
        %v8782 = vadd.f32 %v8645, %v8781
        %v8783 = vpop.f32.mrb[0].mxu0
        %v8784 = vadd.f32 %v8647, %v8783
        %8785 = vmatprep.mubr.f32.mxu0 0.0
        %8786 = vmatmul.mubr.f32.gmra.mrb[0].mxu0 %v8395
        %v8787 = vpop.f32.mrb[0].mxu0
        %v8788 = vadd.f32 %v8651, %v8787
        %v8789 = vpop.f32.mrb[0].mxu0
        %v8790 = vadd.f32 %v8653, %v8789
        %8791 = vmatprep.mubr.f32.mxu0 0.0
        %8792 = vmatmul.mubr.f32.gmra.mrb[0].mxu0 %v8402
        %v8793 = vpop.f32.mrb[0].mxu0
        %v8794 = vadd.f32 %v8657, %v8793
        %v8795 = vpop.f32.mrb[0].mxu0
        %v8796 = vadd.f32 %v8659, %v8795
        %8797 = vmatprep.mubr.f32.mxu0 0.0
        %8798 = vmatmul.mubr.f32.gmra.mrb[0].mxu0 %v8409
        %v8799 = vpop.f32.mrb[0].mxu0
        %v8800 = vadd.f32 %v8663, %v8799
        %v8801 = vpop.f32.mrb[0].mxu0
        %v8802 = vadd.f32 %v8665, %v8801
        %8803 = vdwg.mxu0
        %v8828 = vcombine.low %v8734, %v8736
        %v8829 = vcombine.high %v8734, %v8736
        %v8831 = vunpack.c.l.s4 1966171168
        %v8832 = vunpack.c.0.s8 %v8831
        %v8833 = vlaneseq
        %v8834 = vshrl.u32 %v8833, 7
        %v8835 = vsub.s32 %v8832, %v8834
        %v8836 = vrot.slane %v8828, %v8835
        %v8838 = vunpack.c.l.s4 1966171168
        %v8839 = vunpack.c.0.s8 %v8838
        %v8840 = vlaneseq
        %v8841 = vshrl.u32 %v8840, 7
        %v8842 = vsub.s32 %v8839, %v8841
        %v8843 = vrot.slane %v8829, %v8842
        %v8844 = vcombine.high %v8836, %v8836
        %v8845 = vcombine.high %v8843, %v8843
        %v8847 = vunpack.c.l.s4 1966171168
        %v8848 = vunpack.c.0.s8 %v8847
        %v8849 = vlaneseq
        %v8850 = vshrl.u32 %v8849, 7
        %v8851 = vsub.s32 %v8848, %v8850
        %v8852 = vrot.slane %v8836, %v8851
        %v8854 = vunpack.c.l.s4 1966171168
        %v8855 = vunpack.c.0.s8 %v8854
        %v8856 = vlaneseq
        %v8857 = vshrl.u32 %v8856, 7
        %v8858 = vsub.s32 %v8855, %v8857
        %v8859 = vrot.slane %v8843, %v8858
        %v8861 = vunpack.c.l.s4 1966171168
        %v8862 = vunpack.c.0.s8 %v8861
        %v8863 = vlaneseq
        %v8864 = vshrl.u32 %v8863, 7
        %v8865 = vsub.s32 %v8862, %v8864
        %v8866 = vrot.slane %v8844, %v8865
        %v8868 = vunpack.c.l.s4 1966171168
        %v8869 = vunpack.c.0.s8 %v8868
        %v8870 = vlaneseq
        %v8871 = vshrl.u32 %v8870, 7
        %v8872 = vsub.s32 %v8869, %v8871
        %v8873 = vrot.slane %v8845, %v8872
        %v8874 = vcombine.high %v8852, %v8852
        %v8875 = vcombine.high %v8859, %v8859
        %v8876 = vcombine.high %v8866, %v8866
        %v8877 = vcombine.high %v8873, %v8873
        %v8878 = vcombine.low %v8740, %v8742
        %v8879 = vcombine.high %v8740, %v8742
        %v8881 = vunpack.c.l.s4 1966171168
        %v8882 = vunpack.c.0.s8 %v8881
        %v8883 = vlaneseq
        %v8884 = vshrl.u32 %v8883, 7
        %v8885 = vsub.s32 %v8882, %v8884
        %v8886 = vrot.slane %v8878, %v8885
        %v8888 = vunpack.c.l.s4 1966171168
        %v8889 = vunpack.c.0.s8 %v8888
        %v8890 = vlaneseq
        %v8891 = vshrl.u32 %v8890, 7
        %v8892 = vsub.s32 %v8889, %v8891
        %v8893 = vrot.slane %v8879, %v8892
        %v8894 = vcombine.high %v8886, %v8886
        %v8895 = vcombine.high %v8893, %v8893
        %v8897 = vunpack.c.l.s4 1966171168
        %v8898 = vunpack.c.0.s8 %v8897
        %v8899 = vlaneseq
        %v8900 = vshrl.u32 %v8899, 7
        %v8901 = vsub.s32 %v8898, %v8900
        %v8902 = vrot.slane %v8886, %v8901
        %v8904 = vunpack.c.l.s4 1966171168
        %v8905 = vunpack.c.0.s8 %v8904
        %v8906 = vlaneseq
        %v8907 = vshrl.u32 %v8906, 7
        %v8908 = vsub.s32 %v8905, %v8907
        %v8909 = vrot.slane %v8893, %v8908
        %v8911 = vunpack.c.l.s4 1966171168
        %v8912 = vunpack.c.0.s8 %v8911
        %v8913 = vlaneseq
        %v8914 = vshrl.u32 %v8913, 7
        %v8915 = vsub.s32 %v8912, %v8914
        %v8916 = vrot.slane %v8894, %v8915
        %v8918 = vunpack.c.l.s4 1966171168
        %v8919 = vunpack.c.0.s8 %v8918
        %v8920 = vlaneseq
        %v8921 = vshrl.u32 %v8920, 7
        %v8922 = vsub.s32 %v8919, %v8921
        %v8923 = vrot.slane %v8895, %v8922
        %v8924 = vcombine.high %v8902, %v8902
        %v8925 = vcombine.high %v8909, %v8909
        %v8926 = vcombine.high %v8916, %v8916
        %v8927 = vcombine.high %v8923, %v8923
        %v8928 = vcombine.low %v8746, %v8748
        %v8929 = vcombine.high %v8746, %v8748
        %v8931 = vunpack.c.l.s4 1966171168
        %v8932 = vunpack.c.0.s8 %v8931
        %v8933 = vlaneseq
        %v8934 = vshrl.u32 %v8933, 7
        %v8935 = vsub.s32 %v8932, %v8934
        %v8936 = vrot.slane %v8928, %v8935
        %v8938 = vunpack.c.l.s4 1966171168
        %v8939 = vunpack.c.0.s8 %v8938
        %v8940 = vlaneseq
        %v8941 = vshrl.u32 %v8940, 7
        %v8942 = vsub.s32 %v8939, %v8941
        %v8943 = vrot.slane %v8929, %v8942
        %v8944 = vcombine.high %v8936, %v8936
        %v8945 = vcombine.high %v8943, %v8943
        %v8947 = vunpack.c.l.s4 1966171168
        %v8948 = vunpack.c.0.s8 %v8947
        %v8949 = vlaneseq
        %v8950 = vshrl.u32 %v8949, 7
        %v8951 = vsub.s32 %v8948, %v8950
        %v8952 = vrot.slane %v8936, %v8951
        %v8954 = vunpack.c.l.s4 1966171168
        %v8955 = vunpack.c.0.s8 %v8954
        %v8956 = vlaneseq
        %v8957 = vshrl.u32 %v8956, 7
        %v8958 = vsub.s32 %v8955, %v8957
        %v8959 = vrot.slane %v8943, %v8958
        %v8961 = vunpack.c.l.s4 1966171168
        %v8962 = vunpack.c.0.s8 %v8961
        %v8963 = vlaneseq
        %v8964 = vshrl.u32 %v8963, 7
        %v8965 = vsub.s32 %v8962, %v8964
        %v8966 = vrot.slane %v8944, %v8965
        %v8968 = vunpack.c.l.s4 1966171168
        %v8969 = vunpack.c.0.s8 %v8968
        %v8970 = vlaneseq
        %v8971 = vshrl.u32 %v8970, 7
        %v8972 = vsub.s32 %v8969, %v8971
        %v8973 = vrot.slane %v8945, %v8972
        %v8974 = vcombine.high %v8952, %v8952
        %v8975 = vcombine.high %v8959, %v8959
        %v8976 = vcombine.high %v8966, %v8966
        %v8977 = vcombine.high %v8973, %v8973
        %v8978 = vcombine.low %v8752, %v8754
        %v8979 = vcombine.high %v8752, %v8754
        %v8981 = vunpack.c.l.s4 1966171168
        %v8982 = vunpack.c.0.s8 %v8981
        %v8983 = vlaneseq
        %v8984 = vshrl.u32 %v8983, 7
        %v8985 = vsub.s32 %v8982, %v8984
        %v8986 = vrot.slane %v8978, %v8985
        %v8988 = vunpack.c.l.s4 1966171168
        %v8989 = vunpack.c.0.s8 %v8988
        %v8990 = vlaneseq
        %v8991 = vshrl.u32 %v8990, 7
        %v8992 = vsub.s32 %v8989, %v8991
        %v8993 = vrot.slane %v8979, %v8992
        %v8994 = vcombine.high %v8986, %v8986
        %v8995 = vcombine.high %v8993, %v8993
        %v8997 = vunpack.c.l.s4 1966171168
        %v8998 = vunpack.c.0.s8 %v8997
        %v8999 = vlaneseq
        %v9000 = vshrl.u32 %v8999, 7
        %v9001 = vsub.s32 %v8998, %v9000
        %v9002 = vrot.slane %v8986, %v9001
        %v9004 = vunpack.c.l.s4 1966171168
        %v9005 = vunpack.c.0.s8 %v9004
        %v9006 = vlaneseq
        %v9007 = vshrl.u32 %v9006, 7
        %v9008 = vsub.s32 %v9005, %v9007
        %v9009 = vrot.slane %v8993, %v9008
        %v9011 = vunpack.c.l.s4 1966171168
        %v9012 = vunpack.c.0.s8 %v9011
        %v9013 = vlaneseq
        %v9014 = vshrl.u32 %v9013, 7
        %v9015 = vsub.s32 %v9012, %v9014
        %v9016 = vrot.slane %v8994, %v9015
        %v9018 = vunpack.c.l.s4 1966171168
        %v9019 = vunpack.c.0.s8 %v9018
        %v9020 = vlaneseq
        %v9021 = vshrl.u32 %v9020, 7
        %v9022 = vsub.s32 %v9019, %v9021
        %v9023 = vrot.slane %v8995, %v9022
        %v9024 = vcombine.high %v9002, %v9002
        %v9025 = vcombine.high %v9009, %v9009
        %v9026 = vcombine.high %v9016, %v9016
        %v9027 = vcombine.high %v9023, %v9023
        %v9028 = vcombine.low %v8758, %v8760
        %v9029 = vcombine.high %v8758, %v8760
        %v9031 = vunpack.c.l.s4 1966171168
        %v9032 = vunpack.c.0.s8 %v9031
        %v9033 = vlaneseq
        %v9034 = vshrl.u32 %v9033, 7
        %v9035 = vsub.s32 %v9032, %v9034
        %v9036 = vrot.slane %v9028, %v9035
        %v9038 = vunpack.c.l.s4 1966171168
        %v9039 = vunpack.c.0.s8 %v9038
        %v9040 = vlaneseq
        %v9041 = vshrl.u32 %v9040, 7
        %v9042 = vsub.s32 %v9039, %v9041
        %v9043 = vrot.slane %v9029, %v9042
        %v9044 = vcombine.high %v9036, %v9036
        %v9045 = vcombine.high %v9043, %v9043
        %v9047 = vunpack.c.l.s4 1966171168
        %v9048 = vunpack.c.0.s8 %v9047
        %v9049 = vlaneseq
        %v9050 = vshrl.u32 %v9049, 7
        %v9051 = vsub.s32 %v9048, %v9050
        %v9052 = vrot.slane %v9036, %v9051
        %v9054 = vunpack.c.l.s4 1966171168
        %v9055 = vunpack.c.0.s8 %v9054
        %v9056 = vlaneseq
        %v9057 = vshrl.u32 %v9056, 7
        %v9058 = vsub.s32 %v9055, %v9057
        %v9059 = vrot.slane %v9043, %v9058
        %v9061 = vunpack.c.l.s4 1966171168
        %v9062 = vunpack.c.0.s8 %v9061
        %v9063 = vlaneseq
        %v9064 = vshrl.u32 %v9063, 7
        %v9065 = vsub.s32 %v9062, %v9064
        %v9066 = vrot.slane %v9044, %v9065
        %v9068 = vunpack.c.l.s4 1966171168
        %v9069 = vunpack.c.0.s8 %v9068
        %v9070 = vlaneseq
        %v9071 = vshrl.u32 %v9070, 7
        %v9072 = vsub.s32 %v9069, %v9071
        %v9073 = vrot.slane %v9045, %v9072
        %v9074 = vcombine.high %v9052, %v9052
        %v9075 = vcombine.high %v9059, %v9059
        %v9076 = vcombine.high %v9066, %v9066
        %v9077 = vcombine.high %v9073, %v9073
        %v9078 = vcombine.low %v8764, %v8766
        %v9079 = vcombine.high %v8764, %v8766
        %v9081 = vunpack.c.l.s4 1966171168
        %v9082 = vunpack.c.0.s8 %v9081
        %v9083 = vlaneseq
        %v9084 = vshrl.u32 %v9083, 7
        %v9085 = vsub.s32 %v9082, %v9084
        %v9086 = vrot.slane %v9078, %v9085
        %v9088 = vunpack.c.l.s4 1966171168
        %v9089 = vunpack.c.0.s8 %v9088
        %v9090 = vlaneseq
        %v9091 = vshrl.u32 %v9090, 7
        %v9092 = vsub.s32 %v9089, %v9091
        %v9093 = vrot.slane %v9079, %v9092
        %v9094 = vcombine.high %v9086, %v9086
        %v9095 = vcombine.high %v9093, %v9093
        %v9097 = vunpack.c.l.s4 1966171168
        %v9098 = vunpack.c.0.s8 %v9097
        %v9099 = vlaneseq
        %v9100 = vshrl.u32 %v9099, 7
        %v9101 = vsub.s32 %v9098, %v9100
        %v9102 = vrot.slane %v9086, %v9101
        %v9104 = vunpack.c.l.s4 1966171168
        %v9105 = vunpack.c.0.s8 %v9104
        %v9106 = vlaneseq
        %v9107 = vshrl.u32 %v9106, 7
        %v9108 = vsub.s32 %v9105, %v9107
        %v9109 = vrot.slane %v9093, %v9108
        %v9111 = vunpack.c.l.s4 1966171168
        %v9112 = vunpack.c.0.s8 %v9111
        %v9113 = vlaneseq
        %v9114 = vshrl.u32 %v9113, 7
        %v9115 = vsub.s32 %v9112, %v9114
        %v9116 = vrot.slane %v9094, %v9115
        %v9118 = vunpack.c.l.s4 1966171168
        %v9119 = vunpack.c.0.s8 %v9118
        %v9120 = vlaneseq
        %v9121 = vshrl.u32 %v9120, 7
        %v9122 = vsub.s32 %v9119, %v9121
        %v9123 = vrot.slane %v9095, %v9122
        %v9124 = vcombine.high %v9102, %v9102
        %v9125 = vcombine.high %v9109, %v9109
        %v9126 = vcombine.high %v9116, %v9116
        %v9127 = vcombine.high %v9123, %v9123
        %v9128 = vcombine.low %v8770, %v8772
        %v9129 = vcombine.high %v8770, %v8772
        %v9131 = vunpack.c.l.s4 1966171168
        %v9132 = vunpack.c.0.s8 %v9131
        %v9133 = vlaneseq
        %v9134 = vshrl.u32 %v9133, 7
        %v9135 = vsub.s32 %v9132, %v9134
        %v9136 = vrot.slane %v9128, %v9135
        %v9138 = vunpack.c.l.s4 1966171168
        %v9139 = vunpack.c.0.s8 %v9138
        %v9140 = vlaneseq
        %v9141 = vshrl.u32 %v9140, 7
        %v9142 = vsub.s32 %v9139, %v9141
        %v9143 = vrot.slane %v9129, %v9142
        %v9144 = vcombine.high %v9136, %v9136
        %v9145 = vcombine.high %v9143, %v9143
        %v9147 = vunpack.c.l.s4 1966171168
        %v9148 = vunpack.c.0.s8 %v9147
        %v9149 = vlaneseq
        %v9150 = vshrl.u32 %v9149, 7
        %v9151 = vsub.s32 %v9148, %v9150
        %v9152 = vrot.slane %v9136, %v9151
        %v9154 = vunpack.c.l.s4 1966171168
        %v9155 = vunpack.c.0.s8 %v9154
        %v9156 = vlaneseq
        %v9157 = vshrl.u32 %v9156, 7
        %v9158 = vsub.s32 %v9155, %v9157
        %v9159 = vrot.slane %v9143, %v9158
        %v9161 = vunpack.c.l.s4 1966171168
        %v9162 = vunpack.c.0.s8 %v9161
        %v9163 = vlaneseq
        %v9164 = vshrl.u32 %v9163, 7
        %v9165 = vsub.s32 %v9162, %v9164
        %v9166 = vrot.slane %v9144, %v9165
        %v9168 = vunpack.c.l.s4 1966171168
        %v9169 = vunpack.c.0.s8 %v9168
        %v9170 = vlaneseq
        %v9171 = vshrl.u32 %v9170, 7
        %v9172 = vsub.s32 %v9169, %v9171
        %v9173 = vrot.slane %v9145, %v9172
        %v9174 = vcombine.high %v9152, %v9152
        %v9175 = vcombine.high %v9159, %v9159
        %v9176 = vcombine.high %v9166, %v9166
        %v9177 = vcombine.high %v9173, %v9173
        %v9178 = vcombine.low %v8776, %v8778
        %v9179 = vcombine.high %v8776, %v8778
        %v9181 = vunpack.c.l.s4 1966171168
        %v9182 = vunpack.c.0.s8 %v9181
        %v9183 = vlaneseq
        %v9184 = vshrl.u32 %v9183, 7
        %v9185 = vsub.s32 %v9182, %v9184
        %v9186 = vrot.slane %v9178, %v9185
        %v9188 = vunpack.c.l.s4 1966171168
        %v9189 = vunpack.c.0.s8 %v9188
        %v9190 = vlaneseq
        %v9191 = vshrl.u32 %v9190, 7
        %v9192 = vsub.s32 %v9189, %v9191
        %v9193 = vrot.slane %v9179, %v9192
        %v9194 = vcombine.high %v9186, %v9186
        %v9195 = vcombine.high %v9193, %v9193
        %v9197 = vunpack.c.l.s4 1966171168
        %v9198 = vunpack.c.0.s8 %v9197
        %v9199 = vlaneseq
        %v9200 = vshrl.u32 %v9199, 7
        %v9201 = vsub.s32 %v9198, %v9200
        %v9202 = vrot.slane %v9186, %v9201
        %v9204 = vunpack.c.l.s4 1966171168
        %v9205 = vunpack.c.0.s8 %v9204
        %v9206 = vlaneseq
        %v9207 = vshrl.u32 %v9206, 7
        %v9208 = vsub.s32 %v9205, %v9207
        %v9209 = vrot.slane %v9193, %v9208
        %v9211 = vunpack.c.l.s4 1966171168
        %v9212 = vunpack.c.0.s8 %v9211
        %v9213 = vlaneseq
        %v9214 = vshrl.u32 %v9213, 7
        %v9215 = vsub.s32 %v9212, %v9214
        %v9216 = vrot.slane %v9194, %v9215
        %v9218 = vunpack.c.l.s4 1966171168
        %v9219 = vunpack.c.0.s8 %v9218
        %v9220 = vlaneseq
        %v9221 = vshrl.u32 %v9220, 7
        %v9222 = vsub.s32 %v9219, %v9221
        %v9223 = vrot.slane %v9195, %v9222
        %v9224 = vcombine.high %v9202, %v9202
        %v9225 = vcombine.high %v9209, %v9209
        %v9226 = vcombine.high %v9216, %v9216
        %v9227 = vcombine.high %v9223, %v9223
        %v9228 = vcombine.low %v8782, %v8784
        %v9229 = vcombine.high %v8782, %v8784
        %v9231 = vunpack.c.l.s4 1966171168
        %v9232 = vunpack.c.0.s8 %v9231
        %v9233 = vlaneseq
        %v9234 = vshrl.u32 %v9233, 7
        %v9235 = vsub.s32 %v9232, %v9234
        %v9236 = vrot.slane %v9228, %v9235
        %v9238 = vunpack.c.l.s4 1966171168
        %v9239 = vunpack.c.0.s8 %v9238
        %v9240 = vlaneseq
        %v9241 = vshrl.u32 %v9240, 7
        %v9242 = vsub.s32 %v9239, %v9241
        %v9243 = vrot.slane %v9229, %v9242
        %v9244 = vcombine.high %v9236, %v9236
        %v9245 = vcombine.high %v9243, %v9243
        %v9247 = vunpack.c.l.s4 1966171168
        %v9248 = vunpack.c.0.s8 %v9247
        %v9249 = vlaneseq
        %v9250 = vshrl.u32 %v9249, 7
        %v9251 = vsub.s32 %v9248, %v9250
        %v9252 = vrot.slane %v9236, %v9251
        %v9254 = vunpack.c.l.s4 1966171168
        %v9255 = vunpack.c.0.s8 %v9254
        %v9256 = vlaneseq
        %v9257 = vshrl.u32 %v9256, 7
        %v9258 = vsub.s32 %v9255, %v9257
        %v9259 = vrot.slane %v9243, %v9258
        %v9261 = vunpack.c.l.s4 1966171168
        %v9262 = vunpack.c.0.s8 %v9261
        %v9263 = vlaneseq
        %v9264 = vshrl.u32 %v9263, 7
        %v9265 = vsub.s32 %v9262, %v9264
        %v9266 = vrot.slane %v9244, %v9265
        %v9268 = vunpack.c.l.s4 1966171168
        %v9269 = vunpack.c.0.s8 %v9268
        %v9270 = vlaneseq
        %v9271 = vshrl.u32 %v9270, 7
        %v9272 = vsub.s32 %v9269, %v9271
        %v9273 = vrot.slane %v9245, %v9272
        %v9274 = vcombine.high %v9252, %v9252
        %v9275 = vcombine.high %v9259, %v9259
        %v9276 = vcombine.high %v9266, %v9266
        %v9277 = vcombine.high %v9273, %v9273
        %v9278 = vcombine.low %v8788, %v8790
        %v9279 = vcombine.high %v8788, %v8790
        %v9281 = vunpack.c.l.s4 1966171168
        %v9282 = vunpack.c.0.s8 %v9281
        %v9283 = vlaneseq
        %v9284 = vshrl.u32 %v9283, 7
        %v9285 = vsub.s32 %v9282, %v9284
        %v9286 = vrot.slane %v9278, %v9285
        %v9288 = vunpack.c.l.s4 1966171168
        %v9289 = vunpack.c.0.s8 %v9288
        %v9290 = vlaneseq
        %v9291 = vshrl.u32 %v9290, 7
        %v9292 = vsub.s32 %v9289, %v9291
        %v9293 = vrot.slane %v9279, %v9292
        %v9294 = vcombine.high %v9286, %v9286
        %v9295 = vcombine.high %v9293, %v9293
        %v9297 = vunpack.c.l.s4 1966171168
        %v9298 = vunpack.c.0.s8 %v9297
        %v9299 = vlaneseq
        %v9300 = vshrl.u32 %v9299, 7
        %v9301 = vsub.s32 %v9298, %v9300
        %v9302 = vrot.slane %v9286, %v9301
        %v9304 = vunpack.c.l.s4 1966171168
        %v9305 = vunpack.c.0.s8 %v9304
        %v9306 = vlaneseq
        %v9307 = vshrl.u32 %v9306, 7
        %v9308 = vsub.s32 %v9305, %v9307
        %v9309 = vrot.slane %v9293, %v9308
        %v9311 = vunpack.c.l.s4 1966171168
        %v9312 = vunpack.c.0.s8 %v9311
        %v9313 = vlaneseq
        %v9314 = vshrl.u32 %v9313, 7
        %v9315 = vsub.s32 %v9312, %v9314
        %v9316 = vrot.slane %v9294, %v9315
        %v9318 = vunpack.c.l.s4 1966171168
        %v9319 = vunpack.c.0.s8 %v9318
        %v9320 = vlaneseq
        %v9321 = vshrl.u32 %v9320, 7
        %v9322 = vsub.s32 %v9319, %v9321
        %v9323 = vrot.slane %v9295, %v9322
        %v9324 = vcombine.high %v9302, %v9302
        %v9325 = vcombine.high %v9309, %v9309
        %v9326 = vcombine.high %v9316, %v9316
        %v9327 = vcombine.high %v9323, %v9323
        %v9328 = vcombine.low %v8794, %v8796
        %v9329 = vcombine.high %v8794, %v8796
        %v9331 = vunpack.c.l.s4 1966171168
        %v9332 = vunpack.c.0.s8 %v9331
        %v9333 = vlaneseq
        %v9334 = vshrl.u32 %v9333, 7
        %v9335 = vsub.s32 %v9332, %v9334
        %v9336 = vrot.slane %v9328, %v9335
        %v9338 = vunpack.c.l.s4 1966171168
        %v9339 = vunpack.c.0.s8 %v9338
        %v9340 = vlaneseq
        %v9341 = vshrl.u32 %v9340, 7
        %v9342 = vsub.s32 %v9339, %v9341
        %v9343 = vrot.slane %v9329, %v9342
        %v9344 = vcombine.high %v9336, %v9336
        %v9345 = vcombine.high %v9343, %v9343
        %v9347 = vunpack.c.l.s4 1966171168
        %v9348 = vunpack.c.0.s8 %v9347
        %v9349 = vlaneseq
        %v9350 = vshrl.u32 %v9349, 7
        %v9351 = vsub.s32 %v9348, %v9350
        %v9352 = vrot.slane %v9336, %v9351
        %v9354 = vunpack.c.l.s4 1966171168
        %v9355 = vunpack.c.0.s8 %v9354
        %v9356 = vlaneseq
        %v9357 = vshrl.u32 %v9356, 7
        %v9358 = vsub.s32 %v9355, %v9357
        %v9359 = vrot.slane %v9343, %v9358
        %v9361 = vunpack.c.l.s4 1966171168
        %v9362 = vunpack.c.0.s8 %v9361
        %v9363 = vlaneseq
        %v9364 = vshrl.u32 %v9363, 7
        %v9365 = vsub.s32 %v9362, %v9364
        %v9366 = vrot.slane %v9344, %v9365
        %v9368 = vunpack.c.l.s4 1966171168
        %v9369 = vunpack.c.0.s8 %v9368
        %v9370 = vlaneseq
        %v9371 = vshrl.u32 %v9370, 7
        %v9372 = vsub.s32 %v9369, %v9371
        %v9373 = vrot.slane %v9345, %v9372
        %v9374 = vcombine.high %v9352, %v9352
        %v9375 = vcombine.high %v9359, %v9359
        %v9376 = vcombine.high %v9366, %v9366
        %v9377 = vcombine.high %v9373, %v9373
        %v9378 = vcombine.low %v8800, %v8802
        %v9379 = vcombine.high %v8800, %v8802
        %v9381 = vunpack.c.l.s4 1966171168
        %v9382 = vunpack.c.0.s8 %v9381
        %v9383 = vlaneseq
        %v9384 = vshrl.u32 %v9383, 7
        %v9385 = vsub.s32 %v9382, %v9384
        %v9386 = vrot.slane %v9378, %v9385
        %v9388 = vunpack.c.l.s4 1966171168
        %v9389 = vunpack.c.0.s8 %v9388
        %v9390 = vlaneseq
        %v9391 = vshrl.u32 %v9390, 7
        %v9392 = vsub.s32 %v9389, %v9391
        %v9393 = vrot.slane %v9379, %v9392
        %v9394 = vcombine.high %v9386, %v9386
        %v9395 = vcombine.high %v9393, %v9393
        %v9397 = vunpack.c.l.s4 1966171168
        %v9398 = vunpack.c.0.s8 %v9397
        %v9399 = vlaneseq
        %v9400 = vshrl.u32 %v9399, 7
        %v9401 = vsub.s32 %v9398, %v9400
        %v9402 = vrot.slane %v9386, %v9401
        %v9404 = vunpack.c.l.s4 1966171168
        %v9405 = vunpack.c.0.s8 %v9404
        %v9406 = vlaneseq
        %v9407 = vshrl.u32 %v9406, 7
        %v9408 = vsub.s32 %v9405, %v9407
        %v9409 = vrot.slane %v9393, %v9408
        %v9411 = vunpack.c.l.s4 1966171168
        %v9412 = vunpack.c.0.s8 %v9411
        %v9413 = vlaneseq
        %v9414 = vshrl.u32 %v9413, 7
        %v9415 = vsub.s32 %v9412, %v9414
        %v9416 = vrot.slane %v9394, %v9415
        %v9418 = vunpack.c.l.s4 1966171168
        %v9419 = vunpack.c.0.s8 %v9418
        %v9420 = vlaneseq
        %v9421 = vshrl.u32 %v9420, 7
        %v9422 = vsub.s32 %v9419, %v9421
        %v9423 = vrot.slane %v9395, %v9422
        %v9424 = vcombine.high %v9402, %v9402
        %v9425 = vcombine.high %v9409, %v9409
        %v9426 = vcombine.high %v9416, %v9416
        %v9427 = vcombine.high %v9423, %v9423
        %v9428 = vcombine.low %v8852, %v8866
        %v9430 = vunpack.c.l.s4 1966171168
        %v9431 = vunpack.c.0.s8 %v9430
        %v9432 = vlaneseq
        %v9433 = vshrl.u32 %v9432, 7
        %v9434 = vsub.s32 %v9431, %v9433
        %v9435 = vrot.slane %v9428, %v9434
        %v9437 = vunpack.c.l.s4 1966171168
        %v9438 = vunpack.c.0.s8 %v9437
        %v9439 = vlaneseq
        %v9440 = vshrl.u32 %v9439, 7
        %v9441 = vsub.s32 %v9438, %v9440
        %v9442 = vrot.slane %v8874, %v9441
        %v9443 = vcombine.low %v9435, %v9442
        %v9444 = vcombine.high %v9435, %v9442
        %v9446 = vunpack.c.l.s4 1966171168
        %v9447 = vunpack.c.0.s8 %v9446
        %v9448 = vlaneseq
        %v9449 = vshrl.u32 %v9448, 7
        %v9450 = vsub.s32 %v9447, %v9449
        %v9451 = vrot.slane %v9443, %v9450
        %v9453 = vunpack.c.l.s4 1966171168
        %v9454 = vunpack.c.0.s8 %v9453
        %v9455 = vlaneseq
        %v9456 = vshrl.u32 %v9455, 7
        %v9457 = vsub.s32 %v9454, %v9456
        %v9458 = vrot.slane %v9444, %v9457
        %v9459 = vcombine.low %v8876, %v8859
        %v9461 = vunpack.c.l.s4 1966171168
        %v9462 = vunpack.c.0.s8 %v9461
        %v9463 = vlaneseq
        %v9464 = vshrl.u32 %v9463, 7
        %v9465 = vsub.s32 %v9462, %v9464
        %v9466 = vrot.slane %v9459, %v9465
        %v9468 = vunpack.c.l.s4 1966171168
        %v9469 = vunpack.c.0.s8 %v9468
        %v9470 = vlaneseq
        %v9471 = vshrl.u32 %v9470, 7
        %v9472 = vsub.s32 %v9469, %v9471
        %v9473 = vrot.slane %v8873, %v9472
        %v9474 = vcombine.low %v9466, %v9473
        %v9475 = vcombine.high %v9466, %v9473
        %v9477 = vunpack.c.l.s4 1966171168
        %v9478 = vunpack.c.0.s8 %v9477
        %v9479 = vlaneseq
        %v9480 = vshrl.u32 %v9479, 7
        %v9481 = vsub.s32 %v9478, %v9480
        %v9482 = vrot.slane %v9474, %v9481
        %v9484 = vunpack.c.l.s4 1966171168
        %v9485 = vunpack.c.0.s8 %v9484
        %v9486 = vlaneseq
        %v9487 = vshrl.u32 %v9486, 7
        %v9488 = vsub.s32 %v9485, %v9487
        %v9489 = vrot.slane %v9475, %v9488
        %v9490 = vcombine.low %v8875, %v8877
        %v9492 = vunpack.c.l.s4 1966171168
        %v9493 = vunpack.c.0.s8 %v9492
        %v9494 = vlaneseq
        %v9495 = vshrl.u32 %v9494, 7
        %v9496 = vsub.s32 %v9493, %v9495
        %v9497 = vrot.slane %v9490, %v9496
        %v9499 = vunpack.c.l.s4 1966171168
        %v9500 = vunpack.c.0.s8 %v9499
        %v9501 = vlaneseq
        %v9502 = vshrl.u32 %v9501, 7
        %v9503 = vsub.s32 %v9500, %v9502
        %v9504 = vrot.slane %v8902, %v9503
        %v9505 = vcombine.low %v9497, %v9504
        %v9506 = vcombine.high %v9497, %v9504
        %v9508 = vunpack.c.l.s4 1966171168
        %v9509 = vunpack.c.0.s8 %v9508
        %v9510 = vlaneseq
        %v9511 = vshrl.u32 %v9510, 7
        %v9512 = vsub.s32 %v9509, %v9511
        %v9513 = vrot.slane %v9505, %v9512
        %v9515 = vunpack.c.l.s4 1966171168
        %v9516 = vunpack.c.0.s8 %v9515
        %v9517 = vlaneseq
        %v9518 = vshrl.u32 %v9517, 7
        %v9519 = vsub.s32 %v9516, %v9518
        %v9520 = vrot.slane %v9506, %v9519
        %v9521 = vcombine.low %v8916, %v8924
        %v9523 = vunpack.c.l.s4 1966171168
        %v9524 = vunpack.c.0.s8 %v9523
        %v9525 = vlaneseq
        %v9526 = vshrl.u32 %v9525, 7
        %v9527 = vsub.s32 %v9524, %v9526
        %v9528 = vrot.slane %v9521, %v9527
        %v9530 = vunpack.c.l.s4 1966171168
        %v9531 = vunpack.c.0.s8 %v9530
        %v9532 = vlaneseq
        %v9533 = vshrl.u32 %v9532, 7
        %v9534 = vsub.s32 %v9531, %v9533
        %v9535 = vrot.slane %v8926, %v9534
        %v9536 = vcombine.low %v9528, %v9535
        %v9537 = vcombine.high %v9528, %v9535
        %v9539 = vunpack.c.l.s4 1966171168
        %v9540 = vunpack.c.0.s8 %v9539
        %v9541 = vlaneseq
        %v9542 = vshrl.u32 %v9541, 7
        %v9543 = vsub.s32 %v9540, %v9542
        %v9544 = vrot.slane %v9536, %v9543
        %v9546 = vunpack.c.l.s4 1966171168
        %v9547 = vunpack.c.0.s8 %v9546
        %v9548 = vlaneseq
        %v9549 = vshrl.u32 %v9548, 7
        %v9550 = vsub.s32 %v9547, %v9549
        %v9551 = vrot.slane %v9537, %v9550
        %v9552 = vcombine.low %v8909, %v8923
        %v9554 = vunpack.c.l.s4 1966171168
        %v9555 = vunpack.c.0.s8 %v9554
        %v9556 = vlaneseq
        %v9557 = vshrl.u32 %v9556, 7
        %v9558 = vsub.s32 %v9555, %v9557
        %v9559 = vrot.slane %v9552, %v9558
        %v9561 = vunpack.c.l.s4 1966171168
        %v9562 = vunpack.c.0.s8 %v9561
        %v9563 = vlaneseq
        %v9564 = vshrl.u32 %v9563, 7
        %v9565 = vsub.s32 %v9562, %v9564
        %v9566 = vrot.slane %v8925, %v9565
        %v9567 = vcombine.low %v9559, %v9566
        %v9568 = vcombine.high %v9559, %v9566
        %v9570 = vunpack.c.l.s4 1966171168
        %v9571 = vunpack.c.0.s8 %v9570
        %v9572 = vlaneseq
        %v9573 = vshrl.u32 %v9572, 7
        %v9574 = vsub.s32 %v9571, %v9573
        %v9575 = vrot.slane %v9567, %v9574
        %v9577 = vunpack.c.l.s4 1966171168
        %v9578 = vunpack.c.0.s8 %v9577
        %v9579 = vlaneseq
        %v9580 = vshrl.u32 %v9579, 7
        %v9581 = vsub.s32 %v9578, %v9580
        %v9582 = vrot.slane %v9568, %v9581
        %v9583 = vcombine.low %v8927, %v8952
        %v9585 = vunpack.c.l.s4 1966171168
        %v9586 = vunpack.c.0.s8 %v9585
        %v9587 = vlaneseq
        %v9588 = vshrl.u32 %v9587, 7
        %v9589 = vsub.s32 %v9586, %v9588
        %v9590 = vrot.slane %v9583, %v9589
        %v9592 = vunpack.c.l.s4 1966171168
        %v9593 = vunpack.c.0.s8 %v9592
        %v9594 = vlaneseq
        %v9595 = vshrl.u32 %v9594, 7
        %v9596 = vsub.s32 %v9593, %v9595
        %v9597 = vrot.slane %v8966, %v9596
        %v9598 = vcombine.low %v9590, %v9597
        %v9599 = vcombine.high %v9590, %v9597
        %v9601 = vunpack.c.l.s4 1966171168
        %v9602 = vunpack.c.0.s8 %v9601
        %v9603 = vlaneseq
        %v9604 = vshrl.u32 %v9603, 7
        %v9605 = vsub.s32 %v9602, %v9604
        %v9606 = vrot.slane %v9598, %v9605
        %v9608 = vunpack.c.l.s4 1966171168
        %v9609 = vunpack.c.0.s8 %v9608
        %v9610 = vlaneseq
        %v9611 = vshrl.u32 %v9610, 7
        %v9612 = vsub.s32 %v9609, %v9611
        %v9613 = vrot.slane %v9599, %v9612
        %v9614 = vcombine.low %v8974, %v8976
        %v9616 = vunpack.c.l.s4 1966171168
        %v9617 = vunpack.c.0.s8 %v9616
        %v9618 = vlaneseq
        %v9619 = vshrl.u32 %v9618, 7
        %v9620 = vsub.s32 %v9617, %v9619
        %v9621 = vrot.slane %v9614, %v9620
        %v9623 = vunpack.c.l.s4 1966171168
        %v9624 = vunpack.c.0.s8 %v9623
        %v9625 = vlaneseq
        %v9626 = vshrl.u32 %v9625, 7
        %v9627 = vsub.s32 %v9624, %v9626
        %v9628 = vrot.slane %v8959, %v9627
        %v9629 = vcombine.low %v9621, %v9628
        %v9630 = vcombine.high %v9621, %v9628
        %v9632 = vunpack.c.l.s4 1966171168
        %v9633 = vunpack.c.0.s8 %v9632
        %v9634 = vlaneseq
        %v9635 = vshrl.u32 %v9634, 7
        %v9636 = vsub.s32 %v9633, %v9635
        %v9637 = vrot.slane %v9629, %v9636
        %v9639 = vunpack.c.l.s4 1966171168
        %v9640 = vunpack.c.0.s8 %v9639
        %v9641 = vlaneseq
        %v9642 = vshrl.u32 %v9641, 7
        %v9643 = vsub.s32 %v9640, %v9642
        %v9644 = vrot.slane %v9630, %v9643
        %v9645 = vcombine.low %v8973, %v8975
        %v9647 = vunpack.c.l.s4 1966171168
        %v9648 = vunpack.c.0.s8 %v9647
        %v9649 = vlaneseq
        %v9650 = vshrl.u32 %v9649, 7
        %v9651 = vsub.s32 %v9648, %v9650
        %v9652 = vrot.slane %v9645, %v9651
        %v9654 = vunpack.c.l.s4 1966171168
        %v9655 = vunpack.c.0.s8 %v9654
        %v9656 = vlaneseq
        %v9657 = vshrl.u32 %v9656, 7
        %v9658 = vsub.s32 %v9655, %v9657
        %v9659 = vrot.slane %v8977, %v9658
        %v9660 = vcombine.low %v9652, %v9659
        %v9661 = vcombine.high %v9652, %v9659
        %v9663 = vunpack.c.l.s4 1966171168
        %v9664 = vunpack.c.0.s8 %v9663
        %v9665 = vlaneseq
        %v9666 = vshrl.u32 %v9665, 7
        %v9667 = vsub.s32 %v9664, %v9666
        %v9668 = vrot.slane %v9660, %v9667
        %v9670 = vunpack.c.l.s4 1966171168
        %v9671 = vunpack.c.0.s8 %v9670
        %v9672 = vlaneseq
        %v9673 = vshrl.u32 %v9672, 7
        %v9674 = vsub.s32 %v9671, %v9673
        %v9675 = vrot.slane %v9661, %v9674
        %v9676 = vcombine.low %v9002, %v9016
        %v9678 = vunpack.c.l.s4 1966171168
        %v9679 = vunpack.c.0.s8 %v9678
        %v9680 = vlaneseq
        %v9681 = vshrl.u32 %v9680, 7
        %v9682 = vsub.s32 %v9679, %v9681
        %v9683 = vrot.slane %v9676, %v9682
        %v9685 = vunpack.c.l.s4 1966171168
        %v9686 = vunpack.c.0.s8 %v9685
        %v9687 = vlaneseq
        %v9688 = vshrl.u32 %v9687, 7
        %v9689 = vsub.s32 %v9686, %v9688
        %v9690 = vrot.slane %v9024, %v9689
        %v9691 = vcombine.low %v9683, %v9690
        %v9692 = vcombine.high %v9683, %v9690
        %v9694 = vunpack.c.l.s4 1966171168
        %v9695 = vunpack.c.0.s8 %v9694
        %v9696 = vlaneseq
        %v9697 = vshrl.u32 %v9696, 7
        %v9698 = vsub.s32 %v9695, %v9697
        %v9699 = vrot.slane %v9691, %v9698
        %v9701 = vunpack.c.l.s4 1966171168
        %v9702 = vunpack.c.0.s8 %v9701
        %v9703 = vlaneseq
        %v9704 = vshrl.u32 %v9703, 7
        %v9705 = vsub.s32 %v9702, %v9704
        %v9706 = vrot.slane %v9692, %v9705
        %v9707 = vcombine.low %v9026, %v9009
        %v9709 = vunpack.c.l.s4 1966171168
        %v9710 = vunpack.c.0.s8 %v9709
        %v9711 = vlaneseq
        %v9712 = vshrl.u32 %v9711, 7
        %v9713 = vsub.s32 %v9710, %v9712
        %v9714 = vrot.slane %v9707, %v9713
        %v9716 = vunpack.c.l.s4 1966171168
        %v9717 = vunpack.c.0.s8 %v9716
        %v9718 = vlaneseq
        %v9719 = vshrl.u32 %v9718, 7
        %v9720 = vsub.s32 %v9717, %v9719
        %v9721 = vrot.slane %v9023, %v9720
        %v9722 = vcombine.low %v9714, %v9721
        %v9723 = vcombine.high %v9714, %v9721
        %v9725 = vunpack.c.l.s4 1966171168
        %v9726 = vunpack.c.0.s8 %v9725
        %v9727 = vlaneseq
        %v9728 = vshrl.u32 %v9727, 7
        %v9729 = vsub.s32 %v9726, %v9728
        %v9730 = vrot.slane %v9722, %v9729
        %v9732 = vunpack.c.l.s4 1966171168
        %v9733 = vunpack.c.0.s8 %v9732
        %v9734 = vlaneseq
        %v9735 = vshrl.u32 %v9734, 7
        %v9736 = vsub.s32 %v9733, %v9735
        %v9737 = vrot.slane %v9723, %v9736
        %v9738 = vcombine.low %v9025, %v9027
        %v9740 = vunpack.c.l.s4 1966171168
        %v9741 = vunpack.c.0.s8 %v9740
        %v9742 = vlaneseq
        %v9743 = vshrl.u32 %v9742, 7
        %v9744 = vsub.s32 %v9741, %v9743
        %v9745 = vrot.slane %v9738, %v9744
        %v9747 = vunpack.c.l.s4 1966171168
        %v9748 = vunpack.c.0.s8 %v9747
        %v9749 = vlaneseq
        %v9750 = vshrl.u32 %v9749, 7
        %v9751 = vsub.s32 %v9748, %v9750
        %v9752 = vrot.slane %v9052, %v9751
        %v9753 = vcombine.low %v9745, %v9752
        %v9754 = vcombine.high %v9745, %v9752
        %v9756 = vunpack.c.l.s4 1966171168
        %v9757 = vunpack.c.0.s8 %v9756
        %v9758 = vlaneseq
        %v9759 = vshrl.u32 %v9758, 7
        %v9760 = vsub.s32 %v9757, %v9759
        %v9761 = vrot.slane %v9753, %v9760
        %v9763 = vunpack.c.l.s4 1966171168
        %v9764 = vunpack.c.0.s8 %v9763
        %v9765 = vlaneseq
        %v9766 = vshrl.u32 %v9765, 7
        %v9767 = vsub.s32 %v9764, %v9766
        %v9768 = vrot.slane %v9754, %v9767
        %v9769 = vcombine.low %v9066, %v9074
        %v9771 = vunpack.c.l.s4 1966171168
        %v9772 = vunpack.c.0.s8 %v9771
        %v9773 = vlaneseq
        %v9774 = vshrl.u32 %v9773, 7
        %v9775 = vsub.s32 %v9772, %v9774
        %v9776 = vrot.slane %v9769, %v9775
        %v9778 = vunpack.c.l.s4 1966171168
        %v9779 = vunpack.c.0.s8 %v9778
        %v9780 = vlaneseq
        %v9781 = vshrl.u32 %v9780, 7
        %v9782 = vsub.s32 %v9779, %v9781
        %v9783 = vrot.slane %v9076, %v9782
        %v9784 = vcombine.low %v9776, %v9783
        %v9785 = vcombine.high %v9776, %v9783
        %v9787 = vunpack.c.l.s4 1966171168
        %v9788 = vunpack.c.0.s8 %v9787
        %v9789 = vlaneseq
        %v9790 = vshrl.u32 %v9789, 7
        %v9791 = vsub.s32 %v9788, %v9790
        %v9792 = vrot.slane %v9784, %v9791
        %v9794 = vunpack.c.l.s4 1966171168
        %v9795 = vunpack.c.0.s8 %v9794
        %v9796 = vlaneseq
        %v9797 = vshrl.u32 %v9796, 7
        %v9798 = vsub.s32 %v9795, %v9797
        %v9799 = vrot.slane %v9785, %v9798
        %v9800 = vcombine.low %v9059, %v9073
        %v9802 = vunpack.c.l.s4 1966171168
        %v9803 = vunpack.c.0.s8 %v9802
        %v9804 = vlaneseq
        %v9805 = vshrl.u32 %v9804, 7
        %v9806 = vsub.s32 %v9803, %v9805
        %v9807 = vrot.slane %v9800, %v9806
        %v9809 = vunpack.c.l.s4 1966171168
        %v9810 = vunpack.c.0.s8 %v9809
        %v9811 = vlaneseq
        %v9812 = vshrl.u32 %v9811, 7
        %v9813 = vsub.s32 %v9810, %v9812
        %v9814 = vrot.slane %v9075, %v9813
        %v9815 = vcombine.low %v9807, %v9814
        %v9816 = vcombine.high %v9807, %v9814
        %v9818 = vunpack.c.l.s4 1966171168
        %v9819 = vunpack.c.0.s8 %v9818
        %v9820 = vlaneseq
        %v9821 = vshrl.u32 %v9820, 7
        %v9822 = vsub.s32 %v9819, %v9821
        %v9823 = vrot.slane %v9815, %v9822
        %v9825 = vunpack.c.l.s4 1966171168
        %v9826 = vunpack.c.0.s8 %v9825
        %v9827 = vlaneseq
        %v9828 = vshrl.u32 %v9827, 7
        %v9829 = vsub.s32 %v9826, %v9828
        %v9830 = vrot.slane %v9816, %v9829
        %v9831 = vcombine.low %v9077, %v9102
        %v9833 = vunpack.c.l.s4 1966171168
        %v9834 = vunpack.c.0.s8 %v9833
        %v9835 = vlaneseq
        %v9836 = vshrl.u32 %v9835, 7
        %v9837 = vsub.s32 %v9834, %v9836
        %v9838 = vrot.slane %v9831, %v9837
        %v9840 = vunpack.c.l.s4 1966171168
        %v9841 = vunpack.c.0.s8 %v9840
        %v9842 = vlaneseq
        %v9843 = vshrl.u32 %v9842, 7
        %v9844 = vsub.s32 %v9841, %v9843
        %v9845 = vrot.slane %v9116, %v9844
        %v9846 = vcombine.low %v9838, %v9845
        %v9847 = vcombine.high %v9838, %v9845
        %v9849 = vunpack.c.l.s4 1966171168
        %v9850 = vunpack.c.0.s8 %v9849
        %v9851 = vlaneseq
        %v9852 = vshrl.u32 %v9851, 7
        %v9853 = vsub.s32 %v9850, %v9852
        %v9854 = vrot.slane %v9846, %v9853
        %v9856 = vunpack.c.l.s4 1966171168
        %v9857 = vunpack.c.0.s8 %v9856
        %v9858 = vlaneseq
        %v9859 = vshrl.u32 %v9858, 7
        %v9860 = vsub.s32 %v9857, %v9859
        %v9861 = vrot.slane %v9847, %v9860
        %v9862 = vcombine.low %v9124, %v9126
        %v9864 = vunpack.c.l.s4 1966171168
        %v9865 = vunpack.c.0.s8 %v9864
        %v9866 = vlaneseq
        %v9867 = vshrl.u32 %v9866, 7
        %v9868 = vsub.s32 %v9865, %v9867
        %v9869 = vrot.slane %v9862, %v9868
        %v9871 = vunpack.c.l.s4 1966171168
        %v9872 = vunpack.c.0.s8 %v9871
        %v9873 = vlaneseq
        %v9874 = vshrl.u32 %v9873, 7
        %v9875 = vsub.s32 %v9872, %v9874
        %v9876 = vrot.slane %v9109, %v9875
        %v9877 = vcombine.low %v9869, %v9876
        %v9878 = vcombine.high %v9869, %v9876
        %v9880 = vunpack.c.l.s4 1966171168
        %v9881 = vunpack.c.0.s8 %v9880
        %v9882 = vlaneseq
        %v9883 = vshrl.u32 %v9882, 7
        %v9884 = vsub.s32 %v9881, %v9883
        %v9885 = vrot.slane %v9877, %v9884
        %v9887 = vunpack.c.l.s4 1966171168
        %v9888 = vunpack.c.0.s8 %v9887
        %v9889 = vlaneseq
        %v9890 = vshrl.u32 %v9889, 7
        %v9891 = vsub.s32 %v9888, %v9890
        %v9892 = vrot.slane %v9878, %v9891
        %v9893 = vcombine.low %v9123, %v9125
        %v9895 = vunpack.c.l.s4 1966171168
        %v9896 = vunpack.c.0.s8 %v9895
        %v9897 = vlaneseq
        %v9898 = vshrl.u32 %v9897, 7
        %v9899 = vsub.s32 %v9896, %v9898
        %v9900 = vrot.slane %v9893, %v9899
        %v9902 = vunpack.c.l.s4 1966171168
        %v9903 = vunpack.c.0.s8 %v9902
        %v9904 = vlaneseq
        %v9905 = vshrl.u32 %v9904, 7
        %v9906 = vsub.s32 %v9903, %v9905
        %v9907 = vrot.slane %v9127, %v9906
        %v9908 = vcombine.low %v9900, %v9907
        %v9909 = vcombine.high %v9900, %v9907
        %v9911 = vunpack.c.l.s4 1966171168
        %v9912 = vunpack.c.0.s8 %v9911
        %v9913 = vlaneseq
        %v9914 = vshrl.u32 %v9913, 7
        %v9915 = vsub.s32 %v9912, %v9914
        %v9916 = vrot.slane %v9908, %v9915
        %v9918 = vunpack.c.l.s4 1966171168
        %v9919 = vunpack.c.0.s8 %v9918
        %v9920 = vlaneseq
        %v9921 = vshrl.u32 %v9920, 7
        %v9922 = vsub.s32 %v9919, %v9921
        %v9923 = vrot.slane %v9909, %v9922
        %v9924 = vcombine.low %v9152, %v9166
        %v9926 = vunpack.c.l.s4 1966171168
        %v9927 = vunpack.c.0.s8 %v9926
        %v9928 = vlaneseq
        %v9929 = vshrl.u32 %v9928, 7
        %v9930 = vsub.s32 %v9927, %v9929
        %v9931 = vrot.slane %v9924, %v9930
        %v9933 = vunpack.c.l.s4 1966171168
        %v9934 = vunpack.c.0.s8 %v9933
        %v9935 = vlaneseq
        %v9936 = vshrl.u32 %v9935, 7
        %v9937 = vsub.s32 %v9934, %v9936
        %v9938 = vrot.slane %v9174, %v9937
        %v9939 = vcombine.low %v9931, %v9938
        %v9940 = vcombine.high %v9931, %v9938
        %v9942 = vunpack.c.l.s4 1966171168
        %v9943 = vunpack.c.0.s8 %v9942
        %v9944 = vlaneseq
        %v9945 = vshrl.u32 %v9944, 7
        %v9946 = vsub.s32 %v9943, %v9945
        %v9947 = vrot.slane %v9939, %v9946
        %v9949 = vunpack.c.l.s4 1966171168
        %v9950 = vunpack.c.0.s8 %v9949
        %v9951 = vlaneseq
        %v9952 = vshrl.u32 %v9951, 7
        %v9953 = vsub.s32 %v9950, %v9952
        %v9954 = vrot.slane %v9940, %v9953
        %v9955 = vcombine.low %v9176, %v9159
        %v9957 = vunpack.c.l.s4 1966171168
        %v9958 = vunpack.c.0.s8 %v9957
        %v9959 = vlaneseq
        %v9960 = vshrl.u32 %v9959, 7
        %v9961 = vsub.s32 %v9958, %v9960
        %v9962 = vrot.slane %v9955, %v9961
        %v9964 = vunpack.c.l.s4 1966171168
        %v9965 = vunpack.c.0.s8 %v9964
        %v9966 = vlaneseq
        %v9967 = vshrl.u32 %v9966, 7
        %v9968 = vsub.s32 %v9965, %v9967
        %v9969 = vrot.slane %v9173, %v9968
        %v9970 = vcombine.low %v9962, %v9969
        %v9971 = vcombine.high %v9962, %v9969
        %v9973 = vunpack.c.l.s4 1966171168
        %v9974 = vunpack.c.0.s8 %v9973
        %v9975 = vlaneseq
        %v9976 = vshrl.u32 %v9975, 7
        %v9977 = vsub.s32 %v9974, %v9976
        %v9978 = vrot.slane %v9970, %v9977
        %v9980 = vunpack.c.l.s4 1966171168
        %v9981 = vunpack.c.0.s8 %v9980
        %v9982 = vlaneseq
        %v9983 = vshrl.u32 %v9982, 7
        %v9984 = vsub.s32 %v9981, %v9983
        %v9985 = vrot.slane %v9971, %v9984
        %v9986 = vcombine.low %v9175, %v9177
        %v9988 = vunpack.c.l.s4 1966171168
        %v9989 = vunpack.c.0.s8 %v9988
        %v9990 = vlaneseq
        %v9991 = vshrl.u32 %v9990, 7
        %v9992 = vsub.s32 %v9989, %v9991
        %v9993 = vrot.slane %v9986, %v9992
        %v9995 = vunpack.c.l.s4 1966171168
        %v9996 = vunpack.c.0.s8 %v9995
        %v9997 = vlaneseq
        %v9998 = vshrl.u32 %v9997, 7
        %v9999 = vsub.s32 %v9996, %v9998
        %v10000 = vrot.slane %v9202, %v9999
        %v10001 = vcombine.low %v9993, %v10000
        %v10002 = vcombine.high %v9993, %v10000
        %v10004 = vunpack.c.l.s4 1966171168
        %v10005 = vunpack.c.0.s8 %v10004
        %v10006 = vlaneseq
        %v10007 = vshrl.u32 %v10006, 7
        %v10008 = vsub.s32 %v10005, %v10007
        %v10009 = vrot.slane %v10001, %v10008
        %v10011 = vunpack.c.l.s4 1966171168
        %v10012 = vunpack.c.0.s8 %v10011
        %v10013 = vlaneseq
        %v10014 = vshrl.u32 %v10013, 7
        %v10015 = vsub.s32 %v10012, %v10014
        %v10016 = vrot.slane %v10002, %v10015
        %v10017 = vcombine.low %v9216, %v9224
        %v10019 = vunpack.c.l.s4 1966171168
        %v10020 = vunpack.c.0.s8 %v10019
        %v10021 = vlaneseq
        %v10022 = vshrl.u32 %v10021, 7
        %v10023 = vsub.s32 %v10020, %v10022
        %v10024 = vrot.slane %v10017, %v10023
        %v10026 = vunpack.c.l.s4 1966171168
        %v10027 = vunpack.c.0.s8 %v10026
        %v10028 = vlaneseq
        %v10029 = vshrl.u32 %v10028, 7
        %v10030 = vsub.s32 %v10027, %v10029
        %v10031 = vrot.slane %v9226, %v10030
        %v10032 = vcombine.low %v10024, %v10031
        %v10033 = vcombine.high %v10024, %v10031
        %v10035 = vunpack.c.l.s4 1966171168
        %v10036 = vunpack.c.0.s8 %v10035
        %v10037 = vlaneseq
        %v10038 = vshrl.u32 %v10037, 7
        %v10039 = vsub.s32 %v10036, %v10038
        %v10040 = vrot.slane %v10032, %v10039
        %v10042 = vunpack.c.l.s4 1966171168
        %v10043 = vunpack.c.0.s8 %v10042
        %v10044 = vlaneseq
        %v10045 = vshrl.u32 %v10044, 7
        %v10046 = vsub.s32 %v10043, %v10045
        %v10047 = vrot.slane %v10033, %v10046
        %v10048 = vcombine.low %v9209, %v9223
        %v10050 = vunpack.c.l.s4 1966171168
        %v10051 = vunpack.c.0.s8 %v10050
        %v10052 = vlaneseq
        %v10053 = vshrl.u32 %v10052, 7
        %v10054 = vsub.s32 %v10051, %v10053
        %v10055 = vrot.slane %v10048, %v10054
        %v10057 = vunpack.c.l.s4 1966171168
        %v10058 = vunpack.c.0.s8 %v10057
        %v10059 = vlaneseq
        %v10060 = vshrl.u32 %v10059, 7
        %v10061 = vsub.s32 %v10058, %v10060
        %v10062 = vrot.slane %v9225, %v10061
        %v10063 = vcombine.low %v10055, %v10062
        %v10064 = vcombine.high %v10055, %v10062
        %v10066 = vunpack.c.l.s4 1966171168
        %v10067 = vunpack.c.0.s8 %v10066
        %v10068 = vlaneseq
        %v10069 = vshrl.u32 %v10068, 7
        %v10070 = vsub.s32 %v10067, %v10069
        %v10071 = vrot.slane %v10063, %v10070
        %v10073 = vunpack.c.l.s4 1966171168
        %v10074 = vunpack.c.0.s8 %v10073
        %v10075 = vlaneseq
        %v10076 = vshrl.u32 %v10075, 7
        %v10077 = vsub.s32 %v10074, %v10076
        %v10078 = vrot.slane %v10064, %v10077
        %v10079 = vcombine.low %v9227, %v9252
        %v10081 = vunpack.c.l.s4 1966171168
        %v10082 = vunpack.c.0.s8 %v10081
        %v10083 = vlaneseq
        %v10084 = vshrl.u32 %v10083, 7
        %v10085 = vsub.s32 %v10082, %v10084
        %v10086 = vrot.slane %v10079, %v10085
        %v10088 = vunpack.c.l.s4 1966171168
        %v10089 = vunpack.c.0.s8 %v10088
        %v10090 = vlaneseq
        %v10091 = vshrl.u32 %v10090, 7
        %v10092 = vsub.s32 %v10089, %v10091
        %v10093 = vrot.slane %v9266, %v10092
        %v10094 = vcombine.low %v10086, %v10093
        %v10095 = vcombine.high %v10086, %v10093
        %v10097 = vunpack.c.l.s4 1966171168
        %v10098 = vunpack.c.0.s8 %v10097
        %v10099 = vlaneseq
        %v10100 = vshrl.u32 %v10099, 7
        %v10101 = vsub.s32 %v10098, %v10100
        %v10102 = vrot.slane %v10094, %v10101
        %v10104 = vunpack.c.l.s4 1966171168
        %v10105 = vunpack.c.0.s8 %v10104
        %v10106 = vlaneseq
        %v10107 = vshrl.u32 %v10106, 7
        %v10108 = vsub.s32 %v10105, %v10107
        %v10109 = vrot.slane %v10095, %v10108
        %v10110 = vcombine.low %v9274, %v9276
        %v10112 = vunpack.c.l.s4 1966171168
        %v10113 = vunpack.c.0.s8 %v10112
        %v10114 = vlaneseq
        %v10115 = vshrl.u32 %v10114, 7
        %v10116 = vsub.s32 %v10113, %v10115
        %v10117 = vrot.slane %v10110, %v10116
        %v10119 = vunpack.c.l.s4 1966171168
        %v10120 = vunpack.c.0.s8 %v10119
        %v10121 = vlaneseq
        %v10122 = vshrl.u32 %v10121, 7
        %v10123 = vsub.s32 %v10120, %v10122
        %v10124 = vrot.slane %v9259, %v10123
        %v10125 = vcombine.low %v10117, %v10124
        %v10126 = vcombine.high %v10117, %v10124
        %v10128 = vunpack.c.l.s4 1966171168
        %v10129 = vunpack.c.0.s8 %v10128
        %v10130 = vlaneseq
        %v10131 = vshrl.u32 %v10130, 7
        %v10132 = vsub.s32 %v10129, %v10131
        %v10133 = vrot.slane %v10125, %v10132
        %v10135 = vunpack.c.l.s4 1966171168
        %v10136 = vunpack.c.0.s8 %v10135
        %v10137 = vlaneseq
        %v10138 = vshrl.u32 %v10137, 7
        %v10139 = vsub.s32 %v10136, %v10138
        %v10140 = vrot.slane %v10126, %v10139
        %v10141 = vcombine.low %v9273, %v9275
        %v10143 = vunpack.c.l.s4 1966171168
        %v10144 = vunpack.c.0.s8 %v10143
        %v10145 = vlaneseq
        %v10146 = vshrl.u32 %v10145, 7
        %v10147 = vsub.s32 %v10144, %v10146
        %v10148 = vrot.slane %v10141, %v10147
        %v10150 = vunpack.c.l.s4 1966171168
        %v10151 = vunpack.c.0.s8 %v10150
        %v10152 = vlaneseq
        %v10153 = vshrl.u32 %v10152, 7
        %v10154 = vsub.s32 %v10151, %v10153
        %v10155 = vrot.slane %v9277, %v10154
        %v10156 = vcombine.low %v10148, %v10155
        %v10157 = vcombine.high %v10148, %v10155
        %v10159 = vunpack.c.l.s4 1966171168
        %v10160 = vunpack.c.0.s8 %v10159
        %v10161 = vlaneseq
        %v10162 = vshrl.u32 %v10161, 7
        %v10163 = vsub.s32 %v10160, %v10162
        %v10164 = vrot.slane %v10156, %v10163
        %v10166 = vunpack.c.l.s4 1966171168
        %v10167 = vunpack.c.0.s8 %v10166
        %v10168 = vlaneseq
        %v10169 = vshrl.u32 %v10168, 7
        %v10170 = vsub.s32 %v10167, %v10169
        %v10171 = vrot.slane %v10157, %v10170
        %v10172 = vcombine.low %v9302, %v9316
        %v10174 = vunpack.c.l.s4 1966171168
        %v10175 = vunpack.c.0.s8 %v10174
        %v10176 = vlaneseq
        %v10177 = vshrl.u32 %v10176, 7
        %v10178 = vsub.s32 %v10175, %v10177
        %v10179 = vrot.slane %v10172, %v10178
        %v10181 = vunpack.c.l.s4 1966171168
        %v10182 = vunpack.c.0.s8 %v10181
        %v10183 = vlaneseq
        %v10184 = vshrl.u32 %v10183, 7
        %v10185 = vsub.s32 %v10182, %v10184
        %v10186 = vrot.slane %v9324, %v10185
        %v10187 = vcombine.low %v10179, %v10186
        %v10188 = vcombine.high %v10179, %v10186
        %v10190 = vunpack.c.l.s4 1966171168
        %v10191 = vunpack.c.0.s8 %v10190
        %v10192 = vlaneseq
        %v10193 = vshrl.u32 %v10192, 7
        %v10194 = vsub.s32 %v10191, %v10193
        %v10195 = vrot.slane %v10187, %v10194
        %v10197 = vunpack.c.l.s4 1966171168
        %v10198 = vunpack.c.0.s8 %v10197
        %v10199 = vlaneseq
        %v10200 = vshrl.u32 %v10199, 7
        %v10201 = vsub.s32 %v10198, %v10200
        %v10202 = vrot.slane %v10188, %v10201
        %v10203 = vcombine.low %v9326, %v9309
        %v10205 = vunpack.c.l.s4 1966171168
        %v10206 = vunpack.c.0.s8 %v10205
        %v10207 = vlaneseq
        %v10208 = vshrl.u32 %v10207, 7
        %v10209 = vsub.s32 %v10206, %v10208
        %v10210 = vrot.slane %v10203, %v10209
        %v10212 = vunpack.c.l.s4 1966171168
        %v10213 = vunpack.c.0.s8 %v10212
        %v10214 = vlaneseq
        %v10215 = vshrl.u32 %v10214, 7
        %v10216 = vsub.s32 %v10213, %v10215
        %v10217 = vrot.slane %v9323, %v10216
        %v10218 = vcombine.low %v10210, %v10217
        %v10219 = vcombine.high %v10210, %v10217
        %v10221 = vunpack.c.l.s4 1966171168
        %v10222 = vunpack.c.0.s8 %v10221
        %v10223 = vlaneseq
        %v10224 = vshrl.u32 %v10223, 7
        %v10225 = vsub.s32 %v10222, %v10224
        %v10226 = vrot.slane %v10218, %v10225
        %v10228 = vunpack.c.l.s4 1966171168
        %v10229 = vunpack.c.0.s8 %v10228
        %v10230 = vlaneseq
        %v10231 = vshrl.u32 %v10230, 7
        %v10232 = vsub.s32 %v10229, %v10231
        %v10233 = vrot.slane %v10219, %v10232
        %v10234 = vcombine.low %v9325, %v9327
        %v10236 = vunpack.c.l.s4 1966171168
        %v10237 = vunpack.c.0.s8 %v10236
        %v10238 = vlaneseq
        %v10239 = vshrl.u32 %v10238, 7
        %v10240 = vsub.s32 %v10237, %v10239
        %v10241 = vrot.slane %v10234, %v10240
        %v10243 = vunpack.c.l.s4 1966171168
        %v10244 = vunpack.c.0.s8 %v10243
        %v10245 = vlaneseq
        %v10246 = vshrl.u32 %v10245, 7
        %v10247 = vsub.s32 %v10244, %v10246
        %v10248 = vrot.slane %v9352, %v10247
        %v10249 = vcombine.low %v10241, %v10248
        %v10250 = vcombine.high %v10241, %v10248
        %v10252 = vunpack.c.l.s4 1966171168
        %v10253 = vunpack.c.0.s8 %v10252
        %v10254 = vlaneseq
        %v10255 = vshrl.u32 %v10254, 7
        %v10256 = vsub.s32 %v10253, %v10255
        %v10257 = vrot.slane %v10249, %v10256
        %v10259 = vunpack.c.l.s4 1966171168
        %v10260 = vunpack.c.0.s8 %v10259
        %v10261 = vlaneseq
        %v10262 = vshrl.u32 %v10261, 7
        %v10263 = vsub.s32 %v10260, %v10262
        %v10264 = vrot.slane %v10250, %v10263
        %v10265 = vcombine.low %v9366, %v9374
        %v10267 = vunpack.c.l.s4 1966171168
        %v10268 = vunpack.c.0.s8 %v10267
        %v10269 = vlaneseq
        %v10270 = vshrl.u32 %v10269, 7
        %v10271 = vsub.s32 %v10268, %v10270
        %v10272 = vrot.slane %v10265, %v10271
        %v10274 = vunpack.c.l.s4 1966171168
        %v10275 = vunpack.c.0.s8 %v10274
        %v10276 = vlaneseq
        %v10277 = vshrl.u32 %v10276, 7
        %v10278 = vsub.s32 %v10275, %v10277
        %v10279 = vrot.slane %v9376, %v10278
        %v10280 = vcombine.low %v10272, %v10279
        %v10281 = vcombine.high %v10272, %v10279
        %v10283 = vunpack.c.l.s4 1966171168
        %v10284 = vunpack.c.0.s8 %v10283
        %v10285 = vlaneseq
        %v10286 = vshrl.u32 %v10285, 7
        %v10287 = vsub.s32 %v10284, %v10286
        %v10288 = vrot.slane %v10280, %v10287
        %v10290 = vunpack.c.l.s4 1966171168
        %v10291 = vunpack.c.0.s8 %v10290
        %v10292 = vlaneseq
        %v10293 = vshrl.u32 %v10292, 7
        %v10294 = vsub.s32 %v10291, %v10293
        %v10295 = vrot.slane %v10281, %v10294
        %v10296 = vcombine.low %v9359, %v9373
        %v10298 = vunpack.c.l.s4 1966171168
        %v10299 = vunpack.c.0.s8 %v10298
        %v10300 = vlaneseq
        %v10301 = vshrl.u32 %v10300, 7
        %v10302 = vsub.s32 %v10299, %v10301
        %v10303 = vrot.slane %v10296, %v10302
        %v10305 = vunpack.c.l.s4 1966171168
        %v10306 = vunpack.c.0.s8 %v10305
        %v10307 = vlaneseq
        %v10308 = vshrl.u32 %v10307, 7
        %v10309 = vsub.s32 %v10306, %v10308
        %v10310 = vrot.slane %v9375, %v10309
        %v10311 = vcombine.low %v10303, %v10310
        %v10312 = vcombine.high %v10303, %v10310
        %v10314 = vunpack.c.l.s4 1966171168
        %v10315 = vunpack.c.0.s8 %v10314
        %v10316 = vlaneseq
        %v10317 = vshrl.u32 %v10316, 7
        %v10318 = vsub.s32 %v10315, %v10317
        %v10319 = vrot.slane %v10311, %v10318
        %v10321 = vunpack.c.l.s4 1966171168
        %v10322 = vunpack.c.0.s8 %v10321
        %v10323 = vlaneseq
        %v10324 = vshrl.u32 %v10323, 7
        %v10325 = vsub.s32 %v10322, %v10324
        %v10326 = vrot.slane %v10312, %v10325
        %v10327 = vcombine.low %v9377, %v9402
        %v10329 = vunpack.c.l.s4 1966171168
        %v10330 = vunpack.c.0.s8 %v10329
        %v10331 = vlaneseq
        %v10332 = vshrl.u32 %v10331, 7
        %v10333 = vsub.s32 %v10330, %v10332
        %v10334 = vrot.slane %v10327, %v10333
        %v10336 = vunpack.c.l.s4 1966171168
        %v10337 = vunpack.c.0.s8 %v10336
        %v10338 = vlaneseq
        %v10339 = vshrl.u32 %v10338, 7
        %v10340 = vsub.s32 %v10337, %v10339
        %v10341 = vrot.slane %v9416, %v10340
        %v10342 = vcombine.low %v10334, %v10341
        %v10343 = vcombine.high %v10334, %v10341
        %v10345 = vunpack.c.l.s4 1966171168
        %v10346 = vunpack.c.0.s8 %v10345
        %v10347 = vlaneseq
        %v10348 = vshrl.u32 %v10347, 7
        %v10349 = vsub.s32 %v10346, %v10348
        %v10350 = vrot.slane %v10342, %v10349
        %v10352 = vunpack.c.l.s4 1966171168
        %v10353 = vunpack.c.0.s8 %v10352
        %v10354 = vlaneseq
        %v10355 = vshrl.u32 %v10354, 7
        %v10356 = vsub.s32 %v10353, %v10355
        %v10357 = vrot.slane %v10343, %v10356
        %v10358 = vcombine.low %v9424, %v9426
        %v10360 = vunpack.c.l.s4 1966171168
        %v10361 = vunpack.c.0.s8 %v10360
        %v10362 = vlaneseq
        %v10363 = vshrl.u32 %v10362, 7
        %v10364 = vsub.s32 %v10361, %v10363
        %v10365 = vrot.slane %v10358, %v10364
        %v10367 = vunpack.c.l.s4 1966171168
        %v10368 = vunpack.c.0.s8 %v10367
        %v10369 = vlaneseq
        %v10370 = vshrl.u32 %v10369, 7
        %v10371 = vsub.s32 %v10368, %v10370
        %v10372 = vrot.slane %v9409, %v10371
        %v10373 = vcombine.low %v10365, %v10372
        %v10374 = vcombine.high %v10365, %v10372
        %v10376 = vunpack.c.l.s4 1966171168
        %v10377 = vunpack.c.0.s8 %v10376
        %v10378 = vlaneseq
        %v10379 = vshrl.u32 %v10378, 7
        %v10380 = vsub.s32 %v10377, %v10379
        %v10381 = vrot.slane %v10373, %v10380
        %v10383 = vunpack.c.l.s4 1966171168
        %v10384 = vunpack.c.0.s8 %v10383
        %v10385 = vlaneseq
        %v10386 = vshrl.u32 %v10385, 7
        %v10387 = vsub.s32 %v10384, %v10386
        %v10388 = vrot.slane %v10374, %v10387
        %v10389 = vcombine.low %v9423, %v9425
        %v10391 = vunpack.c.l.s4 1966171168
        %v10392 = vunpack.c.0.s8 %v10391
        %v10393 = vlaneseq
        %v10394 = vshrl.u32 %v10393, 7
        %v10395 = vsub.s32 %v10392, %v10394
        %v10396 = vrot.slane %v10389, %v10395
        %v10398 = vunpack.c.l.s4 1966171168
        %v10399 = vunpack.c.0.s8 %v10398
        %v10400 = vlaneseq
        %v10401 = vshrl.u32 %v10400, 7
        %v10402 = vsub.s32 %v10399, %v10401
        %v10403 = vrot.slane %v9427, %v10402
        %v10404 = vcombine.low %v10396, %v10403
        %v10405 = vcombine.high %v10396, %v10403
        %v10407 = vunpack.c.l.s4 1966171168
        %v10408 = vunpack.c.0.s8 %v10407
        %v10409 = vlaneseq
        %v10410 = vshrl.u32 %v10409, 7
        %v10411 = vsub.s32 %v10408, %v10410
        %v10412 = vrot.slane %v10404, %v10411
        %v10414 = vunpack.c.l.s4 1966171168
        %v10415 = vunpack.c.0.s8 %v10414
        %v10416 = vlaneseq
        %v10417 = vshrl.u32 %v10416, 7
        %v10418 = vsub.s32 %v10415, %v10417
        %v10419 = vrot.slane %v10405, %v10418
        %v10484 = vsel %vm7190, %v9451, -inf
        %v10485 = vrot.slane %v10484, 4
        %v10486 = vmax.f32 %v10484, %v10485
        %v10487 = vrot.slane %v10486, 2
        %v10488 = vmax.f32 %v10486, %v10487
        %v10489 = vrot.slane %v10488, 1
        %v10490 = vmax.f32 %v10488, %v10489
        %v10491 = vsel %vm7190, %v9458, -inf
        %v10492 = vrot.slane %v10491, 4
        %v10493 = vmax.f32 %v10491, %v10492
        %v10494 = vrot.slane %v10493, 2
        %v10495 = vmax.f32 %v10493, %v10494
        %v10496 = vrot.slane %v10495, 1
        %v10497 = vmax.f32 %v10495, %v10496
        %v10498 = vsel %vm7190, %v9482, -inf
        %v10499 = vrot.slane %v10498, 4
        %v10500 = vmax.f32 %v10498, %v10499
        %v10501 = vrot.slane %v10500, 2
        %v10502 = vmax.f32 %v10500, %v10501
        %v10503 = vrot.slane %v10502, 1
        %v10504 = vmax.f32 %v10502, %v10503
        %v10505 = vsel %vm7190, %v9489, -inf
        %v10506 = vrot.slane %v10505, 4
        %v10507 = vmax.f32 %v10505, %v10506
        %v10508 = vrot.slane %v10507, 2
        %v10509 = vmax.f32 %v10507, %v10508
        %v10510 = vrot.slane %v10509, 1
        %v10511 = vmax.f32 %v10509, %v10510
        %v10512 = vsel %vm7190, %v9513, -inf
        %v10513 = vrot.slane %v10512, 4
        %v10514 = vmax.f32 %v10512, %v10513
        %v10515 = vrot.slane %v10514, 2
        %v10516 = vmax.f32 %v10514, %v10515
        %v10517 = vrot.slane %v10516, 1
        %v10518 = vmax.f32 %v10516, %v10517
        %v10519 = vsel %vm7190, %v9520, -inf
        %v10520 = vrot.slane %v10519, 4
        %v10521 = vmax.f32 %v10519, %v10520
        %v10522 = vrot.slane %v10521, 2
        %v10523 = vmax.f32 %v10521, %v10522
        %v10524 = vrot.slane %v10523, 1
        %v10525 = vmax.f32 %v10523, %v10524
        %v10526 = vsel %vm7190, %v9544, -inf
        %v10527 = vrot.slane %v10526, 4
        %v10528 = vmax.f32 %v10526, %v10527
        %v10529 = vrot.slane %v10528, 2
        %v10530 = vmax.f32 %v10528, %v10529
        %v10531 = vrot.slane %v10530, 1
        %v10532 = vmax.f32 %v10530, %v10531
        %v10533 = vsel %vm7190, %v9551, -inf
        %v10534 = vrot.slane %v10533, 4
        %v10535 = vmax.f32 %v10533, %v10534
        %v10536 = vrot.slane %v10535, 2
        %v10537 = vmax.f32 %v10535, %v10536
        %v10538 = vrot.slane %v10537, 1
        %v10539 = vmax.f32 %v10537, %v10538
        %v10540 = vsel %vm7190, %v9575, -inf
        %v10541 = vrot.slane %v10540, 4
        %v10542 = vmax.f32 %v10540, %v10541
        %v10543 = vrot.slane %v10542, 2
        %v10544 = vmax.f32 %v10542, %v10543
        %v10545 = vrot.slane %v10544, 1
        %v10546 = vmax.f32 %v10544, %v10545
        %v10547 = vsel %vm7190, %v9582, -inf
        %v10548 = vrot.slane %v10547, 4
        %v10549 = vmax.f32 %v10547, %v10548
        %v10550 = vrot.slane %v10549, 2
        %v10551 = vmax.f32 %v10549, %v10550
        %v10552 = vrot.slane %v10551, 1
        %v10553 = vmax.f32 %v10551, %v10552
        %v10554 = vsel %vm7190, %v9606, -inf
        %v10555 = vrot.slane %v10554, 4
        %v10556 = vmax.f32 %v10554, %v10555
        %v10557 = vrot.slane %v10556, 2
        %v10558 = vmax.f32 %v10556, %v10557
        %v10559 = vrot.slane %v10558, 1
        %v10560 = vmax.f32 %v10558, %v10559
        %v10561 = vsel %vm7190, %v9613, -inf
        %v10562 = vrot.slane %v10561, 4
        %v10563 = vmax.f32 %v10561, %v10562
        %v10564 = vrot.slane %v10563, 2
        %v10565 = vmax.f32 %v10563, %v10564
        %v10566 = vrot.slane %v10565, 1
        %v10567 = vmax.f32 %v10565, %v10566
        %v10568 = vsel %vm7190, %v9637, -inf
        %v10569 = vrot.slane %v10568, 4
        %v10570 = vmax.f32 %v10568, %v10569
        %v10571 = vrot.slane %v10570, 2
        %v10572 = vmax.f32 %v10570, %v10571
        %v10573 = vrot.slane %v10572, 1
        %v10574 = vmax.f32 %v10572, %v10573
        %v10575 = vsel %vm7190, %v9644, -inf
        %v10576 = vrot.slane %v10575, 4
        %v10577 = vmax.f32 %v10575, %v10576
        %v10578 = vrot.slane %v10577, 2
        %v10579 = vmax.f32 %v10577, %v10578
        %v10580 = vrot.slane %v10579, 1
        %v10581 = vmax.f32 %v10579, %v10580
        %v10582 = vsel %vm7190, %v9668, -inf
        %v10583 = vrot.slane %v10582, 4
        %v10584 = vmax.f32 %v10582, %v10583
        %v10585 = vrot.slane %v10584, 2
        %v10586 = vmax.f32 %v10584, %v10585
        %v10587 = vrot.slane %v10586, 1
        %v10588 = vmax.f32 %v10586, %v10587
        %v10589 = vsel %vm7190, %v9675, -inf
        %v10590 = vrot.slane %v10589, 4
        %v10591 = vmax.f32 %v10589, %v10590
        %v10592 = vrot.slane %v10591, 2
        %v10593 = vmax.f32 %v10591, %v10592
        %v10594 = vrot.slane %v10593, 1
        %v10595 = vmax.f32 %v10593, %v10594
        %v10596 = vsel %vm7190, %v9699, -inf
        %v10597 = vrot.slane %v10596, 4
        %v10598 = vmax.f32 %v10596, %v10597
        %v10599 = vrot.slane %v10598, 2
        %v10600 = vmax.f32 %v10598, %v10599
        %v10601 = vrot.slane %v10600, 1
        %v10602 = vmax.f32 %v10600, %v10601
        %v10603 = vsel %vm7190, %v9706, -inf
        %v10604 = vrot.slane %v10603, 4
        %v10605 = vmax.f32 %v10603, %v10604
        %v10606 = vrot.slane %v10605, 2
        %v10607 = vmax.f32 %v10605, %v10606
        %v10608 = vrot.slane %v10607, 1
        %v10609 = vmax.f32 %v10607, %v10608
        %v10610 = vsel %vm7190, %v9730, -inf
        %v10611 = vrot.slane %v10610, 4
        %v10612 = vmax.f32 %v10610, %v10611
        %v10613 = vrot.slane %v10612, 2
        %v10614 = vmax.f32 %v10612, %v10613
        %v10615 = vrot.slane %v10614, 1
        %v10616 = vmax.f32 %v10614, %v10615
        %v10617 = vsel %vm7190, %v9737, -inf
        %v10618 = vrot.slane %v10617, 4
        %v10619 = vmax.f32 %v10617, %v10618
        %v10620 = vrot.slane %v10619, 2
        %v10621 = vmax.f32 %v10619, %v10620
        %v10622 = vrot.slane %v10621, 1
        %v10623 = vmax.f32 %v10621, %v10622
        %v10624 = vsel %vm7190, %v9761, -inf
        %v10625 = vrot.slane %v10624, 4
        %v10626 = vmax.f32 %v10624, %v10625
        %v10627 = vrot.slane %v10626, 2
        %v10628 = vmax.f32 %v10626, %v10627
        %v10629 = vrot.slane %v10628, 1
        %v10630 = vmax.f32 %v10628, %v10629
        %v10631 = vsel %vm7190, %v9768, -inf
        %v10632 = vrot.slane %v10631, 4
        %v10633 = vmax.f32 %v10631, %v10632
        %v10634 = vrot.slane %v10633, 2
        %v10635 = vmax.f32 %v10633, %v10634
        %v10636 = vrot.slane %v10635, 1
        %v10637 = vmax.f32 %v10635, %v10636
        %v10638 = vsel %vm7190, %v9792, -inf
        %v10639 = vrot.slane %v10638, 4
        %v10640 = vmax.f32 %v10638, %v10639
        %v10641 = vrot.slane %v10640, 2
        %v10642 = vmax.f32 %v10640, %v10641
        %v10643 = vrot.slane %v10642, 1
        %v10644 = vmax.f32 %v10642, %v10643
        %v10645 = vsel %vm7190, %v9799, -inf
        %v10646 = vrot.slane %v10645, 4
        %v10647 = vmax.f32 %v10645, %v10646
        %v10648 = vrot.slane %v10647, 2
        %v10649 = vmax.f32 %v10647, %v10648
        %v10650 = vrot.slane %v10649, 1
        %v10651 = vmax.f32 %v10649, %v10650
        %v10652 = vsel %vm7190, %v9823, -inf
        %v10653 = vrot.slane %v10652, 4
        %v10654 = vmax.f32 %v10652, %v10653
        %v10655 = vrot.slane %v10654, 2
        %v10656 = vmax.f32 %v10654, %v10655
        %v10657 = vrot.slane %v10656, 1
        %v10658 = vmax.f32 %v10656, %v10657
        %v10659 = vsel %vm7190, %v9830, -inf
        %v10660 = vrot.slane %v10659, 4
        %v10661 = vmax.f32 %v10659, %v10660
        %v10662 = vrot.slane %v10661, 2
        %v10663 = vmax.f32 %v10661, %v10662
        %v10664 = vrot.slane %v10663, 1
        %v10665 = vmax.f32 %v10663, %v10664
        %v10666 = vsel %vm7190, %v9854, -inf
        %v10667 = vrot.slane %v10666, 4
        %v10668 = vmax.f32 %v10666, %v10667
        %v10669 = vrot.slane %v10668, 2
        %v10670 = vmax.f32 %v10668, %v10669
        %v10671 = vrot.slane %v10670, 1
        %v10672 = vmax.f32 %v10670, %v10671
        %v10673 = vsel %vm7190, %v9861, -inf
        %v10674 = vrot.slane %v10673, 4
        %v10675 = vmax.f32 %v10673, %v10674
        %v10676 = vrot.slane %v10675, 2
        %v10677 = vmax.f32 %v10675, %v10676
        %v10678 = vrot.slane %v10677, 1
        %v10679 = vmax.f32 %v10677, %v10678
        %v10680 = vsel %vm7190, %v9885, -inf
        %v10681 = vrot.slane %v10680, 4
        %v10682 = vmax.f32 %v10680, %v10681
        %v10683 = vrot.slane %v10682, 2
        %v10684 = vmax.f32 %v10682, %v10683
        %v10685 = vrot.slane %v10684, 1
        %v10686 = vmax.f32 %v10684, %v10685
        %v10687 = vsel %vm7190, %v9892, -inf
        %v10688 = vrot.slane %v10687, 4
        %v10689 = vmax.f32 %v10687, %v10688
        %v10690 = vrot.slane %v10689, 2
        %v10691 = vmax.f32 %v10689, %v10690
        %v10692 = vrot.slane %v10691, 1
        %v10693 = vmax.f32 %v10691, %v10692
        %v10694 = vsel %vm7190, %v9916, -inf
        %v10695 = vrot.slane %v10694, 4
        %v10696 = vmax.f32 %v10694, %v10695
        %v10697 = vrot.slane %v10696, 2
        %v10698 = vmax.f32 %v10696, %v10697
        %v10699 = vrot.slane %v10698, 1
        %v10700 = vmax.f32 %v10698, %v10699
        %v10701 = vsel %vm7190, %v9923, -inf
        %v10702 = vrot.slane %v10701, 4
        %v10703 = vmax.f32 %v10701, %v10702
        %v10704 = vrot.slane %v10703, 2
        %v10705 = vmax.f32 %v10703, %v10704
        %v10706 = vrot.slane %v10705, 1
        %v10707 = vmax.f32 %v10705, %v10706
        %v10708 = vsel %vm7190, %v9947, -inf
        %v10709 = vrot.slane %v10708, 4
        %v10710 = vmax.f32 %v10708, %v10709
        %v10711 = vrot.slane %v10710, 2
        %v10712 = vmax.f32 %v10710, %v10711
        %v10713 = vrot.slane %v10712, 1
        %v10714 = vmax.f32 %v10712, %v10713
        %v10715 = vsel %vm7190, %v9954, -inf
        %v10716 = vrot.slane %v10715, 4
        %v10717 = vmax.f32 %v10715, %v10716
        %v10718 = vrot.slane %v10717, 2
        %v10719 = vmax.f32 %v10717, %v10718
        %v10720 = vrot.slane %v10719, 1
        %v10721 = vmax.f32 %v10719, %v10720
        %v10722 = vsel %vm7190, %v9978, -inf
        %v10723 = vrot.slane %v10722, 4
        %v10724 = vmax.f32 %v10722, %v10723
        %v10725 = vrot.slane %v10724, 2
        %v10726 = vmax.f32 %v10724, %v10725
        %v10727 = vrot.slane %v10726, 1
        %v10728 = vmax.f32 %v10726, %v10727
        %v10729 = vsel %vm7190, %v9985, -inf
        %v10730 = vrot.slane %v10729, 4
        %v10731 = vmax.f32 %v10729, %v10730
        %v10732 = vrot.slane %v10731, 2
        %v10733 = vmax.f32 %v10731, %v10732
        %v10734 = vrot.slane %v10733, 1
        %v10735 = vmax.f32 %v10733, %v10734
        %v10736 = vsel %vm7190, %v10009, -inf
        %v10737 = vrot.slane %v10736, 4
        %v10738 = vmax.f32 %v10736, %v10737
        %v10739 = vrot.slane %v10738, 2
        %v10740 = vmax.f32 %v10738, %v10739
        %v10741 = vrot.slane %v10740, 1
        %v10742 = vmax.f32 %v10740, %v10741
        %v10743 = vsel %vm7190, %v10016, -inf
        %v10744 = vrot.slane %v10743, 4
        %v10745 = vmax.f32 %v10743, %v10744
        %v10746 = vrot.slane %v10745, 2
        %v10747 = vmax.f32 %v10745, %v10746
        %v10748 = vrot.slane %v10747, 1
        %v10749 = vmax.f32 %v10747, %v10748
        %v10750 = vsel %vm7190, %v10040, -inf
        %v10751 = vrot.slane %v10750, 4
        %v10752 = vmax.f32 %v10750, %v10751
        %v10753 = vrot.slane %v10752, 2
        %v10754 = vmax.f32 %v10752, %v10753
        %v10755 = vrot.slane %v10754, 1
        %v10756 = vmax.f32 %v10754, %v10755
        %v10757 = vsel %vm7190, %v10047, -inf
        %v10758 = vrot.slane %v10757, 4
        %v10759 = vmax.f32 %v10757, %v10758
        %v10760 = vrot.slane %v10759, 2
        %v10761 = vmax.f32 %v10759, %v10760
        %v10762 = vrot.slane %v10761, 1
        %v10763 = vmax.f32 %v10761, %v10762
        %v10764 = vsel %vm7190, %v10071, -inf
        %v10765 = vrot.slane %v10764, 4
        %v10766 = vmax.f32 %v10764, %v10765
        %v10767 = vrot.slane %v10766, 2
        %v10768 = vmax.f32 %v10766, %v10767
        %v10769 = vrot.slane %v10768, 1
        %v10770 = vmax.f32 %v10768, %v10769
        %v10771 = vsel %vm7190, %v10078, -inf
        %v10772 = vrot.slane %v10771, 4
        %v10773 = vmax.f32 %v10771, %v10772
        %v10774 = vrot.slane %v10773, 2
        %v10775 = vmax.f32 %v10773, %v10774
        %v10776 = vrot.slane %v10775, 1
        %v10777 = vmax.f32 %v10775, %v10776
        %v10778 = vsel %vm7190, %v10102, -inf
        %v10779 = vrot.slane %v10778, 4
        %v10780 = vmax.f32 %v10778, %v10779
        %v10781 = vrot.slane %v10780, 2
        %v10782 = vmax.f32 %v10780, %v10781
        %v10783 = vrot.slane %v10782, 1
        %v10784 = vmax.f32 %v10782, %v10783
        %v10785 = vsel %vm7190, %v10109, -inf
        %v10786 = vrot.slane %v10785, 4
        %v10787 = vmax.f32 %v10785, %v10786
        %v10788 = vrot.slane %v10787, 2
        %v10789 = vmax.f32 %v10787, %v10788
        %v10790 = vrot.slane %v10789, 1
        %v10791 = vmax.f32 %v10789, %v10790
        %v10792 = vsel %vm7190, %v10133, -inf
        %v10793 = vrot.slane %v10792, 4
        %v10794 = vmax.f32 %v10792, %v10793
        %v10795 = vrot.slane %v10794, 2
        %v10796 = vmax.f32 %v10794, %v10795
        %v10797 = vrot.slane %v10796, 1
        %v10798 = vmax.f32 %v10796, %v10797
        %v10799 = vsel %vm7190, %v10140, -inf
        %v10800 = vrot.slane %v10799, 4
        %v10801 = vmax.f32 %v10799, %v10800
        %v10802 = vrot.slane %v10801, 2
        %v10803 = vmax.f32 %v10801, %v10802
        %v10804 = vrot.slane %v10803, 1
        %v10805 = vmax.f32 %v10803, %v10804
        %v10806 = vsel %vm7190, %v10164, -inf
        %v10807 = vrot.slane %v10806, 4
        %v10808 = vmax.f32 %v10806, %v10807
        %v10809 = vrot.slane %v10808, 2
        %v10810 = vmax.f32 %v10808, %v10809
        %v10811 = vrot.slane %v10810, 1
        %v10812 = vmax.f32 %v10810, %v10811
        %v10813 = vsel %vm7190, %v10171, -inf
        %v10814 = vrot.slane %v10813, 4
        %v10815 = vmax.f32 %v10813, %v10814
        %v10816 = vrot.slane %v10815, 2
        %v10817 = vmax.f32 %v10815, %v10816
        %v10818 = vrot.slane %v10817, 1
        %v10819 = vmax.f32 %v10817, %v10818
        %v10820 = vsel %vm7190, %v10195, -inf
        %v10821 = vrot.slane %v10820, 4
        %v10822 = vmax.f32 %v10820, %v10821
        %v10823 = vrot.slane %v10822, 2
        %v10824 = vmax.f32 %v10822, %v10823
        %v10825 = vrot.slane %v10824, 1
        %v10826 = vmax.f32 %v10824, %v10825
        %v10827 = vsel %vm7190, %v10202, -inf
        %v10828 = vrot.slane %v10827, 4
        %v10829 = vmax.f32 %v10827, %v10828
        %v10830 = vrot.slane %v10829, 2
        %v10831 = vmax.f32 %v10829, %v10830
        %v10832 = vrot.slane %v10831, 1
        %v10833 = vmax.f32 %v10831, %v10832
        %v10834 = vsel %vm7190, %v10226, -inf
        %v10835 = vrot.slane %v10834, 4
        %v10836 = vmax.f32 %v10834, %v10835
        %v10837 = vrot.slane %v10836, 2
        %v10838 = vmax.f32 %v10836, %v10837
        %v10839 = vrot.slane %v10838, 1
        %v10840 = vmax.f32 %v10838, %v10839
        %v10841 = vsel %vm7190, %v10233, -inf
        %v10842 = vrot.slane %v10841, 4
        %v10843 = vmax.f32 %v10841, %v10842
        %v10844 = vrot.slane %v10843, 2
        %v10845 = vmax.f32 %v10843, %v10844
        %v10846 = vrot.slane %v10845, 1
        %v10847 = vmax.f32 %v10845, %v10846
        %v10848 = vsel %vm7190, %v10257, -inf
        %v10849 = vrot.slane %v10848, 4
        %v10850 = vmax.f32 %v10848, %v10849
        %v10851 = vrot.slane %v10850, 2
        %v10852 = vmax.f32 %v10850, %v10851
        %v10853 = vrot.slane %v10852, 1
        %v10854 = vmax.f32 %v10852, %v10853
        %v10855 = vsel %vm7190, %v10264, -inf
        %v10856 = vrot.slane %v10855, 4
        %v10857 = vmax.f32 %v10855, %v10856
        %v10858 = vrot.slane %v10857, 2
        %v10859 = vmax.f32 %v10857, %v10858
        %v10860 = vrot.slane %v10859, 1
        %v10861 = vmax.f32 %v10859, %v10860
        %v10862 = vsel %vm7190, %v10288, -inf
        %v10863 = vrot.slane %v10862, 4
        %v10864 = vmax.f32 %v10862, %v10863
        %v10865 = vrot.slane %v10864, 2
        %v10866 = vmax.f32 %v10864, %v10865
        %v10867 = vrot.slane %v10866, 1
        %v10868 = vmax.f32 %v10866, %v10867
        %v10869 = vsel %vm7190, %v10295, -inf
        %v10870 = vrot.slane %v10869, 4
        %v10871 = vmax.f32 %v10869, %v10870
        %v10872 = vrot.slane %v10871, 2
        %v10873 = vmax.f32 %v10871, %v10872
        %v10874 = vrot.slane %v10873, 1
        %v10875 = vmax.f32 %v10873, %v10874
        %v10876 = vsel %vm7190, %v10319, -inf
        %v10877 = vrot.slane %v10876, 4
        %v10878 = vmax.f32 %v10876, %v10877
        %v10879 = vrot.slane %v10878, 2
        %v10880 = vmax.f32 %v10878, %v10879
        %v10881 = vrot.slane %v10880, 1
        %v10882 = vmax.f32 %v10880, %v10881
        %v10883 = vsel %vm7190, %v10326, -inf
        %v10884 = vrot.slane %v10883, 4
        %v10885 = vmax.f32 %v10883, %v10884
        %v10886 = vrot.slane %v10885, 2
        %v10887 = vmax.f32 %v10885, %v10886
        %v10888 = vrot.slane %v10887, 1
        %v10889 = vmax.f32 %v10887, %v10888
        %v10890 = vsel %vm7190, %v10350, -inf
        %v10891 = vrot.slane %v10890, 4
        %v10892 = vmax.f32 %v10890, %v10891
        %v10893 = vrot.slane %v10892, 2
        %v10894 = vmax.f32 %v10892, %v10893
        %v10895 = vrot.slane %v10894, 1
        %v10896 = vmax.f32 %v10894, %v10895
        %v10897 = vsel %vm7190, %v10357, -inf
        %v10898 = vrot.slane %v10897, 4
        %v10899 = vmax.f32 %v10897, %v10898
        %v10900 = vrot.slane %v10899, 2
        %v10901 = vmax.f32 %v10899, %v10900
        %v10902 = vrot.slane %v10901, 1
        %v10903 = vmax.f32 %v10901, %v10902
        %v10904 = vsel %vm7190, %v10381, -inf
        %v10905 = vrot.slane %v10904, 4
        %v10906 = vmax.f32 %v10904, %v10905
        %v10907 = vrot.slane %v10906, 2
        %v10908 = vmax.f32 %v10906, %v10907
        %v10909 = vrot.slane %v10908, 1
        %v10910 = vmax.f32 %v10908, %v10909
        %v10911 = vsel %vm7190, %v10388, -inf
        %v10912 = vrot.slane %v10911, 4
        %v10913 = vmax.f32 %v10911, %v10912
        %v10914 = vrot.slane %v10913, 2
        %v10915 = vmax.f32 %v10913, %v10914
        %v10916 = vrot.slane %v10915, 1
        %v10917 = vmax.f32 %v10915, %v10916
        %v10918 = vsel %vm7190, %v10412, -inf
        %v10919 = vrot.slane %v10918, 4
        %v10920 = vmax.f32 %v10918, %v10919
        %v10921 = vrot.slane %v10920, 2
        %v10922 = vmax.f32 %v10920, %v10921
        %v10923 = vrot.slane %v10922, 1
        %v10924 = vmax.f32 %v10922, %v10923
        %v10925 = vsel %vm7190, %v10419, -inf
        %v10926 = vrot.slane %v10925, 4
        %v10927 = vmax.f32 %v10925, %v10926
        %v10928 = vrot.slane %v10927, 2
        %v10929 = vmax.f32 %v10927, %v10928
        %v10930 = vrot.slane %v10929, 1
        %v10931 = vmax.f32 %v10929, %v10930
        %v10932 = vtanh.pop %v10490
        %v10933 = vtanh.pop %v10497
        %v10934 = vtanh.pop %v10504
        %v10935 = vtanh.pop %v10511
        %v10936 = vtanh.pop %v10518
        %v10937 = vtanh.pop %v10525
        %v10938 = vtanh.pop %v10532
        %v10939 = vtanh.pop %v10539
        %v10940 = vtanh.pop %v10546
        %v10941 = vtanh.pop %v10553
        %v10942 = vtanh.pop %v10560
        %v10943 = vtanh.pop %v10567
        %v10944 = vtanh.pop %v10574
        %v10945 = vtanh.pop %v10581
        %v10946 = vtanh.pop %v10588
        %v10947 = vtanh.pop %v10595
        %v10948 = vtanh.pop %v10602
        %v10949 = vtanh.pop %v10609
        %v10950 = vtanh.pop %v10616
        %v10951 = vtanh.pop %v10623
        %v10952 = vtanh.pop %v10630
        %v10953 = vtanh.pop %v10637
        %v10954 = vtanh.pop %v10644
        %v10955 = vtanh.pop %v10651
        %v10956 = vtanh.pop %v10658
        %v10957 = vtanh.pop %v10665
        %v10958 = vtanh.pop %v10672
        %v10959 = vtanh.pop %v10679
        %v10960 = vtanh.pop %v10686
        %v10961 = vtanh.pop %v10693
        %v10962 = vtanh.pop %v10700
        %v10963 = vtanh.pop %v10707
        %v10964 = vtanh.pop %v10714
        %v10965 = vtanh.pop %v10721
        %v10966 = vtanh.pop %v10728
        %v10967 = vtanh.pop %v10735
        %v10968 = vtanh.pop %v10742
        %v10969 = vtanh.pop %v10749
        %v10970 = vtanh.pop %v10756
        %v10971 = vtanh.pop %v10763
        %v10972 = vtanh.pop %v10770
        %v10973 = vtanh.pop %v10777
        %v10974 = vtanh.pop %v10784
        %v10975 = vtanh.pop %v10791
        %v10976 = vtanh.pop %v10798
        %v10977 = vtanh.pop %v10805
        %v10978 = vtanh.pop %v10812
        %v10979 = vtanh.pop %v10819
        %v10980 = vtanh.pop %v10826
        %v10981 = vtanh.pop %v10833
        %v10982 = vtanh.pop %v10840
        %v10983 = vtanh.pop %v10847
        %v10984 = vtanh.pop %v10854
        %v10985 = vtanh.pop %v10861
        %v10986 = vtanh.pop %v10868
        %v10987 = vtanh.pop %v10875
        %v10988 = vtanh.pop %v10882
        %v10989 = vtanh.pop %v10889
        %v10990 = vtanh.pop %v10896
        %v10991 = vtanh.pop %v10903
        %v10992 = vtanh.pop %v10910
        %v10993 = vtanh.pop %v10917
        %v10994 = vtanh.pop %v10924
        %v10995 = vtanh.pop %v10931
        %v10996 = vld [vmem:[#allocation10] sm:$0x3]
        %v10997 = vld [vmem:[#allocation9] sm:$0xff]
        %v10998 = vld [vmem:[#allocation9 + $0x8] sm:$0xff]
        %v10999 = vld [vmem:[#allocation9 + $0x10] sm:$0xff]
        %v11000 = vld [vmem:[#allocation9 + $0x18] sm:$0xff]
        %v11001 = vld [vmem:[#allocation9 + $0x20] sm:$0xff]
        %v11002 = vld [vmem:[#allocation9 + $0x28] sm:$0xff]
        %v11003 = vld [vmem:[#allocation9 + $0x30] sm:$0xff]
        %v11004 = vld [vmem:[#allocation9 + $0x38] sm:$0xff]
        %v11005 = vld [vmem:[#allocation9 + $0x40] sm:$0xff]
        %v11006 = vld [vmem:[#allocation9 + $0x48] sm:$0xff]
        %v11007 = vld [vmem:[#allocation9 + $0x50] sm:$0xff]
        %v11008 = vld [vmem:[#allocation9 + $0x58] sm:$0xff]
        %v11009 = vld [vmem:[#allocation9 + $0x60] sm:$0xff]
        %v11010 = vld [vmem:[#allocation9 + $0x68] sm:$0xff]
        %v11011 = vld [vmem:[#allocation9 + $0x70] sm:$0xff]
        %v11012 = vld [vmem:[#allocation9 + $0x78] sm:$0xff]
        %v11013 = vld [vmem:[#allocation9 + $0x80] sm:$0xff]
        %v11014 = vld [vmem:[#allocation9 + $0x88] sm:$0xff]
        %v11015 = vld [vmem:[#allocation9 + $0x90] sm:$0xff]
        %v11016 = vld [vmem:[#allocation9 + $0x98] sm:$0xff]
        %v11017 = vld [vmem:[#allocation9 + $0xa0] sm:$0xff]
        %v11018 = vld [vmem:[#allocation9 + $0xa8] sm:$0xff]
        %v11019 = vld [vmem:[#allocation9 + $0xb0] sm:$0xff]
        %v11020 = vld [vmem:[#allocation9 + $0xb8] sm:$0xff]
        %v11021 = vld [vmem:[#allocation9 + $0xc0] sm:$0xff]
        %v11022 = vld [vmem:[#allocation9 + $0xc8] sm:$0xff]
        %v11023 = vld [vmem:[#allocation9 + $0xd0] sm:$0xff]
        %v11024 = vld [vmem:[#allocation9 + $0xd8] sm:$0xff]
        %v11025 = vld [vmem:[#allocation9 + $0xe0] sm:$0xff]
        %v11026 = vld [vmem:[#allocation9 + $0xe8] sm:$0xff]
        %v11027 = vld [vmem:[#allocation9 + $0xf0] sm:$0xff]
        %v11028 = vld [vmem:[#allocation9 + $0xf8] sm:$0xff]
        %v11029 = vld [vmem:[#allocation9 + $0x100] sm:$0xff]
        %v11030 = vld [vmem:[#allocation9 + $0x108] sm:$0xff]
        %v11031 = vld [vmem:[#allocation9 + $0x110] sm:$0xff]
        %v11032 = vld [vmem:[#allocation9 + $0x118] sm:$0xff]
        %v11033 = vld [vmem:[#allocation9 + $0x120] sm:$0xff]
        %v11034 = vld [vmem:[#allocation9 + $0x128] sm:$0xff]
        %v11035 = vld [vmem:[#allocation9 + $0x130] sm:$0xff]
        %v11036 = vld [vmem:[#allocation9 + $0x138] sm:$0xff]
        %v11037 = vld [vmem:[#allocation9 + $0x140] sm:$0xff]
        %v11038 = vld [vmem:[#allocation9 + $0x148] sm:$0xff]
        %v11039 = vld [vmem:[#allocation9 + $0x150] sm:$0xff]
        %v11040 = vld [vmem:[#allocation9 + $0x158] sm:$0xff]
        %v11041 = vld [vmem:[#allocation9 + $0x160] sm:$0xff]
        %v11042 = vld [vmem:[#allocation9 + $0x168] sm:$0xff]
        %v11043 = vld [vmem:[#allocation9 + $0x170] sm:$0xff]
        %v11044 = vld [vmem:[#allocation9 + $0x178] sm:$0xff]
        %v11045 = vld [vmem:[#allocation9 + $0x180] sm:$0xff]
        %v11046 = vld [vmem:[#allocation9 + $0x188] sm:$0xff]
        %v11047 = vld [vmem:[#allocation9 + $0x190] sm:$0xff]
        %v11048 = vld [vmem:[#allocation9 + $0x198] sm:$0xff]
        %v11049 = vld [vmem:[#allocation9 + $0x1a0] sm:$0xff]
        %v11050 = vld [vmem:[#allocation9 + $0x1a8] sm:$0xff]
        %v11051 = vld [vmem:[#allocation9 + $0x1b0] sm:$0xff]
        %v11052 = vld [vmem:[#allocation9 + $0x1b8] sm:$0xff]
        %v11053 = vld [vmem:[#allocation9 + $0x1c0] sm:$0xff]
        %v11054 = vld [vmem:[#allocation9 + $0x1c8] sm:$0xff]
        %v11055 = vld [vmem:[#allocation9 + $0x1d0] sm:$0xff]
        %v11056 = vld [vmem:[#allocation9 + $0x1d8] sm:$0xff]
        %v11057 = vld [vmem:[#allocation9 + $0x1e0] sm:$0xff]
        %v11058 = vld [vmem:[#allocation9 + $0x1e8] sm:$0xff]
        %v11059 = vld [vmem:[#allocation9 + $0x1f0] sm:$0xff]
        %v11060 = vld [vmem:[#allocation9 + $0x1f8] sm:$0xff]
        %v11069 = vsel %vm8119, %v10948, %v10932
        %v11070 = vsel %vm8121, %v10964, %v11069
        %v11071 = vsel %vm8123, %v10980, %v11070
        %v11072 = vsel %vm8119, %v10949, %v10933
        %v11073 = vsel %vm8121, %v10965, %v11072
        %v11074 = vsel %vm8123, %v10981, %v11073
        %11077 = vmatprep.subr.mxu0 %v10998
        %11078 = vmatpush1.msra.mxu0 %v10997
        %11079 = vmatprep.subr.mxu0 %v11000
        %11080 = vmatpush1.msra.mxu0 %v10999
        %11081 = vmatprep.subr.mxu0 %v11002
        %11082 = vmatpush1.msra.mxu0 %v11001
        %11083 = vmatprep.subr.mxu0 %v11004
        %11084 = vmatpush1.msra.mxu0 %v11003
        %11085 = vmatprep.subr.mxu0 %v11006
        %11086 = vmatpush1.msra.mxu0 %v11005
        %11087 = vmatprep.subr.mxu0 %v11008
        %11088 = vmatpush1.msra.mxu0 %v11007
        %11089 = vmatprep.subr.mxu0 %v11010
        %11090 = vmatpush1.msra.mxu0 %v11009
        %11091 = vmatprep.subr.mxu0 %v11012
        %11092 = vmatpush1.msra.mxu0 %v11011
        %11093 = vmatprep.subr.mxu0 %v11014
        %11094 = vmatpush1.msra.mxu0 %v11013
        %11095 = vmatprep.subr.mxu0 %v11016
        %11096 = vmatpush1.msra.mxu0 %v11015
        %11097 = vmatprep.subr.mxu0 %v11018
        %11098 = vmatpush1.msra.mxu0 %v11017
        %11099 = vmatprep.subr.mxu0 %v11020
        %11100 = vmatpush1.msra.mxu0 %v11019
        %11101 = vmatprep.subr.mxu0 %v11022
        %11102 = vmatpush1.msra.mxu0 %v11021
        %11103 = vmatprep.subr.mxu0 %v11024
        %11104 = vmatpush1.msra.mxu0 %v11023
        %11105 = vmatprep.subr.mxu0 %v11026
        %11106 = vmatpush1.msra.mxu0 %v11025
        %11107 = vmatprep.subr.mxu0 %v11028
        %11108 = vmatpush1.msra.mxu0 %v11027
        %11109 = vmatprep.subr.mxu0 %v11030
        %11110 = vmatpush1.msra.mxu0 %v11029
        %11111 = vmatprep.subr.mxu0 %v11032
        %11112 = vmatpush1.msra.mxu0 %v11031
        %11113 = vmatprep.subr.mxu0 %v11034
        %11114 = vmatpush1.msra.mxu0 %v11033
        %11115 = vmatprep.subr.mxu0 %v11036
        %11116 = vmatpush1.msra.mxu0 %v11035
        %11117 = vmatprep.subr.mxu0 %v11038
        %11118 = vmatpush1.msra.mxu0 %v11037
        %11119 = vmatprep.subr.mxu0 %v11040
        %11120 = vmatpush1.msra.mxu0 %v11039
        %11121 = vmatprep.subr.mxu0 %v11042
        %11122 = vmatpush1.msra.mxu0 %v11041
        %11123 = vmatprep.subr.mxu0 %v11044
        %11124 = vmatpush1.msra.mxu0 %v11043
        %11125 = vmatprep.subr.mxu0 %v11046
        %11126 = vmatpush1.msra.mxu0 %v11045
        %11127 = vmatprep.subr.mxu0 %v11048
        %11128 = vmatpush1.msra.mxu0 %v11047
        %11129 = vmatprep.subr.mxu0 %v11050
        %11130 = vmatpush1.msra.mxu0 %v11049
        %11131 = vmatprep.subr.mxu0 %v11052
        %11132 = vmatpush1.msra.mxu0 %v11051
        %11133 = vmatprep.subr.mxu0 %v11054
        %11134 = vmatpush1.msra.mxu0 %v11053
        %11135 = vmatprep.subr.mxu0 %v11056
        %11136 = vmatpush1.msra.mxu0 %v11055
        %11137 = vmatprep.subr.mxu0 %v11058
        %11138 = vmatpush1.msra.mxu0 %v11057
        %11139 = vmatprep.subr.mxu0 %v11060
        %11140 = vmatpush1.msra.mxu0 %v11059
        %11141 = vmatprep.mubr.f32.mxu0 %v11074
        %11142 = vmatmul.mubr.f32.gmra.mrb[0].mxu0 %v11071
        %v11143 = vpop.f32.mrb[0].mxu0
        %v11144 = vadd.f32 0.0, %v11143
        %v11145 = vpop.f32.mrb[0].mxu0
        %v11146 = vadd.f32 0.0, %v11145
        %11147 = vdwg.mxu0
        %v11149 = vlaneseq
        %v11150 = vshrl.u32 %v11149, 7
        %v11151 = vsub.s32 0, %v11150
        %v11152 = vrot.slane %v10996, %v11151
        %v11153 = vlaneseq
        %v11154 = vshrl.u32 %v11153, 7
        %v11155 = vsub.s32 1, %v11154
        %v11156 = vrot.slane %v10996, %v11155
        %v11159 = vadd.f32 %v11152, %v11144
        %v11160 = vadd.f32 %v11156, %v11146
        %s11161 = scalar_lea.vmem [#allocation9], 512
        %v11162 = vld [vmem:[%s11161] sm:$0xff]
        %v11163 = vld [vmem:[%s11161 + $0x8] sm:$0xff]
        %v11164 = vld [vmem:[%s11161 + $0x10] sm:$0xff]
        %v11165 = vld [vmem:[%s11161 + $0x18] sm:$0xff]
        %v11166 = vld [vmem:[%s11161 + $0x20] sm:$0xff]
        %v11167 = vld [vmem:[%s11161 + $0x28] sm:$0xff]
        %v11168 = vld [vmem:[%s11161 + $0x30] sm:$0xff]
        %v11169 = vld [vmem:[%s11161 + $0x38] sm:$0xff]
        %v11170 = vld [vmem:[%s11161 + $0x40] sm:$0xff]
        %v11171 = vld [vmem:[%s11161 + $0x48] sm:$0xff]
        %v11172 = vld [vmem:[%s11161 + $0x50] sm:$0xff]
        %v11173 = vld [vmem:[%s11161 + $0x58] sm:$0xff]
        %v11174 = vld [vmem:[%s11161 + $0x60] sm:$0xff]
        %v11175 = vld [vmem:[%s11161 + $0x68] sm:$0xff]
        %v11176 = vld [vmem:[%s11161 + $0x70] sm:$0xff]
        %v11177 = vld [vmem:[%s11161 + $0x78] sm:$0xff]
        %v11178 = vld [vmem:[%s11161 + $0x80] sm:$0xff]
        %v11179 = vld [vmem:[%s11161 + $0x88] sm:$0xff]
        %v11180 = vld [vmem:[%s11161 + $0x90] sm:$0xff]
        %v11181 = vld [vmem:[%s11161 + $0x98] sm:$0xff]
        %v11182 = vld [vmem:[%s11161 + $0xa0] sm:$0xff]
        %v11183 = vld [vmem:[%s11161 + $0xa8] sm:$0xff]
        %v11184 = vld [vmem:[%s11161 + $0xb0] sm:$0xff]
        %v11185 = vld [vmem:[%s11161 + $0xb8] sm:$0xff]
        %v11186 = vld [vmem:[%s11161 + $0xc0] sm:$0xff]
        %v11187 = vld [vmem:[%s11161 + $0xc8] sm:$0xff]
        %v11188 = vld [vmem:[%s11161 + $0xd0] sm:$0xff]
        %v11189 = vld [vmem:[%s11161 + $0xd8] sm:$0xff]
        %v11190 = vld [vmem:[%s11161 + $0xe0] sm:$0xff]
        %v11191 = vld [vmem:[%s11161 + $0xe8] sm:$0xff]
        %v11192 = vld [vmem:[%s11161 + $0xf0] sm:$0xff]
        %v11193 = vld [vmem:[%s11161 + $0xf8] sm:$0xff]
        %v11194 = vld [vmem:[%s11161 + $0x100] sm:$0xff]
        %v11195 = vld [vmem:[%s11161 + $0x108] sm:$0xff]
        %v11196 = vld [vmem:[%s11161 + $0x110] sm:$0xff]
        %v11197 = vld [vmem:[%s11161 + $0x118] sm:$0xff]
        %v11198 = vld [vmem:[%s11161 + $0x120] sm:$0xff]
        %v11199 = vld [vmem:[%s11161 + $0x128] sm:$0xff]
        %v11200 = vld [vmem:[%s11161 + $0x130] sm:$0xff]
        %v11201 = vld [vmem:[%s11161 + $0x138] sm:$0xff]
        %v11202 = vld [vmem:[%s11161 + $0x140] sm:$0xff]
        %v11203 = vld [vmem:[%s11161 + $0x148] sm:$0xff]
        %v11204 = vld [vmem:[%s11161 + $0x150] sm:$0xff]
        %v11205 = vld [vmem:[%s11161 + $0x158] sm:$0xff]
        %v11206 = vld [vmem:[%s11161 + $0x160] sm:$0xff]
        %v11207 = vld [vmem:[%s11161 + $0x168] sm:$0xff]
        %v11208 = vld [vmem:[%s11161 + $0x170] sm:$0xff]
        %v11209 = vld [vmem:[%s11161 + $0x178] sm:$0xff]
        %v11210 = vld [vmem:[%s11161 + $0x180] sm:$0xff]
        %v11211 = vld [vmem:[%s11161 + $0x188] sm:$0xff]
        %v11212 = vld [vmem:[%s11161 + $0x190] sm:$0xff]
        %v11213 = vld [vmem:[%s11161 + $0x198] sm:$0xff]
        %v11214 = vld [vmem:[%s11161 + $0x1a0] sm:$0xff]
        %v11215 = vld [vmem:[%s11161 + $0x1a8] sm:$0xff]
        %v11216 = vld [vmem:[%s11161 + $0x1b0] sm:$0xff]
        %v11217 = vld [vmem:[%s11161 + $0x1b8] sm:$0xff]
        %v11218 = vld [vmem:[%s11161 + $0x1c0] sm:$0xff]
        %v11219 = vld [vmem:[%s11161 + $0x1c8] sm:$0xff]
        %v11220 = vld [vmem:[%s11161 + $0x1d0] sm:$0xff]
        %v11221 = vld [vmem:[%s11161 + $0x1d8] sm:$0xff]
        %v11222 = vld [vmem:[%s11161 + $0x1e0] sm:$0xff]
        %v11223 = vld [vmem:[%s11161 + $0x1e8] sm:$0xff]
        %v11224 = vld [vmem:[%s11161 + $0x1f0] sm:$0xff]
        %v11225 = vld [vmem:[%s11161 + $0x1f8] sm:$0xff]
        %v11234 = vsel %vm8119, %v10950, %v10934
        %v11235 = vsel %vm8121, %v10966, %v11234
        %v11236 = vsel %vm8123, %v10982, %v11235
        %v11237 = vsel %vm8119, %v10951, %v10935
        %v11238 = vsel %vm8121, %v10967, %v11237
        %v11239 = vsel %vm8123, %v10983, %v11238
        %11242 = vmatprep.subr.mxu0 %v11163
        %11243 = vmatpush1.msra.mxu0 %v11162
        %11244 = vmatprep.subr.mxu0 %v11165
        %11245 = vmatpush1.msra.mxu0 %v11164
        %11246 = vmatprep.subr.mxu0 %v11167
        %11247 = vmatpush1.msra.mxu0 %v11166
        %11248 = vmatprep.subr.mxu0 %v11169
        %11249 = vmatpush1.msra.mxu0 %v11168
        %11250 = vmatprep.subr.mxu0 %v11171
        %11251 = vmatpush1.msra.mxu0 %v11170
        %11252 = vmatprep.subr.mxu0 %v11173
        %11253 = vmatpush1.msra.mxu0 %v11172
        %11254 = vmatprep.subr.mxu0 %v11175
        %11255 = vmatpush1.msra.mxu0 %v11174
        %11256 = vmatprep.subr.mxu0 %v11177
        %11257 = vmatpush1.msra.mxu0 %v11176
        %11258 = vmatprep.subr.mxu0 %v11179
        %11259 = vmatpush1.msra.mxu0 %v11178
        %11260 = vmatprep.subr.mxu0 %v11181
        %11261 = vmatpush1.msra.mxu0 %v11180
        %11262 = vmatprep.subr.mxu0 %v11183
        %11263 = vmatpush1.msra.mxu0 %v11182
        %11264 = vmatprep.subr.mxu0 %v11185
        %11265 = vmatpush1.msra.mxu0 %v11184
        %11266 = vmatprep.subr.mxu0 %v11187
        %11267 = vmatpush1.msra.mxu0 %v11186
        %11268 = vmatprep.subr.mxu0 %v11189
        %11269 = vmatpush1.msra.mxu0 %v11188
        %11270 = vmatprep.subr.mxu0 %v11191
        %11271 = vmatpush1.msra.mxu0 %v11190
        %11272 = vmatprep.subr.mxu0 %v11193
        %11273 = vmatpush1.msra.mxu0 %v11192
        %11274 = vmatprep.subr.mxu0 %v11195
        %11275 = vmatpush1.msra.mxu0 %v11194
        %11276 = vmatprep.subr.mxu0 %v11197
        %11277 = vmatpush1.msra.mxu0 %v11196
        %11278 = vmatprep.subr.mxu0 %v11199
        %11279 = vmatpush1.msra.mxu0 %v11198
        %11280 = vmatprep.subr.mxu0 %v11201
        %11281 = vmatpush1.msra.mxu0 %v11200
        %11282 = vmatprep.subr.mxu0 %v11203
        %11283 = vmatpush1.msra.mxu0 %v11202
        %11284 = vmatprep.subr.mxu0 %v11205
        %11285 = vmatpush1.msra.mxu0 %v11204
        %11286 = vmatprep.subr.mxu0 %v11207
        %11287 = vmatpush1.msra.mxu0 %v11206
        %11288 = vmatprep.subr.mxu0 %v11209
        %11289 = vmatpush1.msra.mxu0 %v11208
        %11290 = vmatprep.subr.mxu0 %v11211
        %11291 = vmatpush1.msra.mxu0 %v11210
        %11292 = vmatprep.subr.mxu0 %v11213
        %11293 = vmatpush1.msra.mxu0 %v11212
        %11294 = vmatprep.subr.mxu0 %v11215
        %11295 = vmatpush1.msra.mxu0 %v11214
        %11296 = vmatprep.subr.mxu0 %v11217
        %11297 = vmatpush1.msra.mxu0 %v11216
        %11298 = vmatprep.subr.mxu0 %v11219
        %11299 = vmatpush1.msra.mxu0 %v11218
        %11300 = vmatprep.subr.mxu0 %v11221
        %11301 = vmatpush1.msra.mxu0 %v11220
        %11302 = vmatprep.subr.mxu0 %v11223
        %11303 = vmatpush1.msra.mxu0 %v11222
        %11304 = vmatprep.subr.mxu0 %v11225
        %11305 = vmatpush1.msra.mxu0 %v11224
        %11306 = vmatprep.mubr.f32.mxu0 %v11239
        %11307 = vmatmul.mubr.f32.gmra.mrb[0].mxu0 %v11236
        %v11308 = vpop.f32.mrb[0].mxu0
        %v11309 = vadd.f32 0.0, %v11308
        %v11310 = vpop.f32.mrb[0].mxu0
        %v11311 = vadd.f32 0.0, %v11310
        %11312 = vdwg.mxu0
        %v11313 = vadd.f32 %v11159, %v11309
        %v11314 = vadd.f32 %v11160, %v11311
        %s11315 = scalar_lea.vmem [#allocation9], 1024
        %v11316 = vld [vmem:[%s11315] sm:$0xff]
        %v11317 = vld [vmem:[%s11315 + $0x8] sm:$0xff]
        %v11318 = vld [vmem:[%s11315 + $0x10] sm:$0xff]
        %v11319 = vld [vmem:[%s11315 + $0x18] sm:$0xff]
        %v11320 = vld [vmem:[%s11315 + $0x20] sm:$0xff]
        %v11321 = vld [vmem:[%s11315 + $0x28] sm:$0xff]
        %v11322 = vld [vmem:[%s11315 + $0x30] sm:$0xff]
        %v11323 = vld [vmem:[%s11315 + $0x38] sm:$0xff]
        %v11324 = vld [vmem:[%s11315 + $0x40] sm:$0xff]
        %v11325 = vld [vmem:[%s11315 + $0x48] sm:$0xff]
        %v11326 = vld [vmem:[%s11315 + $0x50] sm:$0xff]
        %v11327 = vld [vmem:[%s11315 + $0x58] sm:$0xff]
        %v11328 = vld [vmem:[%s11315 + $0x60] sm:$0xff]
        %v11329 = vld [vmem:[%s11315 + $0x68] sm:$0xff]
        %v11330 = vld [vmem:[%s11315 + $0x70] sm:$0xff]
        %v11331 = vld [vmem:[%s11315 + $0x78] sm:$0xff]
        %v11332 = vld [vmem:[%s11315 + $0x80] sm:$0xff]
        %v11333 = vld [vmem:[%s11315 + $0x88] sm:$0xff]
        %v11334 = vld [vmem:[%s11315 + $0x90] sm:$0xff]
        %v11335 = vld [vmem:[%s11315 + $0x98] sm:$0xff]
        %v11336 = vld [vmem:[%s11315 + $0xa0] sm:$0xff]
        %v11337 = vld [vmem:[%s11315 + $0xa8] sm:$0xff]
        %v11338 = vld [vmem:[%s11315 + $0xb0] sm:$0xff]
        %v11339 = vld [vmem:[%s11315 + $0xb8] sm:$0xff]
        %v11340 = vld [vmem:[%s11315 + $0xc0] sm:$0xff]
        %v11341 = vld [vmem:[%s11315 + $0xc8] sm:$0xff]
        %v11342 = vld [vmem:[%s11315 + $0xd0] sm:$0xff]
        %v11343 = vld [vmem:[%s11315 + $0xd8] sm:$0xff]
        %v11344 = vld [vmem:[%s11315 + $0xe0] sm:$0xff]
        %v11345 = vld [vmem:[%s11315 + $0xe8] sm:$0xff]
        %v11346 = vld [vmem:[%s11315 + $0xf0] sm:$0xff]
        %v11347 = vld [vmem:[%s11315 + $0xf8] sm:$0xff]
        %v11348 = vld [vmem:[%s11315 + $0x100] sm:$0xff]
        %v11349 = vld [vmem:[%s11315 + $0x108] sm:$0xff]
        %v11350 = vld [vmem:[%s11315 + $0x110] sm:$0xff]
        %v11351 = vld [vmem:[%s11315 + $0x118] sm:$0xff]
        %v11352 = vld [vmem:[%s11315 + $0x120] sm:$0xff]
        %v11353 = vld [vmem:[%s11315 + $0x128] sm:$0xff]
        %v11354 = vld [vmem:[%s11315 + $0x130] sm:$0xff]
        %v11355 = vld [vmem:[%s11315 + $0x138] sm:$0xff]
        %v11356 = vld [vmem:[%s11315 + $0x140] sm:$0xff]
        %v11357 = vld [vmem:[%s11315 + $0x148] sm:$0xff]
        %v11358 = vld [vmem:[%s11315 + $0x150] sm:$0xff]
        %v11359 = vld [vmem:[%s11315 + $0x158] sm:$0xff]
        %v11360 = vld [vmem:[%s11315 + $0x160] sm:$0xff]
        %v11361 = vld [vmem:[%s11315 + $0x168] sm:$0xff]
        %v11362 = vld [vmem:[%s11315 + $0x170] sm:$0xff]
        %v11363 = vld [vmem:[%s11315 + $0x178] sm:$0xff]
        %v11364 = vld [vmem:[%s11315 + $0x180] sm:$0xff]
        %v11365 = vld [vmem:[%s11315 + $0x188] sm:$0xff]
        %v11366 = vld [vmem:[%s11315 + $0x190] sm:$0xff]
        %v11367 = vld [vmem:[%s11315 + $0x198] sm:$0xff]
        %v11368 = vld [vmem:[%s11315 + $0x1a0] sm:$0xff]
        %v11369 = vld [vmem:[%s11315 + $0x1a8] sm:$0xff]
        %v11370 = vld [vmem:[%s11315 + $0x1b0] sm:$0xff]
        %v11371 = vld [vmem:[%s11315 + $0x1b8] sm:$0xff]
        %v11372 = vld [vmem:[%s11315 + $0x1c0] sm:$0xff]
        %v11373 = vld [vmem:[%s11315 + $0x1c8] sm:$0xff]
        %v11374 = vld [vmem:[%s11315 + $0x1d0] sm:$0xff]
        %v11375 = vld [vmem:[%s11315 + $0x1d8] sm:$0xff]
        %v11376 = vld [vmem:[%s11315 + $0x1e0] sm:$0xff]
        %v11377 = vld [vmem:[%s11315 + $0x1e8] sm:$0xff]
        %v11378 = vld [vmem:[%s11315 + $0x1f0] sm:$0xff]
        %v11379 = vld [vmem:[%s11315 + $0x1f8] sm:$0xff]
        %v11388 = vsel %vm8119, %v10952, %v10936
        %v11389 = vsel %vm8121, %v10968, %v11388
        %v11390 = vsel %vm8123, %v10984, %v11389
        %v11391 = vsel %vm8119, %v10953, %v10937
        %v11392 = vsel %vm8121, %v10969, %v11391
        %v11393 = vsel %vm8123, %v10985, %v11392
        %11396 = vmatprep.subr.mxu0 %v11317
        %11397 = vmatpush1.msra.mxu0 %v11316
        %11398 = vmatprep.subr.mxu0 %v11319
        %11399 = vmatpush1.msra.mxu0 %v11318
        %11400 = vmatprep.subr.mxu0 %v11321
        %11401 = vmatpush1.msra.mxu0 %v11320
        %11402 = vmatprep.subr.mxu0 %v11323
        %11403 = vmatpush1.msra.mxu0 %v11322
        %11404 = vmatprep.subr.mxu0 %v11325
        %11405 = vmatpush1.msra.mxu0 %v11324
        %11406 = vmatprep.subr.mxu0 %v11327
        %11407 = vmatpush1.msra.mxu0 %v11326
        %11408 = vmatprep.subr.mxu0 %v11329
        %11409 = vmatpush1.msra.mxu0 %v11328
        %11410 = vmatprep.subr.mxu0 %v11331
        %11411 = vmatpush1.msra.mxu0 %v11330
        %11412 = vmatprep.subr.mxu0 %v11333
        %11413 = vmatpush1.msra.mxu0 %v11332
        %11414 = vmatprep.subr.mxu0 %v11335
        %11415 = vmatpush1.msra.mxu0 %v11334
        %11416 = vmatprep.subr.mxu0 %v11337
        %11417 = vmatpush1.msra.mxu0 %v11336
        %11418 = vmatprep.subr.mxu0 %v11339
        %11419 = vmatpush1.msra.mxu0 %v11338
        %11420 = vmatprep.subr.mxu0 %v11341
        %11421 = vmatpush1.msra.mxu0 %v11340
        %11422 = vmatprep.subr.mxu0 %v11343
        %11423 = vmatpush1.msra.mxu0 %v11342
        %11424 = vmatprep.subr.mxu0 %v11345
        %11425 = vmatpush1.msra.mxu0 %v11344
        %11426 = vmatprep.subr.mxu0 %v11347
        %11427 = vmatpush1.msra.mxu0 %v11346
        %11428 = vmatprep.subr.mxu0 %v11349
        %11429 = vmatpush1.msra.mxu0 %v11348
        %11430 = vmatprep.subr.mxu0 %v11351
        %11431 = vmatpush1.msra.mxu0 %v11350
        %11432 = vmatprep.subr.mxu0 %v11353
        %11433 = vmatpush1.msra.mxu0 %v11352
        %11434 = vmatprep.subr.mxu0 %v11355
        %11435 = vmatpush1.msra.mxu0 %v11354
        %11436 = vmatprep.subr.mxu0 %v11357
        %11437 = vmatpush1.msra.mxu0 %v11356
        %11438 = vmatprep.subr.mxu0 %v11359
        %11439 = vmatpush1.msra.mxu0 %v11358
        %11440 = vmatprep.subr.mxu0 %v11361
        %11441 = vmatpush1.msra.mxu0 %v11360
        %11442 = vmatprep.subr.mxu0 %v11363
        %11443 = vmatpush1.msra.mxu0 %v11362
        %11444 = vmatprep.subr.mxu0 %v11365
        %11445 = vmatpush1.msra.mxu0 %v11364
        %11446 = vmatprep.subr.mxu0 %v11367
        %11447 = vmatpush1.msra.mxu0 %v11366
        %11448 = vmatprep.subr.mxu0 %v11369
        %11449 = vmatpush1.msra.mxu0 %v11368
        %11450 = vmatprep.subr.mxu0 %v11371
        %11451 = vmatpush1.msra.mxu0 %v11370
        %11452 = vmatprep.subr.mxu0 %v11373
        %11453 = vmatpush1.msra.mxu0 %v11372
        %11454 = vmatprep.subr.mxu0 %v11375
        %11455 = vmatpush1.msra.mxu0 %v11374
        %11456 = vmatprep.subr.mxu0 %v11377
        %11457 = vmatpush1.msra.mxu0 %v11376
        %11458 = vmatprep.subr.mxu0 %v11379
        %11459 = vmatpush1.msra.mxu0 %v11378
        %11460 = vmatprep.mubr.f32.mxu0 %v11393
        %11461 = vmatmul.mubr.f32.gmra.mrb[0].mxu0 %v11390
        %v11462 = vpop.f32.mrb[0].mxu0
        %v11463 = vadd.f32 0.0, %v11462
        %v11464 = vpop.f32.mrb[0].mxu0
        %v11465 = vadd.f32 0.0, %v11464
        %11466 = vdwg.mxu0
        %v11467 = vadd.f32 %v11313, %v11463
        %v11468 = vadd.f32 %v11314, %v11465
        %s11469 = scalar_lea.vmem [#allocation9], 1536
        %v11470 = vld [vmem:[%s11469] sm:$0xff]
        %v11471 = vld [vmem:[%s11469 + $0x8] sm:$0xff]
        %v11472 = vld [vmem:[%s11469 + $0x10] sm:$0xff]
        %v11473 = vld [vmem:[%s11469 + $0x18] sm:$0xff]
        %v11474 = vld [vmem:[%s11469 + $0x20] sm:$0xff]
        %v11475 = vld [vmem:[%s11469 + $0x28] sm:$0xff]
        %v11476 = vld [vmem:[%s11469 + $0x30] sm:$0xff]
        %v11477 = vld [vmem:[%s11469 + $0x38] sm:$0xff]
        %v11478 = vld [vmem:[%s11469 + $0x40] sm:$0xff]
        %v11479 = vld [vmem:[%s11469 + $0x48] sm:$0xff]
        %v11480 = vld [vmem:[%s11469 + $0x50] sm:$0xff]
        %v11481 = vld [vmem:[%s11469 + $0x58] sm:$0xff]
        %v11482 = vld [vmem:[%s11469 + $0x60] sm:$0xff]
        %v11483 = vld [vmem:[%s11469 + $0x68] sm:$0xff]
        %v11484 = vld [vmem:[%s11469 + $0x70] sm:$0xff]
        %v11485 = vld [vmem:[%s11469 + $0x78] sm:$0xff]
        %v11486 = vld [vmem:[%s11469 + $0x80] sm:$0xff]
        %v11487 = vld [vmem:[%s11469 + $0x88] sm:$0xff]
        %v11488 = vld [vmem:[%s11469 + $0x90] sm:$0xff]
        %v11489 = vld [vmem:[%s11469 + $0x98] sm:$0xff]
        %v11490 = vld [vmem:[%s11469 + $0xa0] sm:$0xff]
        %v11491 = vld [vmem:[%s11469 + $0xa8] sm:$0xff]
        %v11492 = vld [vmem:[%s11469 + $0xb0] sm:$0xff]
        %v11493 = vld [vmem:[%s11469 + $0xb8] sm:$0xff]
        %v11494 = vld [vmem:[%s11469 + $0xc0] sm:$0xff]
        %v11495 = vld [vmem:[%s11469 + $0xc8] sm:$0xff]
        %v11496 = vld [vmem:[%s11469 + $0xd0] sm:$0xff]
        %v11497 = vld [vmem:[%s11469 + $0xd8] sm:$0xff]
        %v11498 = vld [vmem:[%s11469 + $0xe0] sm:$0xff]
        %v11499 = vld [vmem:[%s11469 + $0xe8] sm:$0xff]
        %v11500 = vld [vmem:[%s11469 + $0xf0] sm:$0xff]
        %v11501 = vld [vmem:[%s11469 + $0xf8] sm:$0xff]
        %v11502 = vld [vmem:[%s11469 + $0x100] sm:$0xff]
        %v11503 = vld [vmem:[%s11469 + $0x108] sm:$0xff]
        %v11504 = vld [vmem:[%s11469 + $0x110] sm:$0xff]
        %v11505 = vld [vmem:[%s11469 + $0x118] sm:$0xff]
        %v11506 = vld [vmem:[%s11469 + $0x120] sm:$0xff]
        %v11507 = vld [vmem:[%s11469 + $0x128] sm:$0xff]
        %v11508 = vld [vmem:[%s11469 + $0x130] sm:$0xff]
        %v11509 = vld [vmem:[%s11469 + $0x138] sm:$0xff]
        %v11510 = vld [vmem:[%s11469 + $0x140] sm:$0xff]
        %v11511 = vld [vmem:[%s11469 + $0x148] sm:$0xff]
        %v11512 = vld [vmem:[%s11469 + $0x150] sm:$0xff]
        %v11513 = vld [vmem:[%s11469 + $0x158] sm:$0xff]
        %v11514 = vld [vmem:[%s11469 + $0x160] sm:$0xff]
        %v11515 = vld [vmem:[%s11469 + $0x168] sm:$0xff]
        %v11516 = vld [vmem:[%s11469 + $0x170] sm:$0xff]
        %v11517 = vld [vmem:[%s11469 + $0x178] sm:$0xff]
        %v11518 = vld [vmem:[%s11469 + $0x180] sm:$0xff]
        %v11519 = vld [vmem:[%s11469 + $0x188] sm:$0xff]
        %v11520 = vld [vmem:[%s11469 + $0x190] sm:$0xff]
        %v11521 = vld [vmem:[%s11469 + $0x198] sm:$0xff]
        %v11522 = vld [vmem:[%s11469 + $0x1a0] sm:$0xff]
        %v11523 = vld [vmem:[%s11469 + $0x1a8] sm:$0xff]
        %v11524 = vld [vmem:[%s11469 + $0x1b0] sm:$0xff]
        %v11525 = vld [vmem:[%s11469 + $0x1b8] sm:$0xff]
        %v11526 = vld [vmem:[%s11469 + $0x1c0] sm:$0xff]
        %v11527 = vld [vmem:[%s11469 + $0x1c8] sm:$0xff]
        %v11528 = vld [vmem:[%s11469 + $0x1d0] sm:$0xff]
        %v11529 = vld [vmem:[%s11469 + $0x1d8] sm:$0xff]
        %v11530 = vld [vmem:[%s11469 + $0x1e0] sm:$0xff]
        %v11531 = vld [vmem:[%s11469 + $0x1e8] sm:$0xff]
        %v11532 = vld [vmem:[%s11469 + $0x1f0] sm:$0xff]
        %v11533 = vld [vmem:[%s11469 + $0x1f8] sm:$0xff]
        %v11542 = vsel %vm8119, %v10954, %v10938
        %v11543 = vsel %vm8121, %v10970, %v11542
        %v11544 = vsel %vm8123, %v10986, %v11543
        %v11545 = vsel %vm8119, %v10955, %v10939
        %v11546 = vsel %vm8121, %v10971, %v11545
        %v11547 = vsel %vm8123, %v10987, %v11546
        %11550 = vmatprep.subr.mxu0 %v11471
        %11551 = vmatpush1.msra.mxu0 %v11470
        %11552 = vmatprep.subr.mxu0 %v11473
        %11553 = vmatpush1.msra.mxu0 %v11472
        %11554 = vmatprep.subr.mxu0 %v11475
        %11555 = vmatpush1.msra.mxu0 %v11474
        %11556 = vmatprep.subr.mxu0 %v11477
        %11557 = vmatpush1.msra.mxu0 %v11476
        %11558 = vmatprep.subr.mxu0 %v11479
        %11559 = vmatpush1.msra.mxu0 %v11478
        %11560 = vmatprep.subr.mxu0 %v11481
        %11561 = vmatpush1.msra.mxu0 %v11480
        %11562 = vmatprep.subr.mxu0 %v11483
        %11563 = vmatpush1.msra.mxu0 %v11482
        %11564 = vmatprep.subr.mxu0 %v11485
        %11565 = vmatpush1.msra.mxu0 %v11484
        %11566 = vmatprep.subr.mxu0 %v11487
        %11567 = vmatpush1.msra.mxu0 %v11486
        %11568 = vmatprep.subr.mxu0 %v11489
        %11569 = vmatpush1.msra.mxu0 %v11488
        %11570 = vmatprep.subr.mxu0 %v11491
        %11571 = vmatpush1.msra.mxu0 %v11490
        %11572 = vmatprep.subr.mxu0 %v11493
        %11573 = vmatpush1.msra.mxu0 %v11492
        %11574 = vmatprep.subr.mxu0 %v11495
        %11575 = vmatpush1.msra.mxu0 %v11494
        %11576 = vmatprep.subr.mxu0 %v11497
        %11577 = vmatpush1.msra.mxu0 %v11496
        %11578 = vmatprep.subr.mxu0 %v11499
        %11579 = vmatpush1.msra.mxu0 %v11498
        %11580 = vmatprep.subr.mxu0 %v11501
        %11581 = vmatpush1.msra.mxu0 %v11500
        %11582 = vmatprep.subr.mxu0 %v11503
        %11583 = vmatpush1.msra.mxu0 %v11502
        %11584 = vmatprep.subr.mxu0 %v11505
        %11585 = vmatpush1.msra.mxu0 %v11504
        %11586 = vmatprep.subr.mxu0 %v11507
        %11587 = vmatpush1.msra.mxu0 %v11506
        %11588 = vmatprep.subr.mxu0 %v11509
        %11589 = vmatpush1.msra.mxu0 %v11508
        %11590 = vmatprep.subr.mxu0 %v11511
        %11591 = vmatpush1.msra.mxu0 %v11510
        %11592 = vmatprep.subr.mxu0 %v11513
        %11593 = vmatpush1.msra.mxu0 %v11512
        %11594 = vmatprep.subr.mxu0 %v11515
        %11595 = vmatpush1.msra.mxu0 %v11514
        %11596 = vmatprep.subr.mxu0 %v11517
        %11597 = vmatpush1.msra.mxu0 %v11516
        %11598 = vmatprep.subr.mxu0 %v11519
        %11599 = vmatpush1.msra.mxu0 %v11518
        %11600 = vmatprep.subr.mxu0 %v11521
        %11601 = vmatpush1.msra.mxu0 %v11520
        %11602 = vmatprep.subr.mxu0 %v11523
        %11603 = vmatpush1.msra.mxu0 %v11522
        %11604 = vmatprep.subr.mxu0 %v11525
        %11605 = vmatpush1.msra.mxu0 %v11524
        %11606 = vmatprep.subr.mxu0 %v11527
        %11607 = vmatpush1.msra.mxu0 %v11526
        %11608 = vmatprep.subr.mxu0 %v11529
        %11609 = vmatpush1.msra.mxu0 %v11528
        %11610 = vmatprep.subr.mxu0 %v11531
        %11611 = vmatpush1.msra.mxu0 %v11530
        %11612 = vmatprep.subr.mxu0 %v11533
        %11613 = vmatpush1.msra.mxu0 %v11532
        %11614 = vmatprep.mubr.f32.mxu0 %v11547
        %11615 = vmatmul.mubr.f32.gmra.mrb[0].mxu0 %v11544
        %v11616 = vpop.f32.mrb[0].mxu0
        %v11617 = vadd.f32 0.0, %v11616
        %v11618 = vpop.f32.mrb[0].mxu0
        %v11619 = vadd.f32 0.0, %v11618
        %11620 = vdwg.mxu0
        %v11621 = vadd.f32 %v11467, %v11617
        %v11622 = vadd.f32 %v11468, %v11619
        %s11623 = scalar_lea.vmem [#allocation9], 2048
        %v11624 = vld [vmem:[%s11623] sm:$0xff]
        %v11625 = vld [vmem:[%s11623 + $0x8] sm:$0xff]
        %v11626 = vld [vmem:[%s11623 + $0x10] sm:$0xff]
        %v11627 = vld [vmem:[%s11623 + $0x18] sm:$0xff]
        %v11628 = vld [vmem:[%s11623 + $0x20] sm:$0xff]
        %v11629 = vld [vmem:[%s11623 + $0x28] sm:$0xff]
        %v11630 = vld [vmem:[%s11623 + $0x30] sm:$0xff]
        %v11631 = vld [vmem:[%s11623 + $0x38] sm:$0xff]
        %v11632 = vld [vmem:[%s11623 + $0x40] sm:$0xff]
        %v11633 = vld [vmem:[%s11623 + $0x48] sm:$0xff]
        %v11634 = vld [vmem:[%s11623 + $0x50] sm:$0xff]
        %v11635 = vld [vmem:[%s11623 + $0x58] sm:$0xff]
        %v11636 = vld [vmem:[%s11623 + $0x60] sm:$0xff]
        %v11637 = vld [vmem:[%s11623 + $0x68] sm:$0xff]
        %v11638 = vld [vmem:[%s11623 + $0x70] sm:$0xff]
        %v11639 = vld [vmem:[%s11623 + $0x78] sm:$0xff]
        %v11640 = vld [vmem:[%s11623 + $0x80] sm:$0xff]
        %v11641 = vld [vmem:[%s11623 + $0x88] sm:$0xff]
        %v11642 = vld [vmem:[%s11623 + $0x90] sm:$0xff]
        %v11643 = vld [vmem:[%s11623 + $0x98] sm:$0xff]
        %v11644 = vld [vmem:[%s11623 + $0xa0] sm:$0xff]
        %v11645 = vld [vmem:[%s11623 + $0xa8] sm:$0xff]
        %v11646 = vld [vmem:[%s11623 + $0xb0] sm:$0xff]
        %v11647 = vld [vmem:[%s11623 + $0xb8] sm:$0xff]
        %v11648 = vld [vmem:[%s11623 + $0xc0] sm:$0xff]
        %v11649 = vld [vmem:[%s11623 + $0xc8] sm:$0xff]
        %v11650 = vld [vmem:[%s11623 + $0xd0] sm:$0xff]
        %v11651 = vld [vmem:[%s11623 + $0xd8] sm:$0xff]
        %v11652 = vld [vmem:[%s11623 + $0xe0] sm:$0xff]
        %v11653 = vld [vmem:[%s11623 + $0xe8] sm:$0xff]
        %v11654 = vld [vmem:[%s11623 + $0xf0] sm:$0xff]
        %v11655 = vld [vmem:[%s11623 + $0xf8] sm:$0xff]
        %v11656 = vld [vmem:[%s11623 + $0x100] sm:$0xff]
        %v11657 = vld [vmem:[%s11623 + $0x108] sm:$0xff]
        %v11658 = vld [vmem:[%s11623 + $0x110] sm:$0xff]
        %v11659 = vld [vmem:[%s11623 + $0x118] sm:$0xff]
        %v11660 = vld [vmem:[%s11623 + $0x120] sm:$0xff]
        %v11661 = vld [vmem:[%s11623 + $0x128] sm:$0xff]
        %v11662 = vld [vmem:[%s11623 + $0x130] sm:$0xff]
        %v11663 = vld [vmem:[%s11623 + $0x138] sm:$0xff]
        %v11664 = vld [vmem:[%s11623 + $0x140] sm:$0xff]
        %v11665 = vld [vmem:[%s11623 + $0x148] sm:$0xff]
        %v11666 = vld [vmem:[%s11623 + $0x150] sm:$0xff]
        %v11667 = vld [vmem:[%s11623 + $0x158] sm:$0xff]
        %v11668 = vld [vmem:[%s11623 + $0x160] sm:$0xff]
        %v11669 = vld [vmem:[%s11623 + $0x168] sm:$0xff]
        %v11670 = vld [vmem:[%s11623 + $0x170] sm:$0xff]
        %v11671 = vld [vmem:[%s11623 + $0x178] sm:$0xff]
        %v11672 = vld [vmem:[%s11623 + $0x180] sm:$0xff]
        %v11673 = vld [vmem:[%s11623 + $0x188] sm:$0xff]
        %v11674 = vld [vmem:[%s11623 + $0x190] sm:$0xff]
        %v11675 = vld [vmem:[%s11623 + $0x198] sm:$0xff]
        %v11676 = vld [vmem:[%s11623 + $0x1a0] sm:$0xff]
        %v11677 = vld [vmem:[%s11623 + $0x1a8] sm:$0xff]
        %v11678 = vld [vmem:[%s11623 + $0x1b0] sm:$0xff]
        %v11679 = vld [vmem:[%s11623 + $0x1b8] sm:$0xff]
        %v11680 = vld [vmem:[%s11623 + $0x1c0] sm:$0xff]
        %v11681 = vld [vmem:[%s11623 + $0x1c8] sm:$0xff]
        %v11682 = vld [vmem:[%s11623 + $0x1d0] sm:$0xff]
        %v11683 = vld [vmem:[%s11623 + $0x1d8] sm:$0xff]
        %v11684 = vld [vmem:[%s11623 + $0x1e0] sm:$0xff]
        %v11685 = vld [vmem:[%s11623 + $0x1e8] sm:$0xff]
        %v11686 = vld [vmem:[%s11623 + $0x1f0] sm:$0xff]
        %v11687 = vld [vmem:[%s11623 + $0x1f8] sm:$0xff]
        %v11696 = vsel %vm8119, %v10956, %v10940
        %v11697 = vsel %vm8121, %v10972, %v11696
        %v11698 = vsel %vm8123, %v10988, %v11697
        %v11699 = vsel %vm8119, %v10957, %v10941
        %v11700 = vsel %vm8121, %v10973, %v11699
        %v11701 = vsel %vm8123, %v10989, %v11700
        %11704 = vmatprep.subr.mxu0 %v11625
        %11705 = vmatpush1.msra.mxu0 %v11624
        %11706 = vmatprep.subr.mxu0 %v11627
        %11707 = vmatpush1.msra.mxu0 %v11626
        %11708 = vmatprep.subr.mxu0 %v11629
        %11709 = vmatpush1.msra.mxu0 %v11628
        %11710 = vmatprep.subr.mxu0 %v11631
        %11711 = vmatpush1.msra.mxu0 %v11630
        %11712 = vmatprep.subr.mxu0 %v11633
        %11713 = vmatpush1.msra.mxu0 %v11632
        %11714 = vmatprep.subr.mxu0 %v11635
        %11715 = vmatpush1.msra.mxu0 %v11634
        %11716 = vmatprep.subr.mxu0 %v11637
        %11717 = vmatpush1.msra.mxu0 %v11636
        %11718 = vmatprep.subr.mxu0 %v11639
        %11719 = vmatpush1.msra.mxu0 %v11638
        %11720 = vmatprep.subr.mxu0 %v11641
        %11721 = vmatpush1.msra.mxu0 %v11640
        %11722 = vmatprep.subr.mxu0 %v11643
        %11723 = vmatpush1.msra.mxu0 %v11642
        %11724 = vmatprep.subr.mxu0 %v11645
        %11725 = vmatpush1.msra.mxu0 %v11644
        %11726 = vmatprep.subr.mxu0 %v11647
        %11727 = vmatpush1.msra.mxu0 %v11646
        %11728 = vmatprep.subr.mxu0 %v11649
        %11729 = vmatpush1.msra.mxu0 %v11648
        %11730 = vmatprep.subr.mxu0 %v11651
        %11731 = vmatpush1.msra.mxu0 %v11650
        %11732 = vmatprep.subr.mxu0 %v11653
        %11733 = vmatpush1.msra.mxu0 %v11652
        %11734 = vmatprep.subr.mxu0 %v11655
        %11735 = vmatpush1.msra.mxu0 %v11654
        %11736 = vmatprep.subr.mxu0 %v11657
        %11737 = vmatpush1.msra.mxu0 %v11656
        %11738 = vmatprep.subr.mxu0 %v11659
        %11739 = vmatpush1.msra.mxu0 %v11658
        %11740 = vmatprep.subr.mxu0 %v11661
        %11741 = vmatpush1.msra.mxu0 %v11660
        %11742 = vmatprep.subr.mxu0 %v11663
        %11743 = vmatpush1.msra.mxu0 %v11662
        %11744 = vmatprep.subr.mxu0 %v11665
        %11745 = vmatpush1.msra.mxu0 %v11664
        %11746 = vmatprep.subr.mxu0 %v11667
        %11747 = vmatpush1.msra.mxu0 %v11666
        %11748 = vmatprep.subr.mxu0 %v11669
        %11749 = vmatpush1.msra.mxu0 %v11668
        %11750 = vmatprep.subr.mxu0 %v11671
        %11751 = vmatpush1.msra.mxu0 %v11670
        %11752 = vmatprep.subr.mxu0 %v11673
        %11753 = vmatpush1.msra.mxu0 %v11672
        %11754 = vmatprep.subr.mxu0 %v11675
        %11755 = vmatpush1.msra.mxu0 %v11674
        %11756 = vmatprep.subr.mxu0 %v11677
        %11757 = vmatpush1.msra.mxu0 %v11676
        %11758 = vmatprep.subr.mxu0 %v11679
        %11759 = vmatpush1.msra.mxu0 %v11678
        %11760 = vmatprep.subr.mxu0 %v11681
        %11761 = vmatpush1.msra.mxu0 %v11680
        %11762 = vmatprep.subr.mxu0 %v11683
        %11763 = vmatpush1.msra.mxu0 %v11682
        %11764 = vmatprep.subr.mxu0 %v11685
        %11765 = vmatpush1.msra.mxu0 %v11684
        %11766 = vmatprep.subr.mxu0 %v11687
        %11767 = vmatpush1.msra.mxu0 %v11686
        %11768 = vmatprep.mubr.f32.mxu0 %v11701
        %11769 = vmatmul.mubr.f32.gmra.mrb[0].mxu0 %v11698
        %v11770 = vpop.f32.mrb[0].mxu0
        %v11771 = vadd.f32 0.0, %v11770
        %v11772 = vpop.f32.mrb[0].mxu0
        %v11773 = vadd.f32 0.0, %v11772
        %11774 = vdwg.mxu0
        %v11775 = vadd.f32 %v11621, %v11771
        %v11776 = vadd.f32 %v11622, %v11773
        %s11777 = scalar_lea.vmem [#allocation9], 2560
        %v11778 = vld [vmem:[%s11777] sm:$0xff]
        %v11779 = vld [vmem:[%s11777 + $0x8] sm:$0xff]
        %v11780 = vld [vmem:[%s11777 + $0x10] sm:$0xff]
        %v11781 = vld [vmem:[%s11777 + $0x18] sm:$0xff]
        %v11782 = vld [vmem:[%s11777 + $0x20] sm:$0xff]
        %v11783 = vld [vmem:[%s11777 + $0x28] sm:$0xff]
        %v11784 = vld [vmem:[%s11777 + $0x30] sm:$0xff]
        %v11785 = vld [vmem:[%s11777 + $0x38] sm:$0xff]
        %v11786 = vld [vmem:[%s11777 + $0x40] sm:$0xff]
        %v11787 = vld [vmem:[%s11777 + $0x48] sm:$0xff]
        %v11788 = vld [vmem:[%s11777 + $0x50] sm:$0xff]
        %v11789 = vld [vmem:[%s11777 + $0x58] sm:$0xff]
        %v11790 = vld [vmem:[%s11777 + $0x60] sm:$0xff]
        %v11791 = vld [vmem:[%s11777 + $0x68] sm:$0xff]
        %v11792 = vld [vmem:[%s11777 + $0x70] sm:$0xff]
        %v11793 = vld [vmem:[%s11777 + $0x78] sm:$0xff]
        %v11794 = vld [vmem:[%s11777 + $0x80] sm:$0xff]
        %v11795 = vld [vmem:[%s11777 + $0x88] sm:$0xff]
        %v11796 = vld [vmem:[%s11777 + $0x90] sm:$0xff]
        %v11797 = vld [vmem:[%s11777 + $0x98] sm:$0xff]
        %v11798 = vld [vmem:[%s11777 + $0xa0] sm:$0xff]
        %v11799 = vld [vmem:[%s11777 + $0xa8] sm:$0xff]
        %v11800 = vld [vmem:[%s11777 + $0xb0] sm:$0xff]
        %v11801 = vld [vmem:[%s11777 + $0xb8] sm:$0xff]
        %v11802 = vld [vmem:[%s11777 + $0xc0] sm:$0xff]
        %v11803 = vld [vmem:[%s11777 + $0xc8] sm:$0xff]
        %v11804 = vld [vmem:[%s11777 + $0xd0] sm:$0xff]
        %v11805 = vld [vmem:[%s11777 + $0xd8] sm:$0xff]
        %v11806 = vld [vmem:[%s11777 + $0xe0] sm:$0xff]
        %v11807 = vld [vmem:[%s11777 + $0xe8] sm:$0xff]
        %v11808 = vld [vmem:[%s11777 + $0xf0] sm:$0xff]
        %v11809 = vld [vmem:[%s11777 + $0xf8] sm:$0xff]
        %v11810 = vld [vmem:[%s11777 + $0x100] sm:$0xff]
        %v11811 = vld [vmem:[%s11777 + $0x108] sm:$0xff]
        %v11812 = vld [vmem:[%s11777 + $0x110] sm:$0xff]
        %v11813 = vld [vmem:[%s11777 + $0x118] sm:$0xff]
        %v11814 = vld [vmem:[%s11777 + $0x120] sm:$0xff]
        %v11815 = vld [vmem:[%s11777 + $0x128] sm:$0xff]
        %v11816 = vld [vmem:[%s11777 + $0x130] sm:$0xff]
        %v11817 = vld [vmem:[%s11777 + $0x138] sm:$0xff]
        %v11818 = vld [vmem:[%s11777 + $0x140] sm:$0xff]
        %v11819 = vld [vmem:[%s11777 + $0x148] sm:$0xff]
        %v11820 = vld [vmem:[%s11777 + $0x150] sm:$0xff]
        %v11821 = vld [vmem:[%s11777 + $0x158] sm:$0xff]
        %v11822 = vld [vmem:[%s11777 + $0x160] sm:$0xff]
        %v11823 = vld [vmem:[%s11777 + $0x168] sm:$0xff]
        %v11824 = vld [vmem:[%s11777 + $0x170] sm:$0xff]
        %v11825 = vld [vmem:[%s11777 + $0x178] sm:$0xff]
        %v11826 = vld [vmem:[%s11777 + $0x180] sm:$0xff]
        %v11827 = vld [vmem:[%s11777 + $0x188] sm:$0xff]
        %v11828 = vld [vmem:[%s11777 + $0x190] sm:$0xff]
        %v11829 = vld [vmem:[%s11777 + $0x198] sm:$0xff]
        %v11830 = vld [vmem:[%s11777 + $0x1a0] sm:$0xff]
        %v11831 = vld [vmem:[%s11777 + $0x1a8] sm:$0xff]
        %v11832 = vld [vmem:[%s11777 + $0x1b0] sm:$0xff]
        %v11833 = vld [vmem:[%s11777 + $0x1b8] sm:$0xff]
        %v11834 = vld [vmem:[%s11777 + $0x1c0] sm:$0xff]
        %v11835 = vld [vmem:[%s11777 + $0x1c8] sm:$0xff]
        %v11836 = vld [vmem:[%s11777 + $0x1d0] sm:$0xff]
        %v11837 = vld [vmem:[%s11777 + $0x1d8] sm:$0xff]
        %v11838 = vld [vmem:[%s11777 + $0x1e0] sm:$0xff]
        %v11839 = vld [vmem:[%s11777 + $0x1e8] sm:$0xff]
        %v11840 = vld [vmem:[%s11777 + $0x1f0] sm:$0xff]
        %v11841 = vld [vmem:[%s11777 + $0x1f8] sm:$0xff]
        %v11850 = vsel %vm8119, %v10958, %v10942
        %v11851 = vsel %vm8121, %v10974, %v11850
        %v11852 = vsel %vm8123, %v10990, %v11851
        %v11853 = vsel %vm8119, %v10959, %v10943
        %v11854 = vsel %vm8121, %v10975, %v11853
        %v11855 = vsel %vm8123, %v10991, %v11854
        %11858 = vmatprep.subr.mxu0 %v11779
        %11859 = vmatpush1.msra.mxu0 %v11778
        %11860 = vmatprep.subr.mxu0 %v11781
        %11861 = vmatpush1.msra.mxu0 %v11780
        %11862 = vmatprep.subr.mxu0 %v11783
        %11863 = vmatpush1.msra.mxu0 %v11782
        %11864 = vmatprep.subr.mxu0 %v11785
        %11865 = vmatpush1.msra.mxu0 %v11784
        %11866 = vmatprep.subr.mxu0 %v11787
        %11867 = vmatpush1.msra.mxu0 %v11786
        %11868 = vmatprep.subr.mxu0 %v11789
        %11869 = vmatpush1.msra.mxu0 %v11788
        %11870 = vmatprep.subr.mxu0 %v11791
        %11871 = vmatpush1.msra.mxu0 %v11790
        %11872 = vmatprep.subr.mxu0 %v11793
        %11873 = vmatpush1.msra.mxu0 %v11792
        %11874 = vmatprep.subr.mxu0 %v11795
        %11875 = vmatpush1.msra.mxu0 %v11794
        %11876 = vmatprep.subr.mxu0 %v11797
        %11877 = vmatpush1.msra.mxu0 %v11796
        %11878 = vmatprep.subr.mxu0 %v11799
        %11879 = vmatpush1.msra.mxu0 %v11798
        %11880 = vmatprep.subr.mxu0 %v11801
        %11881 = vmatpush1.msra.mxu0 %v11800
        %11882 = vmatprep.subr.mxu0 %v11803
        %11883 = vmatpush1.msra.mxu0 %v11802
        %11884 = vmatprep.subr.mxu0 %v11805
        %11885 = vmatpush1.msra.mxu0 %v11804
        %11886 = vmatprep.subr.mxu0 %v11807
        %11887 = vmatpush1.msra.mxu0 %v11806
        %11888 = vmatprep.subr.mxu0 %v11809
        %11889 = vmatpush1.msra.mxu0 %v11808
        %11890 = vmatprep.subr.mxu0 %v11811
        %11891 = vmatpush1.msra.mxu0 %v11810
        %11892 = vmatprep.subr.mxu0 %v11813
        %11893 = vmatpush1.msra.mxu0 %v11812
        %11894 = vmatprep.subr.mxu0 %v11815
        %11895 = vmatpush1.msra.mxu0 %v11814
        %11896 = vmatprep.subr.mxu0 %v11817
        %11897 = vmatpush1.msra.mxu0 %v11816
        %11898 = vmatprep.subr.mxu0 %v11819
        %11899 = vmatpush1.msra.mxu0 %v11818
        %11900 = vmatprep.subr.mxu0 %v11821
        %11901 = vmatpush1.msra.mxu0 %v11820
        %11902 = vmatprep.subr.mxu0 %v11823
        %11903 = vmatpush1.msra.mxu0 %v11822
        %11904 = vmatprep.subr.mxu0 %v11825
        %11905 = vmatpush1.msra.mxu0 %v11824
        %11906 = vmatprep.subr.mxu0 %v11827
        %11907 = vmatpush1.msra.mxu0 %v11826
        %11908 = vmatprep.subr.mxu0 %v11829
        %11909 = vmatpush1.msra.mxu0 %v11828
        %11910 = vmatprep.subr.mxu0 %v11831
        %11911 = vmatpush1.msra.mxu0 %v11830
        %11912 = vmatprep.subr.mxu0 %v11833
        %11913 = vmatpush1.msra.mxu0 %v11832
        %11914 = vmatprep.subr.mxu0 %v11835
        %11915 = vmatpush1.msra.mxu0 %v11834
        %11916 = vmatprep.subr.mxu0 %v11837
        %11917 = vmatpush1.msra.mxu0 %v11836
        %11918 = vmatprep.subr.mxu0 %v11839
        %11919 = vmatpush1.msra.mxu0 %v11838
        %11920 = vmatprep.subr.mxu0 %v11841
        %11921 = vmatpush1.msra.mxu0 %v11840
        %11922 = vmatprep.mubr.f32.mxu0 %v11855
        %11923 = vmatmul.mubr.f32.gmra.mrb[0].mxu0 %v11852
        %v11924 = vpop.f32.mrb[0].mxu0
        %v11925 = vadd.f32 0.0, %v11924
        %v11926 = vpop.f32.mrb[0].mxu0
        %v11927 = vadd.f32 0.0, %v11926
        %11928 = vdwg.mxu0
        %v11929 = vadd.f32 %v11775, %v11925
        %v11930 = vadd.f32 %v11776, %v11927
        %s11931 = scalar_lea.vmem [#allocation9], 3072
        %v11932 = vld [vmem:[%s11931] sm:$0xff]
        %v11933 = vld [vmem:[%s11931 + $0x8] sm:$0xff]
        %v11934 = vld [vmem:[%s11931 + $0x10] sm:$0xff]
        %v11935 = vld [vmem:[%s11931 + $0x18] sm:$0xff]
        %v11936 = vld [vmem:[%s11931 + $0x20] sm:$0xff]
        %v11937 = vld [vmem:[%s11931 + $0x28] sm:$0xff]
        %v11938 = vld [vmem:[%s11931 + $0x30] sm:$0xff]
        %v11939 = vld [vmem:[%s11931 + $0x38] sm:$0xff]
        %v11940 = vld [vmem:[%s11931 + $0x40] sm:$0xff]
        %v11941 = vld [vmem:[%s11931 + $0x48] sm:$0xff]
        %v11942 = vld [vmem:[%s11931 + $0x50] sm:$0xff]
        %v11943 = vld [vmem:[%s11931 + $0x58] sm:$0xff]
        %v11944 = vld [vmem:[%s11931 + $0x60] sm:$0xff]
        %v11945 = vld [vmem:[%s11931 + $0x68] sm:$0xff]
        %v11946 = vld [vmem:[%s11931 + $0x70] sm:$0xff]
        %v11947 = vld [vmem:[%s11931 + $0x78] sm:$0xff]
        %v11948 = vld [vmem:[%s11931 + $0x80] sm:$0xff]
        %v11949 = vld [vmem:[%s11931 + $0x88] sm:$0xff]
        %v11950 = vld [vmem:[%s11931 + $0x90] sm:$0xff]
        %v11951 = vld [vmem:[%s11931 + $0x98] sm:$0xff]
        %v11952 = vld [vmem:[%s11931 + $0xa0] sm:$0xff]
        %v11953 = vld [vmem:[%s11931 + $0xa8] sm:$0xff]
        %v11954 = vld [vmem:[%s11931 + $0xb0] sm:$0xff]
        %v11955 = vld [vmem:[%s11931 + $0xb8] sm:$0xff]
        %v11956 = vld [vmem:[%s11931 + $0xc0] sm:$0xff]
        %v11957 = vld [vmem:[%s11931 + $0xc8] sm:$0xff]
        %v11958 = vld [vmem:[%s11931 + $0xd0] sm:$0xff]
        %v11959 = vld [vmem:[%s11931 + $0xd8] sm:$0xff]
        %v11960 = vld [vmem:[%s11931 + $0xe0] sm:$0xff]
        %v11961 = vld [vmem:[%s11931 + $0xe8] sm:$0xff]
        %v11962 = vld [vmem:[%s11931 + $0xf0] sm:$0xff]
        %v11963 = vld [vmem:[%s11931 + $0xf8] sm:$0xff]
        %v11964 = vld [vmem:[%s11931 + $0x100] sm:$0xff]
        %v11965 = vld [vmem:[%s11931 + $0x108] sm:$0xff]
        %v11966 = vld [vmem:[%s11931 + $0x110] sm:$0xff]
        %v11967 = vld [vmem:[%s11931 + $0x118] sm:$0xff]
        %v11968 = vld [vmem:[%s11931 + $0x120] sm:$0xff]
        %v11969 = vld [vmem:[%s11931 + $0x128] sm:$0xff]
        %v11970 = vld [vmem:[%s11931 + $0x130] sm:$0xff]
        %v11971 = vld [vmem:[%s11931 + $0x138] sm:$0xff]
        %v11972 = vld [vmem:[%s11931 + $0x140] sm:$0xff]
        %v11973 = vld [vmem:[%s11931 + $0x148] sm:$0xff]
        %v11974 = vld [vmem:[%s11931 + $0x150] sm:$0xff]
        %v11975 = vld [vmem:[%s11931 + $0x158] sm:$0xff]
        %v11976 = vld [vmem:[%s11931 + $0x160] sm:$0xff]
        %v11977 = vld [vmem:[%s11931 + $0x168] sm:$0xff]
        %v11978 = vld [vmem:[%s11931 + $0x170] sm:$0xff]
        %v11979 = vld [vmem:[%s11931 + $0x178] sm:$0xff]
        %v11980 = vld [vmem:[%s11931 + $0x180] sm:$0xff]
        %v11981 = vld [vmem:[%s11931 + $0x188] sm:$0xff]
        %v11982 = vld [vmem:[%s11931 + $0x190] sm:$0xff]
        %v11983 = vld [vmem:[%s11931 + $0x198] sm:$0xff]
        %v11984 = vld [vmem:[%s11931 + $0x1a0] sm:$0xff]
        %v11985 = vld [vmem:[%s11931 + $0x1a8] sm:$0xff]
        %v11986 = vld [vmem:[%s11931 + $0x1b0] sm:$0xff]
        %v11987 = vld [vmem:[%s11931 + $0x1b8] sm:$0xff]
        %v11988 = vld [vmem:[%s11931 + $0x1c0] sm:$0xff]
        %v11989 = vld [vmem:[%s11931 + $0x1c8] sm:$0xff]
        %v11990 = vld [vmem:[%s11931 + $0x1d0] sm:$0xff]
        %v11991 = vld [vmem:[%s11931 + $0x1d8] sm:$0xff]
        %v11992 = vld [vmem:[%s11931 + $0x1e0] sm:$0xff]
        %v11993 = vld [vmem:[%s11931 + $0x1e8] sm:$0xff]
        %v11994 = vld [vmem:[%s11931 + $0x1f0] sm:$0xff]
        %v11995 = vld [vmem:[%s11931 + $0x1f8] sm:$0xff]
        %v12004 = vsel %vm8119, %v10960, %v10944
        %v12005 = vsel %vm8121, %v10976, %v12004
        %v12006 = vsel %vm8123, %v10992, %v12005
        %v12007 = vsel %vm8119, %v10961, %v10945
        %v12008 = vsel %vm8121, %v10977, %v12007
        %v12009 = vsel %vm8123, %v10993, %v12008
        %12012 = vmatprep.subr.mxu0 %v11933
        %12013 = vmatpush1.msra.mxu0 %v11932
        %12014 = vmatprep.subr.mxu0 %v11935
        %12015 = vmatpush1.msra.mxu0 %v11934
        %12016 = vmatprep.subr.mxu0 %v11937
        %12017 = vmatpush1.msra.mxu0 %v11936
        %12018 = vmatprep.subr.mxu0 %v11939
        %12019 = vmatpush1.msra.mxu0 %v11938
        %12020 = vmatprep.subr.mxu0 %v11941
        %12021 = vmatpush1.msra.mxu0 %v11940
        %12022 = vmatprep.subr.mxu0 %v11943
        %12023 = vmatpush1.msra.mxu0 %v11942
        %12024 = vmatprep.subr.mxu0 %v11945
        %12025 = vmatpush1.msra.mxu0 %v11944
        %12026 = vmatprep.subr.mxu0 %v11947
        %12027 = vmatpush1.msra.mxu0 %v11946
        %12028 = vmatprep.subr.mxu0 %v11949
        %12029 = vmatpush1.msra.mxu0 %v11948
        %12030 = vmatprep.subr.mxu0 %v11951
        %12031 = vmatpush1.msra.mxu0 %v11950
        %12032 = vmatprep.subr.mxu0 %v11953
        %12033 = vmatpush1.msra.mxu0 %v11952
        %12034 = vmatprep.subr.mxu0 %v11955
        %12035 = vmatpush1.msra.mxu0 %v11954
        %12036 = vmatprep.subr.mxu0 %v11957
        %12037 = vmatpush1.msra.mxu0 %v11956
        %12038 = vmatprep.subr.mxu0 %v11959
        %12039 = vmatpush1.msra.mxu0 %v11958
        %12040 = vmatprep.subr.mxu0 %v11961
        %12041 = vmatpush1.msra.mxu0 %v11960
        %12042 = vmatprep.subr.mxu0 %v11963
        %12043 = vmatpush1.msra.mxu0 %v11962
        %12044 = vmatprep.subr.mxu0 %v11965
        %12045 = vmatpush1.msra.mxu0 %v11964
        %12046 = vmatprep.subr.mxu0 %v11967
        %12047 = vmatpush1.msra.mxu0 %v11966
        %12048 = vmatprep.subr.mxu0 %v11969
        %12049 = vmatpush1.msra.mxu0 %v11968
        %12050 = vmatprep.subr.mxu0 %v11971
        %12051 = vmatpush1.msra.mxu0 %v11970
        %12052 = vmatprep.subr.mxu0 %v11973
        %12053 = vmatpush1.msra.mxu0 %v11972
        %12054 = vmatprep.subr.mxu0 %v11975
        %12055 = vmatpush1.msra.mxu0 %v11974
        %12056 = vmatprep.subr.mxu0 %v11977
        %12057 = vmatpush1.msra.mxu0 %v11976
        %12058 = vmatprep.subr.mxu0 %v11979
        %12059 = vmatpush1.msra.mxu0 %v11978
        %12060 = vmatprep.subr.mxu0 %v11981
        %12061 = vmatpush1.msra.mxu0 %v11980
        %12062 = vmatprep.subr.mxu0 %v11983
        %12063 = vmatpush1.msra.mxu0 %v11982
        %12064 = vmatprep.subr.mxu0 %v11985
        %12065 = vmatpush1.msra.mxu0 %v11984
        %12066 = vmatprep.subr.mxu0 %v11987
        %12067 = vmatpush1.msra.mxu0 %v11986
        %12068 = vmatprep.subr.mxu0 %v11989
        %12069 = vmatpush1.msra.mxu0 %v11988
        %12070 = vmatprep.subr.mxu0 %v11991
        %12071 = vmatpush1.msra.mxu0 %v11990
        %12072 = vmatprep.subr.mxu0 %v11993
        %12073 = vmatpush1.msra.mxu0 %v11992
        %12074 = vmatprep.subr.mxu0 %v11995
        %12075 = vmatpush1.msra.mxu0 %v11994
        %12076 = vmatprep.mubr.f32.mxu0 %v12009
        %12077 = vmatmul.mubr.f32.gmra.mrb[0].mxu0 %v12006
        %v12078 = vpop.f32.mrb[0].mxu0
        %v12079 = vadd.f32 0.0, %v12078
        %v12080 = vpop.f32.mrb[0].mxu0
        %v12081 = vadd.f32 0.0, %v12080
        %12082 = vdwg.mxu0
        %v12083 = vadd.f32 %v11929, %v12079
        %v12084 = vadd.f32 %v11930, %v12081
        %s12085 = scalar_lea.vmem [#allocation9], 3584
        %v12086 = vld [vmem:[%s12085] sm:$0xff]
        %v12087 = vld [vmem:[%s12085 + $0x8] sm:$0xff]
        %v12088 = vld [vmem:[%s12085 + $0x10] sm:$0xff]
        %v12089 = vld [vmem:[%s12085 + $0x18] sm:$0xff]
        %v12090 = vld [vmem:[%s12085 + $0x20] sm:$0xff]
        %v12091 = vld [vmem:[%s12085 + $0x28] sm:$0xff]
        %v12092 = vld [vmem:[%s12085 + $0x30] sm:$0xff]
        %v12093 = vld [vmem:[%s12085 + $0x38] sm:$0xff]
        %v12094 = vld [vmem:[%s12085 + $0x40] sm:$0xff]
        %v12095 = vld [vmem:[%s12085 + $0x48] sm:$0xff]
        %v12096 = vld [vmem:[%s12085 + $0x50] sm:$0xff]
        %v12097 = vld [vmem:[%s12085 + $0x58] sm:$0xff]
        %v12098 = vld [vmem:[%s12085 + $0x60] sm:$0xff]
        %v12099 = vld [vmem:[%s12085 + $0x68] sm:$0xff]
        %v12100 = vld [vmem:[%s12085 + $0x70] sm:$0xff]
        %v12101 = vld [vmem:[%s12085 + $0x78] sm:$0xff]
        %v12102 = vld [vmem:[%s12085 + $0x80] sm:$0xff]
        %v12103 = vld [vmem:[%s12085 + $0x88] sm:$0xff]
        %v12104 = vld [vmem:[%s12085 + $0x90] sm:$0xff]
        %v12105 = vld [vmem:[%s12085 + $0x98] sm:$0xff]
        %v12106 = vld [vmem:[%s12085 + $0xa0] sm:$0xff]
        %v12107 = vld [vmem:[%s12085 + $0xa8] sm:$0xff]
        %v12108 = vld [vmem:[%s12085 + $0xb0] sm:$0xff]
        %v12109 = vld [vmem:[%s12085 + $0xb8] sm:$0xff]
        %v12110 = vld [vmem:[%s12085 + $0xc0] sm:$0xff]
        %v12111 = vld [vmem:[%s12085 + $0xc8] sm:$0xff]
        %v12112 = vld [vmem:[%s12085 + $0xd0] sm:$0xff]
        %v12113 = vld [vmem:[%s12085 + $0xd8] sm:$0xff]
        %v12114 = vld [vmem:[%s12085 + $0xe0] sm:$0xff]
        %v12115 = vld [vmem:[%s12085 + $0xe8] sm:$0xff]
        %v12116 = vld [vmem:[%s12085 + $0xf0] sm:$0xff]
        %v12117 = vld [vmem:[%s12085 + $0xf8] sm:$0xff]
        %v12118 = vld [vmem:[%s12085 + $0x100] sm:$0xff]
        %v12119 = vld [vmem:[%s12085 + $0x108] sm:$0xff]
        %v12120 = vld [vmem:[%s12085 + $0x110] sm:$0xff]
        %v12121 = vld [vmem:[%s12085 + $0x118] sm:$0xff]
        %v12122 = vld [vmem:[%s12085 + $0x120] sm:$0xff]
        %v12123 = vld [vmem:[%s12085 + $0x128] sm:$0xff]
        %v12124 = vld [vmem:[%s12085 + $0x130] sm:$0xff]
        %v12125 = vld [vmem:[%s12085 + $0x138] sm:$0xff]
        %v12126 = vld [vmem:[%s12085 + $0x140] sm:$0xff]
        %v12127 = vld [vmem:[%s12085 + $0x148] sm:$0xff]
        %v12128 = vld [vmem:[%s12085 + $0x150] sm:$0xff]
        %v12129 = vld [vmem:[%s12085 + $0x158] sm:$0xff]
        %v12130 = vld [vmem:[%s12085 + $0x160] sm:$0xff]
        %v12131 = vld [vmem:[%s12085 + $0x168] sm:$0xff]
        %v12132 = vld [vmem:[%s12085 + $0x170] sm:$0xff]
        %v12133 = vld [vmem:[%s12085 + $0x178] sm:$0xff]
        %v12134 = vld [vmem:[%s12085 + $0x180] sm:$0xff]
        %v12135 = vld [vmem:[%s12085 + $0x188] sm:$0xff]
        %v12136 = vld [vmem:[%s12085 + $0x190] sm:$0xff]
        %v12137 = vld [vmem:[%s12085 + $0x198] sm:$0xff]
        %v12138 = vld [vmem:[%s12085 + $0x1a0] sm:$0xff]
        %v12139 = vld [vmem:[%s12085 + $0x1a8] sm:$0xff]
        %v12140 = vld [vmem:[%s12085 + $0x1b0] sm:$0xff]
        %v12141 = vld [vmem:[%s12085 + $0x1b8] sm:$0xff]
        %v12142 = vld [vmem:[%s12085 + $0x1c0] sm:$0xff]
        %v12143 = vld [vmem:[%s12085 + $0x1c8] sm:$0xff]
        %v12144 = vld [vmem:[%s12085 + $0x1d0] sm:$0xff]
        %v12145 = vld [vmem:[%s12085 + $0x1d8] sm:$0xff]
        %v12146 = vld [vmem:[%s12085 + $0x1e0] sm:$0xff]
        %v12147 = vld [vmem:[%s12085 + $0x1e8] sm:$0xff]
        %v12148 = vld [vmem:[%s12085 + $0x1f0] sm:$0xff]
        %v12149 = vld [vmem:[%s12085 + $0x1f8] sm:$0xff]
        %v12158 = vsel %vm8119, %v10962, %v10946
        %v12159 = vsel %vm8121, %v10978, %v12158
        %v12160 = vsel %vm8123, %v10994, %v12159
        %v12161 = vsel %vm8119, %v10963, %v10947
        %v12162 = vsel %vm8121, %v10979, %v12161
        %v12163 = vsel %vm8123, %v10995, %v12162
        %12166 = vmatprep.subr.mxu0 %v12087
        %12167 = vmatpush1.msra.mxu0 %v12086
        %12168 = vmatprep.subr.mxu0 %v12089
        %12169 = vmatpush1.msra.mxu0 %v12088
        %12170 = vmatprep.subr.mxu0 %v12091
        %12171 = vmatpush1.msra.mxu0 %v12090
        %12172 = vmatprep.subr.mxu0 %v12093
        %12173 = vmatpush1.msra.mxu0 %v12092
        %12174 = vmatprep.subr.mxu0 %v12095
        %12175 = vmatpush1.msra.mxu0 %v12094
        %12176 = vmatprep.subr.mxu0 %v12097
        %12177 = vmatpush1.msra.mxu0 %v12096
        %12178 = vmatprep.subr.mxu0 %v12099
        %12179 = vmatpush1.msra.mxu0 %v12098
        %12180 = vmatprep.subr.mxu0 %v12101
        %12181 = vmatpush1.msra.mxu0 %v12100
        %12182 = vmatprep.subr.mxu0 %v12103
        %12183 = vmatpush1.msra.mxu0 %v12102
        %12184 = vmatprep.subr.mxu0 %v12105
        %12185 = vmatpush1.msra.mxu0 %v12104
        %12186 = vmatprep.subr.mxu0 %v12107
        %12187 = vmatpush1.msra.mxu0 %v12106
        %12188 = vmatprep.subr.mxu0 %v12109
        %12189 = vmatpush1.msra.mxu0 %v12108
        %12190 = vmatprep.subr.mxu0 %v12111
        %12191 = vmatpush1.msra.mxu0 %v12110
        %12192 = vmatprep.subr.mxu0 %v12113
        %12193 = vmatpush1.msra.mxu0 %v12112
        %12194 = vmatprep.subr.mxu0 %v12115
        %12195 = vmatpush1.msra.mxu0 %v12114
        %12196 = vmatprep.subr.mxu0 %v12117
        %12197 = vmatpush1.msra.mxu0 %v12116
        %12198 = vmatprep.subr.mxu0 %v12119
        %12199 = vmatpush1.msra.mxu0 %v12118
        %12200 = vmatprep.subr.mxu0 %v12121
        %12201 = vmatpush1.msra.mxu0 %v12120
        %12202 = vmatprep.subr.mxu0 %v12123
        %12203 = vmatpush1.msra.mxu0 %v12122
        %12204 = vmatprep.subr.mxu0 %v12125
        %12205 = vmatpush1.msra.mxu0 %v12124
        %12206 = vmatprep.subr.mxu0 %v12127
        %12207 = vmatpush1.msra.mxu0 %v12126
        %12208 = vmatprep.subr.mxu0 %v12129
        %12209 = vmatpush1.msra.mxu0 %v12128
        %12210 = vmatprep.subr.mxu0 %v12131
        %12211 = vmatpush1.msra.mxu0 %v12130
        %12212 = vmatprep.subr.mxu0 %v12133
        %12213 = vmatpush1.msra.mxu0 %v12132
        %12214 = vmatprep.subr.mxu0 %v12135
        %12215 = vmatpush1.msra.mxu0 %v12134
        %12216 = vmatprep.subr.mxu0 %v12137
        %12217 = vmatpush1.msra.mxu0 %v12136
        %12218 = vmatprep.subr.mxu0 %v12139
        %12219 = vmatpush1.msra.mxu0 %v12138
        %12220 = vmatprep.subr.mxu0 %v12141
        %12221 = vmatpush1.msra.mxu0 %v12140
        %12222 = vmatprep.subr.mxu0 %v12143
        %12223 = vmatpush1.msra.mxu0 %v12142
        %12224 = vmatprep.subr.mxu0 %v12145
        %12225 = vmatpush1.msra.mxu0 %v12144
        %12226 = vmatprep.subr.mxu0 %v12147
        %12227 = vmatpush1.msra.mxu0 %v12146
        %12228 = vmatprep.subr.mxu0 %v12149
        %12229 = vmatpush1.msra.mxu0 %v12148
        %12230 = vmatprep.mubr.f32.mxu0 %v12163
        %12231 = vmatmul.mubr.f32.gmra.mrb[0].mxu0 %v12160
        %v12232 = vpop.f32.mrb[0].mxu0
        %v12233 = vadd.f32 0.0, %v12232
        %v12234 = vpop.f32.mrb[0].mxu0
        %v12235 = vadd.f32 0.0, %v12234
        %12236 = vdwg.mxu0
        %v12237 = vadd.f32 %v12083, %v12233
        %v12238 = vadd.f32 %v12084, %v12235
        %v12239 = vxor.u32 %v12237, 2147483648
        %v12240 = vxor.u32 %v12238, 2147483648
        %v12241 = vmul.f32 %v12239, 1.442695
        %v12242 = vpow.pop %v12241
        %v12243 = vmul.f32 %v12240, 1.442695
        %v12244 = vpow.pop %v12243
        %v12245 = vadd.f32 %v12242, 1.0
        %v12246 = vadd.f32 %v12244, 1.0
        %v12247 = vrcp.pop %v12245
        %v12248 = vmul.f32 1.0, %v12247
        %v12249 = vrcp.pop %v12246
        %v12250 = vmul.f32 1.0, %v12249
        %v12251 = vld [vmem:[#allocation12] sm:$0xff]
        %v12252 = vld [vmem:[#allocation12 + $0x8] sm:$0xff]
        %v12253 = vld [vmem:[#allocation12 + $0x10] sm:$0xff]
        %v12254 = vld [vmem:[#allocation12 + $0x18] sm:$0xff]
        %v12255 = vld [vmem:[#allocation12 + $0x20] sm:$0xff]
        %v12256 = vld [vmem:[#allocation12 + $0x28] sm:$0xff]
        %v12257 = vld [vmem:[#allocation12 + $0x30] sm:$0xff]
        %v12258 = vld [vmem:[#allocation12 + $0x38] sm:$0xff]
        %v12259 = vld [vmem:[#allocation12 + $0x40] sm:$0xff]
        %v12260 = vld [vmem:[#allocation12 + $0x48] sm:$0xff]
        %v12261 = vld [vmem:[#allocation12 + $0x50] sm:$0xff]
        %v12262 = vld [vmem:[#allocation12 + $0x58] sm:$0xff]
        %v12263 = vld [vmem:[#allocation12 + $0x60] sm:$0xff]
        %v12264 = vld [vmem:[#allocation12 + $0x68] sm:$0xff]
        %v12265 = vld [vmem:[#allocation12 + $0x70] sm:$0xff]
        %v12266 = vld [vmem:[#allocation12 + $0x78] sm:$0xff]
        %v12267 = vld [vmem:[#allocation12 + $0x80] sm:$0xff]
        %v12268 = vld [vmem:[#allocation12 + $0x88] sm:$0xff]
        %v12269 = vld [vmem:[#allocation12 + $0x90] sm:$0xff]
        %v12270 = vld [vmem:[#allocation12 + $0x98] sm:$0xff]
        %v12271 = vld [vmem:[#allocation12 + $0xa0] sm:$0xff]
        %v12272 = vld [vmem:[#allocation12 + $0xa8] sm:$0xff]
        %v12273 = vld [vmem:[#allocation12 + $0xb0] sm:$0xff]
        %v12274 = vld [vmem:[#allocation12 + $0xb8] sm:$0xff]
        %v12275 = vld [vmem:[#allocation12 + $0xc0] sm:$0xff]
        %v12276 = vld [vmem:[#allocation12 + $0xc8] sm:$0xff]
        %v12277 = vld [vmem:[#allocation12 + $0xd0] sm:$0xff]
        %v12278 = vld [vmem:[#allocation12 + $0xd8] sm:$0xff]
        %v12279 = vld [vmem:[#allocation12 + $0xe0] sm:$0xff]
        %v12280 = vld [vmem:[#allocation12 + $0xe8] sm:$0xff]
        %v12281 = vld [vmem:[#allocation12 + $0xf0] sm:$0xff]
        %v12282 = vld [vmem:[#allocation12 + $0xf8] sm:$0xff]
        %v12283 = vld [vmem:[#allocation13] sm:$0x1]
        %v12285 = vlaneseq
        %v12286 = vshrl.u32 %v12285, 7
        %v12287 = vsub.s32 0, %v12286
        %v12288 = vrot.slane %v12283, %v12287
        %12290 = vmatprep.subr.mxu0 0.0
        %12291 = vmatpush1.msra.mxu0 %v12251
        %12292 = vmatprep.subr.mxu0 0.0
        %12293 = vmatpush1.msra.mxu0 %v12252
        %12294 = vmatprep.subr.mxu0 0.0
        %12295 = vmatpush1.msra.mxu0 %v12253
        %12296 = vmatprep.subr.mxu0 0.0
        %12297 = vmatpush1.msra.mxu0 %v12254
        %12298 = vmatprep.subr.mxu0 0.0
        %12299 = vmatpush1.msra.mxu0 %v12255
        %12300 = vmatprep.subr.mxu0 0.0
        %12301 = vmatpush1.msra.mxu0 %v12256
        %12302 = vmatprep.subr.mxu0 0.0
        %12303 = vmatpush1.msra.mxu0 %v12257
        %12304 = vmatprep.subr.mxu0 0.0
        %12305 = vmatpush1.msra.mxu0 %v12258
        %12306 = vmatprep.subr.mxu0 0.0
        %12307 = vmatpush1.msra.mxu0 %v12259
        %12308 = vmatprep.subr.mxu0 0.0
        %12309 = vmatpush1.msra.mxu0 %v12260
        %12310 = vmatprep.subr.mxu0 0.0
        %12311 = vmatpush1.msra.mxu0 %v12261
        %12312 = vmatprep.subr.mxu0 0.0
        %12313 = vmatpush1.msra.mxu0 %v12262
        %12314 = vmatprep.subr.mxu0 0.0
        %12315 = vmatpush1.msra.mxu0 %v12263
        %12316 = vmatprep.subr.mxu0 0.0
        %12317 = vmatpush1.msra.mxu0 %v12264
        %12318 = vmatprep.subr.mxu0 0.0
        %12319 = vmatpush1.msra.mxu0 %v12265
        %12320 = vmatprep.subr.mxu0 0.0
        %12321 = vmatpush1.msra.mxu0 %v12266
        %12322 = vmatprep.subr.mxu0 0.0
        %12323 = vmatpush1.msra.mxu0 %v12267
        %12324 = vmatprep.subr.mxu0 0.0
        %12325 = vmatpush1.msra.mxu0 %v12268
        %12326 = vmatprep.subr.mxu0 0.0
        %12327 = vmatpush1.msra.mxu0 %v12269
        %12328 = vmatprep.subr.mxu0 0.0
        %12329 = vmatpush1.msra.mxu0 %v12270
        %12330 = vmatprep.subr.mxu0 0.0
        %12331 = vmatpush1.msra.mxu0 %v12271
        %12332 = vmatprep.subr.mxu0 0.0
        %12333 = vmatpush1.msra.mxu0 %v12272
        %12334 = vmatprep.subr.mxu0 0.0
        %12335 = vmatpush1.msra.mxu0 %v12273
        %12336 = vmatprep.subr.mxu0 0.0
        %12337 = vmatpush1.msra.mxu0 %v12274
        %12338 = vmatprep.subr.mxu0 0.0
        %12339 = vmatpush1.msra.mxu0 %v12275
        %12340 = vmatprep.subr.mxu0 0.0
        %12341 = vmatpush1.msra.mxu0 %v12276
        %12342 = vmatprep.subr.mxu0 0.0
        %12343 = vmatpush1.msra.mxu0 %v12277
        %12344 = vmatprep.subr.mxu0 0.0
        %12345 = vmatpush1.msra.mxu0 %v12278
        %12346 = vmatprep.subr.mxu0 0.0
        %12347 = vmatpush1.msra.mxu0 %v12279
        %12348 = vmatprep.subr.mxu0 0.0
        %12349 = vmatpush1.msra.mxu0 %v12280
        %12350 = vmatprep.subr.mxu0 0.0
        %12351 = vmatpush1.msra.mxu0 %v12281
        %12352 = vmatprep.subr.mxu0 0.0
        %12353 = vmatpush1.msra.mxu0 %v12282
        %12354 = vmatprep.mubr.f32.mxu0 %v12250
        %12355 = vmatmul.mubr.f32.gmra.mrb[0].mxu0 %v12248
        %v12356 = vpop.f32.mrb[0].mxu0
        %v12357 = vadd.f32 %v12288, %v12356
        %v12358 = vpop.f32.mrb[0].mxu0
        %12359 = vdwg.mxu0
        %v12360 = vxor.u32 %v12357, 2147483648
        %v12361 = vmul.f32 %v12360, 1.442695
        %v12362 = vpow.pop %v12361
        %v12363 = vadd.f32 %v12362, 1.0
        %v12364 = vrcp.pop %v12363
        %v12365 = vmul.f32 1.0, %v12364
        %v12368 = vunpack.c.l.s4 1966171168
        %v12369 = vunpack.c.0.s8 %v12368
        %v12370 = vlaneseq
        %v12371 = vshrl.u32 %v12370, 7
        %v12372 = vsub.s32 %v12369, %v12371
        %v12373 = vrot.slane %v12365, %v12372
        %v12374 = vcombine.high %v12373, %v12373
        %v12376 = vunpack.c.l.s4 1966171168
        %v12377 = vunpack.c.0.s8 %v12376
        %v12378 = vlaneseq
        %v12379 = vshrl.u32 %v12378, 7
        %v12380 = vsub.s32 %v12377, %v12379
        %v12381 = vrot.slane %v12373, %v12380
        %v12383 = vunpack.c.l.s4 1966171168
        %v12384 = vunpack.c.0.s8 %v12383
        %v12385 = vlaneseq
        %v12386 = vshrl.u32 %v12385, 7
        %v12387 = vsub.s32 %v12384, %v12386
        %v12388 = vrot.slane %v12374, %v12387
        %v12389 = vcombine.high %v12381, %v12381
        %v12390 = vcombine.high %v12388, %v12388
        %12395 = vst [vmem:[%s444] sm:$0x1] %v12381
        %12396 = vst [vmem:[%s444 + $0x1] sm:$0x1] %v12388
        %12397 = vst [vmem:[%s444 + $0x2] sm:$0x1] %v12389
        %12398 = vst [vmem:[%s444 + $0x3] sm:$0x1] %v12390
        %s12399 = smul.u32 4, %s25
        %p12400 = scmp.lt.s32.totalorder %s12399, 7
        %s12401 = scalar_select %p12400, %s12399, 7
        %s12402 = scalar_lea.vmem %s9, %s12401
        // Predicated region
        $region89: #{onset_cnn_forward.1} parent=55 // pred_check
          %p12403 = pneg %p237
        $region90: #{onset_cnn_forward.1} parent=55 // pred_check_branch
          %12405 = sbr.rel (%p12403) target = $region92
        $region91: #{onset_cnn_forward.1} parent=55 // pred_region
          %s12406 = smul.u32 4, %s25
        $region92: #{onset_cnn_forward.1} parent=55 // pred_fallthru
          _
      $region56: #{onset_cnn_forward.1} parent=5 // pred_fallthru
        _
      %p12407 = scmp.le.s32.totalorder 2, %s20
      // Predicated region
      $region93: #{onset_cnn_forward.1} parent=5 // pred_check
        %p12408 = pneg %p12407
      $region94: #{onset_cnn_forward.1} parent=5 // pred_check_branch
        %12410 = sbr.rel (%p12408) target = $region96
      $region95: #{onset_cnn_forward.1} parent=5 // pred_region
        %s12411 = ssub.s32 %s20, 2
        // Predicated region
        $region97: #{onset_cnn_forward.1} parent=95 // pred_check
          %p12412 = pneg %p243
        $region98: #{onset_cnn_forward.1} parent=95 // pred_check_branch
          %12414 = sbr.rel (%p12412) target = $region100
        $region99: #{onset_cnn_forward.1} parent=95 // pred_region
          %s12415 = smul.u32 4, %s26
          %p12416 = scmp.lt.s32.totalorder %s12415, 7
          %s12417 = scalar_select %p12416, %s12415, 7
          %s12418 = scalar_lea.vmem %s9, %s12417
        $region100: #{onset_cnn_forward.1} parent=95 // pred_fallthru
          _
      $region96: #{onset_cnn_forward.1} parent=5 // pred_fallthru
        _
    $region6: #{onset_cnn_forward.1} parent=1 // loop_footer
      %s24 = sadd.s32 1, %s20
    $region7: #{onset_cnn_forward.1} parent=1 // loop_footer_branch
      %19 = sbr.rel target = $region3
    $region8: #{onset_cnn_forward.1} parent=1 // loop_exit
      _
    %12419 = vsyncpa [#allocation3], 1
    %s12420 = scalar_lea.sflag [#allocation3], 1
    %12421 = vsyncpa %s12420, 1
    %12422 = vsyncpa [#allocation5], 1
    %12423 = vsyncpa [#allocation8], 1
    %12424 = vsyncpa [#allocation11], 1
    %12425 = vsyncpa [#allocation14], 1

</llo_original>
